<compile_context>
chip_gen: v7x
topology: tpu7x:2x2x1
jax: 0.10.0
libtpu: 0.0.40
codegen_flags: <defaults>
</compile_context>

<pallas_src>
import jax
import jax.numpy as jnp
from jax.experimental import pallas as pl
from jax.experimental.pallas import tpu as pltpu

# ---- ImageEncoder(semantic=True) hyper-parameters --------------------------
VOCAB = 10.0
OUT_DIM = 32
H0, W0, C0 = 7, 9, 1          # obs[..., :63].view(B, 1, 7, 9)
C1, C2, C3 = 32, 64, 64       # conv output channels
H1, W1 = 6, 8                 # spatial dims after each 2x2 / stride-1 conv
H2, W2 = 5, 7
H3, W3 = 4, 6
FEAT = C3 * H3 * W3           # 64 * 4 * 6 = 1536 == self.feature_dim
OUT_PAD = 128                 # lane-dense output width (>= OUT_DIM)
MAX_BT = 512                  # batch-tile cap (safe for v7x's 64 MiB VMEM)


def _make_kernel(bt):
    def kernel(x_ref, m1_ref, b1_ref, m2_ref, b2_ref, m3_ref, b3_ref,
               wl_ref, bl_ref, out_ref):
        # x_ref: (bt, 63) f32 — one sample per row, lanes = (y, x) of the 7x9 grid.
        x = x_ref[...] * (1.0 / VOCAB)

        # ---- layer 1: ONE matmul; dy AND dx folded into the (18, 256) weight.
        # The operand for output row-group y needs input rows y and y+1, i.e.
        # 18 contiguous lanes [y*9 : y*9+18]; sublane-concat the 6 row-groups
        # to get the (y, b)-major layout used by layers 2/3 (no wrapper transpose).
        a1 = jnp.concatenate(
            [x[:, y * W0:(y + 2) * W0] for y in range(H1)],
            axis=0).astype(jnp.bfloat16)                          # (H1*bt, 18)
        h = jnp.dot(a1, m1_ref[...], preferred_element_type=jnp.float32)
        h = jnp.maximum(h + b1_ref[...], 0.0)                     # (H1*bt, 256)

        def conv2x2_relu(a, hin, m_ref, b_ref):
            # a: (hin*bt, Win*Cin), (y,b)-major rows, (x,c) lanes.  Both dx taps
            # are folded into m_ref[dy] as shifted block-diagonals; dy is a
            # sublane-aligned row slice.  Accumulator starts from the dy=0 dot.
            hout = hin - 1
            a_bf = a.astype(jnp.bfloat16)
            acc = jnp.dot(a_bf[0:hout * bt, :], m_ref[0],
                          preferred_element_type=jnp.float32)
            acc = acc + jnp.dot(a_bf[bt:(1 + hout) * bt, :], m_ref[1],
                                preferred_element_type=jnp.float32)
            return jnp.maximum(acc + b_ref[...], 0.0)             # bias+ReLU f32

        h = conv2x2_relu(h, H1, m2_ref, b2_ref)                   # (H2*bt, 448)
        h = conv2x2_relu(h, H2, m3_ref, b3_ref)                   # (H3*bt, 384)

        # ---- head: lane-concat the H3 row-groups -> (bt, 1536), single matmul.
        hcat = jnp.concatenate(
            [h[y * bt:(y + 1) * bt, :] for y in range(H3)], axis=1)  # f32

        # F.normalize(p=2, dim=1): per-sample sum of squares + one rsqrt; the
        # per-row scale commutes with the linear, so apply it AFTER the matmul.
        ss = jnp.sum(hcat * hcat, axis=1, keepdims=True)          # (bt, 1)
        inv = jax.lax.rsqrt(jnp.maximum(ss, 1e-24))               # 1/max(||h||,1e-12)

        acc = jnp.dot(hcat.astype(jnp.bfloat16), wl_ref[...],
                      preferred_element_type=jnp.float32)         # (bt, OUT_PAD)
        out_ref[...] = acc * inv + bl_ref[...]

    return kernel


def image_encoder(obs, kparams):
    (m1, b1, m2, b2, m3, b3, wlk, blp) = kparams
    B = obs.shape[0]
    bt = min(MAX_BT, ((B + 127) // 128) * 128)     # multiple of 128
    nb = pl.cdiv(B, bt)
    bp = nb * bt

    x = obs[:, :63].astype(jnp.float32)
    if bp != B:
        x = jnp.pad(x, ((0, bp - B), (0, 0)))

    weights = (m1, b1, m2, b2, m3, b3, wlk, blp)

    def wspec(a):
        nd = a.ndim
        return pl.BlockSpec(a.shape, lambda i: (0,) * nd)

    # Advisory cost for XLA's scheduler.
    flops = nb * (2 * (H1 * bt) * (2 * W0 * C0) * (W1 * C1)        # layer 1
                  + 2 * 2 * (H2 * bt) * (W1 * C1) * (W2 * C2)      # layer 2
                  + 2 * 2 * (H3 * bt) * (W2 * C2) * (W3 * C3)      # layer 3
                  + 2 * bt * FEAT * OUT_PAD)                       # head
    bytes_accessed = (int(x.size) * 4 + bp * OUT_PAD * 4
                      + sum(int(w.size) * w.dtype.itemsize for w in weights))

    grid_spec = pltpu.PrefetchScalarGridSpec(
        num_scalar_prefetch=0,
        grid=(nb,),
        in_specs=[pl.BlockSpec((bt, 63), lambda i: (i, 0))]
                 + [wspec(w) for w in weights],
        out_specs=pl.BlockSpec((bt, OUT_PAD), lambda i: (i, 0)),
    )
    out = pl.pallas_call(
        _make_kernel(bt),
        out_shape=jax.ShapeDtypeStruct((bp, OUT_PAD), jnp.float32),
        grid_spec=grid_spec,
        compiler_params=pltpu.CompilerParams(
            dimension_semantics=("parallel",),      # batch tiles are independent
            vmem_limit_bytes=48 * 1024 * 1024),     # BT=512 temps ~20 MB; < v7x 64 MiB
        cost_estimate=pl.CostEstimate(
            flops=flops, transcendentals=bp, bytes_accessed=bytes_accessed),
    )(x, *weights)
    return out[:B, :OUT_DIM]


# ---- deterministic synthetic parameters (PyTorch layouts) ------------------
def init_pt_params(key):
    ks = jax.random.split(key, 8)
    w1 = 0.2 * jax.random.normal(ks[0], (C1, C0, 2, 2), jnp.float32)
    b1 = 0.1 * jax.random.normal(ks[1], (C1,), jnp.float32)
    w2 = 0.2 * jax.random.normal(ks[2], (C2, C1, 2, 2), jnp.float32)
    b2 = 0.1 * jax.random.normal(ks[3], (C2,), jnp.float32)
    w3 = 0.2 * jax.random.normal(ks[4], (C3, C2, 2, 2), jnp.float32)
    b3 = 0.1 * jax.random.normal(ks[5], (C3,), jnp.float32)
    wl = 0.05 * jax.random.normal(ks[6], (OUT_DIM, FEAT), jnp.float32)
    bl = 0.05 * jax.random.normal(ks[7], (OUT_DIM,), jnp.float32)
    return (w1, b1, w2, b2, w3, b3, wl, bl)


def to_kernel_params(pt):
    (w1, b1, w2, b2, w3, b3, wl, bl) = pt

    def conv_mats(w_pt, win, wout, merge_dy=False):
        # (Cout, Cin, 2, 2) -> per-dy (win*Cin, wout*Cout) matrices with both dx
        # taps placed as dx-shifted block diagonals (kron of a shifted eye with
        # the (Cin, Cout) tap matrix).  merge_dy stacks the two dy taps along K.
        cout, cin = w_pt.shape[0], w_pt.shape[1]
        mats = []
        for dy in range(2):
            m = jnp.zeros((win * cin, wout * cout), jnp.float32)
            for dx in range(2):
                e = jnp.eye(win, wout, k=-dx, dtype=jnp.float32)   # [x+dx, x]=1
                m = m + jnp.kron(e, jnp.transpose(w_pt[:, :, dy, dx], (1, 0)))
            mats.append(m)
        if merge_dy:
            return jnp.concatenate(mats, axis=0).astype(jnp.bfloat16)
        return jnp.stack(mats).astype(jnp.bfloat16)

    def tile_bias(b_pt, wout):
        # lane layout is (x, c) -> tile the per-channel bias over x; keep f32.
        return jnp.tile(b_pt, (wout,)).reshape(1, wout * b_pt.shape[0])

    # PyTorch flattens (B, C, H, W) -> (c, y, x); kernel lanes of hcat are
    # (y, x, c), so permute the linear weight to (H3, W3, C3, OUT_DIM), flatten
    # to (FEAT, OUT_DIM), and pad the output dim to 128 lanes.
    wlk = jnp.transpose(wl.reshape(OUT_DIM, C3, H3, W3), (2, 3, 1, 0))
    wlk = wlk.reshape(FEAT, OUT_DIM)
    wlk = jnp.pad(wlk, ((0, 0), (0, OUT_PAD - OUT_DIM))).astype(jnp.bfloat16)
    blp = jnp.pad(bl, (0, OUT_PAD - OUT_DIM)).reshape(1, OUT_PAD)

    return (conv_mats(w1, W0, W1, merge_dy=True), tile_bias(b1, W1),
            conv_mats(w2, W1, W2), tile_bias(b2, W2),
            conv_mats(w3, W2, W3), tile_bias(b3, W3),
            wlk, blp)


# ---- pure-JAX reference that mirrors the PyTorch forward (NCHW) ------------
def reference_forward(obs, pt):
    (w1, b1, w2, b2, w3, b3, wl, bl) = pt
    B = obs.shape[0]
    x = obs[:, :63].reshape(B, 1, H0, W0).astype(jnp.float32) / VOCAB

    def conv(x, w, b):
        y = jax.lax.conv_general_dilated(
            x, w, window_strides=(1, 1), padding="VALID",
            dimension_numbers=("NCHW", "OIHW", "NCHW"))
        return jax.nn.relu(y + b.reshape(1, -1, 1, 1))

    h = conv(x, w1, b1)
    h = conv(h, w2, b2)
    h = conv(h, w3, b3)
    h = h.reshape(B, -1)
    h = h / jnp.maximum(jnp.linalg.norm(h, axis=1, keepdims=True), 1e-12)
    return h @ wl.T + bl


if __name__ == "__main__":
    key = jax.random.PRNGKey(0)
    k_obs, k_par = jax.random.split(key)
    B = 2
    # semantic observations: integer tokens in [0, vocab), 63 entries per row
    obs = jax.random.randint(k_obs, (B, 63), 0, int(VOCAB)).astype(jnp.float32)

    pt_params = init_pt_params(k_par)
    kparams = to_kernel_params(pt_params)

    out = jax.block_until_ready(image_encoder(obs, kparams))
    ref = reference_forward(obs, pt_params)

    assert out.shape == (B, OUT_DIM)
    err = float(jnp.max(jnp.abs(out - ref)))
    assert err < 2e-2, f"mismatch vs reference: {err}"
    print("KERNEL_OK")
</pallas_src>

<mosaic_0001>
module attributes {stable_mosaic.version = 11 : i64} {
  func.func @kernel(%arg0: i32, %arg1: memref<128x63xf32, #tpu.memory_space<vmem>>, %arg2: memref<18x256xbf16, #tpu.memory_space<vmem>>, %arg3: memref<1x256xf32, #tpu.memory_space<vmem>>, %arg4: memref<2x256x448xbf16, #tpu.memory_space<vmem>>, %arg5: memref<1x448xf32, #tpu.memory_space<vmem>>, %arg6: memref<2x448x384xbf16, #tpu.memory_space<vmem>>, %arg7: memref<1x384xf32, #tpu.memory_space<vmem>>, %arg8: memref<1536x128xbf16, #tpu.memory_space<vmem>>, %arg9: memref<1x128xf32, #tpu.memory_space<vmem>>, %arg10: memref<128x128xf32, #tpu.memory_space<vmem>>) attributes {dimension_semantics = [#tpu.dimension_semantics<parallel>], iteration_bounds = array<i64: 1>, scalar_prefetch = 0 : i64, scratch_operands = 0 : i64, tpu.core_type = #tpu.core_type<tc>, window_params = [{transform_indices = @transform_0, window_bounds = array<i64: 128, 63>}, {pipeline_mode = #tpu.pipeline_mode<synchronous>, transform_indices = @transform_1, window_bounds = array<i64: 18, 256>}, {pipeline_mode = #tpu.pipeline_mode<synchronous>, transform_indices = @transform_2, window_bounds = array<i64: 1, 256>}, {pipeline_mode = #tpu.pipeline_mode<synchronous>, transform_indices = @transform_3, window_bounds = array<i64: 2, 256, 448>}, {pipeline_mode = #tpu.pipeline_mode<synchronous>, transform_indices = @transform_4, window_bounds = array<i64: 1, 448>}, {pipeline_mode = #tpu.pipeline_mode<synchronous>, transform_indices = @transform_5, window_bounds = array<i64: 2, 448, 384>}, {pipeline_mode = #tpu.pipeline_mode<synchronous>, transform_indices = @transform_6, window_bounds = array<i64: 1, 384>}, {pipeline_mode = #tpu.pipeline_mode<synchronous>, transform_indices = @transform_7, window_bounds = array<i64: 1536, 128>}, {pipeline_mode = #tpu.pipeline_mode<synchronous>, transform_indices = @transform_8, window_bounds = array<i64: 1, 128>}, {transform_indices = @transform_9, window_bounds = array<i64: 128, 128>}]} {
    %c0 = arith.constant 0 : index
    %c0_0 = arith.constant 0 : index
    %0 = vector.load %arg1[%c0, %c0_0] : memref<128x63xf32, #tpu.memory_space<vmem>>, vector<128x63xf32>
    %cst = arith.constant 1.000000e-01 : f32
    %1 = vector.broadcast %cst : f32 to vector<128x63xf32>
    %2 = arith.mulf %0, %1 : vector<128x63xf32>
    %3 = vector.extract_strided_slice %2 {offsets = [0, 0], sizes = [128, 18], strides = [1, 1]} : vector<128x63xf32> to vector<128x18xf32>
    %4 = vector.extract_strided_slice %2 {offsets = [0, 9], sizes = [128, 18], strides = [1, 1]} : vector<128x63xf32> to vector<128x18xf32>
    %5 = vector.extract_strided_slice %2 {offsets = [0, 18], sizes = [128, 18], strides = [1, 1]} : vector<128x63xf32> to vector<128x18xf32>
    %6 = vector.extract_strided_slice %2 {offsets = [0, 27], sizes = [128, 18], strides = [1, 1]} : vector<128x63xf32> to vector<128x18xf32>
    %7 = vector.extract_strided_slice %2 {offsets = [0, 36], sizes = [128, 18], strides = [1, 1]} : vector<128x63xf32> to vector<128x18xf32>
    %8 = vector.extract_strided_slice %2 {offsets = [0, 45], sizes = [128, 18], strides = [1, 1]} : vector<128x63xf32> to vector<128x18xf32>
    %9 = tpu.concatenate %3, %4, %5, %6, %7, %8 in 0 : vector<128x18xf32>, vector<128x18xf32>, vector<128x18xf32>, vector<128x18xf32>, vector<128x18xf32>, vector<128x18xf32> -> vector<768x18xf32>
    %10 = arith.truncf %9 : vector<768x18xf32> to vector<768x18xbf16>
    %c0_1 = arith.constant 0 : index
    %c0_2 = arith.constant 0 : index
    %11 = vector.load %arg2[%c0_1, %c0_2] : memref<18x256xbf16, #tpu.memory_space<vmem>>, vector<18x256xbf16>
    %cst_3 = arith.constant dense<0.000000e+00> : vector<768x256xf32>
    %12 = tpu.matmul %10, %11, %cst_3 {dimension_numbers = #tpu.dot_dimension_numbers<[1], [0], [0], [1], [0, 0, 1, 1], [], []>} : vector<768x18xbf16>, vector<18x256xbf16>, vector<768x256xf32> -> vector<768x256xf32>
    %c0_4 = arith.constant 0 : index
    %c0_5 = arith.constant 0 : index
    %13 = vector.load %arg3[%c0_4, %c0_5] : memref<1x256xf32, #tpu.memory_space<vmem>>, vector<1x256xf32>
    %14 = vector.broadcast %13 : vector<1x256xf32> to vector<768x256xf32>
    %15 = arith.addf %12, %14 : vector<768x256xf32>
    %cst_6 = arith.constant 0.000000e+00 : f32
    %16 = vector.broadcast %cst_6 : f32 to vector<768x256xf32>
    %17 = arith.maximumf %15, %16 : vector<768x256xf32>
    %18 = arith.truncf %17 : vector<768x256xf32> to vector<768x256xbf16>
    %19 = vector.extract_strided_slice %18 {offsets = [0, 0], sizes = [640, 256], strides = [1, 1]} : vector<768x256xbf16> to vector<640x256xbf16>
    %c0_7 = arith.constant 0 : index
    %c0_8 = arith.constant 0 : index
    %c0_9 = arith.constant 0 : index
    %20 = vector.load %arg4[%c0_7, %c0_8, %c0_9] : memref<2x256x448xbf16, #tpu.memory_space<vmem>>, vector<1x256x448xbf16>
    %21 = vector.shape_cast %20 : vector<1x256x448xbf16> to vector<256x448xbf16>
    %cst_10 = arith.constant dense<0.000000e+00> : vector<640x448xf32>
    %22 = tpu.matmul %19, %21, %cst_10 {dimension_numbers = #tpu.dot_dimension_numbers<[1], [0], [0], [1], [0, 0, 1, 1], [], []>} : vector<640x256xbf16>, vector<256x448xbf16>, vector<640x448xf32> -> vector<640x448xf32>
    %23 = vector.extract_strided_slice %18 {offsets = [128, 0], sizes = [640, 256], strides = [1, 1]} : vector<768x256xbf16> to vector<640x256xbf16>
    %c1 = arith.constant 1 : index
    %c0_11 = arith.constant 0 : index
    %c0_12 = arith.constant 0 : index
    %24 = vector.load %arg4[%c1, %c0_11, %c0_12] : memref<2x256x448xbf16, #tpu.memory_space<vmem>>, vector<1x256x448xbf16>
    %25 = vector.shape_cast %24 : vector<1x256x448xbf16> to vector<256x448xbf16>
    %cst_13 = arith.constant dense<0.000000e+00> : vector<640x448xf32>
    %26 = tpu.matmul %23, %25, %cst_13 {dimension_numbers = #tpu.dot_dimension_numbers<[1], [0], [0], [1], [0, 0, 1, 1], [], []>} : vector<640x256xbf16>, vector<256x448xbf16>, vector<640x448xf32> -> vector<640x448xf32>
    %27 = arith.addf %22, %26 : vector<640x448xf32>
    %c0_14 = arith.constant 0 : index
    %c0_15 = arith.constant 0 : index
    %28 = vector.load %arg5[%c0_14, %c0_15] : memref<1x448xf32, #tpu.memory_space<vmem>>, vector<1x448xf32>
    %29 = vector.broadcast %28 : vector<1x448xf32> to vector<640x448xf32>
    %30 = arith.addf %27, %29 : vector<640x448xf32>
    %cst_16 = arith.constant 0.000000e+00 : f32
    %31 = vector.broadcast %cst_16 : f32 to vector<640x448xf32>
    %32 = arith.maximumf %30, %31 : vector<640x448xf32>
    %33 = arith.truncf %32 : vector<640x448xf32> to vector<640x448xbf16>
    %34 = vector.extract_strided_slice %33 {offsets = [0, 0], sizes = [512, 448], strides = [1, 1]} : vector<640x448xbf16> to vector<512x448xbf16>
    %c0_17 = arith.constant 0 : index
    %c0_18 = arith.constant 0 : index
    %c0_19 = arith.constant 0 : index
    %35 = vector.load %arg6[%c0_17, %c0_18, %c0_19] : memref<2x448x384xbf16, #tpu.memory_space<vmem>>, vector<1x448x384xbf16>
    %36 = vector.shape_cast %35 : vector<1x448x384xbf16> to vector<448x384xbf16>
    %cst_20 = arith.constant dense<0.000000e+00> : vector<512x384xf32>
    %37 = tpu.matmul %34, %36, %cst_20 {dimension_numbers = #tpu.dot_dimension_numbers<[1], [0], [0], [1], [0, 0, 1, 1], [], []>} : vector<512x448xbf16>, vector<448x384xbf16>, vector<512x384xf32> -> vector<512x384xf32>
    %38 = vector.extract_strided_slice %33 {offsets = [128, 0], sizes = [512, 448], strides = [1, 1]} : vector<640x448xbf16> to vector<512x448xbf16>
    %c1_21 = arith.constant 1 : index
    %c0_22 = arith.constant 0 : index
    %c0_23 = arith.constant 0 : index
    %39 = vector.load %arg6[%c1_21, %c0_22, %c0_23] : memref<2x448x384xbf16, #tpu.memory_space<vmem>>, vector<1x448x384xbf16>
    %40 = vector.shape_cast %39 : vector<1x448x384xbf16> to vector<448x384xbf16>
    %cst_24 = arith.constant dense<0.000000e+00> : vector<512x384xf32>
    %41 = tpu.matmul %38, %40, %cst_24 {dimension_numbers = #tpu.dot_dimension_numbers<[1], [0], [0], [1], [0, 0, 1, 1], [], []>} : vector<512x448xbf16>, vector<448x384xbf16>, vector<512x384xf32> -> vector<512x384xf32>
    %42 = arith.addf %37, %41 : vector<512x384xf32>
    %c0_25 = arith.constant 0 : index
    %c0_26 = arith.constant 0 : index
    %43 = vector.load %arg7[%c0_25, %c0_26] : memref<1x384xf32, #tpu.memory_space<vmem>>, vector<1x384xf32>
    %44 = vector.broadcast %43 : vector<1x384xf32> to vector<512x384xf32>
    %45 = arith.addf %42, %44 : vector<512x384xf32>
    %cst_27 = arith.constant 0.000000e+00 : f32
    %46 = vector.broadcast %cst_27 : f32 to vector<512x384xf32>
    %47 = arith.maximumf %45, %46 : vector<512x384xf32>
    %48 = vector.extract_strided_slice %47 {offsets = [0, 0], sizes = [128, 384], strides = [1, 1]} : vector<512x384xf32> to vector<128x384xf32>
    %49 = vector.extract_strided_slice %47 {offsets = [128, 0], sizes = [128, 384], strides = [1, 1]} : vector<512x384xf32> to vector<128x384xf32>
    %50 = vector.extract_strided_slice %47 {offsets = [256, 0], sizes = [128, 384], strides = [1, 1]} : vector<512x384xf32> to vector<128x384xf32>
    %51 = vector.extract_strided_slice %47 {offsets = [384, 0], sizes = [128, 384], strides = [1, 1]} : vector<512x384xf32> to vector<128x384xf32>
    %52 = tpu.concatenate %48, %49, %50, %51 in 1 : vector<128x384xf32>, vector<128x384xf32>, vector<128x384xf32>, vector<128x384xf32> -> vector<128x1536xf32>
    %53 = arith.mulf %52, %52 : vector<128x1536xf32>
    %cst_28 = arith.constant dense<0.000000e+00> : vector<128xf32>
    %54 = vector.multi_reduction <add>, %53, %cst_28 [1] : vector<128x1536xf32> to vector<128xf32>
    %55 = vector.shape_cast %54 : vector<128xf32> to vector<128x1xf32>
    %cst_29 = arith.constant 1.000000e-24 : f32
    %56 = vector.broadcast %cst_29 : f32 to vector<128x1xf32>
    %57 = arith.maximumf %55, %56 : vector<128x1xf32>
    %58 = math.rsqrt %57 : vector<128x1xf32>
    %59 = arith.truncf %52 : vector<128x1536xf32> to vector<128x1536xbf16>
    %c0_30 = arith.constant 0 : index
    %c0_31 = arith.constant 0 : index
    %60 = vector.load %arg8[%c0_30, %c0_31] : memref<1536x128xbf16, #tpu.memory_space<vmem>>, vector<1536x128xbf16>
    %cst_32 = arith.constant dense<0.000000e+00> : vector<128x128xf32>
    %61 = tpu.matmul %59, %60, %cst_32 {dimension_numbers = #tpu.dot_dimension_numbers<[1], [0], [0], [1], [0, 0, 1, 1], [], []>} : vector<128x1536xbf16>, vector<1536x128xbf16>, vector<128x128xf32> -> vector<128x128xf32>
    %62 = vector.broadcast %58 : vector<128x1xf32> to vector<128x128xf32>
    %63 = arith.mulf %61, %62 : vector<128x128xf32>
    %c0_33 = arith.constant 0 : index
    %c0_34 = arith.constant 0 : index
    %64 = vector.load %arg9[%c0_33, %c0_34] : memref<1x128xf32, #tpu.memory_space<vmem>>, vector<1x128xf32>
    %65 = vector.broadcast %64 : vector<1x128xf32> to vector<128x128xf32>
    %66 = arith.addf %63, %65 : vector<128x128xf32>
    %c0_35 = arith.constant 0 : index
    %c0_36 = arith.constant 0 : index
    %67 = vector.load %arg10[%c0_35, %c0_36] : memref<128x128xf32, #tpu.memory_space<vmem>>, vector<128x128xf32>
    tpu.vector_store %arg10[%c0_35, %c0_36], %66 {strides = array<i32>} : memref<128x128xf32, #tpu.memory_space<vmem>>, vector<128x128xf32>,
    return
  }
  func.func @transform_0(%arg0: i32) -> (i32, i32) {
    %c0_i32 = arith.constant 0 : i32
    %c0_i32_0 = arith.constant 0 : i32
    return %arg0, %c0_i32 : i32, i32
  }
  func.func @transform_1(%arg0: i32) -> (i32, i32) {
    %c0_i32 = arith.constant 0 : i32
    %c0_i32_0 = arith.constant 0 : i32
    %c0_i32_1 = arith.constant 0 : i32
    return %c0_i32, %c0_i32_0 : i32, i32
  }
  func.func @transform_2(%arg0: i32) -> (i32, i32) {
    %c0_i32 = arith.constant 0 : i32
    %c0_i32_0 = arith.constant 0 : i32
    %c0_i32_1 = arith.constant 0 : i32
    return %c0_i32, %c0_i32_0 : i32, i32
  }
  func.func @transform_3(%arg0: i32) -> (i32, i32, i32) {
    %c0_i32 = arith.constant 0 : i32
    %c0_i32_0 = arith.constant 0 : i32
    %c0_i32_1 = arith.constant 0 : i32
    %c0_i32_2 = arith.constant 0 : i32
    return %c0_i32, %c0_i32_0, %c0_i32_1 : i32, i32, i32
  }
  func.func @transform_4(%arg0: i32) -> (i32, i32) {
    %c0_i32 = arith.constant 0 : i32
    %c0_i32_0 = arith.constant 0 : i32
    %c0_i32_1 = arith.constant 0 : i32
    return %c0_i32, %c0_i32_0 : i32, i32
  }
  func.func @transform_5(%arg0: i32) -> (i32, i32, i32) {
    %c0_i32 = arith.constant 0 : i32
    %c0_i32_0 = arith.constant 0 : i32
    %c0_i32_1 = arith.constant 0 : i32
    %c0_i32_2 = arith.constant 0 : i32
    return %c0_i32, %c0_i32_0, %c0_i32_1 : i32, i32, i32
  }
  func.func @transform_6(%arg0: i32) -> (i32, i32) {
    %c0_i32 = arith.constant 0 : i32
    %c0_i32_0 = arith.constant 0 : i32
    %c0_i32_1 = arith.constant 0 : i32
    return %c0_i32, %c0_i32_0 : i32, i32
  }
  func.func @transform_7(%arg0: i32) -> (i32, i32) {
    %c0_i32 = arith.constant 0 : i32
    %c0_i32_0 = arith.constant 0 : i32
    %c0_i32_1 = arith.constant 0 : i32
    return %c0_i32, %c0_i32_0 : i32, i32
  }
  func.func @transform_8(%arg0: i32) -> (i32, i32) {
    %c0_i32 = arith.constant 0 : i32
    %c0_i32_0 = arith.constant 0 : i32
    %c0_i32_1 = arith.constant 0 : i32
    return %c0_i32, %c0_i32_0 : i32, i32
  }
  func.func @transform_9(%arg0: i32) -> (i32, i32) {
    %c0_i32 = arith.constant 0 : i32
    %c0_i32_0 = arith.constant 0 : i32
    return %arg0, %c0_i32 : i32, i32
  }
}

</mosaic_0001>

<llo_original>
// kernel: tpu_custom_call.1
$region0: #{tpu_custom_call.1}
  #allocation0 [shape = 'u32[]', space=smem, size = 0x4, offset = 0x4, fixed_abs, tag = 'smem constant byte address 0x4 - core index']
  #allocation1 [shape = 'u32[144,128]{1,0:T(1,128)}', space=vmem, size = 0x12000, scoped, tag = 'internal scratch']
  %s0 = inlined_call_operand.vmem [shape: f32[128,63], index: 0, kind: input, shape index: {}]
  %s1 = inlined_call_operand.hbm [shape: bf16[18,256], index: 1, kind: input, shape index: {}]
  %s2 = inlined_call_operand.vmem [shape: f32[1,256], index: 2, kind: input, shape index: {}]
  %s3 = inlined_call_operand.vmem [shape: bf16[2,256,448], index: 3, kind: input, shape index: {}]
  %s4 = inlined_call_operand.vmem [shape: f32[1,448], index: 4, kind: input, shape index: {}]
  %s5 = inlined_call_operand.vmem [shape: bf16[2,448,384], index: 5, kind: input, shape index: {}]
  %s6 = inlined_call_operand.vmem [shape: f32[1,384], index: 6, kind: input, shape index: {}]
  %s7 = inlined_call_operand.vmem [shape: bf16[1536,128], index: 7, kind: input, shape index: {}]
  %s8 = inlined_call_operand.vmem [shape: f32[1,128], index: 8, kind: input, shape index: {}]
  %s9 = inlined_call_operand.hbm [shape: f32[128,128], index: 9, kind: output, shape index: {}]
  %s10 = sld [smem:[#allocation0]]
  $region50: #{tpu_custom_call.1} parent=0
    _
  %s12 = ssub.s32 1, %s10
  %s13 = scalar_select 0, %s12, %s10
  $region1: #{tpu_custom_call.1} parent=0
    #allocation2 [shape = 'u8[12288]{0}', space=vmem, size = 0x3000, scoped, tag = 'input window, operand 1, single buffered']
    #allocation3 [shape = 's32[1]{0}', space=sflag, size = 0x4, scoped, tag = 'scoped memory for tpu_custom_call.1']
    #allocation4 [shape = 's32[1]{0}', space=sflag, size = 0x4, scoped, tag = 'scoped memory for tpu_custom_call.1']
    #allocation5 [shape = 'u8[65536]{0}', space=vmem, size = 0x10000, scoped, tag = 'output window, operand 0, single buffered']
    %14 = vsyncpa [#allocation3], 0
    %15 = vsyncpa [#allocation4], 0
    // Predicated region
    $region2: #{tpu_custom_call.1} parent=1 // pred_check
      _
    $region3: #{tpu_custom_call.1} parent=1 // pred_check_branch
      %17 = sbr.rel (0) target = $region5
    $region4: #{tpu_custom_call.1} parent=1 // pred_region
      _
    $region5: #{tpu_custom_call.1} parent=1 // pred_fallthru
      _
    // Predicated region
    $region6: #{tpu_custom_call.1} parent=1 // pred_check
      _
    $region7: #{tpu_custom_call.1} parent=1 // pred_check_branch
      %19 = sbr.rel (0) target = $region9
    $region8: #{tpu_custom_call.1} parent=1 // pred_region
      %s21 = ssub.s32 384, 384
      %22 = vsyncadd [#allocation3], %s21
      %s23 = sshll.u32 [#allocation2], 4
      %s24 = int_to_ptr.vmem [resolvable:$true] %s23
      %29 = dma.hbm_to_vmem [thread:$0]  %s1, 384, %s24, [#allocation3], 128, 128, 8
    $region9: #{tpu_custom_call.1} parent=1 // pred_fallthru
      _
    // Predicated region
    $region10: #{tpu_custom_call.1} parent=1 // pred_check
      _
    $region11: #{tpu_custom_call.1} parent=1 // pred_check_branch
      %31 = sbr.rel (0) target = $region13
    $region12: #{tpu_custom_call.1} parent=1 // pred_region
      _
    $region13: #{tpu_custom_call.1} parent=1 // pred_fallthru
      _
    // Predicated region
    $region14: #{tpu_custom_call.1} parent=1 // pred_check
      _
    $region15: #{tpu_custom_call.1} parent=1 // pred_check_branch
      %33 = sbr.rel (0) target = $region17
    $region16: #{tpu_custom_call.1} parent=1 // pred_region
      _
    $region17: #{tpu_custom_call.1} parent=1 // pred_fallthru
      _
    // Predicated region
    $region18: #{tpu_custom_call.1} parent=1 // pred_check
      _
    $region19: #{tpu_custom_call.1} parent=1 // pred_check_branch
      %35 = sbr.rel (0) target = $region21
    $region20: #{tpu_custom_call.1} parent=1 // pred_region
      _
    $region21: #{tpu_custom_call.1} parent=1 // pred_fallthru
      _
    // Predicated region
    $region22: #{tpu_custom_call.1} parent=1 // pred_check
      _
    $region23: #{tpu_custom_call.1} parent=1 // pred_check_branch
      %37 = sbr.rel (0) target = $region25
    $region24: #{tpu_custom_call.1} parent=1 // pred_region
      _
    $region25: #{tpu_custom_call.1} parent=1 // pred_fallthru
      _
    // Predicated region
    $region26: #{tpu_custom_call.1} parent=1 // pred_check
      _
    $region27: #{tpu_custom_call.1} parent=1 // pred_check_branch
      %39 = sbr.rel (0) target = $region29
    $region28: #{tpu_custom_call.1} parent=1 // pred_region
      _
    $region29: #{tpu_custom_call.1} parent=1 // pred_fallthru
      _
    // Predicated region
    $region30: #{tpu_custom_call.1} parent=1 // pred_check
      _
    $region31: #{tpu_custom_call.1} parent=1 // pred_check_branch
      %41 = sbr.rel (0) target = $region33
    $region32: #{tpu_custom_call.1} parent=1 // pred_region
      _
    $region33: #{tpu_custom_call.1} parent=1 // pred_fallthru
      _
    // Predicated region
    $region34: #{tpu_custom_call.1} parent=1 // pred_check
      _
    $region35: #{tpu_custom_call.1} parent=1 // pred_check_branch
      %43 = sbr.rel (0) target = $region37
    $region36: #{tpu_custom_call.1} parent=1 // pred_region
      _
    $region37: #{tpu_custom_call.1} parent=1 // pred_fallthru
      _
    // Predicated region
    $region38: #{tpu_custom_call.1} parent=1 // pred_check
      _
    $region39: #{tpu_custom_call.1} parent=1 // pred_check_branch
      %45 = sbr.rel (0) target = $region41
    $region40: #{tpu_custom_call.1} parent=1 // pred_region
      %46 = dma.done [#allocation3], 384
    $region41: #{tpu_custom_call.1} parent=1 // pred_fallthru
      _
    %v48 = vld [vmem:[%s0] sm:$0xff]
    %v49 = vld [vmem:[%s0 + $0x8] sm:$0xff]
    %v50 = vld [vmem:[%s0 + $0x10] sm:$0xff]
    %v51 = vld [vmem:[%s0 + $0x18] sm:$0xff]
    %v52 = vld [vmem:[%s0 + $0x20] sm:$0xff]
    %v53 = vld [vmem:[%s0 + $0x28] sm:$0xff]
    %v54 = vld [vmem:[%s0 + $0x30] sm:$0xff]
    %v55 = vld [vmem:[%s0 + $0x38] sm:$0xff]
    %v56 = vld [vmem:[%s0 + $0x40] sm:$0xff]
    %v57 = vld [vmem:[%s0 + $0x48] sm:$0xff]
    %v58 = vld [vmem:[%s0 + $0x50] sm:$0xff]
    %v59 = vld [vmem:[%s0 + $0x58] sm:$0xff]
    %v60 = vld [vmem:[%s0 + $0x60] sm:$0xff]
    %v61 = vld [vmem:[%s0 + $0x68] sm:$0xff]
    %v62 = vld [vmem:[%s0 + $0x70] sm:$0xff]
    %v63 = vld [vmem:[%s0 + $0x78] sm:$0xff]
    %v64 = vmul.f32 %v48, 0.1
    %v65 = vmul.f32 %v49, 0.1
    %v66 = vmul.f32 %v50, 0.1
    %v67 = vmul.f32 %v51, 0.1
    %v68 = vmul.f32 %v52, 0.1
    %v69 = vmul.f32 %v53, 0.1
    %v70 = vmul.f32 %v54, 0.1
    %v71 = vmul.f32 %v55, 0.1
    %v72 = vmul.f32 %v56, 0.1
    %v73 = vmul.f32 %v57, 0.1
    %v74 = vmul.f32 %v58, 0.1
    %v75 = vmul.f32 %v59, 0.1
    %v76 = vmul.f32 %v60, 0.1
    %v77 = vmul.f32 %v61, 0.1
    %v78 = vmul.f32 %v62, 0.1
    %v79 = vmul.f32 %v63, 0.1
    %96 = vrot.lane.b32.xlu0 %v64, 119
    %v97 = vpop.permute.xlu0 %96
    %98 = vrot.lane.b32.xlu0 %v65, 119
    %v99 = vpop.permute.xlu0 %98
    %100 = vrot.lane.b32.xlu0 %v66, 119
    %v101 = vpop.permute.xlu0 %100
    %102 = vrot.lane.b32.xlu0 %v67, 119
    %v103 = vpop.permute.xlu0 %102
    %104 = vrot.lane.b32.xlu0 %v68, 119
    %v105 = vpop.permute.xlu0 %104
    %106 = vrot.lane.b32.xlu0 %v69, 119
    %v107 = vpop.permute.xlu0 %106
    %108 = vrot.lane.b32.xlu0 %v70, 119
    %v109 = vpop.permute.xlu0 %108
    %110 = vrot.lane.b32.xlu0 %v71, 119
    %v111 = vpop.permute.xlu0 %110
    %112 = vrot.lane.b32.xlu0 %v72, 119
    %v113 = vpop.permute.xlu0 %112
    %114 = vrot.lane.b32.xlu0 %v73, 119
    %v115 = vpop.permute.xlu0 %114
    %116 = vrot.lane.b32.xlu0 %v74, 119
    %v117 = vpop.permute.xlu0 %116
    %118 = vrot.lane.b32.xlu0 %v75, 119
    %v119 = vpop.permute.xlu0 %118
    %120 = vrot.lane.b32.xlu0 %v76, 119
    %v121 = vpop.permute.xlu0 %120
    %122 = vrot.lane.b32.xlu0 %v77, 119
    %v123 = vpop.permute.xlu0 %122
    %124 = vrot.lane.b32.xlu0 %v78, 119
    %v125 = vpop.permute.xlu0 %124
    %126 = vrot.lane.b32.xlu0 %v79, 119
    %v127 = vpop.permute.xlu0 %126
    %144 = vrot.lane.b32.xlu0 %v64, 110
    %v145 = vpop.permute.xlu0 %144
    %146 = vrot.lane.b32.xlu0 %v65, 110
    %v147 = vpop.permute.xlu0 %146
    %148 = vrot.lane.b32.xlu0 %v66, 110
    %v149 = vpop.permute.xlu0 %148
    %150 = vrot.lane.b32.xlu0 %v67, 110
    %v151 = vpop.permute.xlu0 %150
    %152 = vrot.lane.b32.xlu0 %v68, 110
    %v153 = vpop.permute.xlu0 %152
    %154 = vrot.lane.b32.xlu0 %v69, 110
    %v155 = vpop.permute.xlu0 %154
    %156 = vrot.lane.b32.xlu0 %v70, 110
    %v157 = vpop.permute.xlu0 %156
    %158 = vrot.lane.b32.xlu0 %v71, 110
    %v159 = vpop.permute.xlu0 %158
    %160 = vrot.lane.b32.xlu0 %v72, 110
    %v161 = vpop.permute.xlu0 %160
    %162 = vrot.lane.b32.xlu0 %v73, 110
    %v163 = vpop.permute.xlu0 %162
    %164 = vrot.lane.b32.xlu0 %v74, 110
    %v165 = vpop.permute.xlu0 %164
    %166 = vrot.lane.b32.xlu0 %v75, 110
    %v167 = vpop.permute.xlu0 %166
    %168 = vrot.lane.b32.xlu0 %v76, 110
    %v169 = vpop.permute.xlu0 %168
    %170 = vrot.lane.b32.xlu0 %v77, 110
    %v171 = vpop.permute.xlu0 %170
    %172 = vrot.lane.b32.xlu0 %v78, 110
    %v173 = vpop.permute.xlu0 %172
    %174 = vrot.lane.b32.xlu0 %v79, 110
    %v175 = vpop.permute.xlu0 %174
    %192 = vrot.lane.b32.xlu0 %v64, 101
    %v193 = vpop.permute.xlu0 %192
    %194 = vrot.lane.b32.xlu0 %v65, 101
    %v195 = vpop.permute.xlu0 %194
    %196 = vrot.lane.b32.xlu0 %v66, 101
    %v197 = vpop.permute.xlu0 %196
    %198 = vrot.lane.b32.xlu0 %v67, 101
    %v199 = vpop.permute.xlu0 %198
    %200 = vrot.lane.b32.xlu0 %v68, 101
    %v201 = vpop.permute.xlu0 %200
    %202 = vrot.lane.b32.xlu0 %v69, 101
    %v203 = vpop.permute.xlu0 %202
    %204 = vrot.lane.b32.xlu0 %v70, 101
    %v205 = vpop.permute.xlu0 %204
    %206 = vrot.lane.b32.xlu0 %v71, 101
    %v207 = vpop.permute.xlu0 %206
    %208 = vrot.lane.b32.xlu0 %v72, 101
    %v209 = vpop.permute.xlu0 %208
    %210 = vrot.lane.b32.xlu0 %v73, 101
    %v211 = vpop.permute.xlu0 %210
    %212 = vrot.lane.b32.xlu0 %v74, 101
    %v213 = vpop.permute.xlu0 %212
    %214 = vrot.lane.b32.xlu0 %v75, 101
    %v215 = vpop.permute.xlu0 %214
    %216 = vrot.lane.b32.xlu0 %v76, 101
    %v217 = vpop.permute.xlu0 %216
    %218 = vrot.lane.b32.xlu0 %v77, 101
    %v219 = vpop.permute.xlu0 %218
    %220 = vrot.lane.b32.xlu0 %v78, 101
    %v221 = vpop.permute.xlu0 %220
    %222 = vrot.lane.b32.xlu0 %v79, 101
    %v223 = vpop.permute.xlu0 %222
    %240 = vrot.lane.b32.xlu0 %v64, 92
    %v241 = vpop.permute.xlu0 %240
    %242 = vrot.lane.b32.xlu0 %v65, 92
    %v243 = vpop.permute.xlu0 %242
    %244 = vrot.lane.b32.xlu0 %v66, 92
    %v245 = vpop.permute.xlu0 %244
    %246 = vrot.lane.b32.xlu0 %v67, 92
    %v247 = vpop.permute.xlu0 %246
    %248 = vrot.lane.b32.xlu0 %v68, 92
    %v249 = vpop.permute.xlu0 %248
    %250 = vrot.lane.b32.xlu0 %v69, 92
    %v251 = vpop.permute.xlu0 %250
    %252 = vrot.lane.b32.xlu0 %v70, 92
    %v253 = vpop.permute.xlu0 %252
    %254 = vrot.lane.b32.xlu0 %v71, 92
    %v255 = vpop.permute.xlu0 %254
    %256 = vrot.lane.b32.xlu0 %v72, 92
    %v257 = vpop.permute.xlu0 %256
    %258 = vrot.lane.b32.xlu0 %v73, 92
    %v259 = vpop.permute.xlu0 %258
    %260 = vrot.lane.b32.xlu0 %v74, 92
    %v261 = vpop.permute.xlu0 %260
    %262 = vrot.lane.b32.xlu0 %v75, 92
    %v263 = vpop.permute.xlu0 %262
    %264 = vrot.lane.b32.xlu0 %v76, 92
    %v265 = vpop.permute.xlu0 %264
    %266 = vrot.lane.b32.xlu0 %v77, 92
    %v267 = vpop.permute.xlu0 %266
    %268 = vrot.lane.b32.xlu0 %v78, 92
    %v269 = vpop.permute.xlu0 %268
    %270 = vrot.lane.b32.xlu0 %v79, 92
    %v271 = vpop.permute.xlu0 %270
    %288 = vrot.lane.b32.xlu0 %v64, 83
    %v289 = vpop.permute.xlu0 %288
    %290 = vrot.lane.b32.xlu0 %v65, 83
    %v291 = vpop.permute.xlu0 %290
    %292 = vrot.lane.b32.xlu0 %v66, 83
    %v293 = vpop.permute.xlu0 %292
    %294 = vrot.lane.b32.xlu0 %v67, 83
    %v295 = vpop.permute.xlu0 %294
    %296 = vrot.lane.b32.xlu0 %v68, 83
    %v297 = vpop.permute.xlu0 %296
    %298 = vrot.lane.b32.xlu0 %v69, 83
    %v299 = vpop.permute.xlu0 %298
    %300 = vrot.lane.b32.xlu0 %v70, 83
    %v301 = vpop.permute.xlu0 %300
    %302 = vrot.lane.b32.xlu0 %v71, 83
    %v303 = vpop.permute.xlu0 %302
    %304 = vrot.lane.b32.xlu0 %v72, 83
    %v305 = vpop.permute.xlu0 %304
    %306 = vrot.lane.b32.xlu0 %v73, 83
    %v307 = vpop.permute.xlu0 %306
    %308 = vrot.lane.b32.xlu0 %v74, 83
    %v309 = vpop.permute.xlu0 %308
    %310 = vrot.lane.b32.xlu0 %v75, 83
    %v311 = vpop.permute.xlu0 %310
    %312 = vrot.lane.b32.xlu0 %v76, 83
    %v313 = vpop.permute.xlu0 %312
    %314 = vrot.lane.b32.xlu0 %v77, 83
    %v315 = vpop.permute.xlu0 %314
    %316 = vrot.lane.b32.xlu0 %v78, 83
    %v317 = vpop.permute.xlu0 %316
    %318 = vrot.lane.b32.xlu0 %v79, 83
    %v319 = vpop.permute.xlu0 %318
    %v336 = vpack.c.bf16 %v65, %v64
    %v337 = vpack.c.bf16 %v67, %v66
    %v338 = vpack.c.bf16 %v69, %v68
    %v339 = vpack.c.bf16 %v71, %v70
    %v340 = vpack.c.bf16 %v73, %v72
    %v341 = vpack.c.bf16 %v75, %v74
    %v342 = vpack.c.bf16 %v77, %v76
    %v343 = vpack.c.bf16 %v79, %v78
    %v344 = vpack.c.bf16 %v99, %v97
    %v345 = vpack.c.bf16 %v103, %v101
    %v346 = vpack.c.bf16 %v107, %v105
    %v347 = vpack.c.bf16 %v111, %v109
    %v348 = vpack.c.bf16 %v115, %v113
    %v349 = vpack.c.bf16 %v119, %v117
    %v350 = vpack.c.bf16 %v123, %v121
    %v351 = vpack.c.bf16 %v127, %v125
    %v352 = vpack.c.bf16 %v147, %v145
    %v353 = vpack.c.bf16 %v151, %v149
    %v354 = vpack.c.bf16 %v155, %v153
    %v355 = vpack.c.bf16 %v159, %v157
    %v356 = vpack.c.bf16 %v163, %v161
    %v357 = vpack.c.bf16 %v167, %v165
    %v358 = vpack.c.bf16 %v171, %v169
    %v359 = vpack.c.bf16 %v175, %v173
    %v360 = vpack.c.bf16 %v195, %v193
    %v361 = vpack.c.bf16 %v199, %v197
    %v362 = vpack.c.bf16 %v203, %v201
    %v363 = vpack.c.bf16 %v207, %v205
    %v364 = vpack.c.bf16 %v211, %v209
    %v365 = vpack.c.bf16 %v215, %v213
    %v366 = vpack.c.bf16 %v219, %v217
    %v367 = vpack.c.bf16 %v223, %v221
    %v368 = vpack.c.bf16 %v243, %v241
    %v369 = vpack.c.bf16 %v247, %v245
    %v370 = vpack.c.bf16 %v251, %v249
    %v371 = vpack.c.bf16 %v255, %v253
    %v372 = vpack.c.bf16 %v259, %v257
    %v373 = vpack.c.bf16 %v263, %v261
    %v374 = vpack.c.bf16 %v267, %v265
    %v375 = vpack.c.bf16 %v271, %v269
    %v376 = vpack.c.bf16 %v291, %v289
    %v377 = vpack.c.bf16 %v295, %v293
    %v378 = vpack.c.bf16 %v299, %v297
    %v379 = vpack.c.bf16 %v303, %v301
    %v380 = vpack.c.bf16 %v307, %v305
    %v381 = vpack.c.bf16 %v311, %v309
    %v382 = vpack.c.bf16 %v315, %v313
    %v383 = vpack.c.bf16 %v319, %v317
    %v384 = vld [vmem:[#allocation2] sm:$0xff]
    %v385 = vld [vmem:[#allocation2 + $0x8] sm:$0xff]
    %v386 = vld [vmem:[#allocation2 + $0x10] sm:$0x11]
    %v387 = vld [vmem:[%s2] sm:$0x3]
    %v389 = vlaneseq
    %v390 = vshrl.u32 %v389, 7
    %v391 = vsub.s32 0, %v390
    %v392 = vrot.slane %v387, %v391
    %v393 = vlaneseq
    %v394 = vshrl.u32 %v393, 7
    %v395 = vsub.s32 1, %v394
    %v396 = vrot.slane %v387, %v395
    %v402 = vunpack.c.l.b16 %v384
    %v403 = vunpack.c.h.b16 %v384
    %v404 = vunpack.c.l.b16 %v385
    %v405 = vunpack.c.h.b16 %v385
    %v406 = vunpack.c.l.b16 %v386
    %v407 = vunpack.c.h.b16 %v386
    %v408 = vpack.c.b16 %v404, %v402
    %v409 = vpack.c.b16 %v405, %v403
    %v410 = vpack.c.b16 %v406, %v406
    %v411 = vpack.c.b16 %v407, %v407
    %vm414 = vcmask 146432
    %v416 = vsel %vm414, %v336, 0
    %v419 = vsel %vm414, %v337, 0
    %v422 = vsel %vm414, %v338, 0
    %v425 = vsel %vm414, %v339, 0
    %v428 = vsel %vm414, %v340, 0
    %v431 = vsel %vm414, %v341, 0
    %v434 = vsel %vm414, %v342, 0
    %v437 = vsel %vm414, %v343, 0
    %v440 = vsel %vm414, %v344, 0
    %v443 = vsel %vm414, %v345, 0
    %v446 = vsel %vm414, %v346, 0
    %v449 = vsel %vm414, %v347, 0
    %v452 = vsel %vm414, %v348, 0
    %v455 = vsel %vm414, %v349, 0
    %v458 = vsel %vm414, %v350, 0
    %v461 = vsel %vm414, %v351, 0
    %v464 = vsel %vm414, %v352, 0
    %v467 = vsel %vm414, %v353, 0
    %v470 = vsel %vm414, %v354, 0
    %v473 = vsel %vm414, %v355, 0
    %v476 = vsel %vm414, %v356, 0
    %v479 = vsel %vm414, %v357, 0
    %v482 = vsel %vm414, %v358, 0
    %v485 = vsel %vm414, %v359, 0
    %v488 = vsel %vm414, %v360, 0
    %v491 = vsel %vm414, %v361, 0
    %v494 = vsel %vm414, %v362, 0
    %v497 = vsel %vm414, %v363, 0
    %v500 = vsel %vm414, %v364, 0
    %v503 = vsel %vm414, %v365, 0
    %v506 = vsel %vm414, %v366, 0
    %v509 = vsel %vm414, %v367, 0
    %v512 = vsel %vm414, %v368, 0
    %v515 = vsel %vm414, %v369, 0
    %v518 = vsel %vm414, %v370, 0
    %v521 = vsel %vm414, %v371, 0
    %v524 = vsel %vm414, %v372, 0
    %v527 = vsel %vm414, %v373, 0
    %v530 = vsel %vm414, %v374, 0
    %v533 = vsel %vm414, %v375, 0
    %v536 = vsel %vm414, %v376, 0
    %v539 = vsel %vm414, %v377, 0
    %v542 = vsel %vm414, %v378, 0
    %v545 = vsel %vm414, %v379, 0
    %v548 = vsel %vm414, %v380, 0
    %v551 = vsel %vm414, %v381, 0
    %v554 = vsel %vm414, %v382, 0
    %v557 = vsel %vm414, %v383, 0
    %vm559 = vcmask 1040384
    %v561 = vsel %vm559, %v410, 0
    %v564 = vsel %vm559, %v411, 0
    %566 = vmatprep.subr.bf16.mxu0 %v409
    %567 = vmatpush1.bf16.msra.mxu0 %v408
    %568 = vmatprep.subr.bf16.mxu0 %v564
    %569 = vmatpush1.bf16.msra.mxu0 %v561
    %570 = vmatprep.subr.bf16.mxu0 0
    %571 = vmatpush1.bf16.msra.mxu0 0
    %572 = vmatprep.subr.bf16.mxu0 0
    %573 = vmatpush1.bf16.msra.mxu0 0
    %574 = vmatprep.subr.bf16.mxu0 0
    %575 = vmatpush1.bf16.msra.mxu0 0
    %576 = vmatprep.subr.bf16.mxu0 0
    %577 = vmatpush1.bf16.msra.mxu0 0
    %578 = vmatprep.subr.bf16.mxu0 0
    %579 = vmatpush1.bf16.msra.mxu0 0
    %580 = vmatprep.subr.bf16.mxu0 0
    %581 = vmatpush1.bf16.msra.mxu0 0
    %582 = vmatprep.subr.bf16.mxu0 0
    %583 = vmatpush1.bf16.msra.mxu0 0
    %584 = vmatprep.subr.bf16.mxu0 0
    %585 = vmatpush1.bf16.msra.mxu0 0
    %586 = vmatprep.subr.bf16.mxu0 0
    %587 = vmatpush1.bf16.msra.mxu0 0
    %588 = vmatprep.subr.bf16.mxu0 0
    %589 = vmatpush1.bf16.msra.mxu0 0
    %590 = vmatprep.subr.bf16.mxu0 0
    %591 = vmatpush1.bf16.msra.mxu0 0
    %592 = vmatprep.subr.bf16.mxu0 0
    %593 = vmatpush1.bf16.msra.mxu0 0
    %594 = vmatprep.subr.bf16.mxu0 0
    %595 = vmatpush1.bf16.msra.mxu0 0
    %596 = vmatprep.subr.bf16.mxu0 0
    %597 = vmatpush1.bf16.msra.mxu0 0
    %598 = vmatprep.mubr.bf16.mxu0 0
    %599 = vmatmul.mubr.bf16.gmra.mrb[0].mxu0 %v416
    %v600 = vpop.f32.mrb[0].mxu0
    %v601 = vadd.f32 %v392, %v600
    %v602 = vpop.f32.mrb[0].mxu0
    %v603 = vadd.f32 %v396, %v602
    %v604 = vpop.f32.mrb[0].mxu0
    %v605 = vadd.f32 %v392, %v604
    %v606 = vpop.f32.mrb[0].mxu0
    %v607 = vadd.f32 %v396, %v606
    %608 = vmatprep.mubr.bf16.mxu0 0
    %609 = vmatmul.mubr.bf16.gmra.mrb[0].mxu0 %v419
    %v610 = vpop.f32.mrb[0].mxu0
    %v611 = vadd.f32 %v392, %v610
    %v612 = vpop.f32.mrb[0].mxu0
    %v613 = vadd.f32 %v396, %v612
    %v614 = vpop.f32.mrb[0].mxu0
    %v615 = vadd.f32 %v392, %v614
    %v616 = vpop.f32.mrb[0].mxu0
    %v617 = vadd.f32 %v396, %v616
    %618 = vmatprep.mubr.bf16.mxu0 0
    %619 = vmatmul.mubr.bf16.gmra.mrb[0].mxu0 %v422
    %v620 = vpop.f32.mrb[0].mxu0
    %v621 = vadd.f32 %v392, %v620
    %v622 = vpop.f32.mrb[0].mxu0
    %v623 = vadd.f32 %v396, %v622
    %v624 = vpop.f32.mrb[0].mxu0
    %v625 = vadd.f32 %v392, %v624
    %v626 = vpop.f32.mrb[0].mxu0
    %v627 = vadd.f32 %v396, %v626
    %628 = vmatprep.mubr.bf16.mxu0 0
    %629 = vmatmul.mubr.bf16.gmra.mrb[0].mxu0 %v425
    %v630 = vpop.f32.mrb[0].mxu0
    %v631 = vadd.f32 %v392, %v630
    %v632 = vpop.f32.mrb[0].mxu0
    %v633 = vadd.f32 %v396, %v632
    %v634 = vpop.f32.mrb[0].mxu0
    %v635 = vadd.f32 %v392, %v634
    %v636 = vpop.f32.mrb[0].mxu0
    %v637 = vadd.f32 %v396, %v636
    %638 = vmatprep.mubr.bf16.mxu0 0
    %639 = vmatmul.mubr.bf16.gmra.mrb[0].mxu0 %v428
    %v640 = vpop.f32.mrb[0].mxu0
    %v641 = vadd.f32 %v392, %v640
    %v642 = vpop.f32.mrb[0].mxu0
    %v643 = vadd.f32 %v396, %v642
    %v644 = vpop.f32.mrb[0].mxu0
    %v645 = vadd.f32 %v392, %v644
    %v646 = vpop.f32.mrb[0].mxu0
    %v647 = vadd.f32 %v396, %v646
    %648 = vmatprep.mubr.bf16.mxu0 0
    %649 = vmatmul.mubr.bf16.gmra.mrb[0].mxu0 %v431
    %v650 = vpop.f32.mrb[0].mxu0
    %v651 = vadd.f32 %v392, %v650
    %v652 = vpop.f32.mrb[0].mxu0
    %v653 = vadd.f32 %v396, %v652
    %v654 = vpop.f32.mrb[0].mxu0
    %v655 = vadd.f32 %v392, %v654
    %v656 = vpop.f32.mrb[0].mxu0
    %v657 = vadd.f32 %v396, %v656
    %658 = vmatprep.mubr.bf16.mxu0 0
    %659 = vmatmul.mubr.bf16.gmra.mrb[0].mxu0 %v434
    %v660 = vpop.f32.mrb[0].mxu0
    %v661 = vadd.f32 %v392, %v660
    %v662 = vpop.f32.mrb[0].mxu0
    %v663 = vadd.f32 %v396, %v662
    %v664 = vpop.f32.mrb[0].mxu0
    %v665 = vadd.f32 %v392, %v664
    %v666 = vpop.f32.mrb[0].mxu0
    %v667 = vadd.f32 %v396, %v666
    %668 = vmatprep.mubr.bf16.mxu0 0
    %669 = vmatmul.mubr.bf16.gmra.mrb[0].mxu0 %v437
    %v670 = vpop.f32.mrb[0].mxu0
    %v671 = vadd.f32 %v392, %v670
    %v672 = vpop.f32.mrb[0].mxu0
    %v673 = vadd.f32 %v396, %v672
    %v674 = vpop.f32.mrb[0].mxu0
    %v675 = vadd.f32 %v392, %v674
    %v676 = vpop.f32.mrb[0].mxu0
    %v677 = vadd.f32 %v396, %v676
    %678 = vmatprep.mubr.bf16.mxu0 0
    %679 = vmatmul.mubr.bf16.gmra.mrb[0].mxu0 %v440
    %v680 = vpop.f32.mrb[0].mxu0
    %v681 = vadd.f32 %v392, %v680
    %v682 = vpop.f32.mrb[0].mxu0
    %v683 = vadd.f32 %v396, %v682
    %v684 = vpop.f32.mrb[0].mxu0
    %v685 = vadd.f32 %v392, %v684
    %v686 = vpop.f32.mrb[0].mxu0
    %v687 = vadd.f32 %v396, %v686
    %688 = vmatprep.mubr.bf16.mxu0 0
    %689 = vmatmul.mubr.bf16.gmra.mrb[0].mxu0 %v443
    %v690 = vpop.f32.mrb[0].mxu0
    %v691 = vadd.f32 %v392, %v690
    %v692 = vpop.f32.mrb[0].mxu0
    %v693 = vadd.f32 %v396, %v692
    %v694 = vpop.f32.mrb[0].mxu0
    %v695 = vadd.f32 %v392, %v694
    %v696 = vpop.f32.mrb[0].mxu0
    %v697 = vadd.f32 %v396, %v696
    %698 = vmatprep.mubr.bf16.mxu0 0
    %699 = vmatmul.mubr.bf16.gmra.mrb[0].mxu0 %v446
    %v700 = vpop.f32.mrb[0].mxu0
    %v701 = vadd.f32 %v392, %v700
    %v702 = vpop.f32.mrb[0].mxu0
    %v703 = vadd.f32 %v396, %v702
    %v704 = vpop.f32.mrb[0].mxu0
    %v705 = vadd.f32 %v392, %v704
    %v706 = vpop.f32.mrb[0].mxu0
    %v707 = vadd.f32 %v396, %v706
    %708 = vmatprep.mubr.bf16.mxu0 0
    %709 = vmatmul.mubr.bf16.gmra.mrb[0].mxu0 %v449
    %v710 = vpop.f32.mrb[0].mxu0
    %v711 = vadd.f32 %v392, %v710
    %v712 = vpop.f32.mrb[0].mxu0
    %v713 = vadd.f32 %v396, %v712
    %v714 = vpop.f32.mrb[0].mxu0
    %v715 = vadd.f32 %v392, %v714
    %v716 = vpop.f32.mrb[0].mxu0
    %v717 = vadd.f32 %v396, %v716
    %718 = vmatprep.mubr.bf16.mxu0 0
    %719 = vmatmul.mubr.bf16.gmra.mrb[0].mxu0 %v452
    %v720 = vpop.f32.mrb[0].mxu0
    %v721 = vadd.f32 %v392, %v720
    %v722 = vpop.f32.mrb[0].mxu0
    %v723 = vadd.f32 %v396, %v722
    %v724 = vpop.f32.mrb[0].mxu0
    %v725 = vadd.f32 %v392, %v724
    %v726 = vpop.f32.mrb[0].mxu0
    %v727 = vadd.f32 %v396, %v726
    %728 = vmatprep.mubr.bf16.mxu0 0
    %729 = vmatmul.mubr.bf16.gmra.mrb[0].mxu0 %v455
    %v730 = vpop.f32.mrb[0].mxu0
    %v731 = vadd.f32 %v392, %v730
    %v732 = vpop.f32.mrb[0].mxu0
    %v733 = vadd.f32 %v396, %v732
    %v734 = vpop.f32.mrb[0].mxu0
    %v735 = vadd.f32 %v392, %v734
    %v736 = vpop.f32.mrb[0].mxu0
    %v737 = vadd.f32 %v396, %v736
    %738 = vmatprep.mubr.bf16.mxu0 0
    %739 = vmatmul.mubr.bf16.gmra.mrb[0].mxu0 %v458
    %v740 = vpop.f32.mrb[0].mxu0
    %v741 = vadd.f32 %v392, %v740
    %v742 = vpop.f32.mrb[0].mxu0
    %v743 = vadd.f32 %v396, %v742
    %v744 = vpop.f32.mrb[0].mxu0
    %v745 = vadd.f32 %v392, %v744
    %v746 = vpop.f32.mrb[0].mxu0
    %v747 = vadd.f32 %v396, %v746
    %748 = vmatprep.mubr.bf16.mxu0 0
    %749 = vmatmul.mubr.bf16.gmra.mrb[0].mxu0 %v461
    %v750 = vpop.f32.mrb[0].mxu0
    %v751 = vadd.f32 %v392, %v750
    %v752 = vpop.f32.mrb[0].mxu0
    %v753 = vadd.f32 %v396, %v752
    %v754 = vpop.f32.mrb[0].mxu0
    %v755 = vadd.f32 %v392, %v754
    %v756 = vpop.f32.mrb[0].mxu0
    %v757 = vadd.f32 %v396, %v756
    %758 = vmatprep.mubr.bf16.mxu0 0
    %759 = vmatmul.mubr.bf16.gmra.mrb[0].mxu0 %v464
    %v760 = vpop.f32.mrb[0].mxu0
    %v761 = vadd.f32 %v392, %v760
    %v762 = vpop.f32.mrb[0].mxu0
    %v763 = vadd.f32 %v396, %v762
    %v764 = vpop.f32.mrb[0].mxu0
    %v765 = vadd.f32 %v392, %v764
    %v766 = vpop.f32.mrb[0].mxu0
    %v767 = vadd.f32 %v396, %v766
    %768 = vmatprep.mubr.bf16.mxu0 0
    %769 = vmatmul.mubr.bf16.gmra.mrb[0].mxu0 %v467
    %v770 = vpop.f32.mrb[0].mxu0
    %v771 = vadd.f32 %v392, %v770
    %v772 = vpop.f32.mrb[0].mxu0
    %v773 = vadd.f32 %v396, %v772
    %v774 = vpop.f32.mrb[0].mxu0
    %v775 = vadd.f32 %v392, %v774
    %v776 = vpop.f32.mrb[0].mxu0
    %v777 = vadd.f32 %v396, %v776
    %778 = vmatprep.mubr.bf16.mxu0 0
    %779 = vmatmul.mubr.bf16.gmra.mrb[0].mxu0 %v470
    %v780 = vpop.f32.mrb[0].mxu0
    %v781 = vadd.f32 %v392, %v780
    %v782 = vpop.f32.mrb[0].mxu0
    %v783 = vadd.f32 %v396, %v782
    %v784 = vpop.f32.mrb[0].mxu0
    %v785 = vadd.f32 %v392, %v784
    %v786 = vpop.f32.mrb[0].mxu0
    %v787 = vadd.f32 %v396, %v786
    %788 = vmatprep.mubr.bf16.mxu0 0
    %789 = vmatmul.mubr.bf16.gmra.mrb[0].mxu0 %v473
    %v790 = vpop.f32.mrb[0].mxu0
    %v791 = vadd.f32 %v392, %v790
    %v792 = vpop.f32.mrb[0].mxu0
    %v793 = vadd.f32 %v396, %v792
    %v794 = vpop.f32.mrb[0].mxu0
    %v795 = vadd.f32 %v392, %v794
    %v796 = vpop.f32.mrb[0].mxu0
    %v797 = vadd.f32 %v396, %v796
    %798 = vmatprep.mubr.bf16.mxu0 0
    %799 = vmatmul.mubr.bf16.gmra.mrb[0].mxu0 %v476
    %v800 = vpop.f32.mrb[0].mxu0
    %v801 = vadd.f32 %v392, %v800
    %v802 = vpop.f32.mrb[0].mxu0
    %v803 = vadd.f32 %v396, %v802
    %v804 = vpop.f32.mrb[0].mxu0
    %v805 = vadd.f32 %v392, %v804
    %v806 = vpop.f32.mrb[0].mxu0
    %v807 = vadd.f32 %v396, %v806
    %808 = vmatprep.mubr.bf16.mxu0 0
    %809 = vmatmul.mubr.bf16.gmra.mrb[0].mxu0 %v479
    %v810 = vpop.f32.mrb[0].mxu0
    %v811 = vadd.f32 %v392, %v810
    %v812 = vpop.f32.mrb[0].mxu0
    %v813 = vadd.f32 %v396, %v812
    %v814 = vpop.f32.mrb[0].mxu0
    %v815 = vadd.f32 %v392, %v814
    %v816 = vpop.f32.mrb[0].mxu0
    %v817 = vadd.f32 %v396, %v816
    %818 = vmatprep.mubr.bf16.mxu0 0
    %819 = vmatmul.mubr.bf16.gmra.mrb[0].mxu0 %v482
    %v820 = vpop.f32.mrb[0].mxu0
    %v821 = vadd.f32 %v392, %v820
    %v822 = vpop.f32.mrb[0].mxu0
    %v823 = vadd.f32 %v396, %v822
    %v824 = vpop.f32.mrb[0].mxu0
    %v825 = vadd.f32 %v392, %v824
    %v826 = vpop.f32.mrb[0].mxu0
    %v827 = vadd.f32 %v396, %v826
    %828 = vmatprep.mubr.bf16.mxu0 0
    %829 = vmatmul.mubr.bf16.gmra.mrb[0].mxu0 %v485
    %v830 = vpop.f32.mrb[0].mxu0
    %v831 = vadd.f32 %v392, %v830
    %v832 = vpop.f32.mrb[0].mxu0
    %v833 = vadd.f32 %v396, %v832
    %v834 = vpop.f32.mrb[0].mxu0
    %v835 = vadd.f32 %v392, %v834
    %v836 = vpop.f32.mrb[0].mxu0
    %v837 = vadd.f32 %v396, %v836
    %838 = vmatprep.mubr.bf16.mxu0 0
    %839 = vmatmul.mubr.bf16.gmra.mrb[0].mxu0 %v488
    %v840 = vpop.f32.mrb[0].mxu0
    %v841 = vadd.f32 %v392, %v840
    %v842 = vpop.f32.mrb[0].mxu0
    %v843 = vadd.f32 %v396, %v842
    %v844 = vpop.f32.mrb[0].mxu0
    %v845 = vadd.f32 %v392, %v844
    %v846 = vpop.f32.mrb[0].mxu0
    %v847 = vadd.f32 %v396, %v846
    %848 = vmatprep.mubr.bf16.mxu0 0
    %849 = vmatmul.mubr.bf16.gmra.mrb[0].mxu0 %v491
    %v850 = vpop.f32.mrb[0].mxu0
    %v851 = vadd.f32 %v392, %v850
    %v852 = vpop.f32.mrb[0].mxu0
    %v853 = vadd.f32 %v396, %v852
    %v854 = vpop.f32.mrb[0].mxu0
    %v855 = vadd.f32 %v392, %v854
    %v856 = vpop.f32.mrb[0].mxu0
    %v857 = vadd.f32 %v396, %v856
    %858 = vmatprep.mubr.bf16.mxu0 0
    %859 = vmatmul.mubr.bf16.gmra.mrb[0].mxu0 %v494
    %v860 = vpop.f32.mrb[0].mxu0
    %v861 = vadd.f32 %v392, %v860
    %v862 = vpop.f32.mrb[0].mxu0
    %v863 = vadd.f32 %v396, %v862
    %v864 = vpop.f32.mrb[0].mxu0
    %v865 = vadd.f32 %v392, %v864
    %v866 = vpop.f32.mrb[0].mxu0
    %v867 = vadd.f32 %v396, %v866
    %868 = vmatprep.mubr.bf16.mxu0 0
    %869 = vmatmul.mubr.bf16.gmra.mrb[0].mxu0 %v497
    %v870 = vpop.f32.mrb[0].mxu0
    %v871 = vadd.f32 %v392, %v870
    %v872 = vpop.f32.mrb[0].mxu0
    %v873 = vadd.f32 %v396, %v872
    %v874 = vpop.f32.mrb[0].mxu0
    %v875 = vadd.f32 %v392, %v874
    %v876 = vpop.f32.mrb[0].mxu0
    %v877 = vadd.f32 %v396, %v876
    %878 = vmatprep.mubr.bf16.mxu0 0
    %879 = vmatmul.mubr.bf16.gmra.mrb[0].mxu0 %v500
    %v880 = vpop.f32.mrb[0].mxu0
    %v881 = vadd.f32 %v392, %v880
    %v882 = vpop.f32.mrb[0].mxu0
    %v883 = vadd.f32 %v396, %v882
    %v884 = vpop.f32.mrb[0].mxu0
    %v885 = vadd.f32 %v392, %v884
    %v886 = vpop.f32.mrb[0].mxu0
    %v887 = vadd.f32 %v396, %v886
    %888 = vmatprep.mubr.bf16.mxu0 0
    %889 = vmatmul.mubr.bf16.gmra.mrb[0].mxu0 %v503
    %v890 = vpop.f32.mrb[0].mxu0
    %v891 = vadd.f32 %v392, %v890
    %v892 = vpop.f32.mrb[0].mxu0
    %v893 = vadd.f32 %v396, %v892
    %v894 = vpop.f32.mrb[0].mxu0
    %v895 = vadd.f32 %v392, %v894
    %v896 = vpop.f32.mrb[0].mxu0
    %v897 = vadd.f32 %v396, %v896
    %898 = vmatprep.mubr.bf16.mxu0 0
    %899 = vmatmul.mubr.bf16.gmra.mrb[0].mxu0 %v506
    %v900 = vpop.f32.mrb[0].mxu0
    %v901 = vadd.f32 %v392, %v900
    %v902 = vpop.f32.mrb[0].mxu0
    %v903 = vadd.f32 %v396, %v902
    %v904 = vpop.f32.mrb[0].mxu0
    %v905 = vadd.f32 %v392, %v904
    %v906 = vpop.f32.mrb[0].mxu0
    %v907 = vadd.f32 %v396, %v906
    %908 = vmatprep.mubr.bf16.mxu0 0
    %909 = vmatmul.mubr.bf16.gmra.mrb[0].mxu0 %v509
    %v910 = vpop.f32.mrb[0].mxu0
    %v911 = vadd.f32 %v392, %v910
    %v912 = vpop.f32.mrb[0].mxu0
    %v913 = vadd.f32 %v396, %v912
    %v914 = vpop.f32.mrb[0].mxu0
    %v915 = vadd.f32 %v392, %v914
    %v916 = vpop.f32.mrb[0].mxu0
    %v917 = vadd.f32 %v396, %v916
    %918 = vmatprep.mubr.bf16.mxu0 0
    %919 = vmatmul.mubr.bf16.gmra.mrb[0].mxu0 %v512
    %v920 = vpop.f32.mrb[0].mxu0
    %v921 = vadd.f32 %v392, %v920
    %v922 = vpop.f32.mrb[0].mxu0
    %v923 = vadd.f32 %v396, %v922
    %v924 = vpop.f32.mrb[0].mxu0
    %v925 = vadd.f32 %v392, %v924
    %v926 = vpop.f32.mrb[0].mxu0
    %v927 = vadd.f32 %v396, %v926
    %928 = vmatprep.mubr.bf16.mxu0 0
    %929 = vmatmul.mubr.bf16.gmra.mrb[0].mxu0 %v515
    %v930 = vpop.f32.mrb[0].mxu0
    %v931 = vadd.f32 %v392, %v930
    %v932 = vpop.f32.mrb[0].mxu0
    %v933 = vadd.f32 %v396, %v932
    %v934 = vpop.f32.mrb[0].mxu0
    %v935 = vadd.f32 %v392, %v934
    %v936 = vpop.f32.mrb[0].mxu0
    %v937 = vadd.f32 %v396, %v936
    %938 = vmatprep.mubr.bf16.mxu0 0
    %939 = vmatmul.mubr.bf16.gmra.mrb[0].mxu0 %v518
    %v940 = vpop.f32.mrb[0].mxu0
    %v941 = vadd.f32 %v392, %v940
    %v942 = vpop.f32.mrb[0].mxu0
    %v943 = vadd.f32 %v396, %v942
    %v944 = vpop.f32.mrb[0].mxu0
    %v945 = vadd.f32 %v392, %v944
    %v946 = vpop.f32.mrb[0].mxu0
    %v947 = vadd.f32 %v396, %v946
    %948 = vmatprep.mubr.bf16.mxu0 0
    %949 = vmatmul.mubr.bf16.gmra.mrb[0].mxu0 %v521
    %v950 = vpop.f32.mrb[0].mxu0
    %v951 = vadd.f32 %v392, %v950
    %v952 = vpop.f32.mrb[0].mxu0
    %v953 = vadd.f32 %v396, %v952
    %v954 = vpop.f32.mrb[0].mxu0
    %v955 = vadd.f32 %v392, %v954
    %v956 = vpop.f32.mrb[0].mxu0
    %v957 = vadd.f32 %v396, %v956
    %958 = vmatprep.mubr.bf16.mxu0 0
    %959 = vmatmul.mubr.bf16.gmra.mrb[0].mxu0 %v524
    %v960 = vpop.f32.mrb[0].mxu0
    %v961 = vadd.f32 %v392, %v960
    %v962 = vpop.f32.mrb[0].mxu0
    %v963 = vadd.f32 %v396, %v962
    %v964 = vpop.f32.mrb[0].mxu0
    %v965 = vadd.f32 %v392, %v964
    %v966 = vpop.f32.mrb[0].mxu0
    %v967 = vadd.f32 %v396, %v966
    %968 = vmatprep.mubr.bf16.mxu0 0
    %969 = vmatmul.mubr.bf16.gmra.mrb[0].mxu0 %v527
    %v970 = vpop.f32.mrb[0].mxu0
    %v971 = vadd.f32 %v392, %v970
    %v972 = vpop.f32.mrb[0].mxu0
    %v973 = vadd.f32 %v396, %v972
    %v974 = vpop.f32.mrb[0].mxu0
    %v975 = vadd.f32 %v392, %v974
    %v976 = vpop.f32.mrb[0].mxu0
    %v977 = vadd.f32 %v396, %v976
    %978 = vmatprep.mubr.bf16.mxu0 0
    %979 = vmatmul.mubr.bf16.gmra.mrb[0].mxu0 %v530
    %v980 = vpop.f32.mrb[0].mxu0
    %v981 = vadd.f32 %v392, %v980
    %v982 = vpop.f32.mrb[0].mxu0
    %v983 = vadd.f32 %v396, %v982
    %v984 = vpop.f32.mrb[0].mxu0
    %v985 = vadd.f32 %v392, %v984
    %v986 = vpop.f32.mrb[0].mxu0
    %v987 = vadd.f32 %v396, %v986
    %988 = vmatprep.mubr.bf16.mxu0 0
    %989 = vmatmul.mubr.bf16.gmra.mrb[0].mxu0 %v533
    %v990 = vpop.f32.mrb[0].mxu0
    %v991 = vadd.f32 %v392, %v990
    %v992 = vpop.f32.mrb[0].mxu0
    %v993 = vadd.f32 %v396, %v992
    %v994 = vpop.f32.mrb[0].mxu0
    %v995 = vadd.f32 %v392, %v994
    %v996 = vpop.f32.mrb[0].mxu0
    %v997 = vadd.f32 %v396, %v996
    %998 = vmatprep.mubr.bf16.mxu0 0
    %999 = vmatmul.mubr.bf16.gmra.mrb[0].mxu0 %v536
    %v1000 = vpop.f32.mrb[0].mxu0
    %v1001 = vadd.f32 %v392, %v1000
    %v1002 = vpop.f32.mrb[0].mxu0
    %v1003 = vadd.f32 %v396, %v1002
    %v1004 = vpop.f32.mrb[0].mxu0
    %v1005 = vadd.f32 %v392, %v1004
    %v1006 = vpop.f32.mrb[0].mxu0
    %v1007 = vadd.f32 %v396, %v1006
    %1008 = vmatprep.mubr.bf16.mxu0 0
    %1009 = vmatmul.mubr.bf16.gmra.mrb[0].mxu0 %v539
    %v1010 = vpop.f32.mrb[0].mxu0
    %v1011 = vadd.f32 %v392, %v1010
    %v1012 = vpop.f32.mrb[0].mxu0
    %v1013 = vadd.f32 %v396, %v1012
    %v1014 = vpop.f32.mrb[0].mxu0
    %v1015 = vadd.f32 %v392, %v1014
    %v1016 = vpop.f32.mrb[0].mxu0
    %v1017 = vadd.f32 %v396, %v1016
    %1018 = vmatprep.mubr.bf16.mxu0 0
    %1019 = vmatmul.mubr.bf16.gmra.mrb[0].mxu0 %v542
    %v1020 = vpop.f32.mrb[0].mxu0
    %v1021 = vadd.f32 %v392, %v1020
    %v1022 = vpop.f32.mrb[0].mxu0
    %v1023 = vadd.f32 %v396, %v1022
    %v1024 = vpop.f32.mrb[0].mxu0
    %v1025 = vadd.f32 %v392, %v1024
    %v1026 = vpop.f32.mrb[0].mxu0
    %v1027 = vadd.f32 %v396, %v1026
    %1028 = vmatprep.mubr.bf16.mxu0 0
    %1029 = vmatmul.mubr.bf16.gmra.mrb[0].mxu0 %v545
    %v1030 = vpop.f32.mrb[0].mxu0
    %v1031 = vadd.f32 %v392, %v1030
    %v1032 = vpop.f32.mrb[0].mxu0
    %v1033 = vadd.f32 %v396, %v1032
    %v1034 = vpop.f32.mrb[0].mxu0
    %v1035 = vadd.f32 %v392, %v1034
    %v1036 = vpop.f32.mrb[0].mxu0
    %v1037 = vadd.f32 %v396, %v1036
    %1038 = vmatprep.mubr.bf16.mxu0 0
    %1039 = vmatmul.mubr.bf16.gmra.mrb[0].mxu0 %v548
    %v1040 = vpop.f32.mrb[0].mxu0
    %v1041 = vadd.f32 %v392, %v1040
    %v1042 = vpop.f32.mrb[0].mxu0
    %v1043 = vadd.f32 %v396, %v1042
    %v1044 = vpop.f32.mrb[0].mxu0
    %v1045 = vadd.f32 %v392, %v1044
    %v1046 = vpop.f32.mrb[0].mxu0
    %v1047 = vadd.f32 %v396, %v1046
    %1048 = vmatprep.mubr.bf16.mxu0 0
    %1049 = vmatmul.mubr.bf16.gmra.mrb[0].mxu0 %v551
    %v1050 = vpop.f32.mrb[0].mxu0
    %v1051 = vadd.f32 %v392, %v1050
    %v1052 = vpop.f32.mrb[0].mxu0
    %v1053 = vadd.f32 %v396, %v1052
    %v1054 = vpop.f32.mrb[0].mxu0
    %v1055 = vadd.f32 %v392, %v1054
    %v1056 = vpop.f32.mrb[0].mxu0
    %v1057 = vadd.f32 %v396, %v1056
    %1058 = vmatprep.mubr.bf16.mxu0 0
    %1059 = vmatmul.mubr.bf16.gmra.mrb[0].mxu0 %v554
    %v1060 = vpop.f32.mrb[0].mxu0
    %v1061 = vadd.f32 %v392, %v1060
    %v1062 = vpop.f32.mrb[0].mxu0
    %v1063 = vadd.f32 %v396, %v1062
    %v1064 = vpop.f32.mrb[0].mxu0
    %v1065 = vadd.f32 %v392, %v1064
    %v1066 = vpop.f32.mrb[0].mxu0
    %v1067 = vadd.f32 %v396, %v1066
    %1068 = vmatprep.mubr.bf16.mxu0 0
    %1069 = vmatmul.mubr.bf16.gmra.mrb[0].mxu0 %v557
    %v1070 = vpop.f32.mrb[0].mxu0
    %v1071 = vadd.f32 %v392, %v1070
    %v1072 = vpop.f32.mrb[0].mxu0
    %v1073 = vadd.f32 %v396, %v1072
    %v1074 = vpop.f32.mrb[0].mxu0
    %v1075 = vadd.f32 %v392, %v1074
    %v1076 = vpop.f32.mrb[0].mxu0
    %v1077 = vadd.f32 %v396, %v1076
    %1078 = vdwg.mxu0
    %v1079 = vmax.f32 %v601, 0.0
    %v1080 = vmax.f32 %v603, 0.0
    %v1081 = vmax.f32 %v605, 0.0
    %v1082 = vmax.f32 %v607, 0.0
    %v1083 = vmax.f32 %v611, 0.0
    %v1084 = vmax.f32 %v613, 0.0
    %v1085 = vmax.f32 %v615, 0.0
    %v1086 = vmax.f32 %v617, 0.0
    %v1087 = vmax.f32 %v621, 0.0
    %v1088 = vmax.f32 %v623, 0.0
    %v1089 = vmax.f32 %v625, 0.0
    %v1090 = vmax.f32 %v627, 0.0
    %v1091 = vmax.f32 %v631, 0.0
    %v1092 = vmax.f32 %v633, 0.0
    %v1093 = vmax.f32 %v635, 0.0
    %v1094 = vmax.f32 %v637, 0.0
    %v1095 = vmax.f32 %v641, 0.0
    %v1096 = vmax.f32 %v643, 0.0
    %v1097 = vmax.f32 %v645, 0.0
    %v1098 = vmax.f32 %v647, 0.0
    %v1099 = vmax.f32 %v651, 0.0
    %v1100 = vmax.f32 %v653, 0.0
    %v1101 = vmax.f32 %v655, 0.0
    %v1102 = vmax.f32 %v657, 0.0
    %v1103 = vmax.f32 %v661, 0.0
    %v1104 = vmax.f32 %v663, 0.0
    %v1105 = vmax.f32 %v665, 0.0
    %v1106 = vmax.f32 %v667, 0.0
    %v1107 = vmax.f32 %v671, 0.0
    %v1108 = vmax.f32 %v673, 0.0
    %v1109 = vmax.f32 %v675, 0.0
    %v1110 = vmax.f32 %v677, 0.0
    %v1111 = vmax.f32 %v681, 0.0
    %v1112 = vmax.f32 %v683, 0.0
    %v1113 = vmax.f32 %v685, 0.0
    %v1114 = vmax.f32 %v687, 0.0
    %v1115 = vmax.f32 %v691, 0.0
    %v1116 = vmax.f32 %v693, 0.0
    %v1117 = vmax.f32 %v695, 0.0
    %v1118 = vmax.f32 %v697, 0.0
    %v1119 = vmax.f32 %v701, 0.0
    %v1120 = vmax.f32 %v703, 0.0
    %v1121 = vmax.f32 %v705, 0.0
    %v1122 = vmax.f32 %v707, 0.0
    %v1123 = vmax.f32 %v711, 0.0
    %v1124 = vmax.f32 %v713, 0.0
    %v1125 = vmax.f32 %v715, 0.0
    %v1126 = vmax.f32 %v717, 0.0
    %v1127 = vmax.f32 %v721, 0.0
    %v1128 = vmax.f32 %v723, 0.0
    %v1129 = vmax.f32 %v725, 0.0
    %v1130 = vmax.f32 %v727, 0.0
    %v1131 = vmax.f32 %v731, 0.0
    %v1132 = vmax.f32 %v733, 0.0
    %v1133 = vmax.f32 %v735, 0.0
    %v1134 = vmax.f32 %v737, 0.0
    %v1135 = vmax.f32 %v741, 0.0
    %v1136 = vmax.f32 %v743, 0.0
    %v1137 = vmax.f32 %v745, 0.0
    %v1138 = vmax.f32 %v747, 0.0
    %v1139 = vmax.f32 %v751, 0.0
    %v1140 = vmax.f32 %v753, 0.0
    %v1141 = vmax.f32 %v755, 0.0
    %v1142 = vmax.f32 %v757, 0.0
    %v1143 = vmax.f32 %v761, 0.0
    %v1144 = vmax.f32 %v763, 0.0
    %v1145 = vmax.f32 %v765, 0.0
    %v1146 = vmax.f32 %v767, 0.0
    %v1147 = vmax.f32 %v771, 0.0
    %v1148 = vmax.f32 %v773, 0.0
    %v1149 = vmax.f32 %v775, 0.0
    %v1150 = vmax.f32 %v777, 0.0
    %v1151 = vmax.f32 %v781, 0.0
    %v1152 = vmax.f32 %v783, 0.0
    %v1153 = vmax.f32 %v785, 0.0
    %v1154 = vmax.f32 %v787, 0.0
    %v1155 = vmax.f32 %v791, 0.0
    %v1156 = vmax.f32 %v793, 0.0
    %v1157 = vmax.f32 %v795, 0.0
    %v1158 = vmax.f32 %v797, 0.0
    %v1159 = vmax.f32 %v801, 0.0
    %v1160 = vmax.f32 %v803, 0.0
    %v1161 = vmax.f32 %v805, 0.0
    %v1162 = vmax.f32 %v807, 0.0
    %v1163 = vmax.f32 %v811, 0.0
    %v1164 = vmax.f32 %v813, 0.0
    %v1165 = vmax.f32 %v815, 0.0
    %v1166 = vmax.f32 %v817, 0.0
    %v1167 = vmax.f32 %v821, 0.0
    %v1168 = vmax.f32 %v823, 0.0
    %v1169 = vmax.f32 %v825, 0.0
    %v1170 = vmax.f32 %v827, 0.0
    %v1171 = vmax.f32 %v831, 0.0
    %v1172 = vmax.f32 %v833, 0.0
    %v1173 = vmax.f32 %v835, 0.0
    %v1174 = vmax.f32 %v837, 0.0
    %v1175 = vmax.f32 %v841, 0.0
    %v1176 = vmax.f32 %v843, 0.0
    %v1177 = vmax.f32 %v845, 0.0
    %v1178 = vmax.f32 %v847, 0.0
    %v1179 = vmax.f32 %v851, 0.0
    %v1180 = vmax.f32 %v853, 0.0
    %v1181 = vmax.f32 %v855, 0.0
    %v1182 = vmax.f32 %v857, 0.0
    %v1183 = vmax.f32 %v861, 0.0
    %v1184 = vmax.f32 %v863, 0.0
    %v1185 = vmax.f32 %v865, 0.0
    %v1186 = vmax.f32 %v867, 0.0
    %v1187 = vmax.f32 %v871, 0.0
    %v1188 = vmax.f32 %v873, 0.0
    %v1189 = vmax.f32 %v875, 0.0
    %v1190 = vmax.f32 %v877, 0.0
    %v1191 = vmax.f32 %v881, 0.0
    %v1192 = vmax.f32 %v883, 0.0
    %v1193 = vmax.f32 %v885, 0.0
    %v1194 = vmax.f32 %v887, 0.0
    %v1195 = vmax.f32 %v891, 0.0
    %v1196 = vmax.f32 %v893, 0.0
    %v1197 = vmax.f32 %v895, 0.0
    %v1198 = vmax.f32 %v897, 0.0
    %v1199 = vmax.f32 %v901, 0.0
    %v1200 = vmax.f32 %v903, 0.0
    %v1201 = vmax.f32 %v905, 0.0
    %v1202 = vmax.f32 %v907, 0.0
    %v1203 = vmax.f32 %v911, 0.0
    %v1204 = vmax.f32 %v913, 0.0
    %v1205 = vmax.f32 %v915, 0.0
    %v1206 = vmax.f32 %v917, 0.0
    %v1207 = vmax.f32 %v921, 0.0
    %v1208 = vmax.f32 %v923, 0.0
    %v1209 = vmax.f32 %v925, 0.0
    %v1210 = vmax.f32 %v927, 0.0
    %v1211 = vmax.f32 %v931, 0.0
    %v1212 = vmax.f32 %v933, 0.0
    %v1213 = vmax.f32 %v935, 0.0
    %v1214 = vmax.f32 %v937, 0.0
    %v1215 = vmax.f32 %v941, 0.0
    %v1216 = vmax.f32 %v943, 0.0
    %v1217 = vmax.f32 %v945, 0.0
    %v1218 = vmax.f32 %v947, 0.0
    %v1219 = vmax.f32 %v951, 0.0
    %v1220 = vmax.f32 %v953, 0.0
    %v1221 = vmax.f32 %v955, 0.0
    %v1222 = vmax.f32 %v957, 0.0
    %v1223 = vmax.f32 %v961, 0.0
    %v1224 = vmax.f32 %v963, 0.0
    %v1225 = vmax.f32 %v965, 0.0
    %v1226 = vmax.f32 %v967, 0.0
    %v1227 = vmax.f32 %v971, 0.0
    %v1228 = vmax.f32 %v973, 0.0
    %v1229 = vmax.f32 %v975, 0.0
    %v1230 = vmax.f32 %v977, 0.0
    %v1231 = vmax.f32 %v981, 0.0
    %v1232 = vmax.f32 %v983, 0.0
    %v1233 = vmax.f32 %v985, 0.0
    %v1234 = vmax.f32 %v987, 0.0
    %v1235 = vmax.f32 %v991, 0.0
    %v1236 = vmax.f32 %v993, 0.0
    %v1237 = vmax.f32 %v995, 0.0
    %v1238 = vmax.f32 %v997, 0.0
    %v1239 = vmax.f32 %v1001, 0.0
    %v1240 = vmax.f32 %v1003, 0.0
    %v1241 = vmax.f32 %v1005, 0.0
    %v1242 = vmax.f32 %v1007, 0.0
    %v1243 = vmax.f32 %v1011, 0.0
    %v1244 = vmax.f32 %v1013, 0.0
    %v1245 = vmax.f32 %v1015, 0.0
    %v1246 = vmax.f32 %v1017, 0.0
    %v1247 = vmax.f32 %v1021, 0.0
    %v1248 = vmax.f32 %v1023, 0.0
    %v1249 = vmax.f32 %v1025, 0.0
    %v1250 = vmax.f32 %v1027, 0.0
    %v1251 = vmax.f32 %v1031, 0.0
    %v1252 = vmax.f32 %v1033, 0.0
    %v1253 = vmax.f32 %v1035, 0.0
    %v1254 = vmax.f32 %v1037, 0.0
    %v1255 = vmax.f32 %v1041, 0.0
    %v1256 = vmax.f32 %v1043, 0.0
    %v1257 = vmax.f32 %v1045, 0.0
    %v1258 = vmax.f32 %v1047, 0.0
    %v1259 = vmax.f32 %v1051, 0.0
    %v1260 = vmax.f32 %v1053, 0.0
    %v1261 = vmax.f32 %v1055, 0.0
    %v1262 = vmax.f32 %v1057, 0.0
    %v1263 = vmax.f32 %v1061, 0.0
    %v1264 = vmax.f32 %v1063, 0.0
    %v1265 = vmax.f32 %v1065, 0.0
    %v1266 = vmax.f32 %v1067, 0.0
    %v1267 = vmax.f32 %v1071, 0.0
    %v1268 = vmax.f32 %v1073, 0.0
    %v1269 = vmax.f32 %v1075, 0.0
    %v1270 = vmax.f32 %v1077, 0.0
    %v1271 = vpack.c.bf16 %v1081, %v1079
    %v1272 = vpack.c.bf16 %v1082, %v1080
    %v1273 = vpack.c.bf16 %v1085, %v1083
    %v1274 = vpack.c.bf16 %v1086, %v1084
    %v1275 = vpack.c.bf16 %v1089, %v1087
    %v1276 = vpack.c.bf16 %v1090, %v1088
    %v1277 = vpack.c.bf16 %v1093, %v1091
    %v1278 = vpack.c.bf16 %v1094, %v1092
    %v1279 = vpack.c.bf16 %v1097, %v1095
    %v1280 = vpack.c.bf16 %v1098, %v1096
    %v1281 = vpack.c.bf16 %v1101, %v1099
    %v1282 = vpack.c.bf16 %v1102, %v1100
    %v1283 = vpack.c.bf16 %v1105, %v1103
    %v1284 = vpack.c.bf16 %v1106, %v1104
    %v1285 = vpack.c.bf16 %v1109, %v1107
    %v1286 = vpack.c.bf16 %v1110, %v1108
    %v1287 = vpack.c.bf16 %v1113, %v1111
    %v1288 = vpack.c.bf16 %v1114, %v1112
    %v1289 = vpack.c.bf16 %v1117, %v1115
    %v1290 = vpack.c.bf16 %v1118, %v1116
    %v1291 = vpack.c.bf16 %v1121, %v1119
    %v1292 = vpack.c.bf16 %v1122, %v1120
    %v1293 = vpack.c.bf16 %v1125, %v1123
    %v1294 = vpack.c.bf16 %v1126, %v1124
    %v1295 = vpack.c.bf16 %v1129, %v1127
    %v1296 = vpack.c.bf16 %v1130, %v1128
    %v1297 = vpack.c.bf16 %v1133, %v1131
    %v1298 = vpack.c.bf16 %v1134, %v1132
    %v1299 = vpack.c.bf16 %v1137, %v1135
    %v1300 = vpack.c.bf16 %v1138, %v1136
    %v1301 = vpack.c.bf16 %v1141, %v1139
    %v1302 = vpack.c.bf16 %v1142, %v1140
    %v1303 = vpack.c.bf16 %v1145, %v1143
    %v1304 = vpack.c.bf16 %v1146, %v1144
    %v1305 = vpack.c.bf16 %v1149, %v1147
    %v1306 = vpack.c.bf16 %v1150, %v1148
    %v1307 = vpack.c.bf16 %v1153, %v1151
    %v1308 = vpack.c.bf16 %v1154, %v1152
    %v1309 = vpack.c.bf16 %v1157, %v1155
    %v1310 = vpack.c.bf16 %v1158, %v1156
    %v1311 = vpack.c.bf16 %v1161, %v1159
    %v1312 = vpack.c.bf16 %v1162, %v1160
    %v1313 = vpack.c.bf16 %v1165, %v1163
    %v1314 = vpack.c.bf16 %v1166, %v1164
    %v1315 = vpack.c.bf16 %v1169, %v1167
    %v1316 = vpack.c.bf16 %v1170, %v1168
    %v1317 = vpack.c.bf16 %v1173, %v1171
    %v1318 = vpack.c.bf16 %v1174, %v1172
    %v1319 = vpack.c.bf16 %v1177, %v1175
    %v1320 = vpack.c.bf16 %v1178, %v1176
    %v1321 = vpack.c.bf16 %v1181, %v1179
    %v1322 = vpack.c.bf16 %v1182, %v1180
    %v1323 = vpack.c.bf16 %v1185, %v1183
    %v1324 = vpack.c.bf16 %v1186, %v1184
    %v1325 = vpack.c.bf16 %v1189, %v1187
    %v1326 = vpack.c.bf16 %v1190, %v1188
    %v1327 = vpack.c.bf16 %v1193, %v1191
    %v1328 = vpack.c.bf16 %v1194, %v1192
    %v1329 = vpack.c.bf16 %v1197, %v1195
    %v1330 = vpack.c.bf16 %v1198, %v1196
    %v1331 = vpack.c.bf16 %v1201, %v1199
    %v1332 = vpack.c.bf16 %v1202, %v1200
    %v1333 = vpack.c.bf16 %v1205, %v1203
    %v1334 = vpack.c.bf16 %v1206, %v1204
    %v1335 = vpack.c.bf16 %v1209, %v1207
    %v1336 = vpack.c.bf16 %v1210, %v1208
    %v1337 = vpack.c.bf16 %v1213, %v1211
    %v1338 = vpack.c.bf16 %v1214, %v1212
    %v1339 = vpack.c.bf16 %v1217, %v1215
    %v1340 = vpack.c.bf16 %v1218, %v1216
    %v1341 = vpack.c.bf16 %v1221, %v1219
    %v1342 = vpack.c.bf16 %v1222, %v1220
    %v1343 = vpack.c.bf16 %v1225, %v1223
    %v1344 = vpack.c.bf16 %v1226, %v1224
    %v1345 = vpack.c.bf16 %v1229, %v1227
    %v1346 = vpack.c.bf16 %v1230, %v1228
    %v1347 = vpack.c.bf16 %v1233, %v1231
    %v1348 = vpack.c.bf16 %v1234, %v1232
    %v1349 = vpack.c.bf16 %v1237, %v1235
    %v1350 = vpack.c.bf16 %v1238, %v1236
    %v1351 = vpack.c.bf16 %v1241, %v1239
    %v1352 = vpack.c.bf16 %v1242, %v1240
    %v1353 = vpack.c.bf16 %v1245, %v1243
    %v1354 = vpack.c.bf16 %v1246, %v1244
    %v1355 = vpack.c.bf16 %v1249, %v1247
    %v1356 = vpack.c.bf16 %v1250, %v1248
    %v1357 = vpack.c.bf16 %v1253, %v1251
    %v1358 = vpack.c.bf16 %v1254, %v1252
    %v1359 = vpack.c.bf16 %v1257, %v1255
    %v1360 = vpack.c.bf16 %v1258, %v1256
    %v1361 = vpack.c.bf16 %v1261, %v1259
    %v1362 = vpack.c.bf16 %v1262, %v1260
    %v1363 = vpack.c.bf16 %v1265, %v1263
    %v1364 = vpack.c.bf16 %v1266, %v1264
    %v1365 = vpack.c.bf16 %v1269, %v1267
    %v1366 = vpack.c.bf16 %v1270, %v1268
    %v1367 = vld [vmem:[%s3] sm:$0xff]
    %v1368 = vld [vmem:[%s3 + $0x8] sm:$0xff]
    %v1369 = vld [vmem:[%s3 + $0x10] sm:$0xff]
    %v1370 = vld [vmem:[%s3 + $0x18] sm:$0xff]
    %v1371 = vld [vmem:[%s3 + $0x20] sm:$0xff]
    %v1372 = vld [vmem:[%s3 + $0x28] sm:$0xff]
    %v1373 = vld [vmem:[%s3 + $0x30] sm:$0xff]
    %v1374 = vld [vmem:[%s3 + $0x38] sm:$0xff]
    %v1375 = vld [vmem:[%s3 + $0x40] sm:$0xff]
    %v1376 = vld [vmem:[%s3 + $0x48] sm:$0xff]
    %v1377 = vld [vmem:[%s3 + $0x50] sm:$0xff]
    %v1378 = vld [vmem:[%s3 + $0x58] sm:$0xff]
    %v1379 = vld [vmem:[%s3 + $0x60] sm:$0xff]
    %v1380 = vld [vmem:[%s3 + $0x68] sm:$0xff]
    %v1381 = vld [vmem:[%s3 + $0x70] sm:$0xff]
    %v1382 = vld [vmem:[%s3 + $0x78] sm:$0xff]
    %v1383 = vld [vmem:[%s3 + $0x80] sm:$0xff]
    %v1384 = vld [vmem:[%s3 + $0x88] sm:$0xff]
    %v1385 = vld [vmem:[%s3 + $0x90] sm:$0xff]
    %v1386 = vld [vmem:[%s3 + $0x98] sm:$0xff]
    %v1387 = vld [vmem:[%s3 + $0xa0] sm:$0xff]
    %v1388 = vld [vmem:[%s3 + $0xa8] sm:$0xff]
    %v1389 = vld [vmem:[%s3 + $0xb0] sm:$0xff]
    %v1390 = vld [vmem:[%s3 + $0xb8] sm:$0xff]
    %v1391 = vld [vmem:[%s3 + $0xc0] sm:$0xff]
    %v1392 = vld [vmem:[%s3 + $0xc8] sm:$0xff]
    %v1393 = vld [vmem:[%s3 + $0xd0] sm:$0xff]
    %v1394 = vld [vmem:[%s3 + $0xd8] sm:$0xff]
    %v1395 = vld [vmem:[%s3 + $0xe0] sm:$0xff]
    %v1396 = vld [vmem:[%s3 + $0xe8] sm:$0xff]
    %v1397 = vld [vmem:[%s3 + $0xf0] sm:$0xff]
    %v1398 = vld [vmem:[%s3 + $0xf8] sm:$0xff]
    %v1399 = vld [vmem:[%s3 + $0x100] sm:$0xff]
    %v1400 = vld [vmem:[%s3 + $0x108] sm:$0xff]
    %v1401 = vld [vmem:[%s3 + $0x110] sm:$0xff]
    %v1402 = vld [vmem:[%s3 + $0x118] sm:$0xff]
    %v1403 = vld [vmem:[%s3 + $0x120] sm:$0xff]
    %v1404 = vld [vmem:[%s3 + $0x128] sm:$0xff]
    %v1405 = vld [vmem:[%s3 + $0x130] sm:$0xff]
    %v1406 = vld [vmem:[%s3 + $0x138] sm:$0xff]
    %v1407 = vld [vmem:[%s3 + $0x140] sm:$0xff]
    %v1408 = vld [vmem:[%s3 + $0x148] sm:$0xff]
    %v1409 = vld [vmem:[%s3 + $0x150] sm:$0xff]
    %v1410 = vld [vmem:[%s3 + $0x158] sm:$0xff]
    %v1411 = vld [vmem:[%s3 + $0x160] sm:$0xff]
    %v1412 = vld [vmem:[%s3 + $0x168] sm:$0xff]
    %v1413 = vld [vmem:[%s3 + $0x170] sm:$0xff]
    %v1414 = vld [vmem:[%s3 + $0x178] sm:$0xff]
    %v1415 = vld [vmem:[%s3 + $0x180] sm:$0xff]
    %v1416 = vld [vmem:[%s3 + $0x188] sm:$0xff]
    %v1417 = vld [vmem:[%s3 + $0x190] sm:$0xff]
    %v1418 = vld [vmem:[%s3 + $0x198] sm:$0xff]
    %v1419 = vld [vmem:[%s3 + $0x1a0] sm:$0xff]
    %v1420 = vld [vmem:[%s3 + $0x1a8] sm:$0xff]
    %v1421 = vld [vmem:[%s3 + $0x1b0] sm:$0xff]
    %v1422 = vld [vmem:[%s3 + $0x1b8] sm:$0xff]
    %v1423 = vld [vmem:[%s3 + $0x1c0] sm:$0xff]
    %v1424 = vld [vmem:[%s3 + $0x1c8] sm:$0xff]
    %v1425 = vld [vmem:[%s3 + $0x1d0] sm:$0xff]
    %v1426 = vld [vmem:[%s3 + $0x1d8] sm:$0xff]
    %v1427 = vld [vmem:[%s3 + $0x1e0] sm:$0xff]
    %v1428 = vld [vmem:[%s3 + $0x1e8] sm:$0xff]
    %v1429 = vld [vmem:[%s3 + $0x1f0] sm:$0xff]
    %v1430 = vld [vmem:[%s3 + $0x1f8] sm:$0xff]
    %s1431 = scalar_lea.vmem %s3, 512
    %v1432 = vld [vmem:[%s1431] sm:$0xff]
    %v1433 = vld [vmem:[%s1431 + $0x8] sm:$0xff]
    %v1434 = vld [vmem:[%s1431 + $0x10] sm:$0xff]
    %v1435 = vld [vmem:[%s1431 + $0x18] sm:$0xff]
    %v1436 = vld [vmem:[%s1431 + $0x20] sm:$0xff]
    %v1437 = vld [vmem:[%s1431 + $0x28] sm:$0xff]
    %v1438 = vld [vmem:[%s1431 + $0x30] sm:$0xff]
    %v1439 = vld [vmem:[%s1431 + $0x38] sm:$0xff]
    %v1440 = vld [vmem:[%s1431 + $0x40] sm:$0xff]
    %v1441 = vld [vmem:[%s1431 + $0x48] sm:$0xff]
    %v1442 = vld [vmem:[%s1431 + $0x50] sm:$0xff]
    %v1443 = vld [vmem:[%s1431 + $0x58] sm:$0xff]
    %v1444 = vld [vmem:[%s1431 + $0x60] sm:$0xff]
    %v1445 = vld [vmem:[%s1431 + $0x68] sm:$0xff]
    %v1446 = vld [vmem:[%s1431 + $0x70] sm:$0xff]
    %v1447 = vld [vmem:[%s1431 + $0x78] sm:$0xff]
    %v1448 = vld [vmem:[%s1431 + $0x80] sm:$0xff]
    %v1449 = vld [vmem:[%s1431 + $0x88] sm:$0xff]
    %v1450 = vld [vmem:[%s1431 + $0x90] sm:$0xff]
    %v1451 = vld [vmem:[%s1431 + $0x98] sm:$0xff]
    %v1452 = vld [vmem:[%s1431 + $0xa0] sm:$0xff]
    %v1453 = vld [vmem:[%s1431 + $0xa8] sm:$0xff]
    %v1454 = vld [vmem:[%s1431 + $0xb0] sm:$0xff]
    %v1455 = vld [vmem:[%s1431 + $0xb8] sm:$0xff]
    %v1456 = vld [vmem:[%s1431 + $0xc0] sm:$0xff]
    %v1457 = vld [vmem:[%s1431 + $0xc8] sm:$0xff]
    %v1458 = vld [vmem:[%s1431 + $0xd0] sm:$0xff]
    %v1459 = vld [vmem:[%s1431 + $0xd8] sm:$0xff]
    %v1460 = vld [vmem:[%s1431 + $0xe0] sm:$0xff]
    %v1461 = vld [vmem:[%s1431 + $0xe8] sm:$0xff]
    %v1462 = vld [vmem:[%s1431 + $0xf0] sm:$0xff]
    %v1463 = vld [vmem:[%s1431 + $0xf8] sm:$0xff]
    %v1464 = vld [vmem:[%s1431 + $0x100] sm:$0xff]
    %v1465 = vld [vmem:[%s1431 + $0x108] sm:$0xff]
    %v1466 = vld [vmem:[%s1431 + $0x110] sm:$0xff]
    %v1467 = vld [vmem:[%s1431 + $0x118] sm:$0xff]
    %v1468 = vld [vmem:[%s1431 + $0x120] sm:$0xff]
    %v1469 = vld [vmem:[%s1431 + $0x128] sm:$0xff]
    %v1470 = vld [vmem:[%s1431 + $0x130] sm:$0xff]
    %v1471 = vld [vmem:[%s1431 + $0x138] sm:$0xff]
    %v1472 = vld [vmem:[%s1431 + $0x140] sm:$0xff]
    %v1473 = vld [vmem:[%s1431 + $0x148] sm:$0xff]
    %v1474 = vld [vmem:[%s1431 + $0x150] sm:$0xff]
    %v1475 = vld [vmem:[%s1431 + $0x158] sm:$0xff]
    %v1476 = vld [vmem:[%s1431 + $0x160] sm:$0xff]
    %v1477 = vld [vmem:[%s1431 + $0x168] sm:$0xff]
    %v1478 = vld [vmem:[%s1431 + $0x170] sm:$0xff]
    %v1479 = vld [vmem:[%s1431 + $0x178] sm:$0xff]
    %v1480 = vld [vmem:[%s1431 + $0x180] sm:$0xff]
    %v1481 = vld [vmem:[%s1431 + $0x188] sm:$0xff]
    %v1482 = vld [vmem:[%s1431 + $0x190] sm:$0xff]
    %v1483 = vld [vmem:[%s1431 + $0x198] sm:$0xff]
    %v1484 = vld [vmem:[%s1431 + $0x1a0] sm:$0xff]
    %v1485 = vld [vmem:[%s1431 + $0x1a8] sm:$0xff]
    %v1486 = vld [vmem:[%s1431 + $0x1b0] sm:$0xff]
    %v1487 = vld [vmem:[%s1431 + $0x1b8] sm:$0xff]
    %v1488 = vld [vmem:[%s1431 + $0x1c0] sm:$0xff]
    %v1489 = vld [vmem:[%s1431 + $0x1c8] sm:$0xff]
    %v1490 = vld [vmem:[%s1431 + $0x1d0] sm:$0xff]
    %v1491 = vld [vmem:[%s1431 + $0x1d8] sm:$0xff]
    %v1492 = vld [vmem:[%s1431 + $0x1e0] sm:$0xff]
    %v1493 = vld [vmem:[%s1431 + $0x1e8] sm:$0xff]
    %v1494 = vld [vmem:[%s1431 + $0x1f0] sm:$0xff]
    %v1495 = vld [vmem:[%s1431 + $0x1f8] sm:$0xff]
    %v1560 = vunpack.c.l.b16 %v1432
    %v1561 = vunpack.c.h.b16 %v1432
    %v1562 = vunpack.c.l.b16 %v1433
    %v1563 = vunpack.c.h.b16 %v1433
    %v1564 = vunpack.c.l.b16 %v1434
    %v1565 = vunpack.c.h.b16 %v1434
    %v1566 = vunpack.c.l.b16 %v1435
    %v1567 = vunpack.c.h.b16 %v1435
    %v1568 = vunpack.c.l.b16 %v1436
    %v1569 = vunpack.c.h.b16 %v1436
    %v1570 = vunpack.c.l.b16 %v1437
    %v1571 = vunpack.c.h.b16 %v1437
    %v1572 = vunpack.c.l.b16 %v1438
    %v1573 = vunpack.c.h.b16 %v1438
    %v1574 = vunpack.c.l.b16 %v1439
    %v1575 = vunpack.c.h.b16 %v1439
    %v1576 = vunpack.c.l.b16 %v1440
    %v1577 = vunpack.c.h.b16 %v1440
    %v1578 = vunpack.c.l.b16 %v1441
    %v1579 = vunpack.c.h.b16 %v1441
    %v1580 = vunpack.c.l.b16 %v1442
    %v1581 = vunpack.c.h.b16 %v1442
    %v1582 = vunpack.c.l.b16 %v1443
    %v1583 = vunpack.c.h.b16 %v1443
    %v1584 = vunpack.c.l.b16 %v1444
    %v1585 = vunpack.c.h.b16 %v1444
    %v1586 = vunpack.c.l.b16 %v1445
    %v1587 = vunpack.c.h.b16 %v1445
    %v1588 = vunpack.c.l.b16 %v1446
    %v1589 = vunpack.c.h.b16 %v1446
    %v1590 = vunpack.c.l.b16 %v1447
    %v1591 = vunpack.c.h.b16 %v1447
    %v1592 = vunpack.c.l.b16 %v1448
    %v1593 = vunpack.c.h.b16 %v1448
    %v1594 = vunpack.c.l.b16 %v1449
    %v1595 = vunpack.c.h.b16 %v1449
    %v1596 = vunpack.c.l.b16 %v1450
    %v1597 = vunpack.c.h.b16 %v1450
    %v1598 = vunpack.c.l.b16 %v1451
    %v1599 = vunpack.c.h.b16 %v1451
    %v1600 = vunpack.c.l.b16 %v1452
    %v1601 = vunpack.c.h.b16 %v1452
    %v1602 = vunpack.c.l.b16 %v1453
    %v1603 = vunpack.c.h.b16 %v1453
    %v1604 = vunpack.c.l.b16 %v1454
    %v1605 = vunpack.c.h.b16 %v1454
    %v1606 = vunpack.c.l.b16 %v1455
    %v1607 = vunpack.c.h.b16 %v1455
    %v1608 = vunpack.c.l.b16 %v1456
    %v1609 = vunpack.c.h.b16 %v1456
    %v1610 = vunpack.c.l.b16 %v1457
    %v1611 = vunpack.c.h.b16 %v1457
    %v1612 = vunpack.c.l.b16 %v1458
    %v1613 = vunpack.c.h.b16 %v1458
    %v1614 = vunpack.c.l.b16 %v1459
    %v1615 = vunpack.c.h.b16 %v1459
    %v1616 = vunpack.c.l.b16 %v1460
    %v1617 = vunpack.c.h.b16 %v1460
    %v1618 = vunpack.c.l.b16 %v1461
    %v1619 = vunpack.c.h.b16 %v1461
    %v1620 = vunpack.c.l.b16 %v1462
    %v1621 = vunpack.c.h.b16 %v1462
    %v1622 = vunpack.c.l.b16 %v1463
    %v1623 = vunpack.c.h.b16 %v1463
    %v1624 = vunpack.c.l.b16 %v1464
    %v1625 = vunpack.c.h.b16 %v1464
    %v1626 = vunpack.c.l.b16 %v1465
    %v1627 = vunpack.c.h.b16 %v1465
    %v1628 = vunpack.c.l.b16 %v1466
    %v1629 = vunpack.c.h.b16 %v1466
    %v1630 = vunpack.c.l.b16 %v1467
    %v1631 = vunpack.c.h.b16 %v1467
    %v1632 = vunpack.c.l.b16 %v1468
    %v1633 = vunpack.c.h.b16 %v1468
    %v1634 = vunpack.c.l.b16 %v1469
    %v1635 = vunpack.c.h.b16 %v1469
    %v1636 = vunpack.c.l.b16 %v1470
    %v1637 = vunpack.c.h.b16 %v1470
    %v1638 = vunpack.c.l.b16 %v1471
    %v1639 = vunpack.c.h.b16 %v1471
    %v1640 = vunpack.c.l.b16 %v1472
    %v1641 = vunpack.c.h.b16 %v1472
    %v1642 = vunpack.c.l.b16 %v1473
    %v1643 = vunpack.c.h.b16 %v1473
    %v1644 = vunpack.c.l.b16 %v1474
    %v1645 = vunpack.c.h.b16 %v1474
    %v1646 = vunpack.c.l.b16 %v1475
    %v1647 = vunpack.c.h.b16 %v1475
    %v1648 = vunpack.c.l.b16 %v1476
    %v1649 = vunpack.c.h.b16 %v1476
    %v1650 = vunpack.c.l.b16 %v1477
    %v1651 = vunpack.c.h.b16 %v1477
    %v1652 = vunpack.c.l.b16 %v1478
    %v1653 = vunpack.c.h.b16 %v1478
    %v1654 = vunpack.c.l.b16 %v1479
    %v1655 = vunpack.c.h.b16 %v1479
    %v1656 = vunpack.c.l.b16 %v1480
    %v1657 = vunpack.c.h.b16 %v1480
    %v1658 = vunpack.c.l.b16 %v1481
    %v1659 = vunpack.c.h.b16 %v1481
    %v1660 = vunpack.c.l.b16 %v1482
    %v1661 = vunpack.c.h.b16 %v1482
    %v1662 = vunpack.c.l.b16 %v1483
    %v1663 = vunpack.c.h.b16 %v1483
    %v1664 = vunpack.c.l.b16 %v1484
    %v1665 = vunpack.c.h.b16 %v1484
    %v1666 = vunpack.c.l.b16 %v1485
    %v1667 = vunpack.c.h.b16 %v1485
    %v1668 = vunpack.c.l.b16 %v1486
    %v1669 = vunpack.c.h.b16 %v1486
    %v1670 = vunpack.c.l.b16 %v1487
    %v1671 = vunpack.c.h.b16 %v1487
    %v1672 = vunpack.c.l.b16 %v1488
    %v1673 = vunpack.c.h.b16 %v1488
    %v1674 = vunpack.c.l.b16 %v1489
    %v1675 = vunpack.c.h.b16 %v1489
    %v1676 = vunpack.c.l.b16 %v1490
    %v1677 = vunpack.c.h.b16 %v1490
    %v1678 = vunpack.c.l.b16 %v1491
    %v1679 = vunpack.c.h.b16 %v1491
    %v1680 = vunpack.c.l.b16 %v1492
    %v1681 = vunpack.c.h.b16 %v1492
    %v1682 = vunpack.c.l.b16 %v1493
    %v1683 = vunpack.c.h.b16 %v1493
    %v1684 = vunpack.c.l.b16 %v1494
    %v1685 = vunpack.c.h.b16 %v1494
    %v1686 = vunpack.c.l.b16 %v1495
    %v1687 = vunpack.c.h.b16 %v1495
    %v1688 = vpack.c.b16 %v1564, %v1560
    %v1689 = vpack.c.b16 %v1565, %v1561
    %v1690 = vpack.c.b16 %v1566, %v1562
    %v1691 = vpack.c.b16 %v1567, %v1563
    %v1692 = vpack.c.b16 %v1572, %v1568
    %v1693 = vpack.c.b16 %v1573, %v1569
    %v1694 = vpack.c.b16 %v1574, %v1570
    %v1695 = vpack.c.b16 %v1575, %v1571
    %v1696 = vpack.c.b16 %v1580, %v1576
    %v1697 = vpack.c.b16 %v1581, %v1577
    %v1698 = vpack.c.b16 %v1582, %v1578
    %v1699 = vpack.c.b16 %v1583, %v1579
    %v1700 = vpack.c.b16 %v1588, %v1584
    %v1701 = vpack.c.b16 %v1589, %v1585
    %v1702 = vpack.c.b16 %v1590, %v1586
    %v1703 = vpack.c.b16 %v1591, %v1587
    %v1704 = vpack.c.b16 %v1596, %v1592
    %v1705 = vpack.c.b16 %v1597, %v1593
    %v1706 = vpack.c.b16 %v1598, %v1594
    %v1707 = vpack.c.b16 %v1599, %v1595
    %v1708 = vpack.c.b16 %v1604, %v1600
    %v1709 = vpack.c.b16 %v1605, %v1601
    %v1710 = vpack.c.b16 %v1606, %v1602
    %v1711 = vpack.c.b16 %v1607, %v1603
    %v1712 = vpack.c.b16 %v1612, %v1608
    %v1713 = vpack.c.b16 %v1613, %v1609
    %v1714 = vpack.c.b16 %v1614, %v1610
    %v1715 = vpack.c.b16 %v1615, %v1611
    %v1716 = vpack.c.b16 %v1620, %v1616
    %v1717 = vpack.c.b16 %v1621, %v1617
    %v1718 = vpack.c.b16 %v1622, %v1618
    %v1719 = vpack.c.b16 %v1623, %v1619
    %v1720 = vpack.c.b16 %v1628, %v1624
    %v1721 = vpack.c.b16 %v1629, %v1625
    %v1722 = vpack.c.b16 %v1630, %v1626
    %v1723 = vpack.c.b16 %v1631, %v1627
    %v1724 = vpack.c.b16 %v1636, %v1632
    %v1725 = vpack.c.b16 %v1637, %v1633
    %v1726 = vpack.c.b16 %v1638, %v1634
    %v1727 = vpack.c.b16 %v1639, %v1635
    %v1728 = vpack.c.b16 %v1644, %v1640
    %v1729 = vpack.c.b16 %v1645, %v1641
    %v1730 = vpack.c.b16 %v1646, %v1642
    %v1731 = vpack.c.b16 %v1647, %v1643
    %v1732 = vpack.c.b16 %v1652, %v1648
    %v1733 = vpack.c.b16 %v1653, %v1649
    %v1734 = vpack.c.b16 %v1654, %v1650
    %v1735 = vpack.c.b16 %v1655, %v1651
    %v1736 = vpack.c.b16 %v1660, %v1656
    %v1737 = vpack.c.b16 %v1661, %v1657
    %v1738 = vpack.c.b16 %v1662, %v1658
    %v1739 = vpack.c.b16 %v1663, %v1659
    %v1740 = vpack.c.b16 %v1668, %v1664
    %v1741 = vpack.c.b16 %v1669, %v1665
    %v1742 = vpack.c.b16 %v1670, %v1666
    %v1743 = vpack.c.b16 %v1671, %v1667
    %v1744 = vpack.c.b16 %v1676, %v1672
    %v1745 = vpack.c.b16 %v1677, %v1673
    %v1746 = vpack.c.b16 %v1678, %v1674
    %v1747 = vpack.c.b16 %v1679, %v1675
    %v1748 = vpack.c.b16 %v1684, %v1680
    %v1749 = vpack.c.b16 %v1685, %v1681
    %v1750 = vpack.c.b16 %v1686, %v1682
    %v1751 = vpack.c.b16 %v1687, %v1683
    %1816 = vmatprep.subr.bf16.mxu0 %v1689
    %1817 = vmatpush1.bf16.msra.mxu0 %v1688
    %1818 = vmatprep.subr.bf16.mxu0 %v1693
    %1819 = vmatpush1.bf16.msra.mxu0 %v1692
    %1820 = vmatprep.subr.bf16.mxu0 %v1697
    %1821 = vmatpush1.bf16.msra.mxu0 %v1696
    %1822 = vmatprep.subr.bf16.mxu0 %v1701
    %1823 = vmatpush1.bf16.msra.mxu0 %v1700
    %1824 = vmatprep.subr.bf16.mxu0 %v1705
    %1825 = vmatpush1.bf16.msra.mxu0 %v1704
    %1826 = vmatprep.subr.bf16.mxu0 %v1709
    %1827 = vmatpush1.bf16.msra.mxu0 %v1708
    %1828 = vmatprep.subr.bf16.mxu0 %v1713
    %1829 = vmatpush1.bf16.msra.mxu0 %v1712
    %1830 = vmatprep.subr.bf16.mxu0 %v1717
    %1831 = vmatpush1.bf16.msra.mxu0 %v1716
    %1832 = vmatprep.subr.bf16.mxu0 %v1721
    %1833 = vmatpush1.bf16.msra.mxu0 %v1720
    %1834 = vmatprep.subr.bf16.mxu0 %v1725
    %1835 = vmatpush1.bf16.msra.mxu0 %v1724
    %1836 = vmatprep.subr.bf16.mxu0 %v1729
    %1837 = vmatpush1.bf16.msra.mxu0 %v1728
    %1838 = vmatprep.subr.bf16.mxu0 %v1733
    %1839 = vmatpush1.bf16.msra.mxu0 %v1732
    %1840 = vmatprep.subr.bf16.mxu0 %v1737
    %1841 = vmatpush1.bf16.msra.mxu0 %v1736
    %1842 = vmatprep.subr.bf16.mxu0 %v1741
    %1843 = vmatpush1.bf16.msra.mxu0 %v1740
    %1844 = vmatprep.subr.bf16.mxu0 %v1745
    %1845 = vmatpush1.bf16.msra.mxu0 %v1744
    %1846 = vmatprep.subr.bf16.mxu0 %v1749
    %1847 = vmatpush1.bf16.msra.mxu0 %v1748
    %1848 = vmatprep.mubr.bf16.mxu0 %v1288
    %1849 = vmatmul.mubr.bf16.gmra.mrb[0].mxu0 %v1287
    %v1850 = vpop.f32.mrb[0].mxu0
    %v1851 = vadd.f32 0.0, %v1850
    %v1852 = vpop.f32.mrb[0].mxu0
    %v1853 = vadd.f32 0.0, %v1852
    %v1854 = vpop.f32.mrb[0].mxu0
    %v1855 = vadd.f32 0.0, %v1854
    %v1856 = vpop.f32.mrb[0].mxu0
    %v1857 = vadd.f32 0.0, %v1856
    %1858 = vmatprep.mubr.bf16.mxu0 %v1290
    %1859 = vmatmul.mubr.bf16.gmra.mrb[0].mxu0 %v1289
    %v1860 = vpop.f32.mrb[0].mxu0
    %v1861 = vadd.f32 0.0, %v1860
    %v1862 = vpop.f32.mrb[0].mxu0
    %v1863 = vadd.f32 0.0, %v1862
    %v1864 = vpop.f32.mrb[0].mxu0
    %v1865 = vadd.f32 0.0, %v1864
    %v1866 = vpop.f32.mrb[0].mxu0
    %v1867 = vadd.f32 0.0, %v1866
    %1868 = vmatprep.mubr.bf16.mxu0 %v1292
    %1869 = vmatmul.mubr.bf16.gmra.mrb[0].mxu0 %v1291
    %v1870 = vpop.f32.mrb[0].mxu0
    %v1871 = vadd.f32 0.0, %v1870
    %v1872 = vpop.f32.mrb[0].mxu0
    %v1873 = vadd.f32 0.0, %v1872
    %v1874 = vpop.f32.mrb[0].mxu0
    %v1875 = vadd.f32 0.0, %v1874
    %v1876 = vpop.f32.mrb[0].mxu0
    %v1877 = vadd.f32 0.0, %v1876
    %1878 = vmatprep.mubr.bf16.mxu0 %v1294
    %1879 = vmatmul.mubr.bf16.gmra.mrb[0].mxu0 %v1293
    %v1880 = vpop.f32.mrb[0].mxu0
    %v1881 = vadd.f32 0.0, %v1880
    %v1882 = vpop.f32.mrb[0].mxu0
    %v1883 = vadd.f32 0.0, %v1882
    %v1884 = vpop.f32.mrb[0].mxu0
    %v1885 = vadd.f32 0.0, %v1884
    %v1886 = vpop.f32.mrb[0].mxu0
    %v1887 = vadd.f32 0.0, %v1886
    %1888 = vmatprep.mubr.bf16.mxu0 %v1296
    %1889 = vmatmul.mubr.bf16.gmra.mrb[0].mxu0 %v1295
    %v1890 = vpop.f32.mrb[0].mxu0
    %v1891 = vadd.f32 0.0, %v1890
    %v1892 = vpop.f32.mrb[0].mxu0
    %v1893 = vadd.f32 0.0, %v1892
    %v1894 = vpop.f32.mrb[0].mxu0
    %v1895 = vadd.f32 0.0, %v1894
    %v1896 = vpop.f32.mrb[0].mxu0
    %v1897 = vadd.f32 0.0, %v1896
    %1898 = vmatprep.mubr.bf16.mxu0 %v1298
    %1899 = vmatmul.mubr.bf16.gmra.mrb[0].mxu0 %v1297
    %v1900 = vpop.f32.mrb[0].mxu0
    %v1901 = vadd.f32 0.0, %v1900
    %v1902 = vpop.f32.mrb[0].mxu0
    %v1903 = vadd.f32 0.0, %v1902
    %v1904 = vpop.f32.mrb[0].mxu0
    %v1905 = vadd.f32 0.0, %v1904
    %v1906 = vpop.f32.mrb[0].mxu0
    %v1907 = vadd.f32 0.0, %v1906
    %1908 = vmatprep.mubr.bf16.mxu0 %v1300
    %1909 = vmatmul.mubr.bf16.gmra.mrb[0].mxu0 %v1299
    %v1910 = vpop.f32.mrb[0].mxu0
    %v1911 = vadd.f32 0.0, %v1910
    %v1912 = vpop.f32.mrb[0].mxu0
    %v1913 = vadd.f32 0.0, %v1912
    %v1914 = vpop.f32.mrb[0].mxu0
    %v1915 = vadd.f32 0.0, %v1914
    %v1916 = vpop.f32.mrb[0].mxu0
    %v1917 = vadd.f32 0.0, %v1916
    %1918 = vmatprep.mubr.bf16.mxu0 %v1302
    %1919 = vmatmul.mubr.bf16.gmra.mrb[0].mxu0 %v1301
    %v1920 = vpop.f32.mrb[0].mxu0
    %v1921 = vadd.f32 0.0, %v1920
    %v1922 = vpop.f32.mrb[0].mxu0
    %v1923 = vadd.f32 0.0, %v1922
    %v1924 = vpop.f32.mrb[0].mxu0
    %v1925 = vadd.f32 0.0, %v1924
    %v1926 = vpop.f32.mrb[0].mxu0
    %v1927 = vadd.f32 0.0, %v1926
    %1928 = vmatprep.mubr.bf16.mxu0 %v1304
    %1929 = vmatmul.mubr.bf16.gmra.mrb[0].mxu0 %v1303
    %v1930 = vpop.f32.mrb[0].mxu0
    %v1931 = vadd.f32 0.0, %v1930
    %v1932 = vpop.f32.mrb[0].mxu0
    %v1933 = vadd.f32 0.0, %v1932
    %v1934 = vpop.f32.mrb[0].mxu0
    %v1935 = vadd.f32 0.0, %v1934
    %v1936 = vpop.f32.mrb[0].mxu0
    %v1937 = vadd.f32 0.0, %v1936
    %1938 = vmatprep.mubr.bf16.mxu0 %v1306
    %1939 = vmatmul.mubr.bf16.gmra.mrb[0].mxu0 %v1305
    %v1940 = vpop.f32.mrb[0].mxu0
    %v1941 = vadd.f32 0.0, %v1940
    %v1942 = vpop.f32.mrb[0].mxu0
    %v1943 = vadd.f32 0.0, %v1942
    %v1944 = vpop.f32.mrb[0].mxu0
    %v1945 = vadd.f32 0.0, %v1944
    %v1946 = vpop.f32.mrb[0].mxu0
    %v1947 = vadd.f32 0.0, %v1946
    %1948 = vmatprep.mubr.bf16.mxu0 %v1308
    %1949 = vmatmul.mubr.bf16.gmra.mrb[0].mxu0 %v1307
    %v1950 = vpop.f32.mrb[0].mxu0
    %v1951 = vadd.f32 0.0, %v1950
    %v1952 = vpop.f32.mrb[0].mxu0
    %v1953 = vadd.f32 0.0, %v1952
    %v1954 = vpop.f32.mrb[0].mxu0
    %v1955 = vadd.f32 0.0, %v1954
    %v1956 = vpop.f32.mrb[0].mxu0
    %v1957 = vadd.f32 0.0, %v1956
    %1958 = vmatprep.mubr.bf16.mxu0 %v1310
    %1959 = vmatmul.mubr.bf16.gmra.mrb[0].mxu0 %v1309
    %v1960 = vpop.f32.mrb[0].mxu0
    %v1961 = vadd.f32 0.0, %v1960
    %v1962 = vpop.f32.mrb[0].mxu0
    %v1963 = vadd.f32 0.0, %v1962
    %v1964 = vpop.f32.mrb[0].mxu0
    %v1965 = vadd.f32 0.0, %v1964
    %v1966 = vpop.f32.mrb[0].mxu0
    %v1967 = vadd.f32 0.0, %v1966
    %1968 = vmatprep.mubr.bf16.mxu0 %v1312
    %1969 = vmatmul.mubr.bf16.gmra.mrb[0].mxu0 %v1311
    %v1970 = vpop.f32.mrb[0].mxu0
    %v1971 = vadd.f32 0.0, %v1970
    %v1972 = vpop.f32.mrb[0].mxu0
    %v1973 = vadd.f32 0.0, %v1972
    %v1974 = vpop.f32.mrb[0].mxu0
    %v1975 = vadd.f32 0.0, %v1974
    %v1976 = vpop.f32.mrb[0].mxu0
    %v1977 = vadd.f32 0.0, %v1976
    %1978 = vmatprep.mubr.bf16.mxu0 %v1314
    %1979 = vmatmul.mubr.bf16.gmra.mrb[0].mxu0 %v1313
    %v1980 = vpop.f32.mrb[0].mxu0
    %v1981 = vadd.f32 0.0, %v1980
    %v1982 = vpop.f32.mrb[0].mxu0
    %v1983 = vadd.f32 0.0, %v1982
    %v1984 = vpop.f32.mrb[0].mxu0
    %v1985 = vadd.f32 0.0, %v1984
    %v1986 = vpop.f32.mrb[0].mxu0
    %v1987 = vadd.f32 0.0, %v1986
    %1988 = vmatprep.mubr.bf16.mxu0 %v1316
    %1989 = vmatmul.mubr.bf16.gmra.mrb[0].mxu0 %v1315
    %v1990 = vpop.f32.mrb[0].mxu0
    %v1991 = vadd.f32 0.0, %v1990
    %v1992 = vpop.f32.mrb[0].mxu0
    %v1993 = vadd.f32 0.0, %v1992
    %v1994 = vpop.f32.mrb[0].mxu0
    %v1995 = vadd.f32 0.0, %v1994
    %v1996 = vpop.f32.mrb[0].mxu0
    %v1997 = vadd.f32 0.0, %v1996
    %1998 = vmatprep.mubr.bf16.mxu0 %v1318
    %1999 = vmatmul.mubr.bf16.gmra.mrb[0].mxu0 %v1317
    %v2000 = vpop.f32.mrb[0].mxu0
    %v2001 = vadd.f32 0.0, %v2000
    %v2002 = vpop.f32.mrb[0].mxu0
    %v2003 = vadd.f32 0.0, %v2002
    %v2004 = vpop.f32.mrb[0].mxu0
    %v2005 = vadd.f32 0.0, %v2004
    %v2006 = vpop.f32.mrb[0].mxu0
    %v2007 = vadd.f32 0.0, %v2006
    %2008 = vmatprep.mubr.bf16.mxu0 %v1320
    %2009 = vmatmul.mubr.bf16.gmra.mrb[0].mxu0 %v1319
    %v2010 = vpop.f32.mrb[0].mxu0
    %v2011 = vadd.f32 0.0, %v2010
    %v2012 = vpop.f32.mrb[0].mxu0
    %v2013 = vadd.f32 0.0, %v2012
    %v2014 = vpop.f32.mrb[0].mxu0
    %v2015 = vadd.f32 0.0, %v2014
    %v2016 = vpop.f32.mrb[0].mxu0
    %v2017 = vadd.f32 0.0, %v2016
    %2018 = vmatprep.mubr.bf16.mxu0 %v1322
    %2019 = vmatmul.mubr.bf16.gmra.mrb[0].mxu0 %v1321
    %v2020 = vpop.f32.mrb[0].mxu0
    %v2021 = vadd.f32 0.0, %v2020
    %v2022 = vpop.f32.mrb[0].mxu0
    %v2023 = vadd.f32 0.0, %v2022
    %v2024 = vpop.f32.mrb[0].mxu0
    %v2025 = vadd.f32 0.0, %v2024
    %v2026 = vpop.f32.mrb[0].mxu0
    %v2027 = vadd.f32 0.0, %v2026
    %2028 = vmatprep.mubr.bf16.mxu0 %v1324
    %2029 = vmatmul.mubr.bf16.gmra.mrb[0].mxu0 %v1323
    %v2030 = vpop.f32.mrb[0].mxu0
    %v2031 = vadd.f32 0.0, %v2030
    %v2032 = vpop.f32.mrb[0].mxu0
    %v2033 = vadd.f32 0.0, %v2032
    %v2034 = vpop.f32.mrb[0].mxu0
    %v2035 = vadd.f32 0.0, %v2034
    %v2036 = vpop.f32.mrb[0].mxu0
    %v2037 = vadd.f32 0.0, %v2036
    %2038 = vmatprep.mubr.bf16.mxu0 %v1326
    %2039 = vmatmul.mubr.bf16.gmra.mrb[0].mxu0 %v1325
    %v2040 = vpop.f32.mrb[0].mxu0
    %v2041 = vadd.f32 0.0, %v2040
    %v2042 = vpop.f32.mrb[0].mxu0
    %v2043 = vadd.f32 0.0, %v2042
    %v2044 = vpop.f32.mrb[0].mxu0
    %v2045 = vadd.f32 0.0, %v2044
    %v2046 = vpop.f32.mrb[0].mxu0
    %v2047 = vadd.f32 0.0, %v2046
    %2048 = vmatprep.mubr.bf16.mxu0 %v1328
    %2049 = vmatmul.mubr.bf16.gmra.mrb[0].mxu0 %v1327
    %v2050 = vpop.f32.mrb[0].mxu0
    %v2051 = vadd.f32 0.0, %v2050
    %v2052 = vpop.f32.mrb[0].mxu0
    %v2053 = vadd.f32 0.0, %v2052
    %v2054 = vpop.f32.mrb[0].mxu0
    %v2055 = vadd.f32 0.0, %v2054
    %v2056 = vpop.f32.mrb[0].mxu0
    %v2057 = vadd.f32 0.0, %v2056
    %2058 = vmatprep.mubr.bf16.mxu0 %v1330
    %2059 = vmatmul.mubr.bf16.gmra.mrb[0].mxu0 %v1329
    %v2060 = vpop.f32.mrb[0].mxu0
    %v2061 = vadd.f32 0.0, %v2060
    %v2062 = vpop.f32.mrb[0].mxu0
    %v2063 = vadd.f32 0.0, %v2062
    %v2064 = vpop.f32.mrb[0].mxu0
    %v2065 = vadd.f32 0.0, %v2064
    %v2066 = vpop.f32.mrb[0].mxu0
    %v2067 = vadd.f32 0.0, %v2066
    %2068 = vmatprep.mubr.bf16.mxu0 %v1332
    %2069 = vmatmul.mubr.bf16.gmra.mrb[0].mxu0 %v1331
    %v2070 = vpop.f32.mrb[0].mxu0
    %v2071 = vadd.f32 0.0, %v2070
    %v2072 = vpop.f32.mrb[0].mxu0
    %v2073 = vadd.f32 0.0, %v2072
    %v2074 = vpop.f32.mrb[0].mxu0
    %v2075 = vadd.f32 0.0, %v2074
    %v2076 = vpop.f32.mrb[0].mxu0
    %v2077 = vadd.f32 0.0, %v2076
    %2078 = vmatprep.mubr.bf16.mxu0 %v1334
    %2079 = vmatmul.mubr.bf16.gmra.mrb[0].mxu0 %v1333
    %v2080 = vpop.f32.mrb[0].mxu0
    %v2081 = vadd.f32 0.0, %v2080
    %v2082 = vpop.f32.mrb[0].mxu0
    %v2083 = vadd.f32 0.0, %v2082
    %v2084 = vpop.f32.mrb[0].mxu0
    %v2085 = vadd.f32 0.0, %v2084
    %v2086 = vpop.f32.mrb[0].mxu0
    %v2087 = vadd.f32 0.0, %v2086
    %2088 = vmatprep.mubr.bf16.mxu0 %v1336
    %2089 = vmatmul.mubr.bf16.gmra.mrb[0].mxu0 %v1335
    %v2090 = vpop.f32.mrb[0].mxu0
    %v2091 = vadd.f32 0.0, %v2090
    %v2092 = vpop.f32.mrb[0].mxu0
    %v2093 = vadd.f32 0.0, %v2092
    %v2094 = vpop.f32.mrb[0].mxu0
    %v2095 = vadd.f32 0.0, %v2094
    %v2096 = vpop.f32.mrb[0].mxu0
    %v2097 = vadd.f32 0.0, %v2096
    %2098 = vmatprep.mubr.bf16.mxu0 %v1338
    %2099 = vmatmul.mubr.bf16.gmra.mrb[0].mxu0 %v1337
    %v2100 = vpop.f32.mrb[0].mxu0
    %v2101 = vadd.f32 0.0, %v2100
    %v2102 = vpop.f32.mrb[0].mxu0
    %v2103 = vadd.f32 0.0, %v2102
    %v2104 = vpop.f32.mrb[0].mxu0
    %v2105 = vadd.f32 0.0, %v2104
    %v2106 = vpop.f32.mrb[0].mxu0
    %v2107 = vadd.f32 0.0, %v2106
    %2108 = vmatprep.mubr.bf16.mxu0 %v1340
    %2109 = vmatmul.mubr.bf16.gmra.mrb[0].mxu0 %v1339
    %v2110 = vpop.f32.mrb[0].mxu0
    %v2111 = vadd.f32 0.0, %v2110
    %v2112 = vpop.f32.mrb[0].mxu0
    %v2113 = vadd.f32 0.0, %v2112
    %v2114 = vpop.f32.mrb[0].mxu0
    %v2115 = vadd.f32 0.0, %v2114
    %v2116 = vpop.f32.mrb[0].mxu0
    %v2117 = vadd.f32 0.0, %v2116
    %2118 = vmatprep.mubr.bf16.mxu0 %v1342
    %2119 = vmatmul.mubr.bf16.gmra.mrb[0].mxu0 %v1341
    %v2120 = vpop.f32.mrb[0].mxu0
    %v2121 = vadd.f32 0.0, %v2120
    %v2122 = vpop.f32.mrb[0].mxu0
    %v2123 = vadd.f32 0.0, %v2122
    %v2124 = vpop.f32.mrb[0].mxu0
    %v2125 = vadd.f32 0.0, %v2124
    %v2126 = vpop.f32.mrb[0].mxu0
    %v2127 = vadd.f32 0.0, %v2126
    %2128 = vmatprep.mubr.bf16.mxu0 %v1344
    %2129 = vmatmul.mubr.bf16.gmra.mrb[0].mxu0 %v1343
    %v2130 = vpop.f32.mrb[0].mxu0
    %v2131 = vadd.f32 0.0, %v2130
    %v2132 = vpop.f32.mrb[0].mxu0
    %v2133 = vadd.f32 0.0, %v2132
    %v2134 = vpop.f32.mrb[0].mxu0
    %v2135 = vadd.f32 0.0, %v2134
    %v2136 = vpop.f32.mrb[0].mxu0
    %v2137 = vadd.f32 0.0, %v2136
    %2138 = vmatprep.mubr.bf16.mxu0 %v1346
    %2139 = vmatmul.mubr.bf16.gmra.mrb[0].mxu0 %v1345
    %v2140 = vpop.f32.mrb[0].mxu0
    %v2141 = vadd.f32 0.0, %v2140
    %v2142 = vpop.f32.mrb[0].mxu0
    %v2143 = vadd.f32 0.0, %v2142
    %v2144 = vpop.f32.mrb[0].mxu0
    %v2145 = vadd.f32 0.0, %v2144
    %v2146 = vpop.f32.mrb[0].mxu0
    %v2147 = vadd.f32 0.0, %v2146
    %2148 = vmatprep.mubr.bf16.mxu0 %v1348
    %2149 = vmatmul.mubr.bf16.gmra.mrb[0].mxu0 %v1347
    %v2150 = vpop.f32.mrb[0].mxu0
    %v2151 = vadd.f32 0.0, %v2150
    %v2152 = vpop.f32.mrb[0].mxu0
    %v2153 = vadd.f32 0.0, %v2152
    %v2154 = vpop.f32.mrb[0].mxu0
    %v2155 = vadd.f32 0.0, %v2154
    %v2156 = vpop.f32.mrb[0].mxu0
    %v2157 = vadd.f32 0.0, %v2156
    %2158 = vmatprep.mubr.bf16.mxu0 %v1350
    %2159 = vmatmul.mubr.bf16.gmra.mrb[0].mxu0 %v1349
    %v2160 = vpop.f32.mrb[0].mxu0
    %v2161 = vadd.f32 0.0, %v2160
    %v2162 = vpop.f32.mrb[0].mxu0
    %v2163 = vadd.f32 0.0, %v2162
    %v2164 = vpop.f32.mrb[0].mxu0
    %v2165 = vadd.f32 0.0, %v2164
    %v2166 = vpop.f32.mrb[0].mxu0
    %v2167 = vadd.f32 0.0, %v2166
    %2168 = vmatprep.mubr.bf16.mxu0 %v1352
    %2169 = vmatmul.mubr.bf16.gmra.mrb[0].mxu0 %v1351
    %v2170 = vpop.f32.mrb[0].mxu0
    %v2171 = vadd.f32 0.0, %v2170
    %v2172 = vpop.f32.mrb[0].mxu0
    %v2173 = vadd.f32 0.0, %v2172
    %v2174 = vpop.f32.mrb[0].mxu0
    %v2175 = vadd.f32 0.0, %v2174
    %v2176 = vpop.f32.mrb[0].mxu0
    %v2177 = vadd.f32 0.0, %v2176
    %2178 = vmatprep.mubr.bf16.mxu0 %v1354
    %2179 = vmatmul.mubr.bf16.gmra.mrb[0].mxu0 %v1353
    %v2180 = vpop.f32.mrb[0].mxu0
    %v2181 = vadd.f32 0.0, %v2180
    %v2182 = vpop.f32.mrb[0].mxu0
    %v2183 = vadd.f32 0.0, %v2182
    %v2184 = vpop.f32.mrb[0].mxu0
    %v2185 = vadd.f32 0.0, %v2184
    %v2186 = vpop.f32.mrb[0].mxu0
    %v2187 = vadd.f32 0.0, %v2186
    %2188 = vmatprep.mubr.bf16.mxu0 %v1356
    %2189 = vmatmul.mubr.bf16.gmra.mrb[0].mxu0 %v1355
    %v2190 = vpop.f32.mrb[0].mxu0
    %v2191 = vadd.f32 0.0, %v2190
    %v2192 = vpop.f32.mrb[0].mxu0
    %v2193 = vadd.f32 0.0, %v2192
    %v2194 = vpop.f32.mrb[0].mxu0
    %v2195 = vadd.f32 0.0, %v2194
    %v2196 = vpop.f32.mrb[0].mxu0
    %v2197 = vadd.f32 0.0, %v2196
    %2198 = vmatprep.mubr.bf16.mxu0 %v1358
    %2199 = vmatmul.mubr.bf16.gmra.mrb[0].mxu0 %v1357
    %v2200 = vpop.f32.mrb[0].mxu0
    %v2201 = vadd.f32 0.0, %v2200
    %v2202 = vpop.f32.mrb[0].mxu0
    %v2203 = vadd.f32 0.0, %v2202
    %v2204 = vpop.f32.mrb[0].mxu0
    %v2205 = vadd.f32 0.0, %v2204
    %v2206 = vpop.f32.mrb[0].mxu0
    %v2207 = vadd.f32 0.0, %v2206
    %2208 = vmatprep.mubr.bf16.mxu0 %v1360
    %2209 = vmatmul.mubr.bf16.gmra.mrb[0].mxu0 %v1359
    %v2210 = vpop.f32.mrb[0].mxu0
    %v2211 = vadd.f32 0.0, %v2210
    %v2212 = vpop.f32.mrb[0].mxu0
    %v2213 = vadd.f32 0.0, %v2212
    %v2214 = vpop.f32.mrb[0].mxu0
    %v2215 = vadd.f32 0.0, %v2214
    %v2216 = vpop.f32.mrb[0].mxu0
    %v2217 = vadd.f32 0.0, %v2216
    %2218 = vmatprep.mubr.bf16.mxu0 %v1362
    %2219 = vmatmul.mubr.bf16.gmra.mrb[0].mxu0 %v1361
    %v2220 = vpop.f32.mrb[0].mxu0
    %v2221 = vadd.f32 0.0, %v2220
    %v2222 = vpop.f32.mrb[0].mxu0
    %v2223 = vadd.f32 0.0, %v2222
    %v2224 = vpop.f32.mrb[0].mxu0
    %v2225 = vadd.f32 0.0, %v2224
    %v2226 = vpop.f32.mrb[0].mxu0
    %v2227 = vadd.f32 0.0, %v2226
    %2228 = vmatprep.mubr.bf16.mxu0 %v1364
    %2229 = vmatmul.mubr.bf16.gmra.mrb[0].mxu0 %v1363
    %v2230 = vpop.f32.mrb[0].mxu0
    %v2231 = vadd.f32 0.0, %v2230
    %v2232 = vpop.f32.mrb[0].mxu0
    %v2233 = vadd.f32 0.0, %v2232
    %v2234 = vpop.f32.mrb[0].mxu0
    %v2235 = vadd.f32 0.0, %v2234
    %v2236 = vpop.f32.mrb[0].mxu0
    %v2237 = vadd.f32 0.0, %v2236
    %2238 = vmatprep.mubr.bf16.mxu0 %v1366
    %2239 = vmatmul.mubr.bf16.gmra.mrb[0].mxu0 %v1365
    %v2240 = vpop.f32.mrb[0].mxu0
    %v2241 = vadd.f32 0.0, %v2240
    %v2242 = vpop.f32.mrb[0].mxu0
    %v2243 = vadd.f32 0.0, %v2242
    %v2244 = vpop.f32.mrb[0].mxu0
    %v2245 = vadd.f32 0.0, %v2244
    %v2246 = vpop.f32.mrb[0].mxu0
    %v2247 = vadd.f32 0.0, %v2246
    %2248 = vdwg.mxu0
    %2249 = vmatprep.subr.bf16.mxu0 %v1691
    %2250 = vmatpush1.bf16.msra.mxu0 %v1690
    %2251 = vmatprep.subr.bf16.mxu0 %v1695
    %2252 = vmatpush1.bf16.msra.mxu0 %v1694
    %2253 = vmatprep.subr.bf16.mxu0 %v1699
    %2254 = vmatpush1.bf16.msra.mxu0 %v1698
    %2255 = vmatprep.subr.bf16.mxu0 %v1703
    %2256 = vmatpush1.bf16.msra.mxu0 %v1702
    %2257 = vmatprep.subr.bf16.mxu0 %v1707
    %2258 = vmatpush1.bf16.msra.mxu0 %v1706
    %2259 = vmatprep.subr.bf16.mxu0 %v1711
    %2260 = vmatpush1.bf16.msra.mxu0 %v1710
    %2261 = vmatprep.subr.bf16.mxu0 %v1715
    %2262 = vmatpush1.bf16.msra.mxu0 %v1714
    %2263 = vmatprep.subr.bf16.mxu0 %v1719
    %2264 = vmatpush1.bf16.msra.mxu0 %v1718
    %2265 = vmatprep.subr.bf16.mxu0 %v1723
    %2266 = vmatpush1.bf16.msra.mxu0 %v1722
    %2267 = vmatprep.subr.bf16.mxu0 %v1727
    %2268 = vmatpush1.bf16.msra.mxu0 %v1726
    %2269 = vmatprep.subr.bf16.mxu0 %v1731
    %2270 = vmatpush1.bf16.msra.mxu0 %v1730
    %2271 = vmatprep.subr.bf16.mxu0 %v1735
    %2272 = vmatpush1.bf16.msra.mxu0 %v1734
    %2273 = vmatprep.subr.bf16.mxu0 %v1739
    %2274 = vmatpush1.bf16.msra.mxu0 %v1738
    %2275 = vmatprep.subr.bf16.mxu0 %v1743
    %2276 = vmatpush1.bf16.msra.mxu0 %v1742
    %2277 = vmatprep.subr.bf16.mxu0 %v1747
    %2278 = vmatpush1.bf16.msra.mxu0 %v1746
    %2279 = vmatprep.subr.bf16.mxu0 %v1751
    %2280 = vmatpush1.bf16.msra.mxu0 %v1750
    %2281 = vmatprep.mubr.bf16.mxu0 %v1288
    %2282 = vmatmul.mubr.bf16.gmra.mrb[0].mxu0 %v1287
    %v2283 = vpop.f32.mrb[0].mxu0
    %v2284 = vadd.f32 0.0, %v2283
    %v2285 = vpop.f32.mrb[0].mxu0
    %v2286 = vadd.f32 0.0, %v2285
    %v2287 = vpop.f32.mrb[0].mxu0
    %v2288 = vadd.f32 0.0, %v2287
    %v2289 = vpop.f32.mrb[0].mxu0
    %v2290 = vadd.f32 0.0, %v2289
    %2291 = vmatprep.mubr.bf16.mxu0 %v1290
    %2292 = vmatmul.mubr.bf16.gmra.mrb[0].mxu0 %v1289
    %v2293 = vpop.f32.mrb[0].mxu0
    %v2294 = vadd.f32 0.0, %v2293
    %v2295 = vpop.f32.mrb[0].mxu0
    %v2296 = vadd.f32 0.0, %v2295
    %v2297 = vpop.f32.mrb[0].mxu0
    %v2298 = vadd.f32 0.0, %v2297
    %v2299 = vpop.f32.mrb[0].mxu0
    %v2300 = vadd.f32 0.0, %v2299
    %2301 = vmatprep.mubr.bf16.mxu0 %v1292
    %2302 = vmatmul.mubr.bf16.gmra.mrb[0].mxu0 %v1291
    %v2303 = vpop.f32.mrb[0].mxu0
    %v2304 = vadd.f32 0.0, %v2303
    %v2305 = vpop.f32.mrb[0].mxu0
    %v2306 = vadd.f32 0.0, %v2305
    %v2307 = vpop.f32.mrb[0].mxu0
    %v2308 = vadd.f32 0.0, %v2307
    %v2309 = vpop.f32.mrb[0].mxu0
    %v2310 = vadd.f32 0.0, %v2309
    %2311 = vmatprep.mubr.bf16.mxu0 %v1294
    %2312 = vmatmul.mubr.bf16.gmra.mrb[0].mxu0 %v1293
    %v2313 = vpop.f32.mrb[0].mxu0
    %v2314 = vadd.f32 0.0, %v2313
    %v2315 = vpop.f32.mrb[0].mxu0
    %v2316 = vadd.f32 0.0, %v2315
    %v2317 = vpop.f32.mrb[0].mxu0
    %v2318 = vadd.f32 0.0, %v2317
    %v2319 = vpop.f32.mrb[0].mxu0
    %v2320 = vadd.f32 0.0, %v2319
    %2321 = vmatprep.mubr.bf16.mxu0 %v1296
    %2322 = vmatmul.mubr.bf16.gmra.mrb[0].mxu0 %v1295
    %v2323 = vpop.f32.mrb[0].mxu0
    %v2324 = vadd.f32 0.0, %v2323
    %v2325 = vpop.f32.mrb[0].mxu0
    %v2326 = vadd.f32 0.0, %v2325
    %v2327 = vpop.f32.mrb[0].mxu0
    %v2328 = vadd.f32 0.0, %v2327
    %v2329 = vpop.f32.mrb[0].mxu0
    %v2330 = vadd.f32 0.0, %v2329
    %2331 = vmatprep.mubr.bf16.mxu0 %v1298
    %2332 = vmatmul.mubr.bf16.gmra.mrb[0].mxu0 %v1297
    %v2333 = vpop.f32.mrb[0].mxu0
    %v2334 = vadd.f32 0.0, %v2333
    %v2335 = vpop.f32.mrb[0].mxu0
    %v2336 = vadd.f32 0.0, %v2335
    %v2337 = vpop.f32.mrb[0].mxu0
    %v2338 = vadd.f32 0.0, %v2337
    %v2339 = vpop.f32.mrb[0].mxu0
    %v2340 = vadd.f32 0.0, %v2339
    %2341 = vmatprep.mubr.bf16.mxu0 %v1300
    %2342 = vmatmul.mubr.bf16.gmra.mrb[0].mxu0 %v1299
    %v2343 = vpop.f32.mrb[0].mxu0
    %v2344 = vadd.f32 0.0, %v2343
    %v2345 = vpop.f32.mrb[0].mxu0
    %v2346 = vadd.f32 0.0, %v2345
    %v2347 = vpop.f32.mrb[0].mxu0
    %v2348 = vadd.f32 0.0, %v2347
    %v2349 = vpop.f32.mrb[0].mxu0
    %v2350 = vadd.f32 0.0, %v2349
    %2351 = vmatprep.mubr.bf16.mxu0 %v1302
    %2352 = vmatmul.mubr.bf16.gmra.mrb[0].mxu0 %v1301
    %v2353 = vpop.f32.mrb[0].mxu0
    %v2354 = vadd.f32 0.0, %v2353
    %v2355 = vpop.f32.mrb[0].mxu0
    %v2356 = vadd.f32 0.0, %v2355
    %v2357 = vpop.f32.mrb[0].mxu0
    %v2358 = vadd.f32 0.0, %v2357
    %v2359 = vpop.f32.mrb[0].mxu0
    %v2360 = vadd.f32 0.0, %v2359
    %2361 = vmatprep.mubr.bf16.mxu0 %v1304
    %2362 = vmatmul.mubr.bf16.gmra.mrb[0].mxu0 %v1303
    %v2363 = vpop.f32.mrb[0].mxu0
    %v2364 = vadd.f32 0.0, %v2363
    %v2365 = vpop.f32.mrb[0].mxu0
    %v2366 = vadd.f32 0.0, %v2365
    %v2367 = vpop.f32.mrb[0].mxu0
    %v2368 = vadd.f32 0.0, %v2367
    %v2369 = vpop.f32.mrb[0].mxu0
    %v2370 = vadd.f32 0.0, %v2369
    %2371 = vmatprep.mubr.bf16.mxu0 %v1306
    %2372 = vmatmul.mubr.bf16.gmra.mrb[0].mxu0 %v1305
    %v2373 = vpop.f32.mrb[0].mxu0
    %v2374 = vadd.f32 0.0, %v2373
    %v2375 = vpop.f32.mrb[0].mxu0
    %v2376 = vadd.f32 0.0, %v2375
    %v2377 = vpop.f32.mrb[0].mxu0
    %v2378 = vadd.f32 0.0, %v2377
    %v2379 = vpop.f32.mrb[0].mxu0
    %v2380 = vadd.f32 0.0, %v2379
    %2381 = vmatprep.mubr.bf16.mxu0 %v1308
    %2382 = vmatmul.mubr.bf16.gmra.mrb[0].mxu0 %v1307
    %v2383 = vpop.f32.mrb[0].mxu0
    %v2384 = vadd.f32 0.0, %v2383
    %v2385 = vpop.f32.mrb[0].mxu0
    %v2386 = vadd.f32 0.0, %v2385
    %v2387 = vpop.f32.mrb[0].mxu0
    %v2388 = vadd.f32 0.0, %v2387
    %v2389 = vpop.f32.mrb[0].mxu0
    %v2390 = vadd.f32 0.0, %v2389
    %2391 = vmatprep.mubr.bf16.mxu0 %v1310
    %2392 = vmatmul.mubr.bf16.gmra.mrb[0].mxu0 %v1309
    %v2393 = vpop.f32.mrb[0].mxu0
    %v2394 = vadd.f32 0.0, %v2393
    %v2395 = vpop.f32.mrb[0].mxu0
    %v2396 = vadd.f32 0.0, %v2395
    %v2397 = vpop.f32.mrb[0].mxu0
    %v2398 = vadd.f32 0.0, %v2397
    %v2399 = vpop.f32.mrb[0].mxu0
    %v2400 = vadd.f32 0.0, %v2399
    %2401 = vmatprep.mubr.bf16.mxu0 %v1312
    %2402 = vmatmul.mubr.bf16.gmra.mrb[0].mxu0 %v1311
    %v2403 = vpop.f32.mrb[0].mxu0
    %v2404 = vadd.f32 0.0, %v2403
    %v2405 = vpop.f32.mrb[0].mxu0
    %v2406 = vadd.f32 0.0, %v2405
    %v2407 = vpop.f32.mrb[0].mxu0
    %v2408 = vadd.f32 0.0, %v2407
    %v2409 = vpop.f32.mrb[0].mxu0
    %v2410 = vadd.f32 0.0, %v2409
    %2411 = vmatprep.mubr.bf16.mxu0 %v1314
    %2412 = vmatmul.mubr.bf16.gmra.mrb[0].mxu0 %v1313
    %v2413 = vpop.f32.mrb[0].mxu0
    %v2414 = vadd.f32 0.0, %v2413
    %v2415 = vpop.f32.mrb[0].mxu0
    %v2416 = vadd.f32 0.0, %v2415
    %v2417 = vpop.f32.mrb[0].mxu0
    %v2418 = vadd.f32 0.0, %v2417
    %v2419 = vpop.f32.mrb[0].mxu0
    %v2420 = vadd.f32 0.0, %v2419
    %2421 = vmatprep.mubr.bf16.mxu0 %v1316
    %2422 = vmatmul.mubr.bf16.gmra.mrb[0].mxu0 %v1315
    %v2423 = vpop.f32.mrb[0].mxu0
    %v2424 = vadd.f32 0.0, %v2423
    %v2425 = vpop.f32.mrb[0].mxu0
    %v2426 = vadd.f32 0.0, %v2425
    %v2427 = vpop.f32.mrb[0].mxu0
    %v2428 = vadd.f32 0.0, %v2427
    %v2429 = vpop.f32.mrb[0].mxu0
    %v2430 = vadd.f32 0.0, %v2429
    %2431 = vmatprep.mubr.bf16.mxu0 %v1318
    %2432 = vmatmul.mubr.bf16.gmra.mrb[0].mxu0 %v1317
    %v2433 = vpop.f32.mrb[0].mxu0
    %v2434 = vadd.f32 0.0, %v2433
    %v2435 = vpop.f32.mrb[0].mxu0
    %v2436 = vadd.f32 0.0, %v2435
    %v2437 = vpop.f32.mrb[0].mxu0
    %v2438 = vadd.f32 0.0, %v2437
    %v2439 = vpop.f32.mrb[0].mxu0
    %v2440 = vadd.f32 0.0, %v2439
    %2441 = vmatprep.mubr.bf16.mxu0 %v1320
    %2442 = vmatmul.mubr.bf16.gmra.mrb[0].mxu0 %v1319
    %v2443 = vpop.f32.mrb[0].mxu0
    %v2444 = vadd.f32 0.0, %v2443
    %v2445 = vpop.f32.mrb[0].mxu0
    %v2446 = vadd.f32 0.0, %v2445
    %v2447 = vpop.f32.mrb[0].mxu0
    %v2448 = vadd.f32 0.0, %v2447
    %v2449 = vpop.f32.mrb[0].mxu0
    %v2450 = vadd.f32 0.0, %v2449
    %2451 = vmatprep.mubr.bf16.mxu0 %v1322
    %2452 = vmatmul.mubr.bf16.gmra.mrb[0].mxu0 %v1321
    %v2453 = vpop.f32.mrb[0].mxu0
    %v2454 = vadd.f32 0.0, %v2453
    %v2455 = vpop.f32.mrb[0].mxu0
    %v2456 = vadd.f32 0.0, %v2455
    %v2457 = vpop.f32.mrb[0].mxu0
    %v2458 = vadd.f32 0.0, %v2457
    %v2459 = vpop.f32.mrb[0].mxu0
    %v2460 = vadd.f32 0.0, %v2459
    %2461 = vmatprep.mubr.bf16.mxu0 %v1324
    %2462 = vmatmul.mubr.bf16.gmra.mrb[0].mxu0 %v1323
    %v2463 = vpop.f32.mrb[0].mxu0
    %v2464 = vadd.f32 0.0, %v2463
    %v2465 = vpop.f32.mrb[0].mxu0
    %v2466 = vadd.f32 0.0, %v2465
    %v2467 = vpop.f32.mrb[0].mxu0
    %v2468 = vadd.f32 0.0, %v2467
    %v2469 = vpop.f32.mrb[0].mxu0
    %v2470 = vadd.f32 0.0, %v2469
    %2471 = vmatprep.mubr.bf16.mxu0 %v1326
    %2472 = vmatmul.mubr.bf16.gmra.mrb[0].mxu0 %v1325
    %v2473 = vpop.f32.mrb[0].mxu0
    %v2474 = vadd.f32 0.0, %v2473
    %v2475 = vpop.f32.mrb[0].mxu0
    %v2476 = vadd.f32 0.0, %v2475
    %v2477 = vpop.f32.mrb[0].mxu0
    %v2478 = vadd.f32 0.0, %v2477
    %v2479 = vpop.f32.mrb[0].mxu0
    %v2480 = vadd.f32 0.0, %v2479
    %2481 = vmatprep.mubr.bf16.mxu0 %v1328
    %2482 = vmatmul.mubr.bf16.gmra.mrb[0].mxu0 %v1327
    %v2483 = vpop.f32.mrb[0].mxu0
    %v2484 = vadd.f32 0.0, %v2483
    %v2485 = vpop.f32.mrb[0].mxu0
    %v2486 = vadd.f32 0.0, %v2485
    %v2487 = vpop.f32.mrb[0].mxu0
    %v2488 = vadd.f32 0.0, %v2487
    %v2489 = vpop.f32.mrb[0].mxu0
    %v2490 = vadd.f32 0.0, %v2489
    %2491 = vmatprep.mubr.bf16.mxu0 %v1330
    %2492 = vmatmul.mubr.bf16.gmra.mrb[0].mxu0 %v1329
    %v2493 = vpop.f32.mrb[0].mxu0
    %v2494 = vadd.f32 0.0, %v2493
    %v2495 = vpop.f32.mrb[0].mxu0
    %v2496 = vadd.f32 0.0, %v2495
    %v2497 = vpop.f32.mrb[0].mxu0
    %v2498 = vadd.f32 0.0, %v2497
    %v2499 = vpop.f32.mrb[0].mxu0
    %v2500 = vadd.f32 0.0, %v2499
    %2501 = vmatprep.mubr.bf16.mxu0 %v1332
    %2502 = vmatmul.mubr.bf16.gmra.mrb[0].mxu0 %v1331
    %v2503 = vpop.f32.mrb[0].mxu0
    %v2504 = vadd.f32 0.0, %v2503
    %v2505 = vpop.f32.mrb[0].mxu0
    %v2506 = vadd.f32 0.0, %v2505
    %v2507 = vpop.f32.mrb[0].mxu0
    %v2508 = vadd.f32 0.0, %v2507
    %v2509 = vpop.f32.mrb[0].mxu0
    %v2510 = vadd.f32 0.0, %v2509
    %2511 = vmatprep.mubr.bf16.mxu0 %v1334
    %2512 = vmatmul.mubr.bf16.gmra.mrb[0].mxu0 %v1333
    %v2513 = vpop.f32.mrb[0].mxu0
    %v2514 = vadd.f32 0.0, %v2513
    %v2515 = vpop.f32.mrb[0].mxu0
    %v2516 = vadd.f32 0.0, %v2515
    %v2517 = vpop.f32.mrb[0].mxu0
    %v2518 = vadd.f32 0.0, %v2517
    %v2519 = vpop.f32.mrb[0].mxu0
    %v2520 = vadd.f32 0.0, %v2519
    %2521 = vmatprep.mubr.bf16.mxu0 %v1336
    %2522 = vmatmul.mubr.bf16.gmra.mrb[0].mxu0 %v1335
    %v2523 = vpop.f32.mrb[0].mxu0
    %v2524 = vadd.f32 0.0, %v2523
    %v2525 = vpop.f32.mrb[0].mxu0
    %v2526 = vadd.f32 0.0, %v2525
    %v2527 = vpop.f32.mrb[0].mxu0
    %v2528 = vadd.f32 0.0, %v2527
    %v2529 = vpop.f32.mrb[0].mxu0
    %v2530 = vadd.f32 0.0, %v2529
    %2531 = vmatprep.mubr.bf16.mxu0 %v1338
    %2532 = vmatmul.mubr.bf16.gmra.mrb[0].mxu0 %v1337
    %v2533 = vpop.f32.mrb[0].mxu0
    %v2534 = vadd.f32 0.0, %v2533
    %v2535 = vpop.f32.mrb[0].mxu0
    %v2536 = vadd.f32 0.0, %v2535
    %v2537 = vpop.f32.mrb[0].mxu0
    %v2538 = vadd.f32 0.0, %v2537
    %v2539 = vpop.f32.mrb[0].mxu0
    %v2540 = vadd.f32 0.0, %v2539
    %2541 = vmatprep.mubr.bf16.mxu0 %v1340
    %2542 = vmatmul.mubr.bf16.gmra.mrb[0].mxu0 %v1339
    %v2543 = vpop.f32.mrb[0].mxu0
    %v2544 = vadd.f32 0.0, %v2543
    %v2545 = vpop.f32.mrb[0].mxu0
    %v2546 = vadd.f32 0.0, %v2545
    %v2547 = vpop.f32.mrb[0].mxu0
    %v2548 = vadd.f32 0.0, %v2547
    %v2549 = vpop.f32.mrb[0].mxu0
    %v2550 = vadd.f32 0.0, %v2549
    %2551 = vmatprep.mubr.bf16.mxu0 %v1342
    %2552 = vmatmul.mubr.bf16.gmra.mrb[0].mxu0 %v1341
    %v2553 = vpop.f32.mrb[0].mxu0
    %v2554 = vadd.f32 0.0, %v2553
    %v2555 = vpop.f32.mrb[0].mxu0
    %v2556 = vadd.f32 0.0, %v2555
    %v2557 = vpop.f32.mrb[0].mxu0
    %v2558 = vadd.f32 0.0, %v2557
    %v2559 = vpop.f32.mrb[0].mxu0
    %v2560 = vadd.f32 0.0, %v2559
    %2561 = vmatprep.mubr.bf16.mxu0 %v1344
    %2562 = vmatmul.mubr.bf16.gmra.mrb[0].mxu0 %v1343
    %v2563 = vpop.f32.mrb[0].mxu0
    %v2564 = vadd.f32 0.0, %v2563
    %v2565 = vpop.f32.mrb[0].mxu0
    %v2566 = vadd.f32 0.0, %v2565
    %v2567 = vpop.f32.mrb[0].mxu0
    %v2568 = vadd.f32 0.0, %v2567
    %v2569 = vpop.f32.mrb[0].mxu0
    %v2570 = vadd.f32 0.0, %v2569
    %2571 = vmatprep.mubr.bf16.mxu0 %v1346
    %2572 = vmatmul.mubr.bf16.gmra.mrb[0].mxu0 %v1345
    %v2573 = vpop.f32.mrb[0].mxu0
    %v2574 = vadd.f32 0.0, %v2573
    %v2575 = vpop.f32.mrb[0].mxu0
    %v2576 = vadd.f32 0.0, %v2575
    %v2577 = vpop.f32.mrb[0].mxu0
    %v2578 = vadd.f32 0.0, %v2577
    %v2579 = vpop.f32.mrb[0].mxu0
    %v2580 = vadd.f32 0.0, %v2579
    %2581 = vmatprep.mubr.bf16.mxu0 %v1348
    %2582 = vmatmul.mubr.bf16.gmra.mrb[0].mxu0 %v1347
    %v2583 = vpop.f32.mrb[0].mxu0
    %v2584 = vadd.f32 0.0, %v2583
    %v2585 = vpop.f32.mrb[0].mxu0
    %v2586 = vadd.f32 0.0, %v2585
    %v2587 = vpop.f32.mrb[0].mxu0
    %v2588 = vadd.f32 0.0, %v2587
    %v2589 = vpop.f32.mrb[0].mxu0
    %v2590 = vadd.f32 0.0, %v2589
    %2591 = vmatprep.mubr.bf16.mxu0 %v1350
    %2592 = vmatmul.mubr.bf16.gmra.mrb[0].mxu0 %v1349
    %v2593 = vpop.f32.mrb[0].mxu0
    %v2594 = vadd.f32 0.0, %v2593
    %v2595 = vpop.f32.mrb[0].mxu0
    %v2596 = vadd.f32 0.0, %v2595
    %v2597 = vpop.f32.mrb[0].mxu0
    %v2598 = vadd.f32 0.0, %v2597
    %v2599 = vpop.f32.mrb[0].mxu0
    %v2600 = vadd.f32 0.0, %v2599
    %2601 = vmatprep.mubr.bf16.mxu0 %v1352
    %2602 = vmatmul.mubr.bf16.gmra.mrb[0].mxu0 %v1351
    %v2603 = vpop.f32.mrb[0].mxu0
    %v2604 = vadd.f32 0.0, %v2603
    %v2605 = vpop.f32.mrb[0].mxu0
    %v2606 = vadd.f32 0.0, %v2605
    %v2607 = vpop.f32.mrb[0].mxu0
    %v2608 = vadd.f32 0.0, %v2607
    %v2609 = vpop.f32.mrb[0].mxu0
    %v2610 = vadd.f32 0.0, %v2609
    %2611 = vmatprep.mubr.bf16.mxu0 %v1354
    %2612 = vmatmul.mubr.bf16.gmra.mrb[0].mxu0 %v1353
    %v2613 = vpop.f32.mrb[0].mxu0
    %v2614 = vadd.f32 0.0, %v2613
    %v2615 = vpop.f32.mrb[0].mxu0
    %v2616 = vadd.f32 0.0, %v2615
    %v2617 = vpop.f32.mrb[0].mxu0
    %v2618 = vadd.f32 0.0, %v2617
    %v2619 = vpop.f32.mrb[0].mxu0
    %v2620 = vadd.f32 0.0, %v2619
    %2621 = vmatprep.mubr.bf16.mxu0 %v1356
    %2622 = vmatmul.mubr.bf16.gmra.mrb[0].mxu0 %v1355
    %v2623 = vpop.f32.mrb[0].mxu0
    %v2624 = vadd.f32 0.0, %v2623
    %v2625 = vpop.f32.mrb[0].mxu0
    %v2626 = vadd.f32 0.0, %v2625
    %v2627 = vpop.f32.mrb[0].mxu0
    %v2628 = vadd.f32 0.0, %v2627
    %v2629 = vpop.f32.mrb[0].mxu0
    %v2630 = vadd.f32 0.0, %v2629
    %2631 = vmatprep.mubr.bf16.mxu0 %v1358
    %2632 = vmatmul.mubr.bf16.gmra.mrb[0].mxu0 %v1357
    %v2633 = vpop.f32.mrb[0].mxu0
    %v2634 = vadd.f32 0.0, %v2633
    %v2635 = vpop.f32.mrb[0].mxu0
    %v2636 = vadd.f32 0.0, %v2635
    %v2637 = vpop.f32.mrb[0].mxu0
    %v2638 = vadd.f32 0.0, %v2637
    %v2639 = vpop.f32.mrb[0].mxu0
    %v2640 = vadd.f32 0.0, %v2639
    %2641 = vmatprep.mubr.bf16.mxu0 %v1360
    %2642 = vmatmul.mubr.bf16.gmra.mrb[0].mxu0 %v1359
    %v2643 = vpop.f32.mrb[0].mxu0
    %v2644 = vadd.f32 0.0, %v2643
    %v2645 = vpop.f32.mrb[0].mxu0
    %v2646 = vadd.f32 0.0, %v2645
    %v2647 = vpop.f32.mrb[0].mxu0
    %v2648 = vadd.f32 0.0, %v2647
    %v2649 = vpop.f32.mrb[0].mxu0
    %v2650 = vadd.f32 0.0, %v2649
    %2651 = vmatprep.mubr.bf16.mxu0 %v1362
    %2652 = vmatmul.mubr.bf16.gmra.mrb[0].mxu0 %v1361
    %v2653 = vpop.f32.mrb[0].mxu0
    %v2654 = vadd.f32 0.0, %v2653
    %v2655 = vpop.f32.mrb[0].mxu0
    %v2656 = vadd.f32 0.0, %v2655
    %v2657 = vpop.f32.mrb[0].mxu0
    %v2658 = vadd.f32 0.0, %v2657
    %v2659 = vpop.f32.mrb[0].mxu0
    %v2660 = vadd.f32 0.0, %v2659
    %2661 = vmatprep.mubr.bf16.mxu0 %v1364
    %2662 = vmatmul.mubr.bf16.gmra.mrb[0].mxu0 %v1363
    %v2663 = vpop.f32.mrb[0].mxu0
    %v2664 = vadd.f32 0.0, %v2663
    %v2665 = vpop.f32.mrb[0].mxu0
    %v2666 = vadd.f32 0.0, %v2665
    %v2667 = vpop.f32.mrb[0].mxu0
    %v2668 = vadd.f32 0.0, %v2667
    %v2669 = vpop.f32.mrb[0].mxu0
    %v2670 = vadd.f32 0.0, %v2669
    %2671 = vmatprep.mubr.bf16.mxu0 %v1366
    %2672 = vmatmul.mubr.bf16.gmra.mrb[0].mxu0 %v1365
    %v2673 = vpop.f32.mrb[0].mxu0
    %v2674 = vadd.f32 0.0, %v2673
    %v2675 = vpop.f32.mrb[0].mxu0
    %v2676 = vadd.f32 0.0, %v2675
    %v2677 = vpop.f32.mrb[0].mxu0
    %v2678 = vadd.f32 0.0, %v2677
    %v2679 = vpop.f32.mrb[0].mxu0
    %v2680 = vadd.f32 0.0, %v2679
    %2681 = vdwg.mxu0
    %v2746 = vunpack.c.l.b16 %v1367
    %v2747 = vunpack.c.h.b16 %v1367
    %v2748 = vunpack.c.l.b16 %v1368
    %v2749 = vunpack.c.h.b16 %v1368
    %v2750 = vunpack.c.l.b16 %v1369
    %v2751 = vunpack.c.h.b16 %v1369
    %v2752 = vunpack.c.l.b16 %v1370
    %v2753 = vunpack.c.h.b16 %v1370
    %v2754 = vunpack.c.l.b16 %v1371
    %v2755 = vunpack.c.h.b16 %v1371
    %v2756 = vunpack.c.l.b16 %v1372
    %v2757 = vunpack.c.h.b16 %v1372
    %v2758 = vunpack.c.l.b16 %v1373
    %v2759 = vunpack.c.h.b16 %v1373
    %v2760 = vunpack.c.l.b16 %v1374
    %v2761 = vunpack.c.h.b16 %v1374
    %v2762 = vunpack.c.l.b16 %v1375
    %v2763 = vunpack.c.h.b16 %v1375
    %v2764 = vunpack.c.l.b16 %v1376
    %v2765 = vunpack.c.h.b16 %v1376
    %v2766 = vunpack.c.l.b16 %v1377
    %v2767 = vunpack.c.h.b16 %v1377
    %v2768 = vunpack.c.l.b16 %v1378
    %v2769 = vunpack.c.h.b16 %v1378
    %v2770 = vunpack.c.l.b16 %v1379
    %v2771 = vunpack.c.h.b16 %v1379
    %v2772 = vunpack.c.l.b16 %v1380
    %v2773 = vunpack.c.h.b16 %v1380
    %v2774 = vunpack.c.l.b16 %v1381
    %v2775 = vunpack.c.h.b16 %v1381
    %v2776 = vunpack.c.l.b16 %v1382
    %v2777 = vunpack.c.h.b16 %v1382
    %v2778 = vunpack.c.l.b16 %v1383
    %v2779 = vunpack.c.h.b16 %v1383
    %v2780 = vunpack.c.l.b16 %v1384
    %v2781 = vunpack.c.h.b16 %v1384
    %v2782 = vunpack.c.l.b16 %v1385
    %v2783 = vunpack.c.h.b16 %v1385
    %v2784 = vunpack.c.l.b16 %v1386
    %v2785 = vunpack.c.h.b16 %v1386
    %v2786 = vunpack.c.l.b16 %v1387
    %v2787 = vunpack.c.h.b16 %v1387
    %v2788 = vunpack.c.l.b16 %v1388
    %v2789 = vunpack.c.h.b16 %v1388
    %v2790 = vunpack.c.l.b16 %v1389
    %v2791 = vunpack.c.h.b16 %v1389
    %v2792 = vunpack.c.l.b16 %v1390
    %v2793 = vunpack.c.h.b16 %v1390
    %v2794 = vunpack.c.l.b16 %v1391
    %v2795 = vunpack.c.h.b16 %v1391
    %v2796 = vunpack.c.l.b16 %v1392
    %v2797 = vunpack.c.h.b16 %v1392
    %v2798 = vunpack.c.l.b16 %v1393
    %v2799 = vunpack.c.h.b16 %v1393
    %v2800 = vunpack.c.l.b16 %v1394
    %v2801 = vunpack.c.h.b16 %v1394
    %v2802 = vunpack.c.l.b16 %v1395
    %v2803 = vunpack.c.h.b16 %v1395
    %v2804 = vunpack.c.l.b16 %v1396
    %v2805 = vunpack.c.h.b16 %v1396
    %v2806 = vunpack.c.l.b16 %v1397
    %v2807 = vunpack.c.h.b16 %v1397
    %v2808 = vunpack.c.l.b16 %v1398
    %v2809 = vunpack.c.h.b16 %v1398
    %v2810 = vunpack.c.l.b16 %v1399
    %v2811 = vunpack.c.h.b16 %v1399
    %v2812 = vunpack.c.l.b16 %v1400
    %v2813 = vunpack.c.h.b16 %v1400
    %v2814 = vunpack.c.l.b16 %v1401
    %v2815 = vunpack.c.h.b16 %v1401
    %v2816 = vunpack.c.l.b16 %v1402
    %v2817 = vunpack.c.h.b16 %v1402
    %v2818 = vunpack.c.l.b16 %v1403
    %v2819 = vunpack.c.h.b16 %v1403
    %v2820 = vunpack.c.l.b16 %v1404
    %v2821 = vunpack.c.h.b16 %v1404
    %v2822 = vunpack.c.l.b16 %v1405
    %v2823 = vunpack.c.h.b16 %v1405
    %v2824 = vunpack.c.l.b16 %v1406
    %v2825 = vunpack.c.h.b16 %v1406
    %v2826 = vunpack.c.l.b16 %v1407
    %v2827 = vunpack.c.h.b16 %v1407
    %v2828 = vunpack.c.l.b16 %v1408
    %v2829 = vunpack.c.h.b16 %v1408
    %v2830 = vunpack.c.l.b16 %v1409
    %v2831 = vunpack.c.h.b16 %v1409
    %v2832 = vunpack.c.l.b16 %v1410
    %v2833 = vunpack.c.h.b16 %v1410
    %v2834 = vunpack.c.l.b16 %v1411
    %v2835 = vunpack.c.h.b16 %v1411
    %v2836 = vunpack.c.l.b16 %v1412
    %v2837 = vunpack.c.h.b16 %v1412
    %v2838 = vunpack.c.l.b16 %v1413
    %v2839 = vunpack.c.h.b16 %v1413
    %v2840 = vunpack.c.l.b16 %v1414
    %v2841 = vunpack.c.h.b16 %v1414
    %v2842 = vunpack.c.l.b16 %v1415
    %v2843 = vunpack.c.h.b16 %v1415
    %v2844 = vunpack.c.l.b16 %v1416
    %v2845 = vunpack.c.h.b16 %v1416
    %v2846 = vunpack.c.l.b16 %v1417
    %v2847 = vunpack.c.h.b16 %v1417
    %v2848 = vunpack.c.l.b16 %v1418
    %v2849 = vunpack.c.h.b16 %v1418
    %v2850 = vunpack.c.l.b16 %v1419
    %v2851 = vunpack.c.h.b16 %v1419
    %v2852 = vunpack.c.l.b16 %v1420
    %v2853 = vunpack.c.h.b16 %v1420
    %v2854 = vunpack.c.l.b16 %v1421
    %v2855 = vunpack.c.h.b16 %v1421
    %v2856 = vunpack.c.l.b16 %v1422
    %v2857 = vunpack.c.h.b16 %v1422
    %v2858 = vunpack.c.l.b16 %v1423
    %v2859 = vunpack.c.h.b16 %v1423
    %v2860 = vunpack.c.l.b16 %v1424
    %v2861 = vunpack.c.h.b16 %v1424
    %v2862 = vunpack.c.l.b16 %v1425
    %v2863 = vunpack.c.h.b16 %v1425
    %v2864 = vunpack.c.l.b16 %v1426
    %v2865 = vunpack.c.h.b16 %v1426
    %v2866 = vunpack.c.l.b16 %v1427
    %v2867 = vunpack.c.h.b16 %v1427
    %v2868 = vunpack.c.l.b16 %v1428
    %v2869 = vunpack.c.h.b16 %v1428
    %v2870 = vunpack.c.l.b16 %v1429
    %v2871 = vunpack.c.h.b16 %v1429
    %v2872 = vunpack.c.l.b16 %v1430
    %v2873 = vunpack.c.h.b16 %v1430
    %v2874 = vpack.c.b16 %v2750, %v2746
    %v2875 = vpack.c.b16 %v2751, %v2747
    %v2876 = vpack.c.b16 %v2752, %v2748
    %v2877 = vpack.c.b16 %v2753, %v2749
    %v2878 = vpack.c.b16 %v2758, %v2754
    %v2879 = vpack.c.b16 %v2759, %v2755
    %v2880 = vpack.c.b16 %v2760, %v2756
    %v2881 = vpack.c.b16 %v2761, %v2757
    %v2882 = vpack.c.b16 %v2766, %v2762
    %v2883 = vpack.c.b16 %v2767, %v2763
    %v2884 = vpack.c.b16 %v2768, %v2764
    %v2885 = vpack.c.b16 %v2769, %v2765
    %v2886 = vpack.c.b16 %v2774, %v2770
    %v2887 = vpack.c.b16 %v2775, %v2771
    %v2888 = vpack.c.b16 %v2776, %v2772
    %v2889 = vpack.c.b16 %v2777, %v2773
    %v2890 = vpack.c.b16 %v2782, %v2778
    %v2891 = vpack.c.b16 %v2783, %v2779
    %v2892 = vpack.c.b16 %v2784, %v2780
    %v2893 = vpack.c.b16 %v2785, %v2781
    %v2894 = vpack.c.b16 %v2790, %v2786
    %v2895 = vpack.c.b16 %v2791, %v2787
    %v2896 = vpack.c.b16 %v2792, %v2788
    %v2897 = vpack.c.b16 %v2793, %v2789
    %v2898 = vpack.c.b16 %v2798, %v2794
    %v2899 = vpack.c.b16 %v2799, %v2795
    %v2900 = vpack.c.b16 %v2800, %v2796
    %v2901 = vpack.c.b16 %v2801, %v2797
    %v2902 = vpack.c.b16 %v2806, %v2802
    %v2903 = vpack.c.b16 %v2807, %v2803
    %v2904 = vpack.c.b16 %v2808, %v2804
    %v2905 = vpack.c.b16 %v2809, %v2805
    %v2906 = vpack.c.b16 %v2814, %v2810
    %v2907 = vpack.c.b16 %v2815, %v2811
    %v2908 = vpack.c.b16 %v2816, %v2812
    %v2909 = vpack.c.b16 %v2817, %v2813
    %v2910 = vpack.c.b16 %v2822, %v2818
    %v2911 = vpack.c.b16 %v2823, %v2819
    %v2912 = vpack.c.b16 %v2824, %v2820
    %v2913 = vpack.c.b16 %v2825, %v2821
    %v2914 = vpack.c.b16 %v2830, %v2826
    %v2915 = vpack.c.b16 %v2831, %v2827
    %v2916 = vpack.c.b16 %v2832, %v2828
    %v2917 = vpack.c.b16 %v2833, %v2829
    %v2918 = vpack.c.b16 %v2838, %v2834
    %v2919 = vpack.c.b16 %v2839, %v2835
    %v2920 = vpack.c.b16 %v2840, %v2836
    %v2921 = vpack.c.b16 %v2841, %v2837
    %v2922 = vpack.c.b16 %v2846, %v2842
    %v2923 = vpack.c.b16 %v2847, %v2843
    %v2924 = vpack.c.b16 %v2848, %v2844
    %v2925 = vpack.c.b16 %v2849, %v2845
    %v2926 = vpack.c.b16 %v2854, %v2850
    %v2927 = vpack.c.b16 %v2855, %v2851
    %v2928 = vpack.c.b16 %v2856, %v2852
    %v2929 = vpack.c.b16 %v2857, %v2853
    %v2930 = vpack.c.b16 %v2862, %v2858
    %v2931 = vpack.c.b16 %v2863, %v2859
    %v2932 = vpack.c.b16 %v2864, %v2860
    %v2933 = vpack.c.b16 %v2865, %v2861
    %v2934 = vpack.c.b16 %v2870, %v2866
    %v2935 = vpack.c.b16 %v2871, %v2867
    %v2936 = vpack.c.b16 %v2872, %v2868
    %v2937 = vpack.c.b16 %v2873, %v2869
    %3002 = vmatprep.subr.bf16.mxu0 %v2875
    %3003 = vmatpush1.bf16.msra.mxu0 %v2874
    %3004 = vmatprep.subr.bf16.mxu0 %v2879
    %3005 = vmatpush1.bf16.msra.mxu0 %v2878
    %3006 = vmatprep.subr.bf16.mxu0 %v2883
    %3007 = vmatpush1.bf16.msra.mxu0 %v2882
    %3008 = vmatprep.subr.bf16.mxu0 %v2887
    %3009 = vmatpush1.bf16.msra.mxu0 %v2886
    %3010 = vmatprep.subr.bf16.mxu0 %v2891
    %3011 = vmatpush1.bf16.msra.mxu0 %v2890
    %3012 = vmatprep.subr.bf16.mxu0 %v2895
    %3013 = vmatpush1.bf16.msra.mxu0 %v2894
    %3014 = vmatprep.subr.bf16.mxu0 %v2899
    %3015 = vmatpush1.bf16.msra.mxu0 %v2898
    %3016 = vmatprep.subr.bf16.mxu0 %v2903
    %3017 = vmatpush1.bf16.msra.mxu0 %v2902
    %3018 = vmatprep.subr.bf16.mxu0 %v2907
    %3019 = vmatpush1.bf16.msra.mxu0 %v2906
    %3020 = vmatprep.subr.bf16.mxu0 %v2911
    %3021 = vmatpush1.bf16.msra.mxu0 %v2910
    %3022 = vmatprep.subr.bf16.mxu0 %v2915
    %3023 = vmatpush1.bf16.msra.mxu0 %v2914
    %3024 = vmatprep.subr.bf16.mxu0 %v2919
    %3025 = vmatpush1.bf16.msra.mxu0 %v2918
    %3026 = vmatprep.subr.bf16.mxu0 %v2923
    %3027 = vmatpush1.bf16.msra.mxu0 %v2922
    %3028 = vmatprep.subr.bf16.mxu0 %v2927
    %3029 = vmatpush1.bf16.msra.mxu0 %v2926
    %3030 = vmatprep.subr.bf16.mxu0 %v2931
    %3031 = vmatpush1.bf16.msra.mxu0 %v2930
    %3032 = vmatprep.subr.bf16.mxu0 %v2935
    %3033 = vmatpush1.bf16.msra.mxu0 %v2934
    %3034 = vmatprep.mubr.bf16.mxu0 %v1272
    %3035 = vmatmul.mubr.bf16.gmra.mrb[0].mxu0 %v1271
    %v3036 = vpop.f32.mrb[0].mxu0
    %v3037 = vadd.f32 %v1851, %v3036
    %v3038 = vpop.f32.mrb[0].mxu0
    %v3039 = vadd.f32 %v1853, %v3038
    %v3040 = vpop.f32.mrb[0].mxu0
    %v3041 = vadd.f32 %v1855, %v3040
    %v3042 = vpop.f32.mrb[0].mxu0
    %v3043 = vadd.f32 %v1857, %v3042
    %3044 = vmatprep.mubr.bf16.mxu0 %v1274
    %3045 = vmatmul.mubr.bf16.gmra.mrb[0].mxu0 %v1273
    %v3046 = vpop.f32.mrb[0].mxu0
    %v3047 = vadd.f32 %v1861, %v3046
    %v3048 = vpop.f32.mrb[0].mxu0
    %v3049 = vadd.f32 %v1863, %v3048
    %v3050 = vpop.f32.mrb[0].mxu0
    %v3051 = vadd.f32 %v1865, %v3050
    %v3052 = vpop.f32.mrb[0].mxu0
    %v3053 = vadd.f32 %v1867, %v3052
    %3054 = vmatprep.mubr.bf16.mxu0 %v1276
    %3055 = vmatmul.mubr.bf16.gmra.mrb[0].mxu0 %v1275
    %v3056 = vpop.f32.mrb[0].mxu0
    %v3057 = vadd.f32 %v1871, %v3056
    %v3058 = vpop.f32.mrb[0].mxu0
    %v3059 = vadd.f32 %v1873, %v3058
    %v3060 = vpop.f32.mrb[0].mxu0
    %v3061 = vadd.f32 %v1875, %v3060
    %v3062 = vpop.f32.mrb[0].mxu0
    %v3063 = vadd.f32 %v1877, %v3062
    %3064 = vmatprep.mubr.bf16.mxu0 %v1278
    %3065 = vmatmul.mubr.bf16.gmra.mrb[0].mxu0 %v1277
    %v3066 = vpop.f32.mrb[0].mxu0
    %v3067 = vadd.f32 %v1881, %v3066
    %v3068 = vpop.f32.mrb[0].mxu0
    %v3069 = vadd.f32 %v1883, %v3068
    %v3070 = vpop.f32.mrb[0].mxu0
    %v3071 = vadd.f32 %v1885, %v3070
    %v3072 = vpop.f32.mrb[0].mxu0
    %v3073 = vadd.f32 %v1887, %v3072
    %3074 = vmatprep.mubr.bf16.mxu0 %v1280
    %3075 = vmatmul.mubr.bf16.gmra.mrb[0].mxu0 %v1279
    %v3076 = vpop.f32.mrb[0].mxu0
    %v3077 = vadd.f32 %v1891, %v3076
    %v3078 = vpop.f32.mrb[0].mxu0
    %v3079 = vadd.f32 %v1893, %v3078
    %v3080 = vpop.f32.mrb[0].mxu0
    %v3081 = vadd.f32 %v1895, %v3080
    %v3082 = vpop.f32.mrb[0].mxu0
    %v3083 = vadd.f32 %v1897, %v3082
    %3084 = vmatprep.mubr.bf16.mxu0 %v1282
    %3085 = vmatmul.mubr.bf16.gmra.mrb[0].mxu0 %v1281
    %v3086 = vpop.f32.mrb[0].mxu0
    %v3087 = vadd.f32 %v1901, %v3086
    %v3088 = vpop.f32.mrb[0].mxu0
    %v3089 = vadd.f32 %v1903, %v3088
    %v3090 = vpop.f32.mrb[0].mxu0
    %v3091 = vadd.f32 %v1905, %v3090
    %v3092 = vpop.f32.mrb[0].mxu0
    %v3093 = vadd.f32 %v1907, %v3092
    %3094 = vmatprep.mubr.bf16.mxu0 %v1284
    %3095 = vmatmul.mubr.bf16.gmra.mrb[0].mxu0 %v1283
    %v3096 = vpop.f32.mrb[0].mxu0
    %v3097 = vadd.f32 %v1911, %v3096
    %v3098 = vpop.f32.mrb[0].mxu0
    %v3099 = vadd.f32 %v1913, %v3098
    %v3100 = vpop.f32.mrb[0].mxu0
    %v3101 = vadd.f32 %v1915, %v3100
    %v3102 = vpop.f32.mrb[0].mxu0
    %v3103 = vadd.f32 %v1917, %v3102
    %3104 = vmatprep.mubr.bf16.mxu0 %v1286
    %3105 = vmatmul.mubr.bf16.gmra.mrb[0].mxu0 %v1285
    %v3106 = vpop.f32.mrb[0].mxu0
    %v3107 = vadd.f32 %v1921, %v3106
    %v3108 = vpop.f32.mrb[0].mxu0
    %v3109 = vadd.f32 %v1923, %v3108
    %v3110 = vpop.f32.mrb[0].mxu0
    %v3111 = vadd.f32 %v1925, %v3110
    %v3112 = vpop.f32.mrb[0].mxu0
    %v3113 = vadd.f32 %v1927, %v3112
    %3114 = vmatprep.mubr.bf16.mxu0 %v1288
    %3115 = vmatmul.mubr.bf16.gmra.mrb[0].mxu0 %v1287
    %v3116 = vpop.f32.mrb[0].mxu0
    %v3117 = vadd.f32 %v1931, %v3116
    %v3118 = vpop.f32.mrb[0].mxu0
    %v3119 = vadd.f32 %v1933, %v3118
    %v3120 = vpop.f32.mrb[0].mxu0
    %v3121 = vadd.f32 %v1935, %v3120
    %v3122 = vpop.f32.mrb[0].mxu0
    %v3123 = vadd.f32 %v1937, %v3122
    %3124 = vmatprep.mubr.bf16.mxu0 %v1290
    %3125 = vmatmul.mubr.bf16.gmra.mrb[0].mxu0 %v1289
    %v3126 = vpop.f32.mrb[0].mxu0
    %v3127 = vadd.f32 %v1941, %v3126
    %v3128 = vpop.f32.mrb[0].mxu0
    %v3129 = vadd.f32 %v1943, %v3128
    %v3130 = vpop.f32.mrb[0].mxu0
    %v3131 = vadd.f32 %v1945, %v3130
    %v3132 = vpop.f32.mrb[0].mxu0
    %v3133 = vadd.f32 %v1947, %v3132
    %3134 = vmatprep.mubr.bf16.mxu0 %v1292
    %3135 = vmatmul.mubr.bf16.gmra.mrb[0].mxu0 %v1291
    %v3136 = vpop.f32.mrb[0].mxu0
    %v3137 = vadd.f32 %v1951, %v3136
    %v3138 = vpop.f32.mrb[0].mxu0
    %v3139 = vadd.f32 %v1953, %v3138
    %v3140 = vpop.f32.mrb[0].mxu0
    %v3141 = vadd.f32 %v1955, %v3140
    %v3142 = vpop.f32.mrb[0].mxu0
    %v3143 = vadd.f32 %v1957, %v3142
    %3144 = vmatprep.mubr.bf16.mxu0 %v1294
    %3145 = vmatmul.mubr.bf16.gmra.mrb[0].mxu0 %v1293
    %v3146 = vpop.f32.mrb[0].mxu0
    %v3147 = vadd.f32 %v1961, %v3146
    %v3148 = vpop.f32.mrb[0].mxu0
    %v3149 = vadd.f32 %v1963, %v3148
    %v3150 = vpop.f32.mrb[0].mxu0
    %v3151 = vadd.f32 %v1965, %v3150
    %v3152 = vpop.f32.mrb[0].mxu0
    %v3153 = vadd.f32 %v1967, %v3152
    %3154 = vmatprep.mubr.bf16.mxu0 %v1296
    %3155 = vmatmul.mubr.bf16.gmra.mrb[0].mxu0 %v1295
    %v3156 = vpop.f32.mrb[0].mxu0
    %v3157 = vadd.f32 %v1971, %v3156
    %v3158 = vpop.f32.mrb[0].mxu0
    %v3159 = vadd.f32 %v1973, %v3158
    %v3160 = vpop.f32.mrb[0].mxu0
    %v3161 = vadd.f32 %v1975, %v3160
    %v3162 = vpop.f32.mrb[0].mxu0
    %v3163 = vadd.f32 %v1977, %v3162
    %3164 = vmatprep.mubr.bf16.mxu0 %v1298
    %3165 = vmatmul.mubr.bf16.gmra.mrb[0].mxu0 %v1297
    %v3166 = vpop.f32.mrb[0].mxu0
    %v3167 = vadd.f32 %v1981, %v3166
    %v3168 = vpop.f32.mrb[0].mxu0
    %v3169 = vadd.f32 %v1983, %v3168
    %v3170 = vpop.f32.mrb[0].mxu0
    %v3171 = vadd.f32 %v1985, %v3170
    %v3172 = vpop.f32.mrb[0].mxu0
    %v3173 = vadd.f32 %v1987, %v3172
    %3174 = vmatprep.mubr.bf16.mxu0 %v1300
    %3175 = vmatmul.mubr.bf16.gmra.mrb[0].mxu0 %v1299
    %v3176 = vpop.f32.mrb[0].mxu0
    %v3177 = vadd.f32 %v1991, %v3176
    %v3178 = vpop.f32.mrb[0].mxu0
    %v3179 = vadd.f32 %v1993, %v3178
    %v3180 = vpop.f32.mrb[0].mxu0
    %v3181 = vadd.f32 %v1995, %v3180
    %v3182 = vpop.f32.mrb[0].mxu0
    %v3183 = vadd.f32 %v1997, %v3182
    %3184 = vmatprep.mubr.bf16.mxu0 %v1302
    %3185 = vmatmul.mubr.bf16.gmra.mrb[0].mxu0 %v1301
    %v3186 = vpop.f32.mrb[0].mxu0
    %v3187 = vadd.f32 %v2001, %v3186
    %v3188 = vpop.f32.mrb[0].mxu0
    %v3189 = vadd.f32 %v2003, %v3188
    %v3190 = vpop.f32.mrb[0].mxu0
    %v3191 = vadd.f32 %v2005, %v3190
    %v3192 = vpop.f32.mrb[0].mxu0
    %v3193 = vadd.f32 %v2007, %v3192
    %3194 = vmatprep.mubr.bf16.mxu0 %v1304
    %3195 = vmatmul.mubr.bf16.gmra.mrb[0].mxu0 %v1303
    %v3196 = vpop.f32.mrb[0].mxu0
    %v3197 = vadd.f32 %v2011, %v3196
    %v3198 = vpop.f32.mrb[0].mxu0
    %v3199 = vadd.f32 %v2013, %v3198
    %v3200 = vpop.f32.mrb[0].mxu0
    %v3201 = vadd.f32 %v2015, %v3200
    %v3202 = vpop.f32.mrb[0].mxu0
    %v3203 = vadd.f32 %v2017, %v3202
    %3204 = vmatprep.mubr.bf16.mxu0 %v1306
    %3205 = vmatmul.mubr.bf16.gmra.mrb[0].mxu0 %v1305
    %v3206 = vpop.f32.mrb[0].mxu0
    %v3207 = vadd.f32 %v2021, %v3206
    %v3208 = vpop.f32.mrb[0].mxu0
    %v3209 = vadd.f32 %v2023, %v3208
    %v3210 = vpop.f32.mrb[0].mxu0
    %v3211 = vadd.f32 %v2025, %v3210
    %v3212 = vpop.f32.mrb[0].mxu0
    %v3213 = vadd.f32 %v2027, %v3212
    %3214 = vmatprep.mubr.bf16.mxu0 %v1308
    %3215 = vmatmul.mubr.bf16.gmra.mrb[0].mxu0 %v1307
    %v3216 = vpop.f32.mrb[0].mxu0
    %v3217 = vadd.f32 %v2031, %v3216
    %v3218 = vpop.f32.mrb[0].mxu0
    %v3219 = vadd.f32 %v2033, %v3218
    %v3220 = vpop.f32.mrb[0].mxu0
    %v3221 = vadd.f32 %v2035, %v3220
    %v3222 = vpop.f32.mrb[0].mxu0
    %v3223 = vadd.f32 %v2037, %v3222
    %3224 = vmatprep.mubr.bf16.mxu0 %v1310
    %3225 = vmatmul.mubr.bf16.gmra.mrb[0].mxu0 %v1309
    %v3226 = vpop.f32.mrb[0].mxu0
    %v3227 = vadd.f32 %v2041, %v3226
    %v3228 = vpop.f32.mrb[0].mxu0
    %v3229 = vadd.f32 %v2043, %v3228
    %v3230 = vpop.f32.mrb[0].mxu0
    %v3231 = vadd.f32 %v2045, %v3230
    %v3232 = vpop.f32.mrb[0].mxu0
    %v3233 = vadd.f32 %v2047, %v3232
    %3234 = vmatprep.mubr.bf16.mxu0 %v1312
    %3235 = vmatmul.mubr.bf16.gmra.mrb[0].mxu0 %v1311
    %v3236 = vpop.f32.mrb[0].mxu0
    %v3237 = vadd.f32 %v2051, %v3236
    %v3238 = vpop.f32.mrb[0].mxu0
    %v3239 = vadd.f32 %v2053, %v3238
    %v3240 = vpop.f32.mrb[0].mxu0
    %v3241 = vadd.f32 %v2055, %v3240
    %v3242 = vpop.f32.mrb[0].mxu0
    %v3243 = vadd.f32 %v2057, %v3242
    %3244 = vmatprep.mubr.bf16.mxu0 %v1314
    %3245 = vmatmul.mubr.bf16.gmra.mrb[0].mxu0 %v1313
    %v3246 = vpop.f32.mrb[0].mxu0
    %v3247 = vadd.f32 %v2061, %v3246
    %v3248 = vpop.f32.mrb[0].mxu0
    %v3249 = vadd.f32 %v2063, %v3248
    %v3250 = vpop.f32.mrb[0].mxu0
    %v3251 = vadd.f32 %v2065, %v3250
    %v3252 = vpop.f32.mrb[0].mxu0
    %v3253 = vadd.f32 %v2067, %v3252
    %3254 = vmatprep.mubr.bf16.mxu0 %v1316
    %3255 = vmatmul.mubr.bf16.gmra.mrb[0].mxu0 %v1315
    %v3256 = vpop.f32.mrb[0].mxu0
    %v3257 = vadd.f32 %v2071, %v3256
    %v3258 = vpop.f32.mrb[0].mxu0
    %v3259 = vadd.f32 %v2073, %v3258
    %v3260 = vpop.f32.mrb[0].mxu0
    %v3261 = vadd.f32 %v2075, %v3260
    %v3262 = vpop.f32.mrb[0].mxu0
    %v3263 = vadd.f32 %v2077, %v3262
    %3264 = vmatprep.mubr.bf16.mxu0 %v1318
    %3265 = vmatmul.mubr.bf16.gmra.mrb[0].mxu0 %v1317
    %v3266 = vpop.f32.mrb[0].mxu0
    %v3267 = vadd.f32 %v2081, %v3266
    %v3268 = vpop.f32.mrb[0].mxu0
    %v3269 = vadd.f32 %v2083, %v3268
    %v3270 = vpop.f32.mrb[0].mxu0
    %v3271 = vadd.f32 %v2085, %v3270
    %v3272 = vpop.f32.mrb[0].mxu0
    %v3273 = vadd.f32 %v2087, %v3272
    %3274 = vmatprep.mubr.bf16.mxu0 %v1320
    %3275 = vmatmul.mubr.bf16.gmra.mrb[0].mxu0 %v1319
    %v3276 = vpop.f32.mrb[0].mxu0
    %v3277 = vadd.f32 %v2091, %v3276
    %v3278 = vpop.f32.mrb[0].mxu0
    %v3279 = vadd.f32 %v2093, %v3278
    %v3280 = vpop.f32.mrb[0].mxu0
    %v3281 = vadd.f32 %v2095, %v3280
    %v3282 = vpop.f32.mrb[0].mxu0
    %v3283 = vadd.f32 %v2097, %v3282
    %3284 = vmatprep.mubr.bf16.mxu0 %v1322
    %3285 = vmatmul.mubr.bf16.gmra.mrb[0].mxu0 %v1321
    %v3286 = vpop.f32.mrb[0].mxu0
    %v3287 = vadd.f32 %v2101, %v3286
    %v3288 = vpop.f32.mrb[0].mxu0
    %v3289 = vadd.f32 %v2103, %v3288
    %v3290 = vpop.f32.mrb[0].mxu0
    %v3291 = vadd.f32 %v2105, %v3290
    %v3292 = vpop.f32.mrb[0].mxu0
    %v3293 = vadd.f32 %v2107, %v3292
    %3294 = vmatprep.mubr.bf16.mxu0 %v1324
    %3295 = vmatmul.mubr.bf16.gmra.mrb[0].mxu0 %v1323
    %v3296 = vpop.f32.mrb[0].mxu0
    %v3297 = vadd.f32 %v2111, %v3296
    %v3298 = vpop.f32.mrb[0].mxu0
    %v3299 = vadd.f32 %v2113, %v3298
    %v3300 = vpop.f32.mrb[0].mxu0
    %v3301 = vadd.f32 %v2115, %v3300
    %v3302 = vpop.f32.mrb[0].mxu0
    %v3303 = vadd.f32 %v2117, %v3302
    %3304 = vmatprep.mubr.bf16.mxu0 %v1326
    %3305 = vmatmul.mubr.bf16.gmra.mrb[0].mxu0 %v1325
    %v3306 = vpop.f32.mrb[0].mxu0
    %v3307 = vadd.f32 %v2121, %v3306
    %v3308 = vpop.f32.mrb[0].mxu0
    %v3309 = vadd.f32 %v2123, %v3308
    %v3310 = vpop.f32.mrb[0].mxu0
    %v3311 = vadd.f32 %v2125, %v3310
    %v3312 = vpop.f32.mrb[0].mxu0
    %v3313 = vadd.f32 %v2127, %v3312
    %3314 = vmatprep.mubr.bf16.mxu0 %v1328
    %3315 = vmatmul.mubr.bf16.gmra.mrb[0].mxu0 %v1327
    %v3316 = vpop.f32.mrb[0].mxu0
    %v3317 = vadd.f32 %v2131, %v3316
    %v3318 = vpop.f32.mrb[0].mxu0
    %v3319 = vadd.f32 %v2133, %v3318
    %v3320 = vpop.f32.mrb[0].mxu0
    %v3321 = vadd.f32 %v2135, %v3320
    %v3322 = vpop.f32.mrb[0].mxu0
    %v3323 = vadd.f32 %v2137, %v3322
    %3324 = vmatprep.mubr.bf16.mxu0 %v1330
    %3325 = vmatmul.mubr.bf16.gmra.mrb[0].mxu0 %v1329
    %v3326 = vpop.f32.mrb[0].mxu0
    %v3327 = vadd.f32 %v2141, %v3326
    %v3328 = vpop.f32.mrb[0].mxu0
    %v3329 = vadd.f32 %v2143, %v3328
    %v3330 = vpop.f32.mrb[0].mxu0
    %v3331 = vadd.f32 %v2145, %v3330
    %v3332 = vpop.f32.mrb[0].mxu0
    %v3333 = vadd.f32 %v2147, %v3332
    %3334 = vmatprep.mubr.bf16.mxu0 %v1332
    %3335 = vmatmul.mubr.bf16.gmra.mrb[0].mxu0 %v1331
    %v3336 = vpop.f32.mrb[0].mxu0
    %v3337 = vadd.f32 %v2151, %v3336
    %v3338 = vpop.f32.mrb[0].mxu0
    %v3339 = vadd.f32 %v2153, %v3338
    %v3340 = vpop.f32.mrb[0].mxu0
    %v3341 = vadd.f32 %v2155, %v3340
    %v3342 = vpop.f32.mrb[0].mxu0
    %v3343 = vadd.f32 %v2157, %v3342
    %3344 = vmatprep.mubr.bf16.mxu0 %v1334
    %3345 = vmatmul.mubr.bf16.gmra.mrb[0].mxu0 %v1333
    %v3346 = vpop.f32.mrb[0].mxu0
    %v3347 = vadd.f32 %v2161, %v3346
    %v3348 = vpop.f32.mrb[0].mxu0
    %v3349 = vadd.f32 %v2163, %v3348
    %v3350 = vpop.f32.mrb[0].mxu0
    %v3351 = vadd.f32 %v2165, %v3350
    %v3352 = vpop.f32.mrb[0].mxu0
    %v3353 = vadd.f32 %v2167, %v3352
    %3354 = vmatprep.mubr.bf16.mxu0 %v1336
    %3355 = vmatmul.mubr.bf16.gmra.mrb[0].mxu0 %v1335
    %v3356 = vpop.f32.mrb[0].mxu0
    %v3357 = vadd.f32 %v2171, %v3356
    %v3358 = vpop.f32.mrb[0].mxu0
    %v3359 = vadd.f32 %v2173, %v3358
    %v3360 = vpop.f32.mrb[0].mxu0
    %v3361 = vadd.f32 %v2175, %v3360
    %v3362 = vpop.f32.mrb[0].mxu0
    %v3363 = vadd.f32 %v2177, %v3362
    %3364 = vmatprep.mubr.bf16.mxu0 %v1338
    %3365 = vmatmul.mubr.bf16.gmra.mrb[0].mxu0 %v1337
    %v3366 = vpop.f32.mrb[0].mxu0
    %v3367 = vadd.f32 %v2181, %v3366
    %v3368 = vpop.f32.mrb[0].mxu0
    %v3369 = vadd.f32 %v2183, %v3368
    %v3370 = vpop.f32.mrb[0].mxu0
    %v3371 = vadd.f32 %v2185, %v3370
    %v3372 = vpop.f32.mrb[0].mxu0
    %v3373 = vadd.f32 %v2187, %v3372
    %3374 = vmatprep.mubr.bf16.mxu0 %v1340
    %3375 = vmatmul.mubr.bf16.gmra.mrb[0].mxu0 %v1339
    %v3376 = vpop.f32.mrb[0].mxu0
    %v3377 = vadd.f32 %v2191, %v3376
    %v3378 = vpop.f32.mrb[0].mxu0
    %v3379 = vadd.f32 %v2193, %v3378
    %v3380 = vpop.f32.mrb[0].mxu0
    %v3381 = vadd.f32 %v2195, %v3380
    %v3382 = vpop.f32.mrb[0].mxu0
    %v3383 = vadd.f32 %v2197, %v3382
    %3384 = vmatprep.mubr.bf16.mxu0 %v1342
    %3385 = vmatmul.mubr.bf16.gmra.mrb[0].mxu0 %v1341
    %v3386 = vpop.f32.mrb[0].mxu0
    %v3387 = vadd.f32 %v2201, %v3386
    %v3388 = vpop.f32.mrb[0].mxu0
    %v3389 = vadd.f32 %v2203, %v3388
    %v3390 = vpop.f32.mrb[0].mxu0
    %v3391 = vadd.f32 %v2205, %v3390
    %v3392 = vpop.f32.mrb[0].mxu0
    %v3393 = vadd.f32 %v2207, %v3392
    %3394 = vmatprep.mubr.bf16.mxu0 %v1344
    %3395 = vmatmul.mubr.bf16.gmra.mrb[0].mxu0 %v1343
    %v3396 = vpop.f32.mrb[0].mxu0
    %v3397 = vadd.f32 %v2211, %v3396
    %v3398 = vpop.f32.mrb[0].mxu0
    %v3399 = vadd.f32 %v2213, %v3398
    %v3400 = vpop.f32.mrb[0].mxu0
    %v3401 = vadd.f32 %v2215, %v3400
    %v3402 = vpop.f32.mrb[0].mxu0
    %v3403 = vadd.f32 %v2217, %v3402
    %3404 = vmatprep.mubr.bf16.mxu0 %v1346
    %3405 = vmatmul.mubr.bf16.gmra.mrb[0].mxu0 %v1345
    %v3406 = vpop.f32.mrb[0].mxu0
    %v3407 = vadd.f32 %v2221, %v3406
    %v3408 = vpop.f32.mrb[0].mxu0
    %v3409 = vadd.f32 %v2223, %v3408
    %v3410 = vpop.f32.mrb[0].mxu0
    %v3411 = vadd.f32 %v2225, %v3410
    %v3412 = vpop.f32.mrb[0].mxu0
    %v3413 = vadd.f32 %v2227, %v3412
    %3414 = vmatprep.mubr.bf16.mxu0 %v1348
    %3415 = vmatmul.mubr.bf16.gmra.mrb[0].mxu0 %v1347
    %v3416 = vpop.f32.mrb[0].mxu0
    %v3417 = vadd.f32 %v2231, %v3416
    %v3418 = vpop.f32.mrb[0].mxu0
    %v3419 = vadd.f32 %v2233, %v3418
    %v3420 = vpop.f32.mrb[0].mxu0
    %v3421 = vadd.f32 %v2235, %v3420
    %v3422 = vpop.f32.mrb[0].mxu0
    %v3423 = vadd.f32 %v2237, %v3422
    %3424 = vmatprep.mubr.bf16.mxu0 %v1350
    %3425 = vmatmul.mubr.bf16.gmra.mrb[0].mxu0 %v1349
    %v3426 = vpop.f32.mrb[0].mxu0
    %v3427 = vadd.f32 %v2241, %v3426
    %v3428 = vpop.f32.mrb[0].mxu0
    %v3429 = vadd.f32 %v2243, %v3428
    %v3430 = vpop.f32.mrb[0].mxu0
    %v3431 = vadd.f32 %v2245, %v3430
    %v3432 = vpop.f32.mrb[0].mxu0
    %v3433 = vadd.f32 %v2247, %v3432
    %3434 = vdwg.mxu0
    %3435 = vmatprep.subr.bf16.mxu0 %v2877
    %3436 = vmatpush1.bf16.msra.mxu0 %v2876
    %3437 = vmatprep.subr.bf16.mxu0 %v2881
    %3438 = vmatpush1.bf16.msra.mxu0 %v2880
    %3439 = vmatprep.subr.bf16.mxu0 %v2885
    %3440 = vmatpush1.bf16.msra.mxu0 %v2884
    %3441 = vmatprep.subr.bf16.mxu0 %v2889
    %3442 = vmatpush1.bf16.msra.mxu0 %v2888
    %3443 = vmatprep.subr.bf16.mxu0 %v2893
    %3444 = vmatpush1.bf16.msra.mxu0 %v2892
    %3445 = vmatprep.subr.bf16.mxu0 %v2897
    %3446 = vmatpush1.bf16.msra.mxu0 %v2896
    %3447 = vmatprep.subr.bf16.mxu0 %v2901
    %3448 = vmatpush1.bf16.msra.mxu0 %v2900
    %3449 = vmatprep.subr.bf16.mxu0 %v2905
    %3450 = vmatpush1.bf16.msra.mxu0 %v2904
    %3451 = vmatprep.subr.bf16.mxu0 %v2909
    %3452 = vmatpush1.bf16.msra.mxu0 %v2908
    %3453 = vmatprep.subr.bf16.mxu0 %v2913
    %3454 = vmatpush1.bf16.msra.mxu0 %v2912
    %3455 = vmatprep.subr.bf16.mxu0 %v2917
    %3456 = vmatpush1.bf16.msra.mxu0 %v2916
    %3457 = vmatprep.subr.bf16.mxu0 %v2921
    %3458 = vmatpush1.bf16.msra.mxu0 %v2920
    %3459 = vmatprep.subr.bf16.mxu0 %v2925
    %3460 = vmatpush1.bf16.msra.mxu0 %v2924
    %3461 = vmatprep.subr.bf16.mxu0 %v2929
    %3462 = vmatpush1.bf16.msra.mxu0 %v2928
    %3463 = vmatprep.subr.bf16.mxu0 %v2933
    %3464 = vmatpush1.bf16.msra.mxu0 %v2932
    %3465 = vmatprep.subr.bf16.mxu0 %v2937
    %3466 = vmatpush1.bf16.msra.mxu0 %v2936
    %3467 = vmatprep.mubr.bf16.mxu0 %v1272
    %3468 = vmatmul.mubr.bf16.gmra.mrb[0].mxu0 %v1271
    %v3469 = vpop.f32.mrb[0].mxu0
    %v3470 = vadd.f32 %v2284, %v3469
    %v3471 = vpop.f32.mrb[0].mxu0
    %v3472 = vadd.f32 %v2286, %v3471
    %v3473 = vpop.f32.mrb[0].mxu0
    %v3474 = vadd.f32 %v2288, %v3473
    %v3475 = vpop.f32.mrb[0].mxu0
    %v3476 = vadd.f32 %v2290, %v3475
    %3477 = vmatprep.mubr.bf16.mxu0 %v1274
    %3478 = vmatmul.mubr.bf16.gmra.mrb[0].mxu0 %v1273
    %v3479 = vpop.f32.mrb[0].mxu0
    %v3480 = vadd.f32 %v2294, %v3479
    %v3481 = vpop.f32.mrb[0].mxu0
    %v3482 = vadd.f32 %v2296, %v3481
    %v3483 = vpop.f32.mrb[0].mxu0
    %v3484 = vadd.f32 %v2298, %v3483
    %v3485 = vpop.f32.mrb[0].mxu0
    %v3486 = vadd.f32 %v2300, %v3485
    %3487 = vmatprep.mubr.bf16.mxu0 %v1276
    %3488 = vmatmul.mubr.bf16.gmra.mrb[0].mxu0 %v1275
    %v3489 = vpop.f32.mrb[0].mxu0
    %v3490 = vadd.f32 %v2304, %v3489
    %v3491 = vpop.f32.mrb[0].mxu0
    %v3492 = vadd.f32 %v2306, %v3491
    %v3493 = vpop.f32.mrb[0].mxu0
    %v3494 = vadd.f32 %v2308, %v3493
    %v3495 = vpop.f32.mrb[0].mxu0
    %v3496 = vadd.f32 %v2310, %v3495
    %3497 = vmatprep.mubr.bf16.mxu0 %v1278
    %3498 = vmatmul.mubr.bf16.gmra.mrb[0].mxu0 %v1277
    %v3499 = vpop.f32.mrb[0].mxu0
    %v3500 = vadd.f32 %v2314, %v3499
    %v3501 = vpop.f32.mrb[0].mxu0
    %v3502 = vadd.f32 %v2316, %v3501
    %v3503 = vpop.f32.mrb[0].mxu0
    %v3504 = vadd.f32 %v2318, %v3503
    %v3505 = vpop.f32.mrb[0].mxu0
    %v3506 = vadd.f32 %v2320, %v3505
    %3507 = vmatprep.mubr.bf16.mxu0 %v1280
    %3508 = vmatmul.mubr.bf16.gmra.mrb[0].mxu0 %v1279
    %v3509 = vpop.f32.mrb[0].mxu0
    %v3510 = vadd.f32 %v2324, %v3509
    %v3511 = vpop.f32.mrb[0].mxu0
    %v3512 = vadd.f32 %v2326, %v3511
    %v3513 = vpop.f32.mrb[0].mxu0
    %v3514 = vadd.f32 %v2328, %v3513
    %v3515 = vpop.f32.mrb[0].mxu0
    %v3516 = vadd.f32 %v2330, %v3515
    %3517 = vmatprep.mubr.bf16.mxu0 %v1282
    %3518 = vmatmul.mubr.bf16.gmra.mrb[0].mxu0 %v1281
    %v3519 = vpop.f32.mrb[0].mxu0
    %v3520 = vadd.f32 %v2334, %v3519
    %v3521 = vpop.f32.mrb[0].mxu0
    %v3522 = vadd.f32 %v2336, %v3521
    %v3523 = vpop.f32.mrb[0].mxu0
    %v3524 = vadd.f32 %v2338, %v3523
    %v3525 = vpop.f32.mrb[0].mxu0
    %v3526 = vadd.f32 %v2340, %v3525
    %3527 = vmatprep.mubr.bf16.mxu0 %v1284
    %3528 = vmatmul.mubr.bf16.gmra.mrb[0].mxu0 %v1283
    %v3529 = vpop.f32.mrb[0].mxu0
    %v3530 = vadd.f32 %v2344, %v3529
    %v3531 = vpop.f32.mrb[0].mxu0
    %v3532 = vadd.f32 %v2346, %v3531
    %v3533 = vpop.f32.mrb[0].mxu0
    %v3534 = vadd.f32 %v2348, %v3533
    %v3535 = vpop.f32.mrb[0].mxu0
    %v3536 = vadd.f32 %v2350, %v3535
    %3537 = vmatprep.mubr.bf16.mxu0 %v1286
    %3538 = vmatmul.mubr.bf16.gmra.mrb[0].mxu0 %v1285
    %v3539 = vpop.f32.mrb[0].mxu0
    %v3540 = vadd.f32 %v2354, %v3539
    %v3541 = vpop.f32.mrb[0].mxu0
    %v3542 = vadd.f32 %v2356, %v3541
    %v3543 = vpop.f32.mrb[0].mxu0
    %v3544 = vadd.f32 %v2358, %v3543
    %v3545 = vpop.f32.mrb[0].mxu0
    %v3546 = vadd.f32 %v2360, %v3545
    %3547 = vmatprep.mubr.bf16.mxu0 %v1288
    %3548 = vmatmul.mubr.bf16.gmra.mrb[0].mxu0 %v1287
    %v3549 = vpop.f32.mrb[0].mxu0
    %v3550 = vadd.f32 %v2364, %v3549
    %v3551 = vpop.f32.mrb[0].mxu0
    %v3552 = vadd.f32 %v2366, %v3551
    %v3553 = vpop.f32.mrb[0].mxu0
    %v3554 = vadd.f32 %v2368, %v3553
    %v3555 = vpop.f32.mrb[0].mxu0
    %v3556 = vadd.f32 %v2370, %v3555
    %3557 = vmatprep.mubr.bf16.mxu0 %v1290
    %3558 = vmatmul.mubr.bf16.gmra.mrb[0].mxu0 %v1289
    %v3559 = vpop.f32.mrb[0].mxu0
    %v3560 = vadd.f32 %v2374, %v3559
    %v3561 = vpop.f32.mrb[0].mxu0
    %v3562 = vadd.f32 %v2376, %v3561
    %v3563 = vpop.f32.mrb[0].mxu0
    %v3564 = vadd.f32 %v2378, %v3563
    %v3565 = vpop.f32.mrb[0].mxu0
    %v3566 = vadd.f32 %v2380, %v3565
    %3567 = vmatprep.mubr.bf16.mxu0 %v1292
    %3568 = vmatmul.mubr.bf16.gmra.mrb[0].mxu0 %v1291
    %v3569 = vpop.f32.mrb[0].mxu0
    %v3570 = vadd.f32 %v2384, %v3569
    %v3571 = vpop.f32.mrb[0].mxu0
    %v3572 = vadd.f32 %v2386, %v3571
    %v3573 = vpop.f32.mrb[0].mxu0
    %v3574 = vadd.f32 %v2388, %v3573
    %v3575 = vpop.f32.mrb[0].mxu0
    %v3576 = vadd.f32 %v2390, %v3575
    %3577 = vmatprep.mubr.bf16.mxu0 %v1294
    %3578 = vmatmul.mubr.bf16.gmra.mrb[0].mxu0 %v1293
    %v3579 = vpop.f32.mrb[0].mxu0
    %v3580 = vadd.f32 %v2394, %v3579
    %v3581 = vpop.f32.mrb[0].mxu0
    %v3582 = vadd.f32 %v2396, %v3581
    %v3583 = vpop.f32.mrb[0].mxu0
    %v3584 = vadd.f32 %v2398, %v3583
    %v3585 = vpop.f32.mrb[0].mxu0
    %v3586 = vadd.f32 %v2400, %v3585
    %3587 = vmatprep.mubr.bf16.mxu0 %v1296
    %3588 = vmatmul.mubr.bf16.gmra.mrb[0].mxu0 %v1295
    %v3589 = vpop.f32.mrb[0].mxu0
    %v3590 = vadd.f32 %v2404, %v3589
    %v3591 = vpop.f32.mrb[0].mxu0
    %v3592 = vadd.f32 %v2406, %v3591
    %v3593 = vpop.f32.mrb[0].mxu0
    %v3594 = vadd.f32 %v2408, %v3593
    %v3595 = vpop.f32.mrb[0].mxu0
    %v3596 = vadd.f32 %v2410, %v3595
    %3597 = vmatprep.mubr.bf16.mxu0 %v1298
    %3598 = vmatmul.mubr.bf16.gmra.mrb[0].mxu0 %v1297
    %v3599 = vpop.f32.mrb[0].mxu0
    %v3600 = vadd.f32 %v2414, %v3599
    %v3601 = vpop.f32.mrb[0].mxu0
    %v3602 = vadd.f32 %v2416, %v3601
    %v3603 = vpop.f32.mrb[0].mxu0
    %v3604 = vadd.f32 %v2418, %v3603
    %v3605 = vpop.f32.mrb[0].mxu0
    %v3606 = vadd.f32 %v2420, %v3605
    %3607 = vmatprep.mubr.bf16.mxu0 %v1300
    %3608 = vmatmul.mubr.bf16.gmra.mrb[0].mxu0 %v1299
    %v3609 = vpop.f32.mrb[0].mxu0
    %v3610 = vadd.f32 %v2424, %v3609
    %v3611 = vpop.f32.mrb[0].mxu0
    %v3612 = vadd.f32 %v2426, %v3611
    %v3613 = vpop.f32.mrb[0].mxu0
    %v3614 = vadd.f32 %v2428, %v3613
    %v3615 = vpop.f32.mrb[0].mxu0
    %v3616 = vadd.f32 %v2430, %v3615
    %3617 = vmatprep.mubr.bf16.mxu0 %v1302
    %3618 = vmatmul.mubr.bf16.gmra.mrb[0].mxu0 %v1301
    %v3619 = vpop.f32.mrb[0].mxu0
    %v3620 = vadd.f32 %v2434, %v3619
    %v3621 = vpop.f32.mrb[0].mxu0
    %v3622 = vadd.f32 %v2436, %v3621
    %v3623 = vpop.f32.mrb[0].mxu0
    %v3624 = vadd.f32 %v2438, %v3623
    %v3625 = vpop.f32.mrb[0].mxu0
    %v3626 = vadd.f32 %v2440, %v3625
    %3627 = vmatprep.mubr.bf16.mxu0 %v1304
    %3628 = vmatmul.mubr.bf16.gmra.mrb[0].mxu0 %v1303
    %v3629 = vpop.f32.mrb[0].mxu0
    %v3630 = vadd.f32 %v2444, %v3629
    %v3631 = vpop.f32.mrb[0].mxu0
    %v3632 = vadd.f32 %v2446, %v3631
    %v3633 = vpop.f32.mrb[0].mxu0
    %v3634 = vadd.f32 %v2448, %v3633
    %v3635 = vpop.f32.mrb[0].mxu0
    %v3636 = vadd.f32 %v2450, %v3635
    %3637 = vmatprep.mubr.bf16.mxu0 %v1306
    %3638 = vmatmul.mubr.bf16.gmra.mrb[0].mxu0 %v1305
    %v3639 = vpop.f32.mrb[0].mxu0
    %v3640 = vadd.f32 %v2454, %v3639
    %v3641 = vpop.f32.mrb[0].mxu0
    %v3642 = vadd.f32 %v2456, %v3641
    %v3643 = vpop.f32.mrb[0].mxu0
    %v3644 = vadd.f32 %v2458, %v3643
    %v3645 = vpop.f32.mrb[0].mxu0
    %v3646 = vadd.f32 %v2460, %v3645
    %3647 = vmatprep.mubr.bf16.mxu0 %v1308
    %3648 = vmatmul.mubr.bf16.gmra.mrb[0].mxu0 %v1307
    %v3649 = vpop.f32.mrb[0].mxu0
    %v3650 = vadd.f32 %v2464, %v3649
    %v3651 = vpop.f32.mrb[0].mxu0
    %v3652 = vadd.f32 %v2466, %v3651
    %v3653 = vpop.f32.mrb[0].mxu0
    %v3654 = vadd.f32 %v2468, %v3653
    %v3655 = vpop.f32.mrb[0].mxu0
    %v3656 = vadd.f32 %v2470, %v3655
    %3657 = vmatprep.mubr.bf16.mxu0 %v1310
    %3658 = vmatmul.mubr.bf16.gmra.mrb[0].mxu0 %v1309
    %v3659 = vpop.f32.mrb[0].mxu0
    %v3660 = vadd.f32 %v2474, %v3659
    %v3661 = vpop.f32.mrb[0].mxu0
    %v3662 = vadd.f32 %v2476, %v3661
    %v3663 = vpop.f32.mrb[0].mxu0
    %v3664 = vadd.f32 %v2478, %v3663
    %v3665 = vpop.f32.mrb[0].mxu0
    %v3666 = vadd.f32 %v2480, %v3665
    %3667 = vmatprep.mubr.bf16.mxu0 %v1312
    %3668 = vmatmul.mubr.bf16.gmra.mrb[0].mxu0 %v1311
    %v3669 = vpop.f32.mrb[0].mxu0
    %v3670 = vadd.f32 %v2484, %v3669
    %v3671 = vpop.f32.mrb[0].mxu0
    %v3672 = vadd.f32 %v2486, %v3671
    %v3673 = vpop.f32.mrb[0].mxu0
    %v3674 = vadd.f32 %v2488, %v3673
    %v3675 = vpop.f32.mrb[0].mxu0
    %v3676 = vadd.f32 %v2490, %v3675
    %3677 = vmatprep.mubr.bf16.mxu0 %v1314
    %3678 = vmatmul.mubr.bf16.gmra.mrb[0].mxu0 %v1313
    %v3679 = vpop.f32.mrb[0].mxu0
    %v3680 = vadd.f32 %v2494, %v3679
    %v3681 = vpop.f32.mrb[0].mxu0
    %v3682 = vadd.f32 %v2496, %v3681
    %v3683 = vpop.f32.mrb[0].mxu0
    %v3684 = vadd.f32 %v2498, %v3683
    %v3685 = vpop.f32.mrb[0].mxu0
    %v3686 = vadd.f32 %v2500, %v3685
    %3687 = vmatprep.mubr.bf16.mxu0 %v1316
    %3688 = vmatmul.mubr.bf16.gmra.mrb[0].mxu0 %v1315
    %v3689 = vpop.f32.mrb[0].mxu0
    %v3690 = vadd.f32 %v2504, %v3689
    %v3691 = vpop.f32.mrb[0].mxu0
    %v3692 = vadd.f32 %v2506, %v3691
    %v3693 = vpop.f32.mrb[0].mxu0
    %v3694 = vadd.f32 %v2508, %v3693
    %v3695 = vpop.f32.mrb[0].mxu0
    %v3696 = vadd.f32 %v2510, %v3695
    %3697 = vmatprep.mubr.bf16.mxu0 %v1318
    %3698 = vmatmul.mubr.bf16.gmra.mrb[0].mxu0 %v1317
    %v3699 = vpop.f32.mrb[0].mxu0
    %v3700 = vadd.f32 %v2514, %v3699
    %v3701 = vpop.f32.mrb[0].mxu0
    %v3702 = vadd.f32 %v2516, %v3701
    %v3703 = vpop.f32.mrb[0].mxu0
    %v3704 = vadd.f32 %v2518, %v3703
    %v3705 = vpop.f32.mrb[0].mxu0
    %v3706 = vadd.f32 %v2520, %v3705
    %3707 = vmatprep.mubr.bf16.mxu0 %v1320
    %3708 = vmatmul.mubr.bf16.gmra.mrb[0].mxu0 %v1319
    %v3709 = vpop.f32.mrb[0].mxu0
    %v3710 = vadd.f32 %v2524, %v3709
    %v3711 = vpop.f32.mrb[0].mxu0
    %v3712 = vadd.f32 %v2526, %v3711
    %v3713 = vpop.f32.mrb[0].mxu0
    %v3714 = vadd.f32 %v2528, %v3713
    %v3715 = vpop.f32.mrb[0].mxu0
    %v3716 = vadd.f32 %v2530, %v3715
    %3717 = vmatprep.mubr.bf16.mxu0 %v1322
    %3718 = vmatmul.mubr.bf16.gmra.mrb[0].mxu0 %v1321
    %v3719 = vpop.f32.mrb[0].mxu0
    %v3720 = vadd.f32 %v2534, %v3719
    %v3721 = vpop.f32.mrb[0].mxu0
    %v3722 = vadd.f32 %v2536, %v3721
    %v3723 = vpop.f32.mrb[0].mxu0
    %v3724 = vadd.f32 %v2538, %v3723
    %v3725 = vpop.f32.mrb[0].mxu0
    %v3726 = vadd.f32 %v2540, %v3725
    %3727 = vmatprep.mubr.bf16.mxu0 %v1324
    %3728 = vmatmul.mubr.bf16.gmra.mrb[0].mxu0 %v1323
    %v3729 = vpop.f32.mrb[0].mxu0
    %v3730 = vadd.f32 %v2544, %v3729
    %v3731 = vpop.f32.mrb[0].mxu0
    %v3732 = vadd.f32 %v2546, %v3731
    %v3733 = vpop.f32.mrb[0].mxu0
    %v3734 = vadd.f32 %v2548, %v3733
    %v3735 = vpop.f32.mrb[0].mxu0
    %v3736 = vadd.f32 %v2550, %v3735
    %3737 = vmatprep.mubr.bf16.mxu0 %v1326
    %3738 = vmatmul.mubr.bf16.gmra.mrb[0].mxu0 %v1325
    %v3739 = vpop.f32.mrb[0].mxu0
    %v3740 = vadd.f32 %v2554, %v3739
    %v3741 = vpop.f32.mrb[0].mxu0
    %v3742 = vadd.f32 %v2556, %v3741
    %v3743 = vpop.f32.mrb[0].mxu0
    %v3744 = vadd.f32 %v2558, %v3743
    %v3745 = vpop.f32.mrb[0].mxu0
    %v3746 = vadd.f32 %v2560, %v3745
    %3747 = vmatprep.mubr.bf16.mxu0 %v1328
    %3748 = vmatmul.mubr.bf16.gmra.mrb[0].mxu0 %v1327
    %v3749 = vpop.f32.mrb[0].mxu0
    %v3750 = vadd.f32 %v2564, %v3749
    %v3751 = vpop.f32.mrb[0].mxu0
    %v3752 = vadd.f32 %v2566, %v3751
    %v3753 = vpop.f32.mrb[0].mxu0
    %v3754 = vadd.f32 %v2568, %v3753
    %v3755 = vpop.f32.mrb[0].mxu0
    %v3756 = vadd.f32 %v2570, %v3755
    %3757 = vmatprep.mubr.bf16.mxu0 %v1330
    %3758 = vmatmul.mubr.bf16.gmra.mrb[0].mxu0 %v1329
    %v3759 = vpop.f32.mrb[0].mxu0
    %v3760 = vadd.f32 %v2574, %v3759
    %v3761 = vpop.f32.mrb[0].mxu0
    %v3762 = vadd.f32 %v2576, %v3761
    %v3763 = vpop.f32.mrb[0].mxu0
    %v3764 = vadd.f32 %v2578, %v3763
    %v3765 = vpop.f32.mrb[0].mxu0
    %v3766 = vadd.f32 %v2580, %v3765
    %3767 = vmatprep.mubr.bf16.mxu0 %v1332
    %3768 = vmatmul.mubr.bf16.gmra.mrb[0].mxu0 %v1331
    %v3769 = vpop.f32.mrb[0].mxu0
    %v3770 = vadd.f32 %v2584, %v3769
    %v3771 = vpop.f32.mrb[0].mxu0
    %v3772 = vadd.f32 %v2586, %v3771
    %v3773 = vpop.f32.mrb[0].mxu0
    %v3774 = vadd.f32 %v2588, %v3773
    %v3775 = vpop.f32.mrb[0].mxu0
    %v3776 = vadd.f32 %v2590, %v3775
    %3777 = vmatprep.mubr.bf16.mxu0 %v1334
    %3778 = vmatmul.mubr.bf16.gmra.mrb[0].mxu0 %v1333
    %v3779 = vpop.f32.mrb[0].mxu0
    %v3780 = vadd.f32 %v2594, %v3779
    %v3781 = vpop.f32.mrb[0].mxu0
    %v3782 = vadd.f32 %v2596, %v3781
    %v3783 = vpop.f32.mrb[0].mxu0
    %v3784 = vadd.f32 %v2598, %v3783
    %v3785 = vpop.f32.mrb[0].mxu0
    %v3786 = vadd.f32 %v2600, %v3785
    %3787 = vmatprep.mubr.bf16.mxu0 %v1336
    %3788 = vmatmul.mubr.bf16.gmra.mrb[0].mxu0 %v1335
    %v3789 = vpop.f32.mrb[0].mxu0
    %v3790 = vadd.f32 %v2604, %v3789
    %v3791 = vpop.f32.mrb[0].mxu0
    %v3792 = vadd.f32 %v2606, %v3791
    %v3793 = vpop.f32.mrb[0].mxu0
    %v3794 = vadd.f32 %v2608, %v3793
    %v3795 = vpop.f32.mrb[0].mxu0
    %v3796 = vadd.f32 %v2610, %v3795
    %3797 = vmatprep.mubr.bf16.mxu0 %v1338
    %3798 = vmatmul.mubr.bf16.gmra.mrb[0].mxu0 %v1337
    %v3799 = vpop.f32.mrb[0].mxu0
    %v3800 = vadd.f32 %v2614, %v3799
    %v3801 = vpop.f32.mrb[0].mxu0
    %v3802 = vadd.f32 %v2616, %v3801
    %v3803 = vpop.f32.mrb[0].mxu0
    %v3804 = vadd.f32 %v2618, %v3803
    %v3805 = vpop.f32.mrb[0].mxu0
    %v3806 = vadd.f32 %v2620, %v3805
    %3807 = vmatprep.mubr.bf16.mxu0 %v1340
    %3808 = vmatmul.mubr.bf16.gmra.mrb[0].mxu0 %v1339
    %v3809 = vpop.f32.mrb[0].mxu0
    %v3810 = vadd.f32 %v2624, %v3809
    %v3811 = vpop.f32.mrb[0].mxu0
    %v3812 = vadd.f32 %v2626, %v3811
    %v3813 = vpop.f32.mrb[0].mxu0
    %v3814 = vadd.f32 %v2628, %v3813
    %v3815 = vpop.f32.mrb[0].mxu0
    %v3816 = vadd.f32 %v2630, %v3815
    %3817 = vmatprep.mubr.bf16.mxu0 %v1342
    %3818 = vmatmul.mubr.bf16.gmra.mrb[0].mxu0 %v1341
    %v3819 = vpop.f32.mrb[0].mxu0
    %v3820 = vadd.f32 %v2634, %v3819
    %v3821 = vpop.f32.mrb[0].mxu0
    %v3822 = vadd.f32 %v2636, %v3821
    %v3823 = vpop.f32.mrb[0].mxu0
    %v3824 = vadd.f32 %v2638, %v3823
    %v3825 = vpop.f32.mrb[0].mxu0
    %v3826 = vadd.f32 %v2640, %v3825
    %3827 = vmatprep.mubr.bf16.mxu0 %v1344
    %3828 = vmatmul.mubr.bf16.gmra.mrb[0].mxu0 %v1343
    %v3829 = vpop.f32.mrb[0].mxu0
    %v3830 = vadd.f32 %v2644, %v3829
    %v3831 = vpop.f32.mrb[0].mxu0
    %v3832 = vadd.f32 %v2646, %v3831
    %v3833 = vpop.f32.mrb[0].mxu0
    %v3834 = vadd.f32 %v2648, %v3833
    %v3835 = vpop.f32.mrb[0].mxu0
    %v3836 = vadd.f32 %v2650, %v3835
    %3837 = vmatprep.mubr.bf16.mxu0 %v1346
    %3838 = vmatmul.mubr.bf16.gmra.mrb[0].mxu0 %v1345
    %v3839 = vpop.f32.mrb[0].mxu0
    %v3840 = vadd.f32 %v2654, %v3839
    %v3841 = vpop.f32.mrb[0].mxu0
    %v3842 = vadd.f32 %v2656, %v3841
    %v3843 = vpop.f32.mrb[0].mxu0
    %v3844 = vadd.f32 %v2658, %v3843
    %v3845 = vpop.f32.mrb[0].mxu0
    %v3846 = vadd.f32 %v2660, %v3845
    %3847 = vmatprep.mubr.bf16.mxu0 %v1348
    %3848 = vmatmul.mubr.bf16.gmra.mrb[0].mxu0 %v1347
    %v3849 = vpop.f32.mrb[0].mxu0
    %v3850 = vadd.f32 %v2664, %v3849
    %v3851 = vpop.f32.mrb[0].mxu0
    %v3852 = vadd.f32 %v2666, %v3851
    %v3853 = vpop.f32.mrb[0].mxu0
    %v3854 = vadd.f32 %v2668, %v3853
    %v3855 = vpop.f32.mrb[0].mxu0
    %v3856 = vadd.f32 %v2670, %v3855
    %3857 = vmatprep.mubr.bf16.mxu0 %v1350
    %3858 = vmatmul.mubr.bf16.gmra.mrb[0].mxu0 %v1349
    %v3859 = vpop.f32.mrb[0].mxu0
    %v3860 = vadd.f32 %v2674, %v3859
    %v3861 = vpop.f32.mrb[0].mxu0
    %v3862 = vadd.f32 %v2676, %v3861
    %v3863 = vpop.f32.mrb[0].mxu0
    %v3864 = vadd.f32 %v2678, %v3863
    %v3865 = vpop.f32.mrb[0].mxu0
    %v3866 = vadd.f32 %v2680, %v3865
    %3867 = vdwg.mxu0
    %v3868 = vld [vmem:[%s4] sm:$0xf]
    %v3870 = vlaneseq
    %v3871 = vshrl.u32 %v3870, 7
    %v3872 = vsub.s32 0, %v3871
    %v3873 = vrot.slane %v3868, %v3872
    %v3874 = vlaneseq
    %v3875 = vshrl.u32 %v3874, 7
    %v3876 = vsub.s32 1, %v3875
    %v3877 = vrot.slane %v3868, %v3876
    %v3878 = vlaneseq
    %v3879 = vshrl.u32 %v3878, 7
    %v3880 = vsub.s32 2, %v3879
    %v3881 = vrot.slane %v3868, %v3880
    %v3882 = vlaneseq
    %v3883 = vshrl.u32 %v3882, 7
    %v3884 = vsub.s32 3, %v3883
    %v3885 = vrot.slane %v3868, %v3884
    %v3890 = vadd.f32 %v3037, %v3873
    %v3891 = vadd.f32 %v3039, %v3877
    %v3892 = vadd.f32 %v3470, %v3881
    %v3893 = vadd.f32 %v3472, %v3885
    %v3894 = vadd.f32 %v3041, %v3873
    %v3895 = vadd.f32 %v3043, %v3877
    %v3896 = vadd.f32 %v3474, %v3881
    %v3897 = vadd.f32 %v3476, %v3885
    %v3898 = vadd.f32 %v3047, %v3873
    %v3899 = vadd.f32 %v3049, %v3877
    %v3900 = vadd.f32 %v3480, %v3881
    %v3901 = vadd.f32 %v3482, %v3885
    %v3902 = vadd.f32 %v3051, %v3873
    %v3903 = vadd.f32 %v3053, %v3877
    %v3904 = vadd.f32 %v3484, %v3881
    %v3905 = vadd.f32 %v3486, %v3885
    %v3906 = vadd.f32 %v3057, %v3873
    %v3907 = vadd.f32 %v3059, %v3877
    %v3908 = vadd.f32 %v3490, %v3881
    %v3909 = vadd.f32 %v3492, %v3885
    %v3910 = vadd.f32 %v3061, %v3873
    %v3911 = vadd.f32 %v3063, %v3877
    %v3912 = vadd.f32 %v3494, %v3881
    %v3913 = vadd.f32 %v3496, %v3885
    %v3914 = vadd.f32 %v3067, %v3873
    %v3915 = vadd.f32 %v3069, %v3877
    %v3916 = vadd.f32 %v3500, %v3881
    %v3917 = vadd.f32 %v3502, %v3885
    %v3918 = vadd.f32 %v3071, %v3873
    %v3919 = vadd.f32 %v3073, %v3877
    %v3920 = vadd.f32 %v3504, %v3881
    %v3921 = vadd.f32 %v3506, %v3885
    %v3922 = vadd.f32 %v3077, %v3873
    %v3923 = vadd.f32 %v3079, %v3877
    %v3924 = vadd.f32 %v3510, %v3881
    %v3925 = vadd.f32 %v3512, %v3885
    %v3926 = vadd.f32 %v3081, %v3873
    %v3927 = vadd.f32 %v3083, %v3877
    %v3928 = vadd.f32 %v3514, %v3881
    %v3929 = vadd.f32 %v3516, %v3885
    %v3930 = vadd.f32 %v3087, %v3873
    %v3931 = vadd.f32 %v3089, %v3877
    %v3932 = vadd.f32 %v3520, %v3881
    %v3933 = vadd.f32 %v3522, %v3885
    %v3934 = vadd.f32 %v3091, %v3873
    %v3935 = vadd.f32 %v3093, %v3877
    %v3936 = vadd.f32 %v3524, %v3881
    %v3937 = vadd.f32 %v3526, %v3885
    %v3938 = vadd.f32 %v3097, %v3873
    %v3939 = vadd.f32 %v3099, %v3877
    %v3940 = vadd.f32 %v3530, %v3881
    %v3941 = vadd.f32 %v3532, %v3885
    %v3942 = vadd.f32 %v3101, %v3873
    %v3943 = vadd.f32 %v3103, %v3877
    %v3944 = vadd.f32 %v3534, %v3881
    %v3945 = vadd.f32 %v3536, %v3885
    %v3946 = vadd.f32 %v3107, %v3873
    %v3947 = vadd.f32 %v3109, %v3877
    %v3948 = vadd.f32 %v3540, %v3881
    %v3949 = vadd.f32 %v3542, %v3885
    %v3950 = vadd.f32 %v3111, %v3873
    %v3951 = vadd.f32 %v3113, %v3877
    %v3952 = vadd.f32 %v3544, %v3881
    %v3953 = vadd.f32 %v3546, %v3885
    %v3954 = vadd.f32 %v3117, %v3873
    %v3955 = vadd.f32 %v3119, %v3877
    %v3956 = vadd.f32 %v3550, %v3881
    %v3957 = vadd.f32 %v3552, %v3885
    %v3958 = vadd.f32 %v3121, %v3873
    %v3959 = vadd.f32 %v3123, %v3877
    %v3960 = vadd.f32 %v3554, %v3881
    %v3961 = vadd.f32 %v3556, %v3885
    %v3962 = vadd.f32 %v3127, %v3873
    %v3963 = vadd.f32 %v3129, %v3877
    %v3964 = vadd.f32 %v3560, %v3881
    %v3965 = vadd.f32 %v3562, %v3885
    %v3966 = vadd.f32 %v3131, %v3873
    %v3967 = vadd.f32 %v3133, %v3877
    %v3968 = vadd.f32 %v3564, %v3881
    %v3969 = vadd.f32 %v3566, %v3885
    %v3970 = vadd.f32 %v3137, %v3873
    %v3971 = vadd.f32 %v3139, %v3877
    %v3972 = vadd.f32 %v3570, %v3881
    %v3973 = vadd.f32 %v3572, %v3885
    %v3974 = vadd.f32 %v3141, %v3873
    %v3975 = vadd.f32 %v3143, %v3877
    %v3976 = vadd.f32 %v3574, %v3881
    %v3977 = vadd.f32 %v3576, %v3885
    %v3978 = vadd.f32 %v3147, %v3873
    %v3979 = vadd.f32 %v3149, %v3877
    %v3980 = vadd.f32 %v3580, %v3881
    %v3981 = vadd.f32 %v3582, %v3885
    %v3982 = vadd.f32 %v3151, %v3873
    %v3983 = vadd.f32 %v3153, %v3877
    %v3984 = vadd.f32 %v3584, %v3881
    %v3985 = vadd.f32 %v3586, %v3885
    %v3986 = vadd.f32 %v3157, %v3873
    %v3987 = vadd.f32 %v3159, %v3877
    %v3988 = vadd.f32 %v3590, %v3881
    %v3989 = vadd.f32 %v3592, %v3885
    %v3990 = vadd.f32 %v3161, %v3873
    %v3991 = vadd.f32 %v3163, %v3877
    %v3992 = vadd.f32 %v3594, %v3881
    %v3993 = vadd.f32 %v3596, %v3885
    %v3994 = vadd.f32 %v3167, %v3873
    %v3995 = vadd.f32 %v3169, %v3877
    %v3996 = vadd.f32 %v3600, %v3881
    %v3997 = vadd.f32 %v3602, %v3885
    %v3998 = vadd.f32 %v3171, %v3873
    %v3999 = vadd.f32 %v3173, %v3877
    %v4000 = vadd.f32 %v3604, %v3881
    %v4001 = vadd.f32 %v3606, %v3885
    %v4002 = vadd.f32 %v3177, %v3873
    %v4003 = vadd.f32 %v3179, %v3877
    %v4004 = vadd.f32 %v3610, %v3881
    %v4005 = vadd.f32 %v3612, %v3885
    %v4006 = vadd.f32 %v3181, %v3873
    %v4007 = vadd.f32 %v3183, %v3877
    %v4008 = vadd.f32 %v3614, %v3881
    %v4009 = vadd.f32 %v3616, %v3885
    %v4010 = vadd.f32 %v3187, %v3873
    %v4011 = vadd.f32 %v3189, %v3877
    %v4012 = vadd.f32 %v3620, %v3881
    %v4013 = vadd.f32 %v3622, %v3885
    %v4014 = vadd.f32 %v3191, %v3873
    %v4015 = vadd.f32 %v3193, %v3877
    %v4016 = vadd.f32 %v3624, %v3881
    %v4017 = vadd.f32 %v3626, %v3885
    %v4018 = vadd.f32 %v3197, %v3873
    %v4019 = vadd.f32 %v3199, %v3877
    %v4020 = vadd.f32 %v3630, %v3881
    %v4021 = vadd.f32 %v3632, %v3885
    %v4022 = vadd.f32 %v3201, %v3873
    %v4023 = vadd.f32 %v3203, %v3877
    %v4024 = vadd.f32 %v3634, %v3881
    %v4025 = vadd.f32 %v3636, %v3885
    %v4026 = vadd.f32 %v3207, %v3873
    %v4027 = vadd.f32 %v3209, %v3877
    %v4028 = vadd.f32 %v3640, %v3881
    %v4029 = vadd.f32 %v3642, %v3885
    %v4030 = vadd.f32 %v3211, %v3873
    %v4031 = vadd.f32 %v3213, %v3877
    %v4032 = vadd.f32 %v3644, %v3881
    %v4033 = vadd.f32 %v3646, %v3885
    %v4034 = vadd.f32 %v3217, %v3873
    %v4035 = vadd.f32 %v3219, %v3877
    %v4036 = vadd.f32 %v3650, %v3881
    %v4037 = vadd.f32 %v3652, %v3885
    %v4038 = vadd.f32 %v3221, %v3873
    %v4039 = vadd.f32 %v3223, %v3877
    %v4040 = vadd.f32 %v3654, %v3881
    %v4041 = vadd.f32 %v3656, %v3885
    %v4042 = vadd.f32 %v3227, %v3873
    %v4043 = vadd.f32 %v3229, %v3877
    %v4044 = vadd.f32 %v3660, %v3881
    %v4045 = vadd.f32 %v3662, %v3885
    %v4046 = vadd.f32 %v3231, %v3873
    %v4047 = vadd.f32 %v3233, %v3877
    %v4048 = vadd.f32 %v3664, %v3881
    %v4049 = vadd.f32 %v3666, %v3885
    %v4050 = vadd.f32 %v3237, %v3873
    %v4051 = vadd.f32 %v3239, %v3877
    %v4052 = vadd.f32 %v3670, %v3881
    %v4053 = vadd.f32 %v3672, %v3885
    %v4054 = vadd.f32 %v3241, %v3873
    %v4055 = vadd.f32 %v3243, %v3877
    %v4056 = vadd.f32 %v3674, %v3881
    %v4057 = vadd.f32 %v3676, %v3885
    %v4058 = vadd.f32 %v3247, %v3873
    %v4059 = vadd.f32 %v3249, %v3877
    %v4060 = vadd.f32 %v3680, %v3881
    %v4061 = vadd.f32 %v3682, %v3885
    %v4062 = vadd.f32 %v3251, %v3873
    %v4063 = vadd.f32 %v3253, %v3877
    %v4064 = vadd.f32 %v3684, %v3881
    %v4065 = vadd.f32 %v3686, %v3885
    %v4066 = vadd.f32 %v3257, %v3873
    %v4067 = vadd.f32 %v3259, %v3877
    %v4068 = vadd.f32 %v3690, %v3881
    %v4069 = vadd.f32 %v3692, %v3885
    %v4070 = vadd.f32 %v3261, %v3873
    %v4071 = vadd.f32 %v3263, %v3877
    %v4072 = vadd.f32 %v3694, %v3881
    %v4073 = vadd.f32 %v3696, %v3885
    %v4074 = vadd.f32 %v3267, %v3873
    %v4075 = vadd.f32 %v3269, %v3877
    %v4076 = vadd.f32 %v3700, %v3881
    %v4077 = vadd.f32 %v3702, %v3885
    %v4078 = vadd.f32 %v3271, %v3873
    %v4079 = vadd.f32 %v3273, %v3877
    %v4080 = vadd.f32 %v3704, %v3881
    %v4081 = vadd.f32 %v3706, %v3885
    %v4082 = vadd.f32 %v3277, %v3873
    %v4083 = vadd.f32 %v3279, %v3877
    %v4084 = vadd.f32 %v3710, %v3881
    %v4085 = vadd.f32 %v3712, %v3885
    %v4086 = vadd.f32 %v3281, %v3873
    %v4087 = vadd.f32 %v3283, %v3877
    %v4088 = vadd.f32 %v3714, %v3881
    %v4089 = vadd.f32 %v3716, %v3885
    %v4090 = vadd.f32 %v3287, %v3873
    %v4091 = vadd.f32 %v3289, %v3877
    %v4092 = vadd.f32 %v3720, %v3881
    %v4093 = vadd.f32 %v3722, %v3885
    %v4094 = vadd.f32 %v3291, %v3873
    %v4095 = vadd.f32 %v3293, %v3877
    %v4096 = vadd.f32 %v3724, %v3881
    %v4097 = vadd.f32 %v3726, %v3885
    %v4098 = vadd.f32 %v3297, %v3873
    %v4099 = vadd.f32 %v3299, %v3877
    %v4100 = vadd.f32 %v3730, %v3881
    %v4101 = vadd.f32 %v3732, %v3885
    %v4102 = vadd.f32 %v3301, %v3873
    %v4103 = vadd.f32 %v3303, %v3877
    %v4104 = vadd.f32 %v3734, %v3881
    %v4105 = vadd.f32 %v3736, %v3885
    %v4106 = vadd.f32 %v3307, %v3873
    %v4107 = vadd.f32 %v3309, %v3877
    %v4108 = vadd.f32 %v3740, %v3881
    %v4109 = vadd.f32 %v3742, %v3885
    %v4110 = vadd.f32 %v3311, %v3873
    %v4111 = vadd.f32 %v3313, %v3877
    %v4112 = vadd.f32 %v3744, %v3881
    %v4113 = vadd.f32 %v3746, %v3885
    %v4114 = vadd.f32 %v3317, %v3873
    %v4115 = vadd.f32 %v3319, %v3877
    %v4116 = vadd.f32 %v3750, %v3881
    %v4117 = vadd.f32 %v3752, %v3885
    %v4118 = vadd.f32 %v3321, %v3873
    %v4119 = vadd.f32 %v3323, %v3877
    %v4120 = vadd.f32 %v3754, %v3881
    %v4121 = vadd.f32 %v3756, %v3885
    %v4122 = vadd.f32 %v3327, %v3873
    %v4123 = vadd.f32 %v3329, %v3877
    %v4124 = vadd.f32 %v3760, %v3881
    %v4125 = vadd.f32 %v3762, %v3885
    %v4126 = vadd.f32 %v3331, %v3873
    %v4127 = vadd.f32 %v3333, %v3877
    %v4128 = vadd.f32 %v3764, %v3881
    %v4129 = vadd.f32 %v3766, %v3885
    %v4130 = vadd.f32 %v3337, %v3873
    %v4131 = vadd.f32 %v3339, %v3877
    %v4132 = vadd.f32 %v3770, %v3881
    %v4133 = vadd.f32 %v3772, %v3885
    %v4134 = vadd.f32 %v3341, %v3873
    %v4135 = vadd.f32 %v3343, %v3877
    %v4136 = vadd.f32 %v3774, %v3881
    %v4137 = vadd.f32 %v3776, %v3885
    %v4138 = vadd.f32 %v3347, %v3873
    %v4139 = vadd.f32 %v3349, %v3877
    %v4140 = vadd.f32 %v3780, %v3881
    %v4141 = vadd.f32 %v3782, %v3885
    %v4142 = vadd.f32 %v3351, %v3873
    %v4143 = vadd.f32 %v3353, %v3877
    %v4144 = vadd.f32 %v3784, %v3881
    %v4145 = vadd.f32 %v3786, %v3885
    %v4146 = vadd.f32 %v3357, %v3873
    %v4147 = vadd.f32 %v3359, %v3877
    %v4148 = vadd.f32 %v3790, %v3881
    %v4149 = vadd.f32 %v3792, %v3885
    %v4150 = vadd.f32 %v3361, %v3873
    %v4151 = vadd.f32 %v3363, %v3877
    %v4152 = vadd.f32 %v3794, %v3881
    %v4153 = vadd.f32 %v3796, %v3885
    %v4154 = vadd.f32 %v3367, %v3873
    %v4155 = vadd.f32 %v3369, %v3877
    %v4156 = vadd.f32 %v3800, %v3881
    %v4157 = vadd.f32 %v3802, %v3885
    %v4158 = vadd.f32 %v3371, %v3873
    %v4159 = vadd.f32 %v3373, %v3877
    %v4160 = vadd.f32 %v3804, %v3881
    %v4161 = vadd.f32 %v3806, %v3885
    %v4162 = vadd.f32 %v3377, %v3873
    %v4163 = vadd.f32 %v3379, %v3877
    %v4164 = vadd.f32 %v3810, %v3881
    %v4165 = vadd.f32 %v3812, %v3885
    %v4166 = vadd.f32 %v3381, %v3873
    %v4167 = vadd.f32 %v3383, %v3877
    %v4168 = vadd.f32 %v3814, %v3881
    %v4169 = vadd.f32 %v3816, %v3885
    %v4170 = vadd.f32 %v3387, %v3873
    %v4171 = vadd.f32 %v3389, %v3877
    %v4172 = vadd.f32 %v3820, %v3881
    %v4173 = vadd.f32 %v3822, %v3885
    %v4174 = vadd.f32 %v3391, %v3873
    %v4175 = vadd.f32 %v3393, %v3877
    %v4176 = vadd.f32 %v3824, %v3881
    %v4177 = vadd.f32 %v3826, %v3885
    %v4178 = vadd.f32 %v3397, %v3873
    %v4179 = vadd.f32 %v3399, %v3877
    %v4180 = vadd.f32 %v3830, %v3881
    %v4181 = vadd.f32 %v3832, %v3885
    %v4182 = vadd.f32 %v3401, %v3873
    %v4183 = vadd.f32 %v3403, %v3877
    %v4184 = vadd.f32 %v3834, %v3881
    %v4185 = vadd.f32 %v3836, %v3885
    %v4186 = vadd.f32 %v3407, %v3873
    %v4187 = vadd.f32 %v3409, %v3877
    %v4188 = vadd.f32 %v3840, %v3881
    %v4189 = vadd.f32 %v3842, %v3885
    %v4190 = vadd.f32 %v3411, %v3873
    %v4191 = vadd.f32 %v3413, %v3877
    %v4192 = vadd.f32 %v3844, %v3881
    %v4193 = vadd.f32 %v3846, %v3885
    %v4194 = vadd.f32 %v3417, %v3873
    %v4195 = vadd.f32 %v3419, %v3877
    %v4196 = vadd.f32 %v3850, %v3881
    %v4197 = vadd.f32 %v3852, %v3885
    %v4198 = vadd.f32 %v3421, %v3873
    %v4199 = vadd.f32 %v3423, %v3877
    %v4200 = vadd.f32 %v3854, %v3881
    %v4201 = vadd.f32 %v3856, %v3885
    %v4202 = vadd.f32 %v3427, %v3873
    %v4203 = vadd.f32 %v3429, %v3877
    %v4204 = vadd.f32 %v3860, %v3881
    %v4205 = vadd.f32 %v3862, %v3885
    %v4206 = vadd.f32 %v3431, %v3873
    %v4207 = vadd.f32 %v3433, %v3877
    %v4208 = vadd.f32 %v3864, %v3881
    %v4209 = vadd.f32 %v3866, %v3885
    %v4210 = vmax.f32 %v3890, 0.0
    %v4211 = vmax.f32 %v3891, 0.0
    %v4212 = vmax.f32 %v3892, 0.0
    %v4213 = vmax.f32 %v3893, 0.0
    %v4214 = vmax.f32 %v3894, 0.0
    %v4215 = vmax.f32 %v3895, 0.0
    %v4216 = vmax.f32 %v3896, 0.0
    %v4217 = vmax.f32 %v3897, 0.0
    %v4218 = vmax.f32 %v3898, 0.0
    %v4219 = vmax.f32 %v3899, 0.0
    %v4220 = vmax.f32 %v3900, 0.0
    %v4221 = vmax.f32 %v3901, 0.0
    %v4222 = vmax.f32 %v3902, 0.0
    %v4223 = vmax.f32 %v3903, 0.0
    %v4224 = vmax.f32 %v3904, 0.0
    %v4225 = vmax.f32 %v3905, 0.0
    %v4226 = vmax.f32 %v3906, 0.0
    %v4227 = vmax.f32 %v3907, 0.0
    %v4228 = vmax.f32 %v3908, 0.0
    %v4229 = vmax.f32 %v3909, 0.0
    %v4230 = vmax.f32 %v3910, 0.0
    %v4231 = vmax.f32 %v3911, 0.0
    %v4232 = vmax.f32 %v3912, 0.0
    %v4233 = vmax.f32 %v3913, 0.0
    %v4234 = vmax.f32 %v3914, 0.0
    %v4235 = vmax.f32 %v3915, 0.0
    %v4236 = vmax.f32 %v3916, 0.0
    %v4237 = vmax.f32 %v3917, 0.0
    %v4238 = vmax.f32 %v3918, 0.0
    %v4239 = vmax.f32 %v3919, 0.0
    %v4240 = vmax.f32 %v3920, 0.0
    %v4241 = vmax.f32 %v3921, 0.0
    %v4242 = vmax.f32 %v3922, 0.0
    %v4243 = vmax.f32 %v3923, 0.0
    %v4244 = vmax.f32 %v3924, 0.0
    %v4245 = vmax.f32 %v3925, 0.0
    %v4246 = vmax.f32 %v3926, 0.0
    %v4247 = vmax.f32 %v3927, 0.0
    %v4248 = vmax.f32 %v3928, 0.0
    %v4249 = vmax.f32 %v3929, 0.0
    %v4250 = vmax.f32 %v3930, 0.0
    %v4251 = vmax.f32 %v3931, 0.0
    %v4252 = vmax.f32 %v3932, 0.0
    %v4253 = vmax.f32 %v3933, 0.0
    %v4254 = vmax.f32 %v3934, 0.0
    %v4255 = vmax.f32 %v3935, 0.0
    %v4256 = vmax.f32 %v3936, 0.0
    %v4257 = vmax.f32 %v3937, 0.0
    %v4258 = vmax.f32 %v3938, 0.0
    %v4259 = vmax.f32 %v3939, 0.0
    %v4260 = vmax.f32 %v3940, 0.0
    %v4261 = vmax.f32 %v3941, 0.0
    %v4262 = vmax.f32 %v3942, 0.0
    %v4263 = vmax.f32 %v3943, 0.0
    %v4264 = vmax.f32 %v3944, 0.0
    %v4265 = vmax.f32 %v3945, 0.0
    %v4266 = vmax.f32 %v3946, 0.0
    %v4267 = vmax.f32 %v3947, 0.0
    %v4268 = vmax.f32 %v3948, 0.0
    %v4269 = vmax.f32 %v3949, 0.0
    %v4270 = vmax.f32 %v3950, 0.0
    %v4271 = vmax.f32 %v3951, 0.0
    %v4272 = vmax.f32 %v3952, 0.0
    %v4273 = vmax.f32 %v3953, 0.0
    %v4274 = vmax.f32 %v3954, 0.0
    %v4275 = vmax.f32 %v3955, 0.0
    %v4276 = vmax.f32 %v3956, 0.0
    %v4277 = vmax.f32 %v3957, 0.0
    %v4278 = vmax.f32 %v3958, 0.0
    %v4279 = vmax.f32 %v3959, 0.0
    %v4280 = vmax.f32 %v3960, 0.0
    %v4281 = vmax.f32 %v3961, 0.0
    %v4282 = vmax.f32 %v3962, 0.0
    %v4283 = vmax.f32 %v3963, 0.0
    %v4284 = vmax.f32 %v3964, 0.0
    %v4285 = vmax.f32 %v3965, 0.0
    %v4286 = vmax.f32 %v3966, 0.0
    %v4287 = vmax.f32 %v3967, 0.0
    %v4288 = vmax.f32 %v3968, 0.0
    %v4289 = vmax.f32 %v3969, 0.0
    %v4290 = vmax.f32 %v3970, 0.0
    %v4291 = vmax.f32 %v3971, 0.0
    %v4292 = vmax.f32 %v3972, 0.0
    %v4293 = vmax.f32 %v3973, 0.0
    %v4294 = vmax.f32 %v3974, 0.0
    %v4295 = vmax.f32 %v3975, 0.0
    %v4296 = vmax.f32 %v3976, 0.0
    %v4297 = vmax.f32 %v3977, 0.0
    %v4298 = vmax.f32 %v3978, 0.0
    %v4299 = vmax.f32 %v3979, 0.0
    %v4300 = vmax.f32 %v3980, 0.0
    %v4301 = vmax.f32 %v3981, 0.0
    %v4302 = vmax.f32 %v3982, 0.0
    %v4303 = vmax.f32 %v3983, 0.0
    %v4304 = vmax.f32 %v3984, 0.0
    %v4305 = vmax.f32 %v3985, 0.0
    %v4306 = vmax.f32 %v3986, 0.0
    %v4307 = vmax.f32 %v3987, 0.0
    %v4308 = vmax.f32 %v3988, 0.0
    %v4309 = vmax.f32 %v3989, 0.0
    %v4310 = vmax.f32 %v3990, 0.0
    %v4311 = vmax.f32 %v3991, 0.0
    %v4312 = vmax.f32 %v3992, 0.0
    %v4313 = vmax.f32 %v3993, 0.0
    %v4314 = vmax.f32 %v3994, 0.0
    %v4315 = vmax.f32 %v3995, 0.0
    %v4316 = vmax.f32 %v3996, 0.0
    %v4317 = vmax.f32 %v3997, 0.0
    %v4318 = vmax.f32 %v3998, 0.0
    %v4319 = vmax.f32 %v3999, 0.0
    %v4320 = vmax.f32 %v4000, 0.0
    %v4321 = vmax.f32 %v4001, 0.0
    %v4322 = vmax.f32 %v4002, 0.0
    %v4323 = vmax.f32 %v4003, 0.0
    %v4324 = vmax.f32 %v4004, 0.0
    %v4325 = vmax.f32 %v4005, 0.0
    %v4326 = vmax.f32 %v4006, 0.0
    %v4327 = vmax.f32 %v4007, 0.0
    %v4328 = vmax.f32 %v4008, 0.0
    %v4329 = vmax.f32 %v4009, 0.0
    %v4330 = vmax.f32 %v4010, 0.0
    %v4331 = vmax.f32 %v4011, 0.0
    %v4332 = vmax.f32 %v4012, 0.0
    %v4333 = vmax.f32 %v4013, 0.0
    %v4334 = vmax.f32 %v4014, 0.0
    %v4335 = vmax.f32 %v4015, 0.0
    %v4336 = vmax.f32 %v4016, 0.0
    %v4337 = vmax.f32 %v4017, 0.0
    %v4338 = vmax.f32 %v4018, 0.0
    %v4339 = vmax.f32 %v4019, 0.0
    %v4340 = vmax.f32 %v4020, 0.0
    %v4341 = vmax.f32 %v4021, 0.0
    %v4342 = vmax.f32 %v4022, 0.0
    %v4343 = vmax.f32 %v4023, 0.0
    %v4344 = vmax.f32 %v4024, 0.0
    %v4345 = vmax.f32 %v4025, 0.0
    %v4346 = vmax.f32 %v4026, 0.0
    %v4347 = vmax.f32 %v4027, 0.0
    %v4348 = vmax.f32 %v4028, 0.0
    %v4349 = vmax.f32 %v4029, 0.0
    %v4350 = vmax.f32 %v4030, 0.0
    %v4351 = vmax.f32 %v4031, 0.0
    %v4352 = vmax.f32 %v4032, 0.0
    %v4353 = vmax.f32 %v4033, 0.0
    %v4354 = vmax.f32 %v4034, 0.0
    %v4355 = vmax.f32 %v4035, 0.0
    %v4356 = vmax.f32 %v4036, 0.0
    %v4357 = vmax.f32 %v4037, 0.0
    %v4358 = vmax.f32 %v4038, 0.0
    %v4359 = vmax.f32 %v4039, 0.0
    %v4360 = vmax.f32 %v4040, 0.0
    %v4361 = vmax.f32 %v4041, 0.0
    %v4362 = vmax.f32 %v4042, 0.0
    %v4363 = vmax.f32 %v4043, 0.0
    %v4364 = vmax.f32 %v4044, 0.0
    %v4365 = vmax.f32 %v4045, 0.0
    %v4366 = vmax.f32 %v4046, 0.0
    %v4367 = vmax.f32 %v4047, 0.0
    %v4368 = vmax.f32 %v4048, 0.0
    %v4369 = vmax.f32 %v4049, 0.0
    %v4370 = vmax.f32 %v4050, 0.0
    %v4371 = vmax.f32 %v4051, 0.0
    %v4372 = vmax.f32 %v4052, 0.0
    %v4373 = vmax.f32 %v4053, 0.0
    %v4374 = vmax.f32 %v4054, 0.0
    %v4375 = vmax.f32 %v4055, 0.0
    %v4376 = vmax.f32 %v4056, 0.0
    %v4377 = vmax.f32 %v4057, 0.0
    %v4378 = vmax.f32 %v4058, 0.0
    %v4379 = vmax.f32 %v4059, 0.0
    %v4380 = vmax.f32 %v4060, 0.0
    %v4381 = vmax.f32 %v4061, 0.0
    %v4382 = vmax.f32 %v4062, 0.0
    %v4383 = vmax.f32 %v4063, 0.0
    %v4384 = vmax.f32 %v4064, 0.0
    %v4385 = vmax.f32 %v4065, 0.0
    %v4386 = vmax.f32 %v4066, 0.0
    %v4387 = vmax.f32 %v4067, 0.0
    %v4388 = vmax.f32 %v4068, 0.0
    %v4389 = vmax.f32 %v4069, 0.0
    %v4390 = vmax.f32 %v4070, 0.0
    %v4391 = vmax.f32 %v4071, 0.0
    %v4392 = vmax.f32 %v4072, 0.0
    %v4393 = vmax.f32 %v4073, 0.0
    %v4394 = vmax.f32 %v4074, 0.0
    %v4395 = vmax.f32 %v4075, 0.0
    %v4396 = vmax.f32 %v4076, 0.0
    %v4397 = vmax.f32 %v4077, 0.0
    %v4398 = vmax.f32 %v4078, 0.0
    %v4399 = vmax.f32 %v4079, 0.0
    %v4400 = vmax.f32 %v4080, 0.0
    %v4401 = vmax.f32 %v4081, 0.0
    %v4402 = vmax.f32 %v4082, 0.0
    %v4403 = vmax.f32 %v4083, 0.0
    %v4404 = vmax.f32 %v4084, 0.0
    %v4405 = vmax.f32 %v4085, 0.0
    %v4406 = vmax.f32 %v4086, 0.0
    %v4407 = vmax.f32 %v4087, 0.0
    %v4408 = vmax.f32 %v4088, 0.0
    %v4409 = vmax.f32 %v4089, 0.0
    %v4410 = vmax.f32 %v4090, 0.0
    %v4411 = vmax.f32 %v4091, 0.0
    %v4412 = vmax.f32 %v4092, 0.0
    %v4413 = vmax.f32 %v4093, 0.0
    %v4414 = vmax.f32 %v4094, 0.0
    %v4415 = vmax.f32 %v4095, 0.0
    %v4416 = vmax.f32 %v4096, 0.0
    %v4417 = vmax.f32 %v4097, 0.0
    %v4418 = vmax.f32 %v4098, 0.0
    %v4419 = vmax.f32 %v4099, 0.0
    %v4420 = vmax.f32 %v4100, 0.0
    %v4421 = vmax.f32 %v4101, 0.0
    %v4422 = vmax.f32 %v4102, 0.0
    %v4423 = vmax.f32 %v4103, 0.0
    %v4424 = vmax.f32 %v4104, 0.0
    %v4425 = vmax.f32 %v4105, 0.0
    %v4426 = vmax.f32 %v4106, 0.0
    %v4427 = vmax.f32 %v4107, 0.0
    %v4428 = vmax.f32 %v4108, 0.0
    %v4429 = vmax.f32 %v4109, 0.0
    %v4430 = vmax.f32 %v4110, 0.0
    %v4431 = vmax.f32 %v4111, 0.0
    %v4432 = vmax.f32 %v4112, 0.0
    %v4433 = vmax.f32 %v4113, 0.0
    %v4434 = vmax.f32 %v4114, 0.0
    %v4435 = vmax.f32 %v4115, 0.0
    %v4436 = vmax.f32 %v4116, 0.0
    %v4437 = vmax.f32 %v4117, 0.0
    %v4438 = vmax.f32 %v4118, 0.0
    %v4439 = vmax.f32 %v4119, 0.0
    %v4440 = vmax.f32 %v4120, 0.0
    %v4441 = vmax.f32 %v4121, 0.0
    %v4442 = vmax.f32 %v4122, 0.0
    %v4443 = vmax.f32 %v4123, 0.0
    %v4444 = vmax.f32 %v4124, 0.0
    %v4445 = vmax.f32 %v4125, 0.0
    %v4446 = vmax.f32 %v4126, 0.0
    %v4447 = vmax.f32 %v4127, 0.0
    %v4448 = vmax.f32 %v4128, 0.0
    %v4449 = vmax.f32 %v4129, 0.0
    %v4450 = vmax.f32 %v4130, 0.0
    %v4451 = vmax.f32 %v4131, 0.0
    %v4452 = vmax.f32 %v4132, 0.0
    %v4453 = vmax.f32 %v4133, 0.0
    %v4454 = vmax.f32 %v4134, 0.0
    %v4455 = vmax.f32 %v4135, 0.0
    %v4456 = vmax.f32 %v4136, 0.0
    %v4457 = vmax.f32 %v4137, 0.0
    %v4458 = vmax.f32 %v4138, 0.0
    %v4459 = vmax.f32 %v4139, 0.0
    %v4460 = vmax.f32 %v4140, 0.0
    %v4461 = vmax.f32 %v4141, 0.0
    %v4462 = vmax.f32 %v4142, 0.0
    %v4463 = vmax.f32 %v4143, 0.0
    %v4464 = vmax.f32 %v4144, 0.0
    %v4465 = vmax.f32 %v4145, 0.0
    %v4466 = vmax.f32 %v4146, 0.0
    %v4467 = vmax.f32 %v4147, 0.0
    %v4468 = vmax.f32 %v4148, 0.0
    %v4469 = vmax.f32 %v4149, 0.0
    %v4470 = vmax.f32 %v4150, 0.0
    %v4471 = vmax.f32 %v4151, 0.0
    %v4472 = vmax.f32 %v4152, 0.0
    %v4473 = vmax.f32 %v4153, 0.0
    %v4474 = vmax.f32 %v4154, 0.0
    %v4475 = vmax.f32 %v4155, 0.0
    %v4476 = vmax.f32 %v4156, 0.0
    %v4477 = vmax.f32 %v4157, 0.0
    %v4478 = vmax.f32 %v4158, 0.0
    %v4479 = vmax.f32 %v4159, 0.0
    %v4480 = vmax.f32 %v4160, 0.0
    %v4481 = vmax.f32 %v4161, 0.0
    %v4482 = vmax.f32 %v4162, 0.0
    %v4483 = vmax.f32 %v4163, 0.0
    %v4484 = vmax.f32 %v4164, 0.0
    %v4485 = vmax.f32 %v4165, 0.0
    %v4486 = vmax.f32 %v4166, 0.0
    %v4487 = vmax.f32 %v4167, 0.0
    %v4488 = vmax.f32 %v4168, 0.0
    %v4489 = vmax.f32 %v4169, 0.0
    %v4490 = vmax.f32 %v4170, 0.0
    %v4491 = vmax.f32 %v4171, 0.0
    %v4492 = vmax.f32 %v4172, 0.0
    %v4493 = vmax.f32 %v4173, 0.0
    %v4494 = vmax.f32 %v4174, 0.0
    %v4495 = vmax.f32 %v4175, 0.0
    %v4496 = vmax.f32 %v4176, 0.0
    %v4497 = vmax.f32 %v4177, 0.0
    %v4498 = vmax.f32 %v4178, 0.0
    %v4499 = vmax.f32 %v4179, 0.0
    %v4500 = vmax.f32 %v4180, 0.0
    %v4501 = vmax.f32 %v4181, 0.0
    %v4502 = vmax.f32 %v4182, 0.0
    %v4503 = vmax.f32 %v4183, 0.0
    %v4504 = vmax.f32 %v4184, 0.0
    %v4505 = vmax.f32 %v4185, 0.0
    %v4506 = vmax.f32 %v4186, 0.0
    %v4507 = vmax.f32 %v4187, 0.0
    %v4508 = vmax.f32 %v4188, 0.0
    %v4509 = vmax.f32 %v4189, 0.0
    %v4510 = vmax.f32 %v4190, 0.0
    %v4511 = vmax.f32 %v4191, 0.0
    %v4512 = vmax.f32 %v4192, 0.0
    %v4513 = vmax.f32 %v4193, 0.0
    %v4514 = vmax.f32 %v4194, 0.0
    %v4515 = vmax.f32 %v4195, 0.0
    %v4516 = vmax.f32 %v4196, 0.0
    %v4517 = vmax.f32 %v4197, 0.0
    %v4518 = vmax.f32 %v4198, 0.0
    %v4519 = vmax.f32 %v4199, 0.0
    %v4520 = vmax.f32 %v4200, 0.0
    %v4521 = vmax.f32 %v4201, 0.0
    %v4522 = vmax.f32 %v4202, 0.0
    %v4523 = vmax.f32 %v4203, 0.0
    %v4524 = vmax.f32 %v4204, 0.0
    %v4525 = vmax.f32 %v4205, 0.0
    %v4526 = vmax.f32 %v4206, 0.0
    %v4527 = vmax.f32 %v4207, 0.0
    %v4528 = vmax.f32 %v4208, 0.0
    %v4529 = vmax.f32 %v4209, 0.0
    %v4530 = vpack.c.bf16 %v4214, %v4210
    %v4531 = vpack.c.bf16 %v4215, %v4211
    %v4532 = vpack.c.bf16 %v4216, %v4212
    %v4533 = vpack.c.bf16 %v4217, %v4213
    %v4534 = vpack.c.bf16 %v4222, %v4218
    %v4535 = vpack.c.bf16 %v4223, %v4219
    %v4536 = vpack.c.bf16 %v4224, %v4220
    %v4537 = vpack.c.bf16 %v4225, %v4221
    %v4538 = vpack.c.bf16 %v4230, %v4226
    %v4539 = vpack.c.bf16 %v4231, %v4227
    %v4540 = vpack.c.bf16 %v4232, %v4228
    %v4541 = vpack.c.bf16 %v4233, %v4229
    %v4542 = vpack.c.bf16 %v4238, %v4234
    %v4543 = vpack.c.bf16 %v4239, %v4235
    %v4544 = vpack.c.bf16 %v4240, %v4236
    %v4545 = vpack.c.bf16 %v4241, %v4237
    %v4546 = vpack.c.bf16 %v4246, %v4242
    %v4547 = vpack.c.bf16 %v4247, %v4243
    %v4548 = vpack.c.bf16 %v4248, %v4244
    %v4549 = vpack.c.bf16 %v4249, %v4245
    %v4550 = vpack.c.bf16 %v4254, %v4250
    %v4551 = vpack.c.bf16 %v4255, %v4251
    %v4552 = vpack.c.bf16 %v4256, %v4252
    %v4553 = vpack.c.bf16 %v4257, %v4253
    %v4554 = vpack.c.bf16 %v4262, %v4258
    %v4555 = vpack.c.bf16 %v4263, %v4259
    %v4556 = vpack.c.bf16 %v4264, %v4260
    %v4557 = vpack.c.bf16 %v4265, %v4261
    %v4558 = vpack.c.bf16 %v4270, %v4266
    %v4559 = vpack.c.bf16 %v4271, %v4267
    %v4560 = vpack.c.bf16 %v4272, %v4268
    %v4561 = vpack.c.bf16 %v4273, %v4269
    %v4562 = vpack.c.bf16 %v4278, %v4274
    %v4563 = vpack.c.bf16 %v4279, %v4275
    %v4564 = vpack.c.bf16 %v4280, %v4276
    %v4565 = vpack.c.bf16 %v4281, %v4277
    %v4566 = vpack.c.bf16 %v4286, %v4282
    %v4567 = vpack.c.bf16 %v4287, %v4283
    %v4568 = vpack.c.bf16 %v4288, %v4284
    %v4569 = vpack.c.bf16 %v4289, %v4285
    %v4570 = vpack.c.bf16 %v4294, %v4290
    %v4571 = vpack.c.bf16 %v4295, %v4291
    %v4572 = vpack.c.bf16 %v4296, %v4292
    %v4573 = vpack.c.bf16 %v4297, %v4293
    %v4574 = vpack.c.bf16 %v4302, %v4298
    %v4575 = vpack.c.bf16 %v4303, %v4299
    %v4576 = vpack.c.bf16 %v4304, %v4300
    %v4577 = vpack.c.bf16 %v4305, %v4301
    %v4578 = vpack.c.bf16 %v4310, %v4306
    %v4579 = vpack.c.bf16 %v4311, %v4307
    %v4580 = vpack.c.bf16 %v4312, %v4308
    %v4581 = vpack.c.bf16 %v4313, %v4309
    %v4582 = vpack.c.bf16 %v4318, %v4314
    %v4583 = vpack.c.bf16 %v4319, %v4315
    %v4584 = vpack.c.bf16 %v4320, %v4316
    %v4585 = vpack.c.bf16 %v4321, %v4317
    %v4586 = vpack.c.bf16 %v4326, %v4322
    %v4587 = vpack.c.bf16 %v4327, %v4323
    %v4588 = vpack.c.bf16 %v4328, %v4324
    %v4589 = vpack.c.bf16 %v4329, %v4325
    %v4590 = vpack.c.bf16 %v4334, %v4330
    %v4591 = vpack.c.bf16 %v4335, %v4331
    %v4592 = vpack.c.bf16 %v4336, %v4332
    %v4593 = vpack.c.bf16 %v4337, %v4333
    %v4594 = vpack.c.bf16 %v4342, %v4338
    %v4595 = vpack.c.bf16 %v4343, %v4339
    %v4596 = vpack.c.bf16 %v4344, %v4340
    %v4597 = vpack.c.bf16 %v4345, %v4341
    %v4598 = vpack.c.bf16 %v4350, %v4346
    %v4599 = vpack.c.bf16 %v4351, %v4347
    %v4600 = vpack.c.bf16 %v4352, %v4348
    %v4601 = vpack.c.bf16 %v4353, %v4349
    %v4602 = vpack.c.bf16 %v4358, %v4354
    %v4603 = vpack.c.bf16 %v4359, %v4355
    %v4604 = vpack.c.bf16 %v4360, %v4356
    %v4605 = vpack.c.bf16 %v4361, %v4357
    %v4606 = vpack.c.bf16 %v4366, %v4362
    %v4607 = vpack.c.bf16 %v4367, %v4363
    %v4608 = vpack.c.bf16 %v4368, %v4364
    %v4609 = vpack.c.bf16 %v4369, %v4365
    %v4610 = vpack.c.bf16 %v4374, %v4370
    %v4611 = vpack.c.bf16 %v4375, %v4371
    %v4612 = vpack.c.bf16 %v4376, %v4372
    %v4613 = vpack.c.bf16 %v4377, %v4373
    %v4614 = vpack.c.bf16 %v4382, %v4378
    %v4615 = vpack.c.bf16 %v4383, %v4379
    %v4616 = vpack.c.bf16 %v4384, %v4380
    %v4617 = vpack.c.bf16 %v4385, %v4381
    %v4618 = vpack.c.bf16 %v4390, %v4386
    %v4619 = vpack.c.bf16 %v4391, %v4387
    %v4620 = vpack.c.bf16 %v4392, %v4388
    %v4621 = vpack.c.bf16 %v4393, %v4389
    %v4622 = vpack.c.bf16 %v4398, %v4394
    %v4623 = vpack.c.bf16 %v4399, %v4395
    %v4624 = vpack.c.bf16 %v4400, %v4396
    %v4625 = vpack.c.bf16 %v4401, %v4397
    %v4626 = vpack.c.bf16 %v4406, %v4402
    %v4627 = vpack.c.bf16 %v4407, %v4403
    %v4628 = vpack.c.bf16 %v4408, %v4404
    %v4629 = vpack.c.bf16 %v4409, %v4405
    %v4630 = vpack.c.bf16 %v4414, %v4410
    %v4631 = vpack.c.bf16 %v4415, %v4411
    %v4632 = vpack.c.bf16 %v4416, %v4412
    %v4633 = vpack.c.bf16 %v4417, %v4413
    %v4634 = vpack.c.bf16 %v4422, %v4418
    %v4635 = vpack.c.bf16 %v4423, %v4419
    %v4636 = vpack.c.bf16 %v4424, %v4420
    %v4637 = vpack.c.bf16 %v4425, %v4421
    %v4638 = vpack.c.bf16 %v4430, %v4426
    %v4639 = vpack.c.bf16 %v4431, %v4427
    %v4640 = vpack.c.bf16 %v4432, %v4428
    %v4641 = vpack.c.bf16 %v4433, %v4429
    %v4642 = vpack.c.bf16 %v4438, %v4434
    %v4643 = vpack.c.bf16 %v4439, %v4435
    %v4644 = vpack.c.bf16 %v4440, %v4436
    %v4645 = vpack.c.bf16 %v4441, %v4437
    %v4646 = vpack.c.bf16 %v4446, %v4442
    %v4647 = vpack.c.bf16 %v4447, %v4443
    %v4648 = vpack.c.bf16 %v4448, %v4444
    %v4649 = vpack.c.bf16 %v4449, %v4445
    %v4650 = vpack.c.bf16 %v4454, %v4450
    %v4651 = vpack.c.bf16 %v4455, %v4451
    %v4652 = vpack.c.bf16 %v4456, %v4452
    %v4653 = vpack.c.bf16 %v4457, %v4453
    %v4654 = vpack.c.bf16 %v4462, %v4458
    %v4655 = vpack.c.bf16 %v4463, %v4459
    %v4656 = vpack.c.bf16 %v4464, %v4460
    %v4657 = vpack.c.bf16 %v4465, %v4461
    %v4658 = vpack.c.bf16 %v4470, %v4466
    %v4659 = vpack.c.bf16 %v4471, %v4467
    %v4660 = vpack.c.bf16 %v4472, %v4468
    %v4661 = vpack.c.bf16 %v4473, %v4469
    %v4662 = vpack.c.bf16 %v4478, %v4474
    %v4663 = vpack.c.bf16 %v4479, %v4475
    %v4664 = vpack.c.bf16 %v4480, %v4476
    %v4665 = vpack.c.bf16 %v4481, %v4477
    %v4666 = vpack.c.bf16 %v4486, %v4482
    %v4667 = vpack.c.bf16 %v4487, %v4483
    %v4668 = vpack.c.bf16 %v4488, %v4484
    %v4669 = vpack.c.bf16 %v4489, %v4485
    %v4670 = vpack.c.bf16 %v4494, %v4490
    %v4671 = vpack.c.bf16 %v4495, %v4491
    %v4672 = vpack.c.bf16 %v4496, %v4492
    %v4673 = vpack.c.bf16 %v4497, %v4493
    %v4674 = vpack.c.bf16 %v4502, %v4498
    %v4675 = vpack.c.bf16 %v4503, %v4499
    %v4676 = vpack.c.bf16 %v4504, %v4500
    %v4677 = vpack.c.bf16 %v4505, %v4501
    %v4678 = vpack.c.bf16 %v4510, %v4506
    %v4679 = vpack.c.bf16 %v4511, %v4507
    %v4680 = vpack.c.bf16 %v4512, %v4508
    %v4681 = vpack.c.bf16 %v4513, %v4509
    %v4682 = vpack.c.bf16 %v4518, %v4514
    %v4683 = vpack.c.bf16 %v4519, %v4515
    %v4684 = vpack.c.bf16 %v4520, %v4516
    %v4685 = vpack.c.bf16 %v4521, %v4517
    %v4686 = vpack.c.bf16 %v4526, %v4522
    %v4687 = vpack.c.bf16 %v4527, %v4523
    %v4688 = vpack.c.bf16 %v4528, %v4524
    %v4689 = vpack.c.bf16 %v4529, %v4525
    %v4690 = vld [vmem:[%s5] sm:$0xff]
    %v4691 = vld [vmem:[%s5 + $0x8] sm:$0xf]
    %v4692 = vld [vmem:[%s5 + $0xc] sm:$0xff]
    %v4693 = vld [vmem:[%s5 + $0x14] sm:$0xf]
    %v4694 = vld [vmem:[%s5 + $0x18] sm:$0xff]
    %v4695 = vld [vmem:[%s5 + $0x20] sm:$0xf]
    %v4696 = vld [vmem:[%s5 + $0x24] sm:$0xff]
    %v4697 = vld [vmem:[%s5 + $0x2c] sm:$0xf]
    %v4698 = vld [vmem:[%s5 + $0x30] sm:$0xff]
    %v4699 = vld [vmem:[%s5 + $0x38] sm:$0xf]
    %v4700 = vld [vmem:[%s5 + $0x3c] sm:$0xff]
    %v4701 = vld [vmem:[%s5 + $0x44] sm:$0xf]
    %v4702 = vld [vmem:[%s5 + $0x48] sm:$0xff]
    %v4703 = vld [vmem:[%s5 + $0x50] sm:$0xf]
    %v4704 = vld [vmem:[%s5 + $0x54] sm:$0xff]
    %v4705 = vld [vmem:[%s5 + $0x5c] sm:$0xf]
    %v4706 = vld [vmem:[%s5 + $0x60] sm:$0xff]
    %v4707 = vld [vmem:[%s5 + $0x68] sm:$0xf]
    %v4708 = vld [vmem:[%s5 + $0x6c] sm:$0xff]
    %v4709 = vld [vmem:[%s5 + $0x74] sm:$0xf]
    %v4710 = vld [vmem:[%s5 + $0x78] sm:$0xff]
    %v4711 = vld [vmem:[%s5 + $0x80] sm:$0xf]
    %v4712 = vld [vmem:[%s5 + $0x84] sm:$0xff]
    %v4713 = vld [vmem:[%s5 + $0x8c] sm:$0xf]
    %v4714 = vld [vmem:[%s5 + $0x90] sm:$0xff]
    %v4715 = vld [vmem:[%s5 + $0x98] sm:$0xf]
    %v4716 = vld [vmem:[%s5 + $0x9c] sm:$0xff]
    %v4717 = vld [vmem:[%s5 + $0xa4] sm:$0xf]
    %v4718 = vld [vmem:[%s5 + $0xa8] sm:$0xff]
    %v4719 = vld [vmem:[%s5 + $0xb0] sm:$0xf]
    %v4720 = vld [vmem:[%s5 + $0xb4] sm:$0xff]
    %v4721 = vld [vmem:[%s5 + $0xbc] sm:$0xf]
    %v4722 = vld [vmem:[%s5 + $0xc0] sm:$0xff]
    %v4723 = vld [vmem:[%s5 + $0xc8] sm:$0xf]
    %v4724 = vld [vmem:[%s5 + $0xcc] sm:$0xff]
    %v4725 = vld [vmem:[%s5 + $0xd4] sm:$0xf]
    %v4726 = vld [vmem:[%s5 + $0xd8] sm:$0xff]
    %v4727 = vld [vmem:[%s5 + $0xe0] sm:$0xf]
    %v4728 = vld [vmem:[%s5 + $0xe4] sm:$0xff]
    %v4729 = vld [vmem:[%s5 + $0xec] sm:$0xf]
    %v4730 = vld [vmem:[%s5 + $0xf0] sm:$0xff]
    %v4731 = vld [vmem:[%s5 + $0xf8] sm:$0xf]
    %v4732 = vld [vmem:[%s5 + $0xfc] sm:$0xff]
    %v4733 = vld [vmem:[%s5 + $0x104] sm:$0xf]
    %v4734 = vld [vmem:[%s5 + $0x108] sm:$0xff]
    %v4735 = vld [vmem:[%s5 + $0x110] sm:$0xf]
    %v4736 = vld [vmem:[%s5 + $0x114] sm:$0xff]
    %v4737 = vld [vmem:[%s5 + $0x11c] sm:$0xf]
    %v4738 = vld [vmem:[%s5 + $0x120] sm:$0xff]
    %v4739 = vld [vmem:[%s5 + $0x128] sm:$0xf]
    %v4740 = vld [vmem:[%s5 + $0x12c] sm:$0xff]
    %v4741 = vld [vmem:[%s5 + $0x134] sm:$0xf]
    %v4742 = vld [vmem:[%s5 + $0x138] sm:$0xff]
    %v4743 = vld [vmem:[%s5 + $0x140] sm:$0xf]
    %v4744 = vld [vmem:[%s5 + $0x144] sm:$0xff]
    %v4745 = vld [vmem:[%s5 + $0x14c] sm:$0xf]
    %v4746 = vld [vmem:[%s5 + $0x150] sm:$0xff]
    %v4747 = vld [vmem:[%s5 + $0x158] sm:$0xf]
    %v4748 = vld [vmem:[%s5 + $0x15c] sm:$0xff]
    %v4749 = vld [vmem:[%s5 + $0x164] sm:$0xf]
    %v4750 = vld [vmem:[%s5 + $0x168] sm:$0xff]
    %v4751 = vld [vmem:[%s5 + $0x170] sm:$0xf]
    %v4752 = vld [vmem:[%s5 + $0x174] sm:$0xff]
    %v4753 = vld [vmem:[%s5 + $0x17c] sm:$0xf]
    %v4754 = vld [vmem:[%s5 + $0x180] sm:$0xff]
    %v4755 = vld [vmem:[%s5 + $0x188] sm:$0xf]
    %v4756 = vld [vmem:[%s5 + $0x18c] sm:$0xff]
    %v4757 = vld [vmem:[%s5 + $0x194] sm:$0xf]
    %v4758 = vld [vmem:[%s5 + $0x198] sm:$0xff]
    %v4759 = vld [vmem:[%s5 + $0x1a0] sm:$0xf]
    %v4760 = vld [vmem:[%s5 + $0x1a4] sm:$0xff]
    %v4761 = vld [vmem:[%s5 + $0x1ac] sm:$0xf]
    %v4762 = vld [vmem:[%s5 + $0x1b0] sm:$0xff]
    %v4763 = vld [vmem:[%s5 + $0x1b8] sm:$0xf]
    %v4764 = vld [vmem:[%s5 + $0x1bc] sm:$0xff]
    %v4765 = vld [vmem:[%s5 + $0x1c4] sm:$0xf]
    %v4766 = vld [vmem:[%s5 + $0x1c8] sm:$0xff]
    %v4767 = vld [vmem:[%s5 + $0x1d0] sm:$0xf]
    %v4768 = vld [vmem:[%s5 + $0x1d4] sm:$0xff]
    %v4769 = vld [vmem:[%s5 + $0x1dc] sm:$0xf]
    %v4770 = vld [vmem:[%s5 + $0x1e0] sm:$0xff]
    %v4771 = vld [vmem:[%s5 + $0x1e8] sm:$0xf]
    %v4772 = vld [vmem:[%s5 + $0x1ec] sm:$0xff]
    %v4773 = vld [vmem:[%s5 + $0x1f4] sm:$0xf]
    %v4774 = vld [vmem:[%s5 + $0x1f8] sm:$0xff]
    %v4775 = vld [vmem:[%s5 + $0x200] sm:$0xf]
    %v4776 = vld [vmem:[%s5 + $0x204] sm:$0xff]
    %v4777 = vld [vmem:[%s5 + $0x20c] sm:$0xf]
    %v4778 = vld [vmem:[%s5 + $0x210] sm:$0xff]
    %v4779 = vld [vmem:[%s5 + $0x218] sm:$0xf]
    %v4780 = vld [vmem:[%s5 + $0x21c] sm:$0xff]
    %v4781 = vld [vmem:[%s5 + $0x224] sm:$0xf]
    %v4782 = vld [vmem:[%s5 + $0x228] sm:$0xff]
    %v4783 = vld [vmem:[%s5 + $0x230] sm:$0xf]
    %v4784 = vld [vmem:[%s5 + $0x234] sm:$0xff]
    %v4785 = vld [vmem:[%s5 + $0x23c] sm:$0xf]
    %v4786 = vld [vmem:[%s5 + $0x240] sm:$0xff]
    %v4787 = vld [vmem:[%s5 + $0x248] sm:$0xf]
    %v4788 = vld [vmem:[%s5 + $0x24c] sm:$0xff]
    %v4789 = vld [vmem:[%s5 + $0x254] sm:$0xf]
    %v4790 = vld [vmem:[%s5 + $0x258] sm:$0xff]
    %v4791 = vld [vmem:[%s5 + $0x260] sm:$0xf]
    %v4792 = vld [vmem:[%s5 + $0x264] sm:$0xff]
    %v4793 = vld [vmem:[%s5 + $0x26c] sm:$0xf]
    %v4794 = vld [vmem:[%s5 + $0x270] sm:$0xff]
    %v4795 = vld [vmem:[%s5 + $0x278] sm:$0xf]
    %v4796 = vld [vmem:[%s5 + $0x27c] sm:$0xff]
    %v4797 = vld [vmem:[%s5 + $0x284] sm:$0xf]
    %v4798 = vld [vmem:[%s5 + $0x288] sm:$0xff]
    %v4799 = vld [vmem:[%s5 + $0x290] sm:$0xf]
    %v4800 = vld [vmem:[%s5 + $0x294] sm:$0xff]
    %v4801 = vld [vmem:[%s5 + $0x29c] sm:$0xf]
    %s4802 = scalar_lea.vmem %s5, 672
    %v4803 = vld [vmem:[%s4802] sm:$0xff]
    %v4804 = vld [vmem:[%s4802 + $0x8] sm:$0xf]
    %v4805 = vld [vmem:[%s4802 + $0xc] sm:$0xff]
    %v4806 = vld [vmem:[%s4802 + $0x14] sm:$0xf]
    %v4807 = vld [vmem:[%s4802 + $0x18] sm:$0xff]
    %v4808 = vld [vmem:[%s4802 + $0x20] sm:$0xf]
    %v4809 = vld [vmem:[%s4802 + $0x24] sm:$0xff]
    %v4810 = vld [vmem:[%s4802 + $0x2c] sm:$0xf]
    %v4811 = vld [vmem:[%s4802 + $0x30] sm:$0xff]
    %v4812 = vld [vmem:[%s4802 + $0x38] sm:$0xf]
    %v4813 = vld [vmem:[%s4802 + $0x3c] sm:$0xff]
    %v4814 = vld [vmem:[%s4802 + $0x44] sm:$0xf]
    %v4815 = vld [vmem:[%s4802 + $0x48] sm:$0xff]
    %v4816 = vld [vmem:[%s4802 + $0x50] sm:$0xf]
    %v4817 = vld [vmem:[%s4802 + $0x54] sm:$0xff]
    %v4818 = vld [vmem:[%s4802 + $0x5c] sm:$0xf]
    %v4819 = vld [vmem:[%s4802 + $0x60] sm:$0xff]
    %v4820 = vld [vmem:[%s4802 + $0x68] sm:$0xf]
    %v4821 = vld [vmem:[%s4802 + $0x6c] sm:$0xff]
    %v4822 = vld [vmem:[%s4802 + $0x74] sm:$0xf]
    %v4823 = vld [vmem:[%s4802 + $0x78] sm:$0xff]
    %v4824 = vld [vmem:[%s4802 + $0x80] sm:$0xf]
    %v4825 = vld [vmem:[%s4802 + $0x84] sm:$0xff]
    %v4826 = vld [vmem:[%s4802 + $0x8c] sm:$0xf]
    %v4827 = vld [vmem:[%s4802 + $0x90] sm:$0xff]
    %v4828 = vld [vmem:[%s4802 + $0x98] sm:$0xf]
    %v4829 = vld [vmem:[%s4802 + $0x9c] sm:$0xff]
    %v4830 = vld [vmem:[%s4802 + $0xa4] sm:$0xf]
    %v4831 = vld [vmem:[%s4802 + $0xa8] sm:$0xff]
    %v4832 = vld [vmem:[%s4802 + $0xb0] sm:$0xf]
    %v4833 = vld [vmem:[%s4802 + $0xb4] sm:$0xff]
    %v4834 = vld [vmem:[%s4802 + $0xbc] sm:$0xf]
    %v4835 = vld [vmem:[%s4802 + $0xc0] sm:$0xff]
    %v4836 = vld [vmem:[%s4802 + $0xc8] sm:$0xf]
    %v4837 = vld [vmem:[%s4802 + $0xcc] sm:$0xff]
    %v4838 = vld [vmem:[%s4802 + $0xd4] sm:$0xf]
    %v4839 = vld [vmem:[%s4802 + $0xd8] sm:$0xff]
    %v4840 = vld [vmem:[%s4802 + $0xe0] sm:$0xf]
    %v4841 = vld [vmem:[%s4802 + $0xe4] sm:$0xff]
    %v4842 = vld [vmem:[%s4802 + $0xec] sm:$0xf]
    %v4843 = vld [vmem:[%s4802 + $0xf0] sm:$0xff]
    %v4844 = vld [vmem:[%s4802 + $0xf8] sm:$0xf]
    %v4845 = vld [vmem:[%s4802 + $0xfc] sm:$0xff]
    %v4846 = vld [vmem:[%s4802 + $0x104] sm:$0xf]
    %v4847 = vld [vmem:[%s4802 + $0x108] sm:$0xff]
    %v4848 = vld [vmem:[%s4802 + $0x110] sm:$0xf]
    %v4849 = vld [vmem:[%s4802 + $0x114] sm:$0xff]
    %v4850 = vld [vmem:[%s4802 + $0x11c] sm:$0xf]
    %v4851 = vld [vmem:[%s4802 + $0x120] sm:$0xff]
    %v4852 = vld [vmem:[%s4802 + $0x128] sm:$0xf]
    %v4853 = vld [vmem:[%s4802 + $0x12c] sm:$0xff]
    %v4854 = vld [vmem:[%s4802 + $0x134] sm:$0xf]
    %v4855 = vld [vmem:[%s4802 + $0x138] sm:$0xff]
    %v4856 = vld [vmem:[%s4802 + $0x140] sm:$0xf]
    %v4857 = vld [vmem:[%s4802 + $0x144] sm:$0xff]
    %v4858 = vld [vmem:[%s4802 + $0x14c] sm:$0xf]
    %v4859 = vld [vmem:[%s4802 + $0x150] sm:$0xff]
    %v4860 = vld [vmem:[%s4802 + $0x158] sm:$0xf]
    %v4861 = vld [vmem:[%s4802 + $0x15c] sm:$0xff]
    %v4862 = vld [vmem:[%s4802 + $0x164] sm:$0xf]
    %v4863 = vld [vmem:[%s4802 + $0x168] sm:$0xff]
    %v4864 = vld [vmem:[%s4802 + $0x170] sm:$0xf]
    %v4865 = vld [vmem:[%s4802 + $0x174] sm:$0xff]
    %v4866 = vld [vmem:[%s4802 + $0x17c] sm:$0xf]
    %v4867 = vld [vmem:[%s4802 + $0x180] sm:$0xff]
    %v4868 = vld [vmem:[%s4802 + $0x188] sm:$0xf]
    %v4869 = vld [vmem:[%s4802 + $0x18c] sm:$0xff]
    %v4870 = vld [vmem:[%s4802 + $0x194] sm:$0xf]
    %v4871 = vld [vmem:[%s4802 + $0x198] sm:$0xff]
    %v4872 = vld [vmem:[%s4802 + $0x1a0] sm:$0xf]
    %v4873 = vld [vmem:[%s4802 + $0x1a4] sm:$0xff]
    %v4874 = vld [vmem:[%s4802 + $0x1ac] sm:$0xf]
    %v4875 = vld [vmem:[%s4802 + $0x1b0] sm:$0xff]
    %v4876 = vld [vmem:[%s4802 + $0x1b8] sm:$0xf]
    %v4877 = vld [vmem:[%s4802 + $0x1bc] sm:$0xff]
    %v4878 = vld [vmem:[%s4802 + $0x1c4] sm:$0xf]
    %v4879 = vld [vmem:[%s4802 + $0x1c8] sm:$0xff]
    %v4880 = vld [vmem:[%s4802 + $0x1d0] sm:$0xf]
    %v4881 = vld [vmem:[%s4802 + $0x1d4] sm:$0xff]
    %v4882 = vld [vmem:[%s4802 + $0x1dc] sm:$0xf]
    %v4883 = vld [vmem:[%s4802 + $0x1e0] sm:$0xff]
    %v4884 = vld [vmem:[%s4802 + $0x1e8] sm:$0xf]
    %v4885 = vld [vmem:[%s4802 + $0x1ec] sm:$0xff]
    %v4886 = vld [vmem:[%s4802 + $0x1f4] sm:$0xf]
    %v4887 = vld [vmem:[%s4802 + $0x1f8] sm:$0xff]
    %v4888 = vld [vmem:[%s4802 + $0x200] sm:$0xf]
    %v4889 = vld [vmem:[%s4802 + $0x204] sm:$0xff]
    %v4890 = vld [vmem:[%s4802 + $0x20c] sm:$0xf]
    %v4891 = vld [vmem:[%s4802 + $0x210] sm:$0xff]
    %v4892 = vld [vmem:[%s4802 + $0x218] sm:$0xf]
    %v4893 = vld [vmem:[%s4802 + $0x21c] sm:$0xff]
    %v4894 = vld [vmem:[%s4802 + $0x224] sm:$0xf]
    %v4895 = vld [vmem:[%s4802 + $0x228] sm:$0xff]
    %v4896 = vld [vmem:[%s4802 + $0x230] sm:$0xf]
    %v4897 = vld [vmem:[%s4802 + $0x234] sm:$0xff]
    %v4898 = vld [vmem:[%s4802 + $0x23c] sm:$0xf]
    %v4899 = vld [vmem:[%s4802 + $0x240] sm:$0xff]
    %v4900 = vld [vmem:[%s4802 + $0x248] sm:$0xf]
    %v4901 = vld [vmem:[%s4802 + $0x24c] sm:$0xff]
    %v4902 = vld [vmem:[%s4802 + $0x254] sm:$0xf]
    %v4903 = vld [vmem:[%s4802 + $0x258] sm:$0xff]
    %v4904 = vld [vmem:[%s4802 + $0x260] sm:$0xf]
    %v4905 = vld [vmem:[%s4802 + $0x264] sm:$0xff]
    %v4906 = vld [vmem:[%s4802 + $0x26c] sm:$0xf]
    %v4907 = vld [vmem:[%s4802 + $0x270] sm:$0xff]
    %v4908 = vld [vmem:[%s4802 + $0x278] sm:$0xf]
    %v4909 = vld [vmem:[%s4802 + $0x27c] sm:$0xff]
    %v4910 = vld [vmem:[%s4802 + $0x284] sm:$0xf]
    %v4911 = vld [vmem:[%s4802 + $0x288] sm:$0xff]
    %v4912 = vld [vmem:[%s4802 + $0x290] sm:$0xf]
    %v4913 = vld [vmem:[%s4802 + $0x294] sm:$0xff]
    %v4914 = vld [vmem:[%s4802 + $0x29c] sm:$0xf]
    %v5027 = vunpack.c.l.b16 %v4803
    %v5028 = vunpack.c.h.b16 %v4803
    %v5029 = vunpack.c.l.b16 %v4804
    %v5030 = vunpack.c.l.b16 %v4805
    %v5031 = vunpack.c.h.b16 %v4805
    %v5032 = vunpack.c.l.b16 %v4806
    %v5033 = vunpack.c.l.b16 %v4807
    %v5034 = vunpack.c.h.b16 %v4807
    %v5035 = vunpack.c.l.b16 %v4808
    %v5036 = vunpack.c.l.b16 %v4809
    %v5037 = vunpack.c.h.b16 %v4809
    %v5038 = vunpack.c.l.b16 %v4810
    %v5039 = vunpack.c.l.b16 %v4811
    %v5040 = vunpack.c.h.b16 %v4811
    %v5041 = vunpack.c.l.b16 %v4812
    %v5042 = vunpack.c.l.b16 %v4813
    %v5043 = vunpack.c.h.b16 %v4813
    %v5044 = vunpack.c.l.b16 %v4814
    %v5045 = vunpack.c.l.b16 %v4815
    %v5046 = vunpack.c.h.b16 %v4815
    %v5047 = vunpack.c.l.b16 %v4816
    %v5048 = vunpack.c.l.b16 %v4817
    %v5049 = vunpack.c.h.b16 %v4817
    %v5050 = vunpack.c.l.b16 %v4818
    %v5051 = vunpack.c.l.b16 %v4819
    %v5052 = vunpack.c.h.b16 %v4819
    %v5053 = vunpack.c.l.b16 %v4820
    %v5054 = vunpack.c.l.b16 %v4821
    %v5055 = vunpack.c.h.b16 %v4821
    %v5056 = vunpack.c.l.b16 %v4822
    %v5057 = vunpack.c.l.b16 %v4823
    %v5058 = vunpack.c.h.b16 %v4823
    %v5059 = vunpack.c.l.b16 %v4824
    %v5060 = vunpack.c.l.b16 %v4825
    %v5061 = vunpack.c.h.b16 %v4825
    %v5062 = vunpack.c.l.b16 %v4826
    %v5063 = vunpack.c.l.b16 %v4827
    %v5064 = vunpack.c.h.b16 %v4827
    %v5065 = vunpack.c.l.b16 %v4828
    %v5066 = vunpack.c.l.b16 %v4829
    %v5067 = vunpack.c.h.b16 %v4829
    %v5068 = vunpack.c.l.b16 %v4830
    %v5069 = vunpack.c.l.b16 %v4831
    %v5070 = vunpack.c.h.b16 %v4831
    %v5071 = vunpack.c.l.b16 %v4832
    %v5072 = vunpack.c.l.b16 %v4833
    %v5073 = vunpack.c.h.b16 %v4833
    %v5074 = vunpack.c.l.b16 %v4834
    %v5075 = vunpack.c.l.b16 %v4835
    %v5076 = vunpack.c.h.b16 %v4835
    %v5077 = vunpack.c.l.b16 %v4836
    %v5078 = vunpack.c.l.b16 %v4837
    %v5079 = vunpack.c.h.b16 %v4837
    %v5080 = vunpack.c.l.b16 %v4838
    %v5081 = vunpack.c.l.b16 %v4839
    %v5082 = vunpack.c.h.b16 %v4839
    %v5083 = vunpack.c.l.b16 %v4840
    %v5084 = vunpack.c.l.b16 %v4841
    %v5085 = vunpack.c.h.b16 %v4841
    %v5086 = vunpack.c.l.b16 %v4842
    %v5087 = vunpack.c.l.b16 %v4843
    %v5088 = vunpack.c.h.b16 %v4843
    %v5089 = vunpack.c.l.b16 %v4844
    %v5090 = vunpack.c.l.b16 %v4845
    %v5091 = vunpack.c.h.b16 %v4845
    %v5092 = vunpack.c.l.b16 %v4846
    %v5093 = vunpack.c.l.b16 %v4847
    %v5094 = vunpack.c.h.b16 %v4847
    %v5095 = vunpack.c.l.b16 %v4848
    %v5096 = vunpack.c.l.b16 %v4849
    %v5097 = vunpack.c.h.b16 %v4849
    %v5098 = vunpack.c.l.b16 %v4850
    %v5099 = vunpack.c.l.b16 %v4851
    %v5100 = vunpack.c.h.b16 %v4851
    %v5101 = vunpack.c.l.b16 %v4852
    %v5102 = vunpack.c.l.b16 %v4853
    %v5103 = vunpack.c.h.b16 %v4853
    %v5104 = vunpack.c.l.b16 %v4854
    %v5105 = vunpack.c.l.b16 %v4855
    %v5106 = vunpack.c.h.b16 %v4855
    %v5107 = vunpack.c.l.b16 %v4856
    %v5108 = vunpack.c.l.b16 %v4857
    %v5109 = vunpack.c.h.b16 %v4857
    %v5110 = vunpack.c.l.b16 %v4858
    %v5111 = vunpack.c.l.b16 %v4859
    %v5112 = vunpack.c.h.b16 %v4859
    %v5113 = vunpack.c.l.b16 %v4860
    %v5114 = vunpack.c.l.b16 %v4861
    %v5115 = vunpack.c.h.b16 %v4861
    %v5116 = vunpack.c.l.b16 %v4862
    %v5117 = vunpack.c.l.b16 %v4863
    %v5118 = vunpack.c.h.b16 %v4863
    %v5119 = vunpack.c.l.b16 %v4864
    %v5120 = vunpack.c.l.b16 %v4865
    %v5121 = vunpack.c.h.b16 %v4865
    %v5122 = vunpack.c.l.b16 %v4866
    %v5123 = vunpack.c.l.b16 %v4867
    %v5124 = vunpack.c.h.b16 %v4867
    %v5125 = vunpack.c.l.b16 %v4868
    %v5126 = vunpack.c.l.b16 %v4869
    %v5127 = vunpack.c.h.b16 %v4869
    %v5128 = vunpack.c.l.b16 %v4870
    %v5129 = vunpack.c.l.b16 %v4871
    %v5130 = vunpack.c.h.b16 %v4871
    %v5131 = vunpack.c.l.b16 %v4872
    %v5132 = vunpack.c.l.b16 %v4873
    %v5133 = vunpack.c.h.b16 %v4873
    %v5134 = vunpack.c.l.b16 %v4874
    %v5135 = vunpack.c.l.b16 %v4875
    %v5136 = vunpack.c.h.b16 %v4875
    %v5137 = vunpack.c.l.b16 %v4876
    %v5138 = vunpack.c.l.b16 %v4877
    %v5139 = vunpack.c.h.b16 %v4877
    %v5140 = vunpack.c.l.b16 %v4878
    %v5141 = vunpack.c.l.b16 %v4879
    %v5142 = vunpack.c.h.b16 %v4879
    %v5143 = vunpack.c.l.b16 %v4880
    %v5144 = vunpack.c.l.b16 %v4881
    %v5145 = vunpack.c.h.b16 %v4881
    %v5146 = vunpack.c.l.b16 %v4882
    %v5147 = vunpack.c.l.b16 %v4883
    %v5148 = vunpack.c.h.b16 %v4883
    %v5149 = vunpack.c.l.b16 %v4884
    %v5150 = vunpack.c.l.b16 %v4885
    %v5151 = vunpack.c.h.b16 %v4885
    %v5152 = vunpack.c.l.b16 %v4886
    %v5153 = vunpack.c.l.b16 %v4887
    %v5154 = vunpack.c.h.b16 %v4887
    %v5155 = vunpack.c.l.b16 %v4888
    %v5156 = vunpack.c.l.b16 %v4889
    %v5157 = vunpack.c.h.b16 %v4889
    %v5158 = vunpack.c.l.b16 %v4890
    %v5159 = vunpack.c.l.b16 %v4891
    %v5160 = vunpack.c.h.b16 %v4891
    %v5161 = vunpack.c.l.b16 %v4892
    %v5162 = vunpack.c.l.b16 %v4893
    %v5163 = vunpack.c.h.b16 %v4893
    %v5164 = vunpack.c.l.b16 %v4894
    %v5165 = vunpack.c.l.b16 %v4895
    %v5166 = vunpack.c.h.b16 %v4895
    %v5167 = vunpack.c.l.b16 %v4896
    %v5168 = vunpack.c.l.b16 %v4897
    %v5169 = vunpack.c.h.b16 %v4897
    %v5170 = vunpack.c.l.b16 %v4898
    %v5171 = vunpack.c.l.b16 %v4899
    %v5172 = vunpack.c.h.b16 %v4899
    %v5173 = vunpack.c.l.b16 %v4900
    %v5174 = vunpack.c.l.b16 %v4901
    %v5175 = vunpack.c.h.b16 %v4901
    %v5176 = vunpack.c.l.b16 %v4902
    %v5177 = vunpack.c.l.b16 %v4903
    %v5178 = vunpack.c.h.b16 %v4903
    %v5179 = vunpack.c.l.b16 %v4904
    %v5180 = vunpack.c.l.b16 %v4905
    %v5181 = vunpack.c.h.b16 %v4905
    %v5182 = vunpack.c.l.b16 %v4906
    %v5183 = vunpack.c.l.b16 %v4907
    %v5184 = vunpack.c.h.b16 %v4907
    %v5185 = vunpack.c.l.b16 %v4908
    %v5186 = vunpack.c.l.b16 %v4909
    %v5187 = vunpack.c.h.b16 %v4909
    %v5188 = vunpack.c.l.b16 %v4910
    %v5189 = vunpack.c.l.b16 %v4911
    %v5190 = vunpack.c.h.b16 %v4911
    %v5191 = vunpack.c.l.b16 %v4912
    %v5192 = vunpack.c.l.b16 %v4913
    %v5193 = vunpack.c.h.b16 %v4913
    %v5194 = vunpack.c.l.b16 %v4914
    %v5195 = vpack.c.b16 %v5030, %v5027
    %v5196 = vpack.c.b16 %v5031, %v5028
    %v5197 = vpack.c.b16 %v5032, %v5029
    %v5198 = vpack.c.b16 %v5036, %v5033
    %v5199 = vpack.c.b16 %v5037, %v5034
    %v5200 = vpack.c.b16 %v5038, %v5035
    %v5201 = vpack.c.b16 %v5042, %v5039
    %v5202 = vpack.c.b16 %v5043, %v5040
    %v5203 = vpack.c.b16 %v5044, %v5041
    %v5204 = vpack.c.b16 %v5048, %v5045
    %v5205 = vpack.c.b16 %v5049, %v5046
    %v5206 = vpack.c.b16 %v5050, %v5047
    %v5207 = vpack.c.b16 %v5054, %v5051
    %v5208 = vpack.c.b16 %v5055, %v5052
    %v5209 = vpack.c.b16 %v5056, %v5053
    %v5210 = vpack.c.b16 %v5060, %v5057
    %v5211 = vpack.c.b16 %v5061, %v5058
    %v5212 = vpack.c.b16 %v5062, %v5059
    %v5213 = vpack.c.b16 %v5066, %v5063
    %v5214 = vpack.c.b16 %v5067, %v5064
    %v5215 = vpack.c.b16 %v5068, %v5065
    %v5216 = vpack.c.b16 %v5072, %v5069
    %v5217 = vpack.c.b16 %v5073, %v5070
    %v5218 = vpack.c.b16 %v5074, %v5071
    %v5219 = vpack.c.b16 %v5078, %v5075
    %v5220 = vpack.c.b16 %v5079, %v5076
    %v5221 = vpack.c.b16 %v5080, %v5077
    %v5222 = vpack.c.b16 %v5084, %v5081
    %v5223 = vpack.c.b16 %v5085, %v5082
    %v5224 = vpack.c.b16 %v5086, %v5083
    %v5225 = vpack.c.b16 %v5090, %v5087
    %v5226 = vpack.c.b16 %v5091, %v5088
    %v5227 = vpack.c.b16 %v5092, %v5089
    %v5228 = vpack.c.b16 %v5096, %v5093
    %v5229 = vpack.c.b16 %v5097, %v5094
    %v5230 = vpack.c.b16 %v5098, %v5095
    %v5231 = vpack.c.b16 %v5102, %v5099
    %v5232 = vpack.c.b16 %v5103, %v5100
    %v5233 = vpack.c.b16 %v5104, %v5101
    %v5234 = vpack.c.b16 %v5108, %v5105
    %v5235 = vpack.c.b16 %v5109, %v5106
    %v5236 = vpack.c.b16 %v5110, %v5107
    %v5237 = vpack.c.b16 %v5114, %v5111
    %v5238 = vpack.c.b16 %v5115, %v5112
    %v5239 = vpack.c.b16 %v5116, %v5113
    %v5240 = vpack.c.b16 %v5120, %v5117
    %v5241 = vpack.c.b16 %v5121, %v5118
    %v5242 = vpack.c.b16 %v5122, %v5119
    %v5243 = vpack.c.b16 %v5126, %v5123
    %v5244 = vpack.c.b16 %v5127, %v5124
    %v5245 = vpack.c.b16 %v5128, %v5125
    %v5246 = vpack.c.b16 %v5132, %v5129
    %v5247 = vpack.c.b16 %v5133, %v5130
    %v5248 = vpack.c.b16 %v5134, %v5131
    %v5249 = vpack.c.b16 %v5138, %v5135
    %v5250 = vpack.c.b16 %v5139, %v5136
    %v5251 = vpack.c.b16 %v5140, %v5137
    %v5252 = vpack.c.b16 %v5144, %v5141
    %v5253 = vpack.c.b16 %v5145, %v5142
    %v5254 = vpack.c.b16 %v5146, %v5143
    %v5255 = vpack.c.b16 %v5150, %v5147
    %v5256 = vpack.c.b16 %v5151, %v5148
    %v5257 = vpack.c.b16 %v5152, %v5149
    %v5258 = vpack.c.b16 %v5156, %v5153
    %v5259 = vpack.c.b16 %v5157, %v5154
    %v5260 = vpack.c.b16 %v5158, %v5155
    %v5261 = vpack.c.b16 %v5162, %v5159
    %v5262 = vpack.c.b16 %v5163, %v5160
    %v5263 = vpack.c.b16 %v5164, %v5161
    %v5264 = vpack.c.b16 %v5168, %v5165
    %v5265 = vpack.c.b16 %v5169, %v5166
    %v5266 = vpack.c.b16 %v5170, %v5167
    %v5267 = vpack.c.b16 %v5174, %v5171
    %v5268 = vpack.c.b16 %v5175, %v5172
    %v5269 = vpack.c.b16 %v5176, %v5173
    %v5270 = vpack.c.b16 %v5180, %v5177
    %v5271 = vpack.c.b16 %v5181, %v5178
    %v5272 = vpack.c.b16 %v5182, %v5179
    %v5273 = vpack.c.b16 %v5186, %v5183
    %v5274 = vpack.c.b16 %v5187, %v5184
    %v5275 = vpack.c.b16 %v5188, %v5185
    %v5276 = vpack.c.b16 %v5192, %v5189
    %v5277 = vpack.c.b16 %v5193, %v5190
    %v5278 = vpack.c.b16 %v5194, %v5191
    %vm5363 = vcmask 523264
    %v5365 = vsel %vm5363, %v4565, 0
    %v5368 = vsel %vm5363, %v4569, 0
    %v5371 = vsel %vm5363, %v4573, 0
    %v5374 = vsel %vm5363, %v4577, 0
    %v5377 = vsel %vm5363, %v4581, 0
    %v5380 = vsel %vm5363, %v4585, 0
    %v5383 = vsel %vm5363, %v4589, 0
    %v5386 = vsel %vm5363, %v4593, 0
    %v5389 = vsel %vm5363, %v4597, 0
    %v5392 = vsel %vm5363, %v4601, 0
    %v5395 = vsel %vm5363, %v4605, 0
    %v5398 = vsel %vm5363, %v4609, 0
    %v5401 = vsel %vm5363, %v4613, 0
    %v5404 = vsel %vm5363, %v4617, 0
    %v5407 = vsel %vm5363, %v4621, 0
    %v5410 = vsel %vm5363, %v4625, 0
    %v5413 = vsel %vm5363, %v4629, 0
    %v5416 = vsel %vm5363, %v4633, 0
    %v5419 = vsel %vm5363, %v4637, 0
    %v5422 = vsel %vm5363, %v4641, 0
    %v5425 = vsel %vm5363, %v4645, 0
    %v5428 = vsel %vm5363, %v4649, 0
    %v5431 = vsel %vm5363, %v4653, 0
    %v5434 = vsel %vm5363, %v4657, 0
    %v5437 = vsel %vm5363, %v4661, 0
    %v5440 = vsel %vm5363, %v4665, 0
    %v5443 = vsel %vm5363, %v4669, 0
    %v5446 = vsel %vm5363, %v4673, 0
    %v5449 = vsel %vm5363, %v4677, 0
    %v5452 = vsel %vm5363, %v4681, 0
    %v5455 = vsel %vm5363, %v4685, 0
    %v5458 = vsel %vm5363, %v4689, 0
    %5460 = vmatprep.subr.bf16.mxu0 %v5196
    %5461 = vmatpush1.bf16.msra.mxu0 %v5195
    %5462 = vmatprep.subr.bf16.mxu0 %v5199
    %5463 = vmatpush1.bf16.msra.mxu0 %v5198
    %5464 = vmatprep.subr.bf16.mxu0 %v5202
    %5465 = vmatpush1.bf16.msra.mxu0 %v5201
    %5466 = vmatprep.subr.bf16.mxu0 %v5205
    %5467 = vmatpush1.bf16.msra.mxu0 %v5204
    %5468 = vmatprep.subr.bf16.mxu0 %v5208
    %5469 = vmatpush1.bf16.msra.mxu0 %v5207
    %5470 = vmatprep.subr.bf16.mxu0 %v5211
    %5471 = vmatpush1.bf16.msra.mxu0 %v5210
    %5472 = vmatprep.subr.bf16.mxu0 %v5214
    %5473 = vmatpush1.bf16.msra.mxu0 %v5213
    %5474 = vmatprep.subr.bf16.mxu0 %v5217
    %5475 = vmatpush1.bf16.msra.mxu0 %v5216
    %5476 = vmatprep.subr.bf16.mxu0 %v5220
    %5477 = vmatpush1.bf16.msra.mxu0 %v5219
    %5478 = vmatprep.subr.bf16.mxu0 %v5223
    %5479 = vmatpush1.bf16.msra.mxu0 %v5222
    %5480 = vmatprep.subr.bf16.mxu0 %v5226
    %5481 = vmatpush1.bf16.msra.mxu0 %v5225
    %5482 = vmatprep.subr.bf16.mxu0 %v5229
    %5483 = vmatpush1.bf16.msra.mxu0 %v5228
    %5484 = vmatprep.subr.bf16.mxu0 %v5232
    %5485 = vmatpush1.bf16.msra.mxu0 %v5231
    %5486 = vmatprep.subr.bf16.mxu0 %v5235
    %5487 = vmatpush1.bf16.msra.mxu0 %v5234
    %5488 = vmatprep.subr.bf16.mxu0 %v5238
    %5489 = vmatpush1.bf16.msra.mxu0 %v5237
    %5490 = vmatprep.subr.bf16.mxu0 %v5241
    %5491 = vmatpush1.bf16.msra.mxu0 %v5240
    %5492 = vmatprep.mubr.bf16.mxu0 %v4563
    %5493 = vmatmul.mubr.bf16.gmra.mrb[0].mxu0 %v4562
    %v5494 = vpop.f32.mrb[0].mxu0
    %v5495 = vadd.f32 0.0, %v5494
    %v5496 = vpop.f32.mrb[0].mxu0
    %v5497 = vadd.f32 0.0, %v5496
    %v5498 = vpop.f32.mrb[0].mxu0
    %v5499 = vadd.f32 0.0, %v5498
    %v5500 = vpop.f32.mrb[0].mxu0
    %v5501 = vadd.f32 0.0, %v5500
    %5502 = vmatprep.mubr.bf16.mxu0 %v4567
    %5503 = vmatmul.mubr.bf16.gmra.mrb[0].mxu0 %v4566
    %v5504 = vpop.f32.mrb[0].mxu0
    %v5505 = vadd.f32 0.0, %v5504
    %v5506 = vpop.f32.mrb[0].mxu0
    %v5507 = vadd.f32 0.0, %v5506
    %v5508 = vpop.f32.mrb[0].mxu0
    %v5509 = vadd.f32 0.0, %v5508
    %v5510 = vpop.f32.mrb[0].mxu0
    %v5511 = vadd.f32 0.0, %v5510
    %5512 = vmatprep.mubr.bf16.mxu0 %v4571
    %5513 = vmatmul.mubr.bf16.gmra.mrb[0].mxu0 %v4570
    %v5514 = vpop.f32.mrb[0].mxu0
    %v5515 = vadd.f32 0.0, %v5514
    %v5516 = vpop.f32.mrb[0].mxu0
    %v5517 = vadd.f32 0.0, %v5516
    %v5518 = vpop.f32.mrb[0].mxu0
    %v5519 = vadd.f32 0.0, %v5518
    %v5520 = vpop.f32.mrb[0].mxu0
    %v5521 = vadd.f32 0.0, %v5520
    %5522 = vmatprep.mubr.bf16.mxu0 %v4575
    %5523 = vmatmul.mubr.bf16.gmra.mrb[0].mxu0 %v4574
    %v5524 = vpop.f32.mrb[0].mxu0
    %v5525 = vadd.f32 0.0, %v5524
    %v5526 = vpop.f32.mrb[0].mxu0
    %v5527 = vadd.f32 0.0, %v5526
    %v5528 = vpop.f32.mrb[0].mxu0
    %v5529 = vadd.f32 0.0, %v5528
    %v5530 = vpop.f32.mrb[0].mxu0
    %v5531 = vadd.f32 0.0, %v5530
    %5532 = vmatprep.mubr.bf16.mxu0 %v4579
    %5533 = vmatmul.mubr.bf16.gmra.mrb[0].mxu0 %v4578
    %v5534 = vpop.f32.mrb[0].mxu0
    %v5535 = vadd.f32 0.0, %v5534
    %v5536 = vpop.f32.mrb[0].mxu0
    %v5537 = vadd.f32 0.0, %v5536
    %v5538 = vpop.f32.mrb[0].mxu0
    %v5539 = vadd.f32 0.0, %v5538
    %v5540 = vpop.f32.mrb[0].mxu0
    %v5541 = vadd.f32 0.0, %v5540
    %5542 = vmatprep.mubr.bf16.mxu0 %v4583
    %5543 = vmatmul.mubr.bf16.gmra.mrb[0].mxu0 %v4582
    %v5544 = vpop.f32.mrb[0].mxu0
    %v5545 = vadd.f32 0.0, %v5544
    %v5546 = vpop.f32.mrb[0].mxu0
    %v5547 = vadd.f32 0.0, %v5546
    %v5548 = vpop.f32.mrb[0].mxu0
    %v5549 = vadd.f32 0.0, %v5548
    %v5550 = vpop.f32.mrb[0].mxu0
    %v5551 = vadd.f32 0.0, %v5550
    %5552 = vmatprep.mubr.bf16.mxu0 %v4587
    %5553 = vmatmul.mubr.bf16.gmra.mrb[0].mxu0 %v4586
    %v5554 = vpop.f32.mrb[0].mxu0
    %v5555 = vadd.f32 0.0, %v5554
    %v5556 = vpop.f32.mrb[0].mxu0
    %v5557 = vadd.f32 0.0, %v5556
    %v5558 = vpop.f32.mrb[0].mxu0
    %v5559 = vadd.f32 0.0, %v5558
    %v5560 = vpop.f32.mrb[0].mxu0
    %v5561 = vadd.f32 0.0, %v5560
    %5562 = vmatprep.mubr.bf16.mxu0 %v4591
    %5563 = vmatmul.mubr.bf16.gmra.mrb[0].mxu0 %v4590
    %v5564 = vpop.f32.mrb[0].mxu0
    %v5565 = vadd.f32 0.0, %v5564
    %v5566 = vpop.f32.mrb[0].mxu0
    %v5567 = vadd.f32 0.0, %v5566
    %v5568 = vpop.f32.mrb[0].mxu0
    %v5569 = vadd.f32 0.0, %v5568
    %v5570 = vpop.f32.mrb[0].mxu0
    %v5571 = vadd.f32 0.0, %v5570
    %5572 = vmatprep.mubr.bf16.mxu0 %v4595
    %5573 = vmatmul.mubr.bf16.gmra.mrb[0].mxu0 %v4594
    %v5574 = vpop.f32.mrb[0].mxu0
    %v5575 = vadd.f32 0.0, %v5574
    %v5576 = vpop.f32.mrb[0].mxu0
    %v5577 = vadd.f32 0.0, %v5576
    %v5578 = vpop.f32.mrb[0].mxu0
    %v5579 = vadd.f32 0.0, %v5578
    %v5580 = vpop.f32.mrb[0].mxu0
    %v5581 = vadd.f32 0.0, %v5580
    %5582 = vmatprep.mubr.bf16.mxu0 %v4599
    %5583 = vmatmul.mubr.bf16.gmra.mrb[0].mxu0 %v4598
    %v5584 = vpop.f32.mrb[0].mxu0
    %v5585 = vadd.f32 0.0, %v5584
    %v5586 = vpop.f32.mrb[0].mxu0
    %v5587 = vadd.f32 0.0, %v5586
    %v5588 = vpop.f32.mrb[0].mxu0
    %v5589 = vadd.f32 0.0, %v5588
    %v5590 = vpop.f32.mrb[0].mxu0
    %v5591 = vadd.f32 0.0, %v5590
    %5592 = vmatprep.mubr.bf16.mxu0 %v4603
    %5593 = vmatmul.mubr.bf16.gmra.mrb[0].mxu0 %v4602
    %v5594 = vpop.f32.mrb[0].mxu0
    %v5595 = vadd.f32 0.0, %v5594
    %v5596 = vpop.f32.mrb[0].mxu0
    %v5597 = vadd.f32 0.0, %v5596
    %v5598 = vpop.f32.mrb[0].mxu0
    %v5599 = vadd.f32 0.0, %v5598
    %v5600 = vpop.f32.mrb[0].mxu0
    %v5601 = vadd.f32 0.0, %v5600
    %5602 = vmatprep.mubr.bf16.mxu0 %v4607
    %5603 = vmatmul.mubr.bf16.gmra.mrb[0].mxu0 %v4606
    %v5604 = vpop.f32.mrb[0].mxu0
    %v5605 = vadd.f32 0.0, %v5604
    %v5606 = vpop.f32.mrb[0].mxu0
    %v5607 = vadd.f32 0.0, %v5606
    %v5608 = vpop.f32.mrb[0].mxu0
    %v5609 = vadd.f32 0.0, %v5608
    %v5610 = vpop.f32.mrb[0].mxu0
    %v5611 = vadd.f32 0.0, %v5610
    %5612 = vmatprep.mubr.bf16.mxu0 %v4611
    %5613 = vmatmul.mubr.bf16.gmra.mrb[0].mxu0 %v4610
    %v5614 = vpop.f32.mrb[0].mxu0
    %v5615 = vadd.f32 0.0, %v5614
    %v5616 = vpop.f32.mrb[0].mxu0
    %v5617 = vadd.f32 0.0, %v5616
    %v5618 = vpop.f32.mrb[0].mxu0
    %v5619 = vadd.f32 0.0, %v5618
    %v5620 = vpop.f32.mrb[0].mxu0
    %v5621 = vadd.f32 0.0, %v5620
    %5622 = vmatprep.mubr.bf16.mxu0 %v4615
    %5623 = vmatmul.mubr.bf16.gmra.mrb[0].mxu0 %v4614
    %v5624 = vpop.f32.mrb[0].mxu0
    %v5625 = vadd.f32 0.0, %v5624
    %v5626 = vpop.f32.mrb[0].mxu0
    %v5627 = vadd.f32 0.0, %v5626
    %v5628 = vpop.f32.mrb[0].mxu0
    %v5629 = vadd.f32 0.0, %v5628
    %v5630 = vpop.f32.mrb[0].mxu0
    %v5631 = vadd.f32 0.0, %v5630
    %5632 = vmatprep.mubr.bf16.mxu0 %v4619
    %5633 = vmatmul.mubr.bf16.gmra.mrb[0].mxu0 %v4618
    %v5634 = vpop.f32.mrb[0].mxu0
    %v5635 = vadd.f32 0.0, %v5634
    %v5636 = vpop.f32.mrb[0].mxu0
    %v5637 = vadd.f32 0.0, %v5636
    %v5638 = vpop.f32.mrb[0].mxu0
    %v5639 = vadd.f32 0.0, %v5638
    %v5640 = vpop.f32.mrb[0].mxu0
    %v5641 = vadd.f32 0.0, %v5640
    %5642 = vmatprep.mubr.bf16.mxu0 %v4623
    %5643 = vmatmul.mubr.bf16.gmra.mrb[0].mxu0 %v4622
    %v5644 = vpop.f32.mrb[0].mxu0
    %v5645 = vadd.f32 0.0, %v5644
    %v5646 = vpop.f32.mrb[0].mxu0
    %v5647 = vadd.f32 0.0, %v5646
    %v5648 = vpop.f32.mrb[0].mxu0
    %v5649 = vadd.f32 0.0, %v5648
    %v5650 = vpop.f32.mrb[0].mxu0
    %v5651 = vadd.f32 0.0, %v5650
    %5652 = vmatprep.mubr.bf16.mxu0 %v4627
    %5653 = vmatmul.mubr.bf16.gmra.mrb[0].mxu0 %v4626
    %v5654 = vpop.f32.mrb[0].mxu0
    %v5655 = vadd.f32 0.0, %v5654
    %v5656 = vpop.f32.mrb[0].mxu0
    %v5657 = vadd.f32 0.0, %v5656
    %v5658 = vpop.f32.mrb[0].mxu0
    %v5659 = vadd.f32 0.0, %v5658
    %v5660 = vpop.f32.mrb[0].mxu0
    %v5661 = vadd.f32 0.0, %v5660
    %5662 = vmatprep.mubr.bf16.mxu0 %v4631
    %5663 = vmatmul.mubr.bf16.gmra.mrb[0].mxu0 %v4630
    %v5664 = vpop.f32.mrb[0].mxu0
    %v5665 = vadd.f32 0.0, %v5664
    %v5666 = vpop.f32.mrb[0].mxu0
    %v5667 = vadd.f32 0.0, %v5666
    %v5668 = vpop.f32.mrb[0].mxu0
    %v5669 = vadd.f32 0.0, %v5668
    %v5670 = vpop.f32.mrb[0].mxu0
    %v5671 = vadd.f32 0.0, %v5670
    %5672 = vmatprep.mubr.bf16.mxu0 %v4635
    %5673 = vmatmul.mubr.bf16.gmra.mrb[0].mxu0 %v4634
    %v5674 = vpop.f32.mrb[0].mxu0
    %v5675 = vadd.f32 0.0, %v5674
    %v5676 = vpop.f32.mrb[0].mxu0
    %v5677 = vadd.f32 0.0, %v5676
    %v5678 = vpop.f32.mrb[0].mxu0
    %v5679 = vadd.f32 0.0, %v5678
    %v5680 = vpop.f32.mrb[0].mxu0
    %v5681 = vadd.f32 0.0, %v5680
    %5682 = vmatprep.mubr.bf16.mxu0 %v4639
    %5683 = vmatmul.mubr.bf16.gmra.mrb[0].mxu0 %v4638
    %v5684 = vpop.f32.mrb[0].mxu0
    %v5685 = vadd.f32 0.0, %v5684
    %v5686 = vpop.f32.mrb[0].mxu0
    %v5687 = vadd.f32 0.0, %v5686
    %v5688 = vpop.f32.mrb[0].mxu0
    %v5689 = vadd.f32 0.0, %v5688
    %v5690 = vpop.f32.mrb[0].mxu0
    %v5691 = vadd.f32 0.0, %v5690
    %5692 = vmatprep.mubr.bf16.mxu0 %v4643
    %5693 = vmatmul.mubr.bf16.gmra.mrb[0].mxu0 %v4642
    %v5694 = vpop.f32.mrb[0].mxu0
    %v5695 = vadd.f32 0.0, %v5694
    %v5696 = vpop.f32.mrb[0].mxu0
    %v5697 = vadd.f32 0.0, %v5696
    %v5698 = vpop.f32.mrb[0].mxu0
    %v5699 = vadd.f32 0.0, %v5698
    %v5700 = vpop.f32.mrb[0].mxu0
    %v5701 = vadd.f32 0.0, %v5700
    %5702 = vmatprep.mubr.bf16.mxu0 %v4647
    %5703 = vmatmul.mubr.bf16.gmra.mrb[0].mxu0 %v4646
    %v5704 = vpop.f32.mrb[0].mxu0
    %v5705 = vadd.f32 0.0, %v5704
    %v5706 = vpop.f32.mrb[0].mxu0
    %v5707 = vadd.f32 0.0, %v5706
    %v5708 = vpop.f32.mrb[0].mxu0
    %v5709 = vadd.f32 0.0, %v5708
    %v5710 = vpop.f32.mrb[0].mxu0
    %v5711 = vadd.f32 0.0, %v5710
    %5712 = vmatprep.mubr.bf16.mxu0 %v4651
    %5713 = vmatmul.mubr.bf16.gmra.mrb[0].mxu0 %v4650
    %v5714 = vpop.f32.mrb[0].mxu0
    %v5715 = vadd.f32 0.0, %v5714
    %v5716 = vpop.f32.mrb[0].mxu0
    %v5717 = vadd.f32 0.0, %v5716
    %v5718 = vpop.f32.mrb[0].mxu0
    %v5719 = vadd.f32 0.0, %v5718
    %v5720 = vpop.f32.mrb[0].mxu0
    %v5721 = vadd.f32 0.0, %v5720
    %5722 = vmatprep.mubr.bf16.mxu0 %v4655
    %5723 = vmatmul.mubr.bf16.gmra.mrb[0].mxu0 %v4654
    %v5724 = vpop.f32.mrb[0].mxu0
    %v5725 = vadd.f32 0.0, %v5724
    %v5726 = vpop.f32.mrb[0].mxu0
    %v5727 = vadd.f32 0.0, %v5726
    %v5728 = vpop.f32.mrb[0].mxu0
    %v5729 = vadd.f32 0.0, %v5728
    %v5730 = vpop.f32.mrb[0].mxu0
    %v5731 = vadd.f32 0.0, %v5730
    %5732 = vmatprep.mubr.bf16.mxu0 %v4659
    %5733 = vmatmul.mubr.bf16.gmra.mrb[0].mxu0 %v4658
    %v5734 = vpop.f32.mrb[0].mxu0
    %v5735 = vadd.f32 0.0, %v5734
    %v5736 = vpop.f32.mrb[0].mxu0
    %v5737 = vadd.f32 0.0, %v5736
    %v5738 = vpop.f32.mrb[0].mxu0
    %v5739 = vadd.f32 0.0, %v5738
    %v5740 = vpop.f32.mrb[0].mxu0
    %v5741 = vadd.f32 0.0, %v5740
    %5742 = vmatprep.mubr.bf16.mxu0 %v4663
    %5743 = vmatmul.mubr.bf16.gmra.mrb[0].mxu0 %v4662
    %v5744 = vpop.f32.mrb[0].mxu0
    %v5745 = vadd.f32 0.0, %v5744
    %v5746 = vpop.f32.mrb[0].mxu0
    %v5747 = vadd.f32 0.0, %v5746
    %v5748 = vpop.f32.mrb[0].mxu0
    %v5749 = vadd.f32 0.0, %v5748
    %v5750 = vpop.f32.mrb[0].mxu0
    %v5751 = vadd.f32 0.0, %v5750
    %5752 = vmatprep.mubr.bf16.mxu0 %v4667
    %5753 = vmatmul.mubr.bf16.gmra.mrb[0].mxu0 %v4666
    %v5754 = vpop.f32.mrb[0].mxu0
    %v5755 = vadd.f32 0.0, %v5754
    %v5756 = vpop.f32.mrb[0].mxu0
    %v5757 = vadd.f32 0.0, %v5756
    %v5758 = vpop.f32.mrb[0].mxu0
    %v5759 = vadd.f32 0.0, %v5758
    %v5760 = vpop.f32.mrb[0].mxu0
    %v5761 = vadd.f32 0.0, %v5760
    %5762 = vmatprep.mubr.bf16.mxu0 %v4671
    %5763 = vmatmul.mubr.bf16.gmra.mrb[0].mxu0 %v4670
    %v5764 = vpop.f32.mrb[0].mxu0
    %v5765 = vadd.f32 0.0, %v5764
    %v5766 = vpop.f32.mrb[0].mxu0
    %v5767 = vadd.f32 0.0, %v5766
    %v5768 = vpop.f32.mrb[0].mxu0
    %v5769 = vadd.f32 0.0, %v5768
    %v5770 = vpop.f32.mrb[0].mxu0
    %v5771 = vadd.f32 0.0, %v5770
    %5772 = vmatprep.mubr.bf16.mxu0 %v4675
    %5773 = vmatmul.mubr.bf16.gmra.mrb[0].mxu0 %v4674
    %v5774 = vpop.f32.mrb[0].mxu0
    %v5775 = vadd.f32 0.0, %v5774
    %v5776 = vpop.f32.mrb[0].mxu0
    %v5777 = vadd.f32 0.0, %v5776
    %v5778 = vpop.f32.mrb[0].mxu0
    %v5779 = vadd.f32 0.0, %v5778
    %v5780 = vpop.f32.mrb[0].mxu0
    %v5781 = vadd.f32 0.0, %v5780
    %5782 = vmatprep.mubr.bf16.mxu0 %v4679
    %5783 = vmatmul.mubr.bf16.gmra.mrb[0].mxu0 %v4678
    %v5784 = vpop.f32.mrb[0].mxu0
    %v5785 = vadd.f32 0.0, %v5784
    %v5786 = vpop.f32.mrb[0].mxu0
    %v5787 = vadd.f32 0.0, %v5786
    %v5788 = vpop.f32.mrb[0].mxu0
    %v5789 = vadd.f32 0.0, %v5788
    %v5790 = vpop.f32.mrb[0].mxu0
    %v5791 = vadd.f32 0.0, %v5790
    %5792 = vmatprep.mubr.bf16.mxu0 %v4683
    %5793 = vmatmul.mubr.bf16.gmra.mrb[0].mxu0 %v4682
    %v5794 = vpop.f32.mrb[0].mxu0
    %v5795 = vadd.f32 0.0, %v5794
    %v5796 = vpop.f32.mrb[0].mxu0
    %v5797 = vadd.f32 0.0, %v5796
    %v5798 = vpop.f32.mrb[0].mxu0
    %v5799 = vadd.f32 0.0, %v5798
    %v5800 = vpop.f32.mrb[0].mxu0
    %v5801 = vadd.f32 0.0, %v5800
    %5802 = vmatprep.mubr.bf16.mxu0 %v4687
    %5803 = vmatmul.mubr.bf16.gmra.mrb[0].mxu0 %v4686
    %v5804 = vpop.f32.mrb[0].mxu0
    %v5805 = vadd.f32 0.0, %v5804
    %v5806 = vpop.f32.mrb[0].mxu0
    %v5807 = vadd.f32 0.0, %v5806
    %v5808 = vpop.f32.mrb[0].mxu0
    %v5809 = vadd.f32 0.0, %v5808
    %v5810 = vpop.f32.mrb[0].mxu0
    %v5811 = vadd.f32 0.0, %v5810
    %5812 = vdwg.mxu0
    %5813 = vmatprep.subr.bf16.mxu0 %v5244
    %5814 = vmatpush1.bf16.msra.mxu0 %v5243
    %5815 = vmatprep.subr.bf16.mxu0 %v5247
    %5816 = vmatpush1.bf16.msra.mxu0 %v5246
    %5817 = vmatprep.subr.bf16.mxu0 %v5250
    %5818 = vmatpush1.bf16.msra.mxu0 %v5249
    %5819 = vmatprep.subr.bf16.mxu0 %v5253
    %5820 = vmatpush1.bf16.msra.mxu0 %v5252
    %5821 = vmatprep.subr.bf16.mxu0 %v5256
    %5822 = vmatpush1.bf16.msra.mxu0 %v5255
    %5823 = vmatprep.subr.bf16.mxu0 %v5259
    %5824 = vmatpush1.bf16.msra.mxu0 %v5258
    %5825 = vmatprep.subr.bf16.mxu0 %v5262
    %5826 = vmatpush1.bf16.msra.mxu0 %v5261
    %5827 = vmatprep.subr.bf16.mxu0 %v5265
    %5828 = vmatpush1.bf16.msra.mxu0 %v5264
    %5829 = vmatprep.subr.bf16.mxu0 %v5268
    %5830 = vmatpush1.bf16.msra.mxu0 %v5267
    %5831 = vmatprep.subr.bf16.mxu0 %v5271
    %5832 = vmatpush1.bf16.msra.mxu0 %v5270
    %5833 = vmatprep.subr.bf16.mxu0 %v5274
    %5834 = vmatpush1.bf16.msra.mxu0 %v5273
    %5835 = vmatprep.subr.bf16.mxu0 %v5277
    %5836 = vmatpush1.bf16.msra.mxu0 %v5276
    %5837 = vmatprep.subr.bf16.mxu0 0
    %5838 = vmatpush1.bf16.msra.mxu0 0
    %5839 = vmatprep.subr.bf16.mxu0 0
    %5840 = vmatpush1.bf16.msra.mxu0 0
    %5841 = vmatprep.subr.bf16.mxu0 0
    %5842 = vmatpush1.bf16.msra.mxu0 0
    %5843 = vmatprep.subr.bf16.mxu0 0
    %5844 = vmatpush1.bf16.msra.mxu0 0
    %5845 = vmatprep.mubr.bf16.mxu0 %v5365
    %5846 = vmatmul.mubr.bf16.gmra.mrb[0].mxu0 %v4564
    %v5847 = vpop.f32.mrb[0].mxu0
    %v5848 = vadd.f32 %v5495, %v5847
    %v5849 = vpop.f32.mrb[0].mxu0
    %v5850 = vadd.f32 %v5497, %v5849
    %v5851 = vpop.f32.mrb[0].mxu0
    %v5852 = vadd.f32 %v5499, %v5851
    %v5853 = vpop.f32.mrb[0].mxu0
    %v5854 = vadd.f32 %v5501, %v5853
    %5855 = vmatprep.mubr.bf16.mxu0 %v5368
    %5856 = vmatmul.mubr.bf16.gmra.mrb[0].mxu0 %v4568
    %v5857 = vpop.f32.mrb[0].mxu0
    %v5858 = vadd.f32 %v5505, %v5857
    %v5859 = vpop.f32.mrb[0].mxu0
    %v5860 = vadd.f32 %v5507, %v5859
    %v5861 = vpop.f32.mrb[0].mxu0
    %v5862 = vadd.f32 %v5509, %v5861
    %v5863 = vpop.f32.mrb[0].mxu0
    %v5864 = vadd.f32 %v5511, %v5863
    %5865 = vmatprep.mubr.bf16.mxu0 %v5371
    %5866 = vmatmul.mubr.bf16.gmra.mrb[0].mxu0 %v4572
    %v5867 = vpop.f32.mrb[0].mxu0
    %v5868 = vadd.f32 %v5515, %v5867
    %v5869 = vpop.f32.mrb[0].mxu0
    %v5870 = vadd.f32 %v5517, %v5869
    %v5871 = vpop.f32.mrb[0].mxu0
    %v5872 = vadd.f32 %v5519, %v5871
    %v5873 = vpop.f32.mrb[0].mxu0
    %v5874 = vadd.f32 %v5521, %v5873
    %5875 = vmatprep.mubr.bf16.mxu0 %v5374
    %5876 = vmatmul.mubr.bf16.gmra.mrb[0].mxu0 %v4576
    %v5877 = vpop.f32.mrb[0].mxu0
    %v5878 = vadd.f32 %v5525, %v5877
    %v5879 = vpop.f32.mrb[0].mxu0
    %v5880 = vadd.f32 %v5527, %v5879
    %v5881 = vpop.f32.mrb[0].mxu0
    %v5882 = vadd.f32 %v5529, %v5881
    %v5883 = vpop.f32.mrb[0].mxu0
    %v5884 = vadd.f32 %v5531, %v5883
    %5885 = vmatprep.mubr.bf16.mxu0 %v5377
    %5886 = vmatmul.mubr.bf16.gmra.mrb[0].mxu0 %v4580
    %v5887 = vpop.f32.mrb[0].mxu0
    %v5888 = vadd.f32 %v5535, %v5887
    %v5889 = vpop.f32.mrb[0].mxu0
    %v5890 = vadd.f32 %v5537, %v5889
    %v5891 = vpop.f32.mrb[0].mxu0
    %v5892 = vadd.f32 %v5539, %v5891
    %v5893 = vpop.f32.mrb[0].mxu0
    %v5894 = vadd.f32 %v5541, %v5893
    %5895 = vmatprep.mubr.bf16.mxu0 %v5380
    %5896 = vmatmul.mubr.bf16.gmra.mrb[0].mxu0 %v4584
    %v5897 = vpop.f32.mrb[0].mxu0
    %v5898 = vadd.f32 %v5545, %v5897
    %v5899 = vpop.f32.mrb[0].mxu0
    %v5900 = vadd.f32 %v5547, %v5899
    %v5901 = vpop.f32.mrb[0].mxu0
    %v5902 = vadd.f32 %v5549, %v5901
    %v5903 = vpop.f32.mrb[0].mxu0
    %v5904 = vadd.f32 %v5551, %v5903
    %5905 = vmatprep.mubr.bf16.mxu0 %v5383
    %5906 = vmatmul.mubr.bf16.gmra.mrb[0].mxu0 %v4588
    %v5907 = vpop.f32.mrb[0].mxu0
    %v5908 = vadd.f32 %v5555, %v5907
    %v5909 = vpop.f32.mrb[0].mxu0
    %v5910 = vadd.f32 %v5557, %v5909
    %v5911 = vpop.f32.mrb[0].mxu0
    %v5912 = vadd.f32 %v5559, %v5911
    %v5913 = vpop.f32.mrb[0].mxu0
    %v5914 = vadd.f32 %v5561, %v5913
    %5915 = vmatprep.mubr.bf16.mxu0 %v5386
    %5916 = vmatmul.mubr.bf16.gmra.mrb[0].mxu0 %v4592
    %v5917 = vpop.f32.mrb[0].mxu0
    %v5918 = vadd.f32 %v5565, %v5917
    %v5919 = vpop.f32.mrb[0].mxu0
    %v5920 = vadd.f32 %v5567, %v5919
    %v5921 = vpop.f32.mrb[0].mxu0
    %v5922 = vadd.f32 %v5569, %v5921
    %v5923 = vpop.f32.mrb[0].mxu0
    %v5924 = vadd.f32 %v5571, %v5923
    %5925 = vmatprep.mubr.bf16.mxu0 %v5389
    %5926 = vmatmul.mubr.bf16.gmra.mrb[0].mxu0 %v4596
    %v5927 = vpop.f32.mrb[0].mxu0
    %v5928 = vadd.f32 %v5575, %v5927
    %v5929 = vpop.f32.mrb[0].mxu0
    %v5930 = vadd.f32 %v5577, %v5929
    %v5931 = vpop.f32.mrb[0].mxu0
    %v5932 = vadd.f32 %v5579, %v5931
    %v5933 = vpop.f32.mrb[0].mxu0
    %v5934 = vadd.f32 %v5581, %v5933
    %5935 = vmatprep.mubr.bf16.mxu0 %v5392
    %5936 = vmatmul.mubr.bf16.gmra.mrb[0].mxu0 %v4600
    %v5937 = vpop.f32.mrb[0].mxu0
    %v5938 = vadd.f32 %v5585, %v5937
    %v5939 = vpop.f32.mrb[0].mxu0
    %v5940 = vadd.f32 %v5587, %v5939
    %v5941 = vpop.f32.mrb[0].mxu0
    %v5942 = vadd.f32 %v5589, %v5941
    %v5943 = vpop.f32.mrb[0].mxu0
    %v5944 = vadd.f32 %v5591, %v5943
    %5945 = vmatprep.mubr.bf16.mxu0 %v5395
    %5946 = vmatmul.mubr.bf16.gmra.mrb[0].mxu0 %v4604
    %v5947 = vpop.f32.mrb[0].mxu0
    %v5948 = vadd.f32 %v5595, %v5947
    %v5949 = vpop.f32.mrb[0].mxu0
    %v5950 = vadd.f32 %v5597, %v5949
    %v5951 = vpop.f32.mrb[0].mxu0
    %v5952 = vadd.f32 %v5599, %v5951
    %v5953 = vpop.f32.mrb[0].mxu0
    %v5954 = vadd.f32 %v5601, %v5953
    %5955 = vmatprep.mubr.bf16.mxu0 %v5398
    %5956 = vmatmul.mubr.bf16.gmra.mrb[0].mxu0 %v4608
    %v5957 = vpop.f32.mrb[0].mxu0
    %v5958 = vadd.f32 %v5605, %v5957
    %v5959 = vpop.f32.mrb[0].mxu0
    %v5960 = vadd.f32 %v5607, %v5959
    %v5961 = vpop.f32.mrb[0].mxu0
    %v5962 = vadd.f32 %v5609, %v5961
    %v5963 = vpop.f32.mrb[0].mxu0
    %v5964 = vadd.f32 %v5611, %v5963
    %5965 = vmatprep.mubr.bf16.mxu0 %v5401
    %5966 = vmatmul.mubr.bf16.gmra.mrb[0].mxu0 %v4612
    %v5967 = vpop.f32.mrb[0].mxu0
    %v5968 = vadd.f32 %v5615, %v5967
    %v5969 = vpop.f32.mrb[0].mxu0
    %v5970 = vadd.f32 %v5617, %v5969
    %v5971 = vpop.f32.mrb[0].mxu0
    %v5972 = vadd.f32 %v5619, %v5971
    %v5973 = vpop.f32.mrb[0].mxu0
    %v5974 = vadd.f32 %v5621, %v5973
    %5975 = vmatprep.mubr.bf16.mxu0 %v5404
    %5976 = vmatmul.mubr.bf16.gmra.mrb[0].mxu0 %v4616
    %v5977 = vpop.f32.mrb[0].mxu0
    %v5978 = vadd.f32 %v5625, %v5977
    %v5979 = vpop.f32.mrb[0].mxu0
    %v5980 = vadd.f32 %v5627, %v5979
    %v5981 = vpop.f32.mrb[0].mxu0
    %v5982 = vadd.f32 %v5629, %v5981
    %v5983 = vpop.f32.mrb[0].mxu0
    %v5984 = vadd.f32 %v5631, %v5983
    %5985 = vmatprep.mubr.bf16.mxu0 %v5407
    %5986 = vmatmul.mubr.bf16.gmra.mrb[0].mxu0 %v4620
    %v5987 = vpop.f32.mrb[0].mxu0
    %v5988 = vadd.f32 %v5635, %v5987
    %v5989 = vpop.f32.mrb[0].mxu0
    %v5990 = vadd.f32 %v5637, %v5989
    %v5991 = vpop.f32.mrb[0].mxu0
    %v5992 = vadd.f32 %v5639, %v5991
    %v5993 = vpop.f32.mrb[0].mxu0
    %v5994 = vadd.f32 %v5641, %v5993
    %5995 = vmatprep.mubr.bf16.mxu0 %v5410
    %5996 = vmatmul.mubr.bf16.gmra.mrb[0].mxu0 %v4624
    %v5997 = vpop.f32.mrb[0].mxu0
    %v5998 = vadd.f32 %v5645, %v5997
    %v5999 = vpop.f32.mrb[0].mxu0
    %v6000 = vadd.f32 %v5647, %v5999
    %v6001 = vpop.f32.mrb[0].mxu0
    %v6002 = vadd.f32 %v5649, %v6001
    %v6003 = vpop.f32.mrb[0].mxu0
    %v6004 = vadd.f32 %v5651, %v6003
    %6005 = vmatprep.mubr.bf16.mxu0 %v5413
    %6006 = vmatmul.mubr.bf16.gmra.mrb[0].mxu0 %v4628
    %v6007 = vpop.f32.mrb[0].mxu0
    %v6008 = vadd.f32 %v5655, %v6007
    %v6009 = vpop.f32.mrb[0].mxu0
    %v6010 = vadd.f32 %v5657, %v6009
    %v6011 = vpop.f32.mrb[0].mxu0
    %v6012 = vadd.f32 %v5659, %v6011
    %v6013 = vpop.f32.mrb[0].mxu0
    %v6014 = vadd.f32 %v5661, %v6013
    %6015 = vmatprep.mubr.bf16.mxu0 %v5416
    %6016 = vmatmul.mubr.bf16.gmra.mrb[0].mxu0 %v4632
    %v6017 = vpop.f32.mrb[0].mxu0
    %v6018 = vadd.f32 %v5665, %v6017
    %v6019 = vpop.f32.mrb[0].mxu0
    %v6020 = vadd.f32 %v5667, %v6019
    %v6021 = vpop.f32.mrb[0].mxu0
    %v6022 = vadd.f32 %v5669, %v6021
    %v6023 = vpop.f32.mrb[0].mxu0
    %v6024 = vadd.f32 %v5671, %v6023
    %6025 = vmatprep.mubr.bf16.mxu0 %v5419
    %6026 = vmatmul.mubr.bf16.gmra.mrb[0].mxu0 %v4636
    %v6027 = vpop.f32.mrb[0].mxu0
    %v6028 = vadd.f32 %v5675, %v6027
    %v6029 = vpop.f32.mrb[0].mxu0
    %v6030 = vadd.f32 %v5677, %v6029
    %v6031 = vpop.f32.mrb[0].mxu0
    %v6032 = vadd.f32 %v5679, %v6031
    %v6033 = vpop.f32.mrb[0].mxu0
    %v6034 = vadd.f32 %v5681, %v6033
    %6035 = vmatprep.mubr.bf16.mxu0 %v5422
    %6036 = vmatmul.mubr.bf16.gmra.mrb[0].mxu0 %v4640
    %v6037 = vpop.f32.mrb[0].mxu0
    %v6038 = vadd.f32 %v5685, %v6037
    %v6039 = vpop.f32.mrb[0].mxu0
    %v6040 = vadd.f32 %v5687, %v6039
    %v6041 = vpop.f32.mrb[0].mxu0
    %v6042 = vadd.f32 %v5689, %v6041
    %v6043 = vpop.f32.mrb[0].mxu0
    %v6044 = vadd.f32 %v5691, %v6043
    %6045 = vmatprep.mubr.bf16.mxu0 %v5425
    %6046 = vmatmul.mubr.bf16.gmra.mrb[0].mxu0 %v4644
    %v6047 = vpop.f32.mrb[0].mxu0
    %v6048 = vadd.f32 %v5695, %v6047
    %v6049 = vpop.f32.mrb[0].mxu0
    %v6050 = vadd.f32 %v5697, %v6049
    %v6051 = vpop.f32.mrb[0].mxu0
    %v6052 = vadd.f32 %v5699, %v6051
    %v6053 = vpop.f32.mrb[0].mxu0
    %v6054 = vadd.f32 %v5701, %v6053
    %6055 = vmatprep.mubr.bf16.mxu0 %v5428
    %6056 = vmatmul.mubr.bf16.gmra.mrb[0].mxu0 %v4648
    %v6057 = vpop.f32.mrb[0].mxu0
    %v6058 = vadd.f32 %v5705, %v6057
    %v6059 = vpop.f32.mrb[0].mxu0
    %v6060 = vadd.f32 %v5707, %v6059
    %v6061 = vpop.f32.mrb[0].mxu0
    %v6062 = vadd.f32 %v5709, %v6061
    %v6063 = vpop.f32.mrb[0].mxu0
    %v6064 = vadd.f32 %v5711, %v6063
    %6065 = vmatprep.mubr.bf16.mxu0 %v5431
    %6066 = vmatmul.mubr.bf16.gmra.mrb[0].mxu0 %v4652
    %v6067 = vpop.f32.mrb[0].mxu0
    %v6068 = vadd.f32 %v5715, %v6067
    %v6069 = vpop.f32.mrb[0].mxu0
    %v6070 = vadd.f32 %v5717, %v6069
    %v6071 = vpop.f32.mrb[0].mxu0
    %v6072 = vadd.f32 %v5719, %v6071
    %v6073 = vpop.f32.mrb[0].mxu0
    %v6074 = vadd.f32 %v5721, %v6073
    %6075 = vmatprep.mubr.bf16.mxu0 %v5434
    %6076 = vmatmul.mubr.bf16.gmra.mrb[0].mxu0 %v4656
    %v6077 = vpop.f32.mrb[0].mxu0
    %v6078 = vadd.f32 %v5725, %v6077
    %v6079 = vpop.f32.mrb[0].mxu0
    %v6080 = vadd.f32 %v5727, %v6079
    %v6081 = vpop.f32.mrb[0].mxu0
    %v6082 = vadd.f32 %v5729, %v6081
    %v6083 = vpop.f32.mrb[0].mxu0
    %v6084 = vadd.f32 %v5731, %v6083
    %6085 = vmatprep.mubr.bf16.mxu0 %v5437
    %6086 = vmatmul.mubr.bf16.gmra.mrb[0].mxu0 %v4660
    %v6087 = vpop.f32.mrb[0].mxu0
    %v6088 = vadd.f32 %v5735, %v6087
    %v6089 = vpop.f32.mrb[0].mxu0
    %v6090 = vadd.f32 %v5737, %v6089
    %v6091 = vpop.f32.mrb[0].mxu0
    %v6092 = vadd.f32 %v5739, %v6091
    %v6093 = vpop.f32.mrb[0].mxu0
    %v6094 = vadd.f32 %v5741, %v6093
    %6095 = vmatprep.mubr.bf16.mxu0 %v5440
    %6096 = vmatmul.mubr.bf16.gmra.mrb[0].mxu0 %v4664
    %v6097 = vpop.f32.mrb[0].mxu0
    %v6098 = vadd.f32 %v5745, %v6097
    %v6099 = vpop.f32.mrb[0].mxu0
    %v6100 = vadd.f32 %v5747, %v6099
    %v6101 = vpop.f32.mrb[0].mxu0
    %v6102 = vadd.f32 %v5749, %v6101
    %v6103 = vpop.f32.mrb[0].mxu0
    %v6104 = vadd.f32 %v5751, %v6103
    %6105 = vmatprep.mubr.bf16.mxu0 %v5443
    %6106 = vmatmul.mubr.bf16.gmra.mrb[0].mxu0 %v4668
    %v6107 = vpop.f32.mrb[0].mxu0
    %v6108 = vadd.f32 %v5755, %v6107
    %v6109 = vpop.f32.mrb[0].mxu0
    %v6110 = vadd.f32 %v5757, %v6109
    %v6111 = vpop.f32.mrb[0].mxu0
    %v6112 = vadd.f32 %v5759, %v6111
    %v6113 = vpop.f32.mrb[0].mxu0
    %v6114 = vadd.f32 %v5761, %v6113
    %6115 = vmatprep.mubr.bf16.mxu0 %v5446
    %6116 = vmatmul.mubr.bf16.gmra.mrb[0].mxu0 %v4672
    %v6117 = vpop.f32.mrb[0].mxu0
    %v6118 = vadd.f32 %v5765, %v6117
    %v6119 = vpop.f32.mrb[0].mxu0
    %v6120 = vadd.f32 %v5767, %v6119
    %v6121 = vpop.f32.mrb[0].mxu0
    %v6122 = vadd.f32 %v5769, %v6121
    %v6123 = vpop.f32.mrb[0].mxu0
    %v6124 = vadd.f32 %v5771, %v6123
    %6125 = vmatprep.mubr.bf16.mxu0 %v5449
    %6126 = vmatmul.mubr.bf16.gmra.mrb[0].mxu0 %v4676
    %v6127 = vpop.f32.mrb[0].mxu0
    %v6128 = vadd.f32 %v5775, %v6127
    %v6129 = vpop.f32.mrb[0].mxu0
    %v6130 = vadd.f32 %v5777, %v6129
    %v6131 = vpop.f32.mrb[0].mxu0
    %v6132 = vadd.f32 %v5779, %v6131
    %v6133 = vpop.f32.mrb[0].mxu0
    %v6134 = vadd.f32 %v5781, %v6133
    %6135 = vmatprep.mubr.bf16.mxu0 %v5452
    %6136 = vmatmul.mubr.bf16.gmra.mrb[0].mxu0 %v4680
    %v6137 = vpop.f32.mrb[0].mxu0
    %v6138 = vadd.f32 %v5785, %v6137
    %v6139 = vpop.f32.mrb[0].mxu0
    %v6140 = vadd.f32 %v5787, %v6139
    %v6141 = vpop.f32.mrb[0].mxu0
    %v6142 = vadd.f32 %v5789, %v6141
    %v6143 = vpop.f32.mrb[0].mxu0
    %v6144 = vadd.f32 %v5791, %v6143
    %6145 = vmatprep.mubr.bf16.mxu0 %v5455
    %6146 = vmatmul.mubr.bf16.gmra.mrb[0].mxu0 %v4684
    %v6147 = vpop.f32.mrb[0].mxu0
    %v6148 = vadd.f32 %v5795, %v6147
    %v6149 = vpop.f32.mrb[0].mxu0
    %v6150 = vadd.f32 %v5797, %v6149
    %v6151 = vpop.f32.mrb[0].mxu0
    %v6152 = vadd.f32 %v5799, %v6151
    %v6153 = vpop.f32.mrb[0].mxu0
    %v6154 = vadd.f32 %v5801, %v6153
    %6155 = vmatprep.mubr.bf16.mxu0 %v5458
    %6156 = vmatmul.mubr.bf16.gmra.mrb[0].mxu0 %v4688
    %v6157 = vpop.f32.mrb[0].mxu0
    %v6158 = vadd.f32 %v5805, %v6157
    %v6159 = vpop.f32.mrb[0].mxu0
    %v6160 = vadd.f32 %v5807, %v6159
    %v6161 = vpop.f32.mrb[0].mxu0
    %v6162 = vadd.f32 %v5809, %v6161
    %v6163 = vpop.f32.mrb[0].mxu0
    %v6164 = vadd.f32 %v5811, %v6163
    %6165 = vdwg.mxu0
    %6166 = vmatprep.subr.bf16.mxu0 0
    %6167 = vmatpush1.bf16.msra.mxu0 %v5197
    %6168 = vmatprep.subr.bf16.mxu0 0
    %6169 = vmatpush1.bf16.msra.mxu0 %v5200
    %6170 = vmatprep.subr.bf16.mxu0 0
    %6171 = vmatpush1.bf16.msra.mxu0 %v5203
    %6172 = vmatprep.subr.bf16.mxu0 0
    %6173 = vmatpush1.bf16.msra.mxu0 %v5206
    %6174 = vmatprep.subr.bf16.mxu0 0
    %6175 = vmatpush1.bf16.msra.mxu0 %v5209
    %6176 = vmatprep.subr.bf16.mxu0 0
    %6177 = vmatpush1.bf16.msra.mxu0 %v5212
    %6178 = vmatprep.subr.bf16.mxu0 0
    %6179 = vmatpush1.bf16.msra.mxu0 %v5215
    %6180 = vmatprep.subr.bf16.mxu0 0
    %6181 = vmatpush1.bf16.msra.mxu0 %v5218
    %6182 = vmatprep.subr.bf16.mxu0 0
    %6183 = vmatpush1.bf16.msra.mxu0 %v5221
    %6184 = vmatprep.subr.bf16.mxu0 0
    %6185 = vmatpush1.bf16.msra.mxu0 %v5224
    %6186 = vmatprep.subr.bf16.mxu0 0
    %6187 = vmatpush1.bf16.msra.mxu0 %v5227
    %6188 = vmatprep.subr.bf16.mxu0 0
    %6189 = vmatpush1.bf16.msra.mxu0 %v5230
    %6190 = vmatprep.subr.bf16.mxu0 0
    %6191 = vmatpush1.bf16.msra.mxu0 %v5233
    %6192 = vmatprep.subr.bf16.mxu0 0
    %6193 = vmatpush1.bf16.msra.mxu0 %v5236
    %6194 = vmatprep.subr.bf16.mxu0 0
    %6195 = vmatpush1.bf16.msra.mxu0 %v5239
    %6196 = vmatprep.subr.bf16.mxu0 0
    %6197 = vmatpush1.bf16.msra.mxu0 %v5242
    %6198 = vmatprep.mubr.bf16.mxu0 %v4563
    %6199 = vmatmul.mubr.bf16.gmra.mrb[0].mxu0 %v4562
    %v6200 = vpop.f32.mrb[0].mxu0
    %v6201 = vadd.f32 0.0, %v6200
    %v6202 = vpop.f32.mrb[0].mxu0
    %v6203 = vpop.f32.mrb[0].mxu0
    %v6204 = vadd.f32 0.0, %v6203
    %v6205 = vpop.f32.mrb[0].mxu0
    %6206 = vmatprep.mubr.bf16.mxu0 %v4567
    %6207 = vmatmul.mubr.bf16.gmra.mrb[0].mxu0 %v4566
    %v6208 = vpop.f32.mrb[0].mxu0
    %v6209 = vadd.f32 0.0, %v6208
    %v6210 = vpop.f32.mrb[0].mxu0
    %v6211 = vpop.f32.mrb[0].mxu0
    %v6212 = vadd.f32 0.0, %v6211
    %v6213 = vpop.f32.mrb[0].mxu0
    %6214 = vmatprep.mubr.bf16.mxu0 %v4571
    %6215 = vmatmul.mubr.bf16.gmra.mrb[0].mxu0 %v4570
    %v6216 = vpop.f32.mrb[0].mxu0
    %v6217 = vadd.f32 0.0, %v6216
    %v6218 = vpop.f32.mrb[0].mxu0
    %v6219 = vpop.f32.mrb[0].mxu0
    %v6220 = vadd.f32 0.0, %v6219
    %v6221 = vpop.f32.mrb[0].mxu0
    %6222 = vmatprep.mubr.bf16.mxu0 %v4575
    %6223 = vmatmul.mubr.bf16.gmra.mrb[0].mxu0 %v4574
    %v6224 = vpop.f32.mrb[0].mxu0
    %v6225 = vadd.f32 0.0, %v6224
    %v6226 = vpop.f32.mrb[0].mxu0
    %v6227 = vpop.f32.mrb[0].mxu0
    %v6228 = vadd.f32 0.0, %v6227
    %v6229 = vpop.f32.mrb[0].mxu0
    %6230 = vmatprep.mubr.bf16.mxu0 %v4579
    %6231 = vmatmul.mubr.bf16.gmra.mrb[0].mxu0 %v4578
    %v6232 = vpop.f32.mrb[0].mxu0
    %v6233 = vadd.f32 0.0, %v6232
    %v6234 = vpop.f32.mrb[0].mxu0
    %v6235 = vpop.f32.mrb[0].mxu0
    %v6236 = vadd.f32 0.0, %v6235
    %v6237 = vpop.f32.mrb[0].mxu0
    %6238 = vmatprep.mubr.bf16.mxu0 %v4583
    %6239 = vmatmul.mubr.bf16.gmra.mrb[0].mxu0 %v4582
    %v6240 = vpop.f32.mrb[0].mxu0
    %v6241 = vadd.f32 0.0, %v6240
    %v6242 = vpop.f32.mrb[0].mxu0
    %v6243 = vpop.f32.mrb[0].mxu0
    %v6244 = vadd.f32 0.0, %v6243
    %v6245 = vpop.f32.mrb[0].mxu0
    %6246 = vmatprep.mubr.bf16.mxu0 %v4587
    %6247 = vmatmul.mubr.bf16.gmra.mrb[0].mxu0 %v4586
    %v6248 = vpop.f32.mrb[0].mxu0
    %v6249 = vadd.f32 0.0, %v6248
    %v6250 = vpop.f32.mrb[0].mxu0
    %v6251 = vpop.f32.mrb[0].mxu0
    %v6252 = vadd.f32 0.0, %v6251
    %v6253 = vpop.f32.mrb[0].mxu0
    %6254 = vmatprep.mubr.bf16.mxu0 %v4591
    %6255 = vmatmul.mubr.bf16.gmra.mrb[0].mxu0 %v4590
    %v6256 = vpop.f32.mrb[0].mxu0
    %v6257 = vadd.f32 0.0, %v6256
    %v6258 = vpop.f32.mrb[0].mxu0
    %v6259 = vpop.f32.mrb[0].mxu0
    %v6260 = vadd.f32 0.0, %v6259
    %v6261 = vpop.f32.mrb[0].mxu0
    %6262 = vmatprep.mubr.bf16.mxu0 %v4595
    %6263 = vmatmul.mubr.bf16.gmra.mrb[0].mxu0 %v4594
    %v6264 = vpop.f32.mrb[0].mxu0
    %v6265 = vadd.f32 0.0, %v6264
    %v6266 = vpop.f32.mrb[0].mxu0
    %v6267 = vpop.f32.mrb[0].mxu0
    %v6268 = vadd.f32 0.0, %v6267
    %v6269 = vpop.f32.mrb[0].mxu0
    %6270 = vmatprep.mubr.bf16.mxu0 %v4599
    %6271 = vmatmul.mubr.bf16.gmra.mrb[0].mxu0 %v4598
    %v6272 = vpop.f32.mrb[0].mxu0
    %v6273 = vadd.f32 0.0, %v6272
    %v6274 = vpop.f32.mrb[0].mxu0
    %v6275 = vpop.f32.mrb[0].mxu0
    %v6276 = vadd.f32 0.0, %v6275
    %v6277 = vpop.f32.mrb[0].mxu0
    %6278 = vmatprep.mubr.bf16.mxu0 %v4603
    %6279 = vmatmul.mubr.bf16.gmra.mrb[0].mxu0 %v4602
    %v6280 = vpop.f32.mrb[0].mxu0
    %v6281 = vadd.f32 0.0, %v6280
    %v6282 = vpop.f32.mrb[0].mxu0
    %v6283 = vpop.f32.mrb[0].mxu0
    %v6284 = vadd.f32 0.0, %v6283
    %v6285 = vpop.f32.mrb[0].mxu0
    %6286 = vmatprep.mubr.bf16.mxu0 %v4607
    %6287 = vmatmul.mubr.bf16.gmra.mrb[0].mxu0 %v4606
    %v6288 = vpop.f32.mrb[0].mxu0
    %v6289 = vadd.f32 0.0, %v6288
    %v6290 = vpop.f32.mrb[0].mxu0
    %v6291 = vpop.f32.mrb[0].mxu0
    %v6292 = vadd.f32 0.0, %v6291
    %v6293 = vpop.f32.mrb[0].mxu0
    %6294 = vmatprep.mubr.bf16.mxu0 %v4611
    %6295 = vmatmul.mubr.bf16.gmra.mrb[0].mxu0 %v4610
    %v6296 = vpop.f32.mrb[0].mxu0
    %v6297 = vadd.f32 0.0, %v6296
    %v6298 = vpop.f32.mrb[0].mxu0
    %v6299 = vpop.f32.mrb[0].mxu0
    %v6300 = vadd.f32 0.0, %v6299
    %v6301 = vpop.f32.mrb[0].mxu0
    %6302 = vmatprep.mubr.bf16.mxu0 %v4615
    %6303 = vmatmul.mubr.bf16.gmra.mrb[0].mxu0 %v4614
    %v6304 = vpop.f32.mrb[0].mxu0
    %v6305 = vadd.f32 0.0, %v6304
    %v6306 = vpop.f32.mrb[0].mxu0
    %v6307 = vpop.f32.mrb[0].mxu0
    %v6308 = vadd.f32 0.0, %v6307
    %v6309 = vpop.f32.mrb[0].mxu0
    %6310 = vmatprep.mubr.bf16.mxu0 %v4619
    %6311 = vmatmul.mubr.bf16.gmra.mrb[0].mxu0 %v4618
    %v6312 = vpop.f32.mrb[0].mxu0
    %v6313 = vadd.f32 0.0, %v6312
    %v6314 = vpop.f32.mrb[0].mxu0
    %v6315 = vpop.f32.mrb[0].mxu0
    %v6316 = vadd.f32 0.0, %v6315
    %v6317 = vpop.f32.mrb[0].mxu0
    %6318 = vmatprep.mubr.bf16.mxu0 %v4623
    %6319 = vmatmul.mubr.bf16.gmra.mrb[0].mxu0 %v4622
    %v6320 = vpop.f32.mrb[0].mxu0
    %v6321 = vadd.f32 0.0, %v6320
    %v6322 = vpop.f32.mrb[0].mxu0
    %v6323 = vpop.f32.mrb[0].mxu0
    %v6324 = vadd.f32 0.0, %v6323
    %v6325 = vpop.f32.mrb[0].mxu0
    %6326 = vmatprep.mubr.bf16.mxu0 %v4627
    %6327 = vmatmul.mubr.bf16.gmra.mrb[0].mxu0 %v4626
    %v6328 = vpop.f32.mrb[0].mxu0
    %v6329 = vadd.f32 0.0, %v6328
    %v6330 = vpop.f32.mrb[0].mxu0
    %v6331 = vpop.f32.mrb[0].mxu0
    %v6332 = vadd.f32 0.0, %v6331
    %v6333 = vpop.f32.mrb[0].mxu0
    %6334 = vmatprep.mubr.bf16.mxu0 %v4631
    %6335 = vmatmul.mubr.bf16.gmra.mrb[0].mxu0 %v4630
    %v6336 = vpop.f32.mrb[0].mxu0
    %v6337 = vadd.f32 0.0, %v6336
    %v6338 = vpop.f32.mrb[0].mxu0
    %v6339 = vpop.f32.mrb[0].mxu0
    %v6340 = vadd.f32 0.0, %v6339
    %v6341 = vpop.f32.mrb[0].mxu0
    %6342 = vmatprep.mubr.bf16.mxu0 %v4635
    %6343 = vmatmul.mubr.bf16.gmra.mrb[0].mxu0 %v4634
    %v6344 = vpop.f32.mrb[0].mxu0
    %v6345 = vadd.f32 0.0, %v6344
    %v6346 = vpop.f32.mrb[0].mxu0
    %v6347 = vpop.f32.mrb[0].mxu0
    %v6348 = vadd.f32 0.0, %v6347
    %v6349 = vpop.f32.mrb[0].mxu0
    %6350 = vmatprep.mubr.bf16.mxu0 %v4639
    %6351 = vmatmul.mubr.bf16.gmra.mrb[0].mxu0 %v4638
    %v6352 = vpop.f32.mrb[0].mxu0
    %v6353 = vadd.f32 0.0, %v6352
    %v6354 = vpop.f32.mrb[0].mxu0
    %v6355 = vpop.f32.mrb[0].mxu0
    %v6356 = vadd.f32 0.0, %v6355
    %v6357 = vpop.f32.mrb[0].mxu0
    %6358 = vmatprep.mubr.bf16.mxu0 %v4643
    %6359 = vmatmul.mubr.bf16.gmra.mrb[0].mxu0 %v4642
    %v6360 = vpop.f32.mrb[0].mxu0
    %v6361 = vadd.f32 0.0, %v6360
    %v6362 = vpop.f32.mrb[0].mxu0
    %v6363 = vpop.f32.mrb[0].mxu0
    %v6364 = vadd.f32 0.0, %v6363
    %v6365 = vpop.f32.mrb[0].mxu0
    %6366 = vmatprep.mubr.bf16.mxu0 %v4647
    %6367 = vmatmul.mubr.bf16.gmra.mrb[0].mxu0 %v4646
    %v6368 = vpop.f32.mrb[0].mxu0
    %v6369 = vadd.f32 0.0, %v6368
    %v6370 = vpop.f32.mrb[0].mxu0
    %v6371 = vpop.f32.mrb[0].mxu0
    %v6372 = vadd.f32 0.0, %v6371
    %v6373 = vpop.f32.mrb[0].mxu0
    %6374 = vmatprep.mubr.bf16.mxu0 %v4651
    %6375 = vmatmul.mubr.bf16.gmra.mrb[0].mxu0 %v4650
    %v6376 = vpop.f32.mrb[0].mxu0
    %v6377 = vadd.f32 0.0, %v6376
    %v6378 = vpop.f32.mrb[0].mxu0
    %v6379 = vpop.f32.mrb[0].mxu0
    %v6380 = vadd.f32 0.0, %v6379
    %v6381 = vpop.f32.mrb[0].mxu0
    %6382 = vmatprep.mubr.bf16.mxu0 %v4655
    %6383 = vmatmul.mubr.bf16.gmra.mrb[0].mxu0 %v4654
    %v6384 = vpop.f32.mrb[0].mxu0
    %v6385 = vadd.f32 0.0, %v6384
    %v6386 = vpop.f32.mrb[0].mxu0
    %v6387 = vpop.f32.mrb[0].mxu0
    %v6388 = vadd.f32 0.0, %v6387
    %v6389 = vpop.f32.mrb[0].mxu0
    %6390 = vmatprep.mubr.bf16.mxu0 %v4659
    %6391 = vmatmul.mubr.bf16.gmra.mrb[0].mxu0 %v4658
    %v6392 = vpop.f32.mrb[0].mxu0
    %v6393 = vadd.f32 0.0, %v6392
    %v6394 = vpop.f32.mrb[0].mxu0
    %v6395 = vpop.f32.mrb[0].mxu0
    %v6396 = vadd.f32 0.0, %v6395
    %v6397 = vpop.f32.mrb[0].mxu0
    %6398 = vmatprep.mubr.bf16.mxu0 %v4663
    %6399 = vmatmul.mubr.bf16.gmra.mrb[0].mxu0 %v4662
    %v6400 = vpop.f32.mrb[0].mxu0
    %v6401 = vadd.f32 0.0, %v6400
    %v6402 = vpop.f32.mrb[0].mxu0
    %v6403 = vpop.f32.mrb[0].mxu0
    %v6404 = vadd.f32 0.0, %v6403
    %v6405 = vpop.f32.mrb[0].mxu0
    %6406 = vmatprep.mubr.bf16.mxu0 %v4667
    %6407 = vmatmul.mubr.bf16.gmra.mrb[0].mxu0 %v4666
    %v6408 = vpop.f32.mrb[0].mxu0
    %v6409 = vadd.f32 0.0, %v6408
    %v6410 = vpop.f32.mrb[0].mxu0
    %v6411 = vpop.f32.mrb[0].mxu0
    %v6412 = vadd.f32 0.0, %v6411
    %v6413 = vpop.f32.mrb[0].mxu0
    %6414 = vmatprep.mubr.bf16.mxu0 %v4671
    %6415 = vmatmul.mubr.bf16.gmra.mrb[0].mxu0 %v4670
    %v6416 = vpop.f32.mrb[0].mxu0
    %v6417 = vadd.f32 0.0, %v6416
    %v6418 = vpop.f32.mrb[0].mxu0
    %v6419 = vpop.f32.mrb[0].mxu0
    %v6420 = vadd.f32 0.0, %v6419
    %v6421 = vpop.f32.mrb[0].mxu0
    %6422 = vmatprep.mubr.bf16.mxu0 %v4675
    %6423 = vmatmul.mubr.bf16.gmra.mrb[0].mxu0 %v4674
    %v6424 = vpop.f32.mrb[0].mxu0
    %v6425 = vadd.f32 0.0, %v6424
    %v6426 = vpop.f32.mrb[0].mxu0
    %v6427 = vpop.f32.mrb[0].mxu0
    %v6428 = vadd.f32 0.0, %v6427
    %v6429 = vpop.f32.mrb[0].mxu0
    %6430 = vmatprep.mubr.bf16.mxu0 %v4679
    %6431 = vmatmul.mubr.bf16.gmra.mrb[0].mxu0 %v4678
    %v6432 = vpop.f32.mrb[0].mxu0
    %v6433 = vadd.f32 0.0, %v6432
    %v6434 = vpop.f32.mrb[0].mxu0
    %v6435 = vpop.f32.mrb[0].mxu0
    %v6436 = vadd.f32 0.0, %v6435
    %v6437 = vpop.f32.mrb[0].mxu0
    %6438 = vmatprep.mubr.bf16.mxu0 %v4683
    %6439 = vmatmul.mubr.bf16.gmra.mrb[0].mxu0 %v4682
    %v6440 = vpop.f32.mrb[0].mxu0
    %v6441 = vadd.f32 0.0, %v6440
    %v6442 = vpop.f32.mrb[0].mxu0
    %v6443 = vpop.f32.mrb[0].mxu0
    %v6444 = vadd.f32 0.0, %v6443
    %v6445 = vpop.f32.mrb[0].mxu0
    %6446 = vmatprep.mubr.bf16.mxu0 %v4687
    %6447 = vmatmul.mubr.bf16.gmra.mrb[0].mxu0 %v4686
    %v6448 = vpop.f32.mrb[0].mxu0
    %v6449 = vadd.f32 0.0, %v6448
    %v6450 = vpop.f32.mrb[0].mxu0
    %v6451 = vpop.f32.mrb[0].mxu0
    %v6452 = vadd.f32 0.0, %v6451
    %v6453 = vpop.f32.mrb[0].mxu0
    %6454 = vdwg.mxu0
    %6455 = vmatprep.subr.bf16.mxu0 0
    %6456 = vmatpush1.bf16.msra.mxu0 %v5245
    %6457 = vmatprep.subr.bf16.mxu0 0
    %6458 = vmatpush1.bf16.msra.mxu0 %v5248
    %6459 = vmatprep.subr.bf16.mxu0 0
    %6460 = vmatpush1.bf16.msra.mxu0 %v5251
    %6461 = vmatprep.subr.bf16.mxu0 0
    %6462 = vmatpush1.bf16.msra.mxu0 %v5254
    %6463 = vmatprep.subr.bf16.mxu0 0
    %6464 = vmatpush1.bf16.msra.mxu0 %v5257
    %6465 = vmatprep.subr.bf16.mxu0 0
    %6466 = vmatpush1.bf16.msra.mxu0 %v5260
    %6467 = vmatprep.subr.bf16.mxu0 0
    %6468 = vmatpush1.bf16.msra.mxu0 %v5263
    %6469 = vmatprep.subr.bf16.mxu0 0
    %6470 = vmatpush1.bf16.msra.mxu0 %v5266
    %6471 = vmatprep.subr.bf16.mxu0 0
    %6472 = vmatpush1.bf16.msra.mxu0 %v5269
    %6473 = vmatprep.subr.bf16.mxu0 0
    %6474 = vmatpush1.bf16.msra.mxu0 %v5272
    %6475 = vmatprep.subr.bf16.mxu0 0
    %6476 = vmatpush1.bf16.msra.mxu0 %v5275
    %6477 = vmatprep.subr.bf16.mxu0 0
    %6478 = vmatpush1.bf16.msra.mxu0 %v5278
    %6479 = vmatprep.subr.bf16.mxu0 0
    %6480 = vmatpush1.bf16.msra.mxu0 0
    %6481 = vmatprep.subr.bf16.mxu0 0
    %6482 = vmatpush1.bf16.msra.mxu0 0
    %6483 = vmatprep.subr.bf16.mxu0 0
    %6484 = vmatpush1.bf16.msra.mxu0 0
    %6485 = vmatprep.subr.bf16.mxu0 0
    %6486 = vmatpush1.bf16.msra.mxu0 0
    %6487 = vmatprep.mubr.bf16.mxu0 %v5365
    %6488 = vmatmul.mubr.bf16.gmra.mrb[0].mxu0 %v4564
    %v6489 = vpop.f32.mrb[0].mxu0
    %v6490 = vadd.f32 %v6201, %v6489
    %v6491 = vpop.f32.mrb[0].mxu0
    %v6492 = vpop.f32.mrb[0].mxu0
    %v6493 = vadd.f32 %v6204, %v6492
    %v6494 = vpop.f32.mrb[0].mxu0
    %6495 = vmatprep.mubr.bf16.mxu0 %v5368
    %6496 = vmatmul.mubr.bf16.gmra.mrb[0].mxu0 %v4568
    %v6497 = vpop.f32.mrb[0].mxu0
    %v6498 = vadd.f32 %v6209, %v6497
    %v6499 = vpop.f32.mrb[0].mxu0
    %v6500 = vpop.f32.mrb[0].mxu0
    %v6501 = vadd.f32 %v6212, %v6500
    %v6502 = vpop.f32.mrb[0].mxu0
    %6503 = vmatprep.mubr.bf16.mxu0 %v5371
    %6504 = vmatmul.mubr.bf16.gmra.mrb[0].mxu0 %v4572
    %v6505 = vpop.f32.mrb[0].mxu0
    %v6506 = vadd.f32 %v6217, %v6505
    %v6507 = vpop.f32.mrb[0].mxu0
    %v6508 = vpop.f32.mrb[0].mxu0
    %v6509 = vadd.f32 %v6220, %v6508
    %v6510 = vpop.f32.mrb[0].mxu0
    %6511 = vmatprep.mubr.bf16.mxu0 %v5374
    %6512 = vmatmul.mubr.bf16.gmra.mrb[0].mxu0 %v4576
    %v6513 = vpop.f32.mrb[0].mxu0
    %v6514 = vadd.f32 %v6225, %v6513
    %v6515 = vpop.f32.mrb[0].mxu0
    %v6516 = vpop.f32.mrb[0].mxu0
    %v6517 = vadd.f32 %v6228, %v6516
    %v6518 = vpop.f32.mrb[0].mxu0
    %6519 = vmatprep.mubr.bf16.mxu0 %v5377
    %6520 = vmatmul.mubr.bf16.gmra.mrb[0].mxu0 %v4580
    %v6521 = vpop.f32.mrb[0].mxu0
    %v6522 = vadd.f32 %v6233, %v6521
    %v6523 = vpop.f32.mrb[0].mxu0
    %v6524 = vpop.f32.mrb[0].mxu0
    %v6525 = vadd.f32 %v6236, %v6524
    %v6526 = vpop.f32.mrb[0].mxu0
    %6527 = vmatprep.mubr.bf16.mxu0 %v5380
    %6528 = vmatmul.mubr.bf16.gmra.mrb[0].mxu0 %v4584
    %v6529 = vpop.f32.mrb[0].mxu0
    %v6530 = vadd.f32 %v6241, %v6529
    %v6531 = vpop.f32.mrb[0].mxu0
    %v6532 = vpop.f32.mrb[0].mxu0
    %v6533 = vadd.f32 %v6244, %v6532
    %v6534 = vpop.f32.mrb[0].mxu0
    %6535 = vmatprep.mubr.bf16.mxu0 %v5383
    %6536 = vmatmul.mubr.bf16.gmra.mrb[0].mxu0 %v4588
    %v6537 = vpop.f32.mrb[0].mxu0
    %v6538 = vadd.f32 %v6249, %v6537
    %v6539 = vpop.f32.mrb[0].mxu0
    %v6540 = vpop.f32.mrb[0].mxu0
    %v6541 = vadd.f32 %v6252, %v6540
    %v6542 = vpop.f32.mrb[0].mxu0
    %6543 = vmatprep.mubr.bf16.mxu0 %v5386
    %6544 = vmatmul.mubr.bf16.gmra.mrb[0].mxu0 %v4592
    %v6545 = vpop.f32.mrb[0].mxu0
    %v6546 = vadd.f32 %v6257, %v6545
    %v6547 = vpop.f32.mrb[0].mxu0
    %v6548 = vpop.f32.mrb[0].mxu0
    %v6549 = vadd.f32 %v6260, %v6548
    %v6550 = vpop.f32.mrb[0].mxu0
    %6551 = vmatprep.mubr.bf16.mxu0 %v5389
    %6552 = vmatmul.mubr.bf16.gmra.mrb[0].mxu0 %v4596
    %v6553 = vpop.f32.mrb[0].mxu0
    %v6554 = vadd.f32 %v6265, %v6553
    %v6555 = vpop.f32.mrb[0].mxu0
    %v6556 = vpop.f32.mrb[0].mxu0
    %v6557 = vadd.f32 %v6268, %v6556
    %v6558 = vpop.f32.mrb[0].mxu0
    %6559 = vmatprep.mubr.bf16.mxu0 %v5392
    %6560 = vmatmul.mubr.bf16.gmra.mrb[0].mxu0 %v4600
    %v6561 = vpop.f32.mrb[0].mxu0
    %v6562 = vadd.f32 %v6273, %v6561
    %v6563 = vpop.f32.mrb[0].mxu0
    %v6564 = vpop.f32.mrb[0].mxu0
    %v6565 = vadd.f32 %v6276, %v6564
    %v6566 = vpop.f32.mrb[0].mxu0
    %6567 = vmatprep.mubr.bf16.mxu0 %v5395
    %6568 = vmatmul.mubr.bf16.gmra.mrb[0].mxu0 %v4604
    %v6569 = vpop.f32.mrb[0].mxu0
    %v6570 = vadd.f32 %v6281, %v6569
    %v6571 = vpop.f32.mrb[0].mxu0
    %v6572 = vpop.f32.mrb[0].mxu0
    %v6573 = vadd.f32 %v6284, %v6572
    %v6574 = vpop.f32.mrb[0].mxu0
    %6575 = vmatprep.mubr.bf16.mxu0 %v5398
    %6576 = vmatmul.mubr.bf16.gmra.mrb[0].mxu0 %v4608
    %v6577 = vpop.f32.mrb[0].mxu0
    %v6578 = vadd.f32 %v6289, %v6577
    %v6579 = vpop.f32.mrb[0].mxu0
    %v6580 = vpop.f32.mrb[0].mxu0
    %v6581 = vadd.f32 %v6292, %v6580
    %v6582 = vpop.f32.mrb[0].mxu0
    %6583 = vmatprep.mubr.bf16.mxu0 %v5401
    %6584 = vmatmul.mubr.bf16.gmra.mrb[0].mxu0 %v4612
    %v6585 = vpop.f32.mrb[0].mxu0
    %v6586 = vadd.f32 %v6297, %v6585
    %v6587 = vpop.f32.mrb[0].mxu0
    %v6588 = vpop.f32.mrb[0].mxu0
    %v6589 = vadd.f32 %v6300, %v6588
    %v6590 = vpop.f32.mrb[0].mxu0
    %6591 = vmatprep.mubr.bf16.mxu0 %v5404
    %6592 = vmatmul.mubr.bf16.gmra.mrb[0].mxu0 %v4616
    %v6593 = vpop.f32.mrb[0].mxu0
    %v6594 = vadd.f32 %v6305, %v6593
    %v6595 = vpop.f32.mrb[0].mxu0
    %v6596 = vpop.f32.mrb[0].mxu0
    %v6597 = vadd.f32 %v6308, %v6596
    %v6598 = vpop.f32.mrb[0].mxu0
    %6599 = vmatprep.mubr.bf16.mxu0 %v5407
    %6600 = vmatmul.mubr.bf16.gmra.mrb[0].mxu0 %v4620
    %v6601 = vpop.f32.mrb[0].mxu0
    %v6602 = vadd.f32 %v6313, %v6601
    %v6603 = vpop.f32.mrb[0].mxu0
    %v6604 = vpop.f32.mrb[0].mxu0
    %v6605 = vadd.f32 %v6316, %v6604
    %v6606 = vpop.f32.mrb[0].mxu0
    %6607 = vmatprep.mubr.bf16.mxu0 %v5410
    %6608 = vmatmul.mubr.bf16.gmra.mrb[0].mxu0 %v4624
    %v6609 = vpop.f32.mrb[0].mxu0
    %v6610 = vadd.f32 %v6321, %v6609
    %v6611 = vpop.f32.mrb[0].mxu0
    %v6612 = vpop.f32.mrb[0].mxu0
    %v6613 = vadd.f32 %v6324, %v6612
    %v6614 = vpop.f32.mrb[0].mxu0
    %6615 = vmatprep.mubr.bf16.mxu0 %v5413
    %6616 = vmatmul.mubr.bf16.gmra.mrb[0].mxu0 %v4628
    %v6617 = vpop.f32.mrb[0].mxu0
    %v6618 = vadd.f32 %v6329, %v6617
    %v6619 = vpop.f32.mrb[0].mxu0
    %v6620 = vpop.f32.mrb[0].mxu0
    %v6621 = vadd.f32 %v6332, %v6620
    %v6622 = vpop.f32.mrb[0].mxu0
    %6623 = vmatprep.mubr.bf16.mxu0 %v5416
    %6624 = vmatmul.mubr.bf16.gmra.mrb[0].mxu0 %v4632
    %v6625 = vpop.f32.mrb[0].mxu0
    %v6626 = vadd.f32 %v6337, %v6625
    %v6627 = vpop.f32.mrb[0].mxu0
    %v6628 = vpop.f32.mrb[0].mxu0
    %v6629 = vadd.f32 %v6340, %v6628
    %v6630 = vpop.f32.mrb[0].mxu0
    %6631 = vmatprep.mubr.bf16.mxu0 %v5419
    %6632 = vmatmul.mubr.bf16.gmra.mrb[0].mxu0 %v4636
    %v6633 = vpop.f32.mrb[0].mxu0
    %v6634 = vadd.f32 %v6345, %v6633
    %v6635 = vpop.f32.mrb[0].mxu0
    %v6636 = vpop.f32.mrb[0].mxu0
    %v6637 = vadd.f32 %v6348, %v6636
    %v6638 = vpop.f32.mrb[0].mxu0
    %6639 = vmatprep.mubr.bf16.mxu0 %v5422
    %6640 = vmatmul.mubr.bf16.gmra.mrb[0].mxu0 %v4640
    %v6641 = vpop.f32.mrb[0].mxu0
    %v6642 = vadd.f32 %v6353, %v6641
    %v6643 = vpop.f32.mrb[0].mxu0
    %v6644 = vpop.f32.mrb[0].mxu0
    %v6645 = vadd.f32 %v6356, %v6644
    %v6646 = vpop.f32.mrb[0].mxu0
    %6647 = vmatprep.mubr.bf16.mxu0 %v5425
    %6648 = vmatmul.mubr.bf16.gmra.mrb[0].mxu0 %v4644
    %v6649 = vpop.f32.mrb[0].mxu0
    %v6650 = vadd.f32 %v6361, %v6649
    %v6651 = vpop.f32.mrb[0].mxu0
    %v6652 = vpop.f32.mrb[0].mxu0
    %v6653 = vadd.f32 %v6364, %v6652
    %v6654 = vpop.f32.mrb[0].mxu0
    %6655 = vmatprep.mubr.bf16.mxu0 %v5428
    %6656 = vmatmul.mubr.bf16.gmra.mrb[0].mxu0 %v4648
    %v6657 = vpop.f32.mrb[0].mxu0
    %v6658 = vadd.f32 %v6369, %v6657
    %v6659 = vpop.f32.mrb[0].mxu0
    %v6660 = vpop.f32.mrb[0].mxu0
    %v6661 = vadd.f32 %v6372, %v6660
    %v6662 = vpop.f32.mrb[0].mxu0
    %6663 = vmatprep.mubr.bf16.mxu0 %v5431
    %6664 = vmatmul.mubr.bf16.gmra.mrb[0].mxu0 %v4652
    %v6665 = vpop.f32.mrb[0].mxu0
    %v6666 = vadd.f32 %v6377, %v6665
    %v6667 = vpop.f32.mrb[0].mxu0
    %v6668 = vpop.f32.mrb[0].mxu0
    %v6669 = vadd.f32 %v6380, %v6668
    %v6670 = vpop.f32.mrb[0].mxu0
    %6671 = vmatprep.mubr.bf16.mxu0 %v5434
    %6672 = vmatmul.mubr.bf16.gmra.mrb[0].mxu0 %v4656
    %v6673 = vpop.f32.mrb[0].mxu0
    %v6674 = vadd.f32 %v6385, %v6673
    %v6675 = vpop.f32.mrb[0].mxu0
    %v6676 = vpop.f32.mrb[0].mxu0
    %v6677 = vadd.f32 %v6388, %v6676
    %v6678 = vpop.f32.mrb[0].mxu0
    %6679 = vmatprep.mubr.bf16.mxu0 %v5437
    %6680 = vmatmul.mubr.bf16.gmra.mrb[0].mxu0 %v4660
    %v6681 = vpop.f32.mrb[0].mxu0
    %v6682 = vadd.f32 %v6393, %v6681
    %v6683 = vpop.f32.mrb[0].mxu0
    %v6684 = vpop.f32.mrb[0].mxu0
    %v6685 = vadd.f32 %v6396, %v6684
    %v6686 = vpop.f32.mrb[0].mxu0
    %6687 = vmatprep.mubr.bf16.mxu0 %v5440
    %6688 = vmatmul.mubr.bf16.gmra.mrb[0].mxu0 %v4664
    %v6689 = vpop.f32.mrb[0].mxu0
    %v6690 = vadd.f32 %v6401, %v6689
    %v6691 = vpop.f32.mrb[0].mxu0
    %v6692 = vpop.f32.mrb[0].mxu0
    %v6693 = vadd.f32 %v6404, %v6692
    %v6694 = vpop.f32.mrb[0].mxu0
    %6695 = vmatprep.mubr.bf16.mxu0 %v5443
    %6696 = vmatmul.mubr.bf16.gmra.mrb[0].mxu0 %v4668
    %v6697 = vpop.f32.mrb[0].mxu0
    %v6698 = vadd.f32 %v6409, %v6697
    %v6699 = vpop.f32.mrb[0].mxu0
    %v6700 = vpop.f32.mrb[0].mxu0
    %v6701 = vadd.f32 %v6412, %v6700
    %v6702 = vpop.f32.mrb[0].mxu0
    %6703 = vmatprep.mubr.bf16.mxu0 %v5446
    %6704 = vmatmul.mubr.bf16.gmra.mrb[0].mxu0 %v4672
    %v6705 = vpop.f32.mrb[0].mxu0
    %v6706 = vadd.f32 %v6417, %v6705
    %v6707 = vpop.f32.mrb[0].mxu0
    %v6708 = vpop.f32.mrb[0].mxu0
    %v6709 = vadd.f32 %v6420, %v6708
    %v6710 = vpop.f32.mrb[0].mxu0
    %6711 = vmatprep.mubr.bf16.mxu0 %v5449
    %6712 = vmatmul.mubr.bf16.gmra.mrb[0].mxu0 %v4676
    %v6713 = vpop.f32.mrb[0].mxu0
    %v6714 = vadd.f32 %v6425, %v6713
    %v6715 = vpop.f32.mrb[0].mxu0
    %v6716 = vpop.f32.mrb[0].mxu0
    %v6717 = vadd.f32 %v6428, %v6716
    %v6718 = vpop.f32.mrb[0].mxu0
    %6719 = vmatprep.mubr.bf16.mxu0 %v5452
    %6720 = vmatmul.mubr.bf16.gmra.mrb[0].mxu0 %v4680
    %v6721 = vpop.f32.mrb[0].mxu0
    %v6722 = vadd.f32 %v6433, %v6721
    %v6723 = vpop.f32.mrb[0].mxu0
    %v6724 = vpop.f32.mrb[0].mxu0
    %v6725 = vadd.f32 %v6436, %v6724
    %v6726 = vpop.f32.mrb[0].mxu0
    %6727 = vmatprep.mubr.bf16.mxu0 %v5455
    %6728 = vmatmul.mubr.bf16.gmra.mrb[0].mxu0 %v4684
    %v6729 = vpop.f32.mrb[0].mxu0
    %v6730 = vadd.f32 %v6441, %v6729
    %v6731 = vpop.f32.mrb[0].mxu0
    %v6732 = vpop.f32.mrb[0].mxu0
    %v6733 = vadd.f32 %v6444, %v6732
    %v6734 = vpop.f32.mrb[0].mxu0
    %6735 = vmatprep.mubr.bf16.mxu0 %v5458
    %6736 = vmatmul.mubr.bf16.gmra.mrb[0].mxu0 %v4688
    %v6737 = vpop.f32.mrb[0].mxu0
    %v6738 = vadd.f32 %v6449, %v6737
    %v6739 = vpop.f32.mrb[0].mxu0
    %v6740 = vpop.f32.mrb[0].mxu0
    %v6741 = vadd.f32 %v6452, %v6740
    %v6742 = vpop.f32.mrb[0].mxu0
    %6743 = vdwg.mxu0
    %v6856 = vunpack.c.l.b16 %v4690
    %v6857 = vunpack.c.h.b16 %v4690
    %v6858 = vunpack.c.l.b16 %v4691
    %v6859 = vunpack.c.l.b16 %v4692
    %v6860 = vunpack.c.h.b16 %v4692
    %v6861 = vunpack.c.l.b16 %v4693
    %v6862 = vunpack.c.l.b16 %v4694
    %v6863 = vunpack.c.h.b16 %v4694
    %v6864 = vunpack.c.l.b16 %v4695
    %v6865 = vunpack.c.l.b16 %v4696
    %v6866 = vunpack.c.h.b16 %v4696
    %v6867 = vunpack.c.l.b16 %v4697
    %v6868 = vunpack.c.l.b16 %v4698
    %v6869 = vunpack.c.h.b16 %v4698
    %v6870 = vunpack.c.l.b16 %v4699
    %v6871 = vunpack.c.l.b16 %v4700
    %v6872 = vunpack.c.h.b16 %v4700
    %v6873 = vunpack.c.l.b16 %v4701
    %v6874 = vunpack.c.l.b16 %v4702
    %v6875 = vunpack.c.h.b16 %v4702
    %v6876 = vunpack.c.l.b16 %v4703
    %v6877 = vunpack.c.l.b16 %v4704
    %v6878 = vunpack.c.h.b16 %v4704
    %v6879 = vunpack.c.l.b16 %v4705
    %v6880 = vunpack.c.l.b16 %v4706
    %v6881 = vunpack.c.h.b16 %v4706
    %v6882 = vunpack.c.l.b16 %v4707
    %v6883 = vunpack.c.l.b16 %v4708
    %v6884 = vunpack.c.h.b16 %v4708
    %v6885 = vunpack.c.l.b16 %v4709
    %v6886 = vunpack.c.l.b16 %v4710
    %v6887 = vunpack.c.h.b16 %v4710
    %v6888 = vunpack.c.l.b16 %v4711
    %v6889 = vunpack.c.l.b16 %v4712
    %v6890 = vunpack.c.h.b16 %v4712
    %v6891 = vunpack.c.l.b16 %v4713
    %v6892 = vunpack.c.l.b16 %v4714
    %v6893 = vunpack.c.h.b16 %v4714
    %v6894 = vunpack.c.l.b16 %v4715
    %v6895 = vunpack.c.l.b16 %v4716
    %v6896 = vunpack.c.h.b16 %v4716
    %v6897 = vunpack.c.l.b16 %v4717
    %v6898 = vunpack.c.l.b16 %v4718
    %v6899 = vunpack.c.h.b16 %v4718
    %v6900 = vunpack.c.l.b16 %v4719
    %v6901 = vunpack.c.l.b16 %v4720
    %v6902 = vunpack.c.h.b16 %v4720
    %v6903 = vunpack.c.l.b16 %v4721
    %v6904 = vunpack.c.l.b16 %v4722
    %v6905 = vunpack.c.h.b16 %v4722
    %v6906 = vunpack.c.l.b16 %v4723
    %v6907 = vunpack.c.l.b16 %v4724
    %v6908 = vunpack.c.h.b16 %v4724
    %v6909 = vunpack.c.l.b16 %v4725
    %v6910 = vunpack.c.l.b16 %v4726
    %v6911 = vunpack.c.h.b16 %v4726
    %v6912 = vunpack.c.l.b16 %v4727
    %v6913 = vunpack.c.l.b16 %v4728
    %v6914 = vunpack.c.h.b16 %v4728
    %v6915 = vunpack.c.l.b16 %v4729
    %v6916 = vunpack.c.l.b16 %v4730
    %v6917 = vunpack.c.h.b16 %v4730
    %v6918 = vunpack.c.l.b16 %v4731
    %v6919 = vunpack.c.l.b16 %v4732
    %v6920 = vunpack.c.h.b16 %v4732
    %v6921 = vunpack.c.l.b16 %v4733
    %v6922 = vunpack.c.l.b16 %v4734
    %v6923 = vunpack.c.h.b16 %v4734
    %v6924 = vunpack.c.l.b16 %v4735
    %v6925 = vunpack.c.l.b16 %v4736
    %v6926 = vunpack.c.h.b16 %v4736
    %v6927 = vunpack.c.l.b16 %v4737
    %v6928 = vunpack.c.l.b16 %v4738
    %v6929 = vunpack.c.h.b16 %v4738
    %v6930 = vunpack.c.l.b16 %v4739
    %v6931 = vunpack.c.l.b16 %v4740
    %v6932 = vunpack.c.h.b16 %v4740
    %v6933 = vunpack.c.l.b16 %v4741
    %v6934 = vunpack.c.l.b16 %v4742
    %v6935 = vunpack.c.h.b16 %v4742
    %v6936 = vunpack.c.l.b16 %v4743
    %v6937 = vunpack.c.l.b16 %v4744
    %v6938 = vunpack.c.h.b16 %v4744
    %v6939 = vunpack.c.l.b16 %v4745
    %v6940 = vunpack.c.l.b16 %v4746
    %v6941 = vunpack.c.h.b16 %v4746
    %v6942 = vunpack.c.l.b16 %v4747
    %v6943 = vunpack.c.l.b16 %v4748
    %v6944 = vunpack.c.h.b16 %v4748
    %v6945 = vunpack.c.l.b16 %v4749
    %v6946 = vunpack.c.l.b16 %v4750
    %v6947 = vunpack.c.h.b16 %v4750
    %v6948 = vunpack.c.l.b16 %v4751
    %v6949 = vunpack.c.l.b16 %v4752
    %v6950 = vunpack.c.h.b16 %v4752
    %v6951 = vunpack.c.l.b16 %v4753
    %v6952 = vunpack.c.l.b16 %v4754
    %v6953 = vunpack.c.h.b16 %v4754
    %v6954 = vunpack.c.l.b16 %v4755
    %v6955 = vunpack.c.l.b16 %v4756
    %v6956 = vunpack.c.h.b16 %v4756
    %v6957 = vunpack.c.l.b16 %v4757
    %v6958 = vunpack.c.l.b16 %v4758
    %v6959 = vunpack.c.h.b16 %v4758
    %v6960 = vunpack.c.l.b16 %v4759
    %v6961 = vunpack.c.l.b16 %v4760
    %v6962 = vunpack.c.h.b16 %v4760
    %v6963 = vunpack.c.l.b16 %v4761
    %v6964 = vunpack.c.l.b16 %v4762
    %v6965 = vunpack.c.h.b16 %v4762
    %v6966 = vunpack.c.l.b16 %v4763
    %v6967 = vunpack.c.l.b16 %v4764
    %v6968 = vunpack.c.h.b16 %v4764
    %v6969 = vunpack.c.l.b16 %v4765
    %v6970 = vunpack.c.l.b16 %v4766
    %v6971 = vunpack.c.h.b16 %v4766
    %v6972 = vunpack.c.l.b16 %v4767
    %v6973 = vunpack.c.l.b16 %v4768
    %v6974 = vunpack.c.h.b16 %v4768
    %v6975 = vunpack.c.l.b16 %v4769
    %v6976 = vunpack.c.l.b16 %v4770
    %v6977 = vunpack.c.h.b16 %v4770
    %v6978 = vunpack.c.l.b16 %v4771
    %v6979 = vunpack.c.l.b16 %v4772
    %v6980 = vunpack.c.h.b16 %v4772
    %v6981 = vunpack.c.l.b16 %v4773
    %v6982 = vunpack.c.l.b16 %v4774
    %v6983 = vunpack.c.h.b16 %v4774
    %v6984 = vunpack.c.l.b16 %v4775
    %v6985 = vunpack.c.l.b16 %v4776
    %v6986 = vunpack.c.h.b16 %v4776
    %v6987 = vunpack.c.l.b16 %v4777
    %v6988 = vunpack.c.l.b16 %v4778
    %v6989 = vunpack.c.h.b16 %v4778
    %v6990 = vunpack.c.l.b16 %v4779
    %v6991 = vunpack.c.l.b16 %v4780
    %v6992 = vunpack.c.h.b16 %v4780
    %v6993 = vunpack.c.l.b16 %v4781
    %v6994 = vunpack.c.l.b16 %v4782
    %v6995 = vunpack.c.h.b16 %v4782
    %v6996 = vunpack.c.l.b16 %v4783
    %v6997 = vunpack.c.l.b16 %v4784
    %v6998 = vunpack.c.h.b16 %v4784
    %v6999 = vunpack.c.l.b16 %v4785
    %v7000 = vunpack.c.l.b16 %v4786
    %v7001 = vunpack.c.h.b16 %v4786
    %v7002 = vunpack.c.l.b16 %v4787
    %v7003 = vunpack.c.l.b16 %v4788
    %v7004 = vunpack.c.h.b16 %v4788
    %v7005 = vunpack.c.l.b16 %v4789
    %v7006 = vunpack.c.l.b16 %v4790
    %v7007 = vunpack.c.h.b16 %v4790
    %v7008 = vunpack.c.l.b16 %v4791
    %v7009 = vunpack.c.l.b16 %v4792
    %v7010 = vunpack.c.h.b16 %v4792
    %v7011 = vunpack.c.l.b16 %v4793
    %v7012 = vunpack.c.l.b16 %v4794
    %v7013 = vunpack.c.h.b16 %v4794
    %v7014 = vunpack.c.l.b16 %v4795
    %v7015 = vunpack.c.l.b16 %v4796
    %v7016 = vunpack.c.h.b16 %v4796
    %v7017 = vunpack.c.l.b16 %v4797
    %v7018 = vunpack.c.l.b16 %v4798
    %v7019 = vunpack.c.h.b16 %v4798
    %v7020 = vunpack.c.l.b16 %v4799
    %v7021 = vunpack.c.l.b16 %v4800
    %v7022 = vunpack.c.h.b16 %v4800
    %v7023 = vunpack.c.l.b16 %v4801
    %v7024 = vpack.c.b16 %v6859, %v6856
    %v7025 = vpack.c.b16 %v6860, %v6857
    %v7026 = vpack.c.b16 %v6861, %v6858
    %v7027 = vpack.c.b16 %v6865, %v6862
    %v7028 = vpack.c.b16 %v6866, %v6863
    %v7029 = vpack.c.b16 %v6867, %v6864
    %v7030 = vpack.c.b16 %v6871, %v6868
    %v7031 = vpack.c.b16 %v6872, %v6869
    %v7032 = vpack.c.b16 %v6873, %v6870
    %v7033 = vpack.c.b16 %v6877, %v6874
    %v7034 = vpack.c.b16 %v6878, %v6875
    %v7035 = vpack.c.b16 %v6879, %v6876
    %v7036 = vpack.c.b16 %v6883, %v6880
    %v7037 = vpack.c.b16 %v6884, %v6881
    %v7038 = vpack.c.b16 %v6885, %v6882
    %v7039 = vpack.c.b16 %v6889, %v6886
    %v7040 = vpack.c.b16 %v6890, %v6887
    %v7041 = vpack.c.b16 %v6891, %v6888
    %v7042 = vpack.c.b16 %v6895, %v6892
    %v7043 = vpack.c.b16 %v6896, %v6893
    %v7044 = vpack.c.b16 %v6897, %v6894
    %v7045 = vpack.c.b16 %v6901, %v6898
    %v7046 = vpack.c.b16 %v6902, %v6899
    %v7047 = vpack.c.b16 %v6903, %v6900
    %v7048 = vpack.c.b16 %v6907, %v6904
    %v7049 = vpack.c.b16 %v6908, %v6905
    %v7050 = vpack.c.b16 %v6909, %v6906
    %v7051 = vpack.c.b16 %v6913, %v6910
    %v7052 = vpack.c.b16 %v6914, %v6911
    %v7053 = vpack.c.b16 %v6915, %v6912
    %v7054 = vpack.c.b16 %v6919, %v6916
    %v7055 = vpack.c.b16 %v6920, %v6917
    %v7056 = vpack.c.b16 %v6921, %v6918
    %v7057 = vpack.c.b16 %v6925, %v6922
    %v7058 = vpack.c.b16 %v6926, %v6923
    %v7059 = vpack.c.b16 %v6927, %v6924
    %v7060 = vpack.c.b16 %v6931, %v6928
    %v7061 = vpack.c.b16 %v6932, %v6929
    %v7062 = vpack.c.b16 %v6933, %v6930
    %v7063 = vpack.c.b16 %v6937, %v6934
    %v7064 = vpack.c.b16 %v6938, %v6935
    %v7065 = vpack.c.b16 %v6939, %v6936
    %v7066 = vpack.c.b16 %v6943, %v6940
    %v7067 = vpack.c.b16 %v6944, %v6941
    %v7068 = vpack.c.b16 %v6945, %v6942
    %v7069 = vpack.c.b16 %v6949, %v6946
    %v7070 = vpack.c.b16 %v6950, %v6947
    %v7071 = vpack.c.b16 %v6951, %v6948
    %v7072 = vpack.c.b16 %v6955, %v6952
    %v7073 = vpack.c.b16 %v6956, %v6953
    %v7074 = vpack.c.b16 %v6957, %v6954
    %v7075 = vpack.c.b16 %v6961, %v6958
    %v7076 = vpack.c.b16 %v6962, %v6959
    %v7077 = vpack.c.b16 %v6963, %v6960
    %v7078 = vpack.c.b16 %v6967, %v6964
    %v7079 = vpack.c.b16 %v6968, %v6965
    %v7080 = vpack.c.b16 %v6969, %v6966
    %v7081 = vpack.c.b16 %v6973, %v6970
    %v7082 = vpack.c.b16 %v6974, %v6971
    %v7083 = vpack.c.b16 %v6975, %v6972
    %v7084 = vpack.c.b16 %v6979, %v6976
    %v7085 = vpack.c.b16 %v6980, %v6977
    %v7086 = vpack.c.b16 %v6981, %v6978
    %v7087 = vpack.c.b16 %v6985, %v6982
    %v7088 = vpack.c.b16 %v6986, %v6983
    %v7089 = vpack.c.b16 %v6987, %v6984
    %v7090 = vpack.c.b16 %v6991, %v6988
    %v7091 = vpack.c.b16 %v6992, %v6989
    %v7092 = vpack.c.b16 %v6993, %v6990
    %v7093 = vpack.c.b16 %v6997, %v6994
    %v7094 = vpack.c.b16 %v6998, %v6995
    %v7095 = vpack.c.b16 %v6999, %v6996
    %v7096 = vpack.c.b16 %v7003, %v7000
    %v7097 = vpack.c.b16 %v7004, %v7001
    %v7098 = vpack.c.b16 %v7005, %v7002
    %v7099 = vpack.c.b16 %v7009, %v7006
    %v7100 = vpack.c.b16 %v7010, %v7007
    %v7101 = vpack.c.b16 %v7011, %v7008
    %v7102 = vpack.c.b16 %v7015, %v7012
    %v7103 = vpack.c.b16 %v7016, %v7013
    %v7104 = vpack.c.b16 %v7017, %v7014
    %v7105 = vpack.c.b16 %v7021, %v7018
    %v7106 = vpack.c.b16 %v7022, %v7019
    %v7107 = vpack.c.b16 %v7023, %v7020
    %v7193 = vsel %vm5363, %v4533, 0
    %v7196 = vsel %vm5363, %v4537, 0
    %v7199 = vsel %vm5363, %v4541, 0
    %v7202 = vsel %vm5363, %v4545, 0
    %v7205 = vsel %vm5363, %v4549, 0
    %v7208 = vsel %vm5363, %v4553, 0
    %v7211 = vsel %vm5363, %v4557, 0
    %v7214 = vsel %vm5363, %v4561, 0
    %7216 = vmatprep.subr.bf16.mxu0 %v7025
    %7217 = vmatpush1.bf16.msra.mxu0 %v7024
    %7218 = vmatprep.subr.bf16.mxu0 %v7028
    %7219 = vmatpush1.bf16.msra.mxu0 %v7027
    %7220 = vmatprep.subr.bf16.mxu0 %v7031
    %7221 = vmatpush1.bf16.msra.mxu0 %v7030
    %7222 = vmatprep.subr.bf16.mxu0 %v7034
    %7223 = vmatpush1.bf16.msra.mxu0 %v7033
    %7224 = vmatprep.subr.bf16.mxu0 %v7037
    %7225 = vmatpush1.bf16.msra.mxu0 %v7036
    %7226 = vmatprep.subr.bf16.mxu0 %v7040
    %7227 = vmatpush1.bf16.msra.mxu0 %v7039
    %7228 = vmatprep.subr.bf16.mxu0 %v7043
    %7229 = vmatpush1.bf16.msra.mxu0 %v7042
    %7230 = vmatprep.subr.bf16.mxu0 %v7046
    %7231 = vmatpush1.bf16.msra.mxu0 %v7045
    %7232 = vmatprep.subr.bf16.mxu0 %v7049
    %7233 = vmatpush1.bf16.msra.mxu0 %v7048
    %7234 = vmatprep.subr.bf16.mxu0 %v7052
    %7235 = vmatpush1.bf16.msra.mxu0 %v7051
    %7236 = vmatprep.subr.bf16.mxu0 %v7055
    %7237 = vmatpush1.bf16.msra.mxu0 %v7054
    %7238 = vmatprep.subr.bf16.mxu0 %v7058
    %7239 = vmatpush1.bf16.msra.mxu0 %v7057
    %7240 = vmatprep.subr.bf16.mxu0 %v7061
    %7241 = vmatpush1.bf16.msra.mxu0 %v7060
    %7242 = vmatprep.subr.bf16.mxu0 %v7064
    %7243 = vmatpush1.bf16.msra.mxu0 %v7063
    %7244 = vmatprep.subr.bf16.mxu0 %v7067
    %7245 = vmatpush1.bf16.msra.mxu0 %v7066
    %7246 = vmatprep.subr.bf16.mxu0 %v7070
    %7247 = vmatpush1.bf16.msra.mxu0 %v7069
    %7248 = vmatprep.mubr.bf16.mxu0 %v4531
    %7249 = vmatmul.mubr.bf16.gmra.mrb[0].mxu0 %v4530
    %v7250 = vpop.f32.mrb[0].mxu0
    %v7251 = vadd.f32 %v5848, %v7250
    %v7252 = vpop.f32.mrb[0].mxu0
    %v7253 = vadd.f32 %v5850, %v7252
    %v7254 = vpop.f32.mrb[0].mxu0
    %v7255 = vadd.f32 %v5852, %v7254
    %v7256 = vpop.f32.mrb[0].mxu0
    %v7257 = vadd.f32 %v5854, %v7256
    %7258 = vmatprep.mubr.bf16.mxu0 %v4535
    %7259 = vmatmul.mubr.bf16.gmra.mrb[0].mxu0 %v4534
    %v7260 = vpop.f32.mrb[0].mxu0
    %v7261 = vadd.f32 %v5858, %v7260
    %v7262 = vpop.f32.mrb[0].mxu0
    %v7263 = vadd.f32 %v5860, %v7262
    %v7264 = vpop.f32.mrb[0].mxu0
    %v7265 = vadd.f32 %v5862, %v7264
    %v7266 = vpop.f32.mrb[0].mxu0
    %v7267 = vadd.f32 %v5864, %v7266
    %7268 = vmatprep.mubr.bf16.mxu0 %v4539
    %7269 = vmatmul.mubr.bf16.gmra.mrb[0].mxu0 %v4538
    %v7270 = vpop.f32.mrb[0].mxu0
    %v7271 = vadd.f32 %v5868, %v7270
    %v7272 = vpop.f32.mrb[0].mxu0
    %v7273 = vadd.f32 %v5870, %v7272
    %v7274 = vpop.f32.mrb[0].mxu0
    %v7275 = vadd.f32 %v5872, %v7274
    %v7276 = vpop.f32.mrb[0].mxu0
    %v7277 = vadd.f32 %v5874, %v7276
    %7278 = vmatprep.mubr.bf16.mxu0 %v4543
    %7279 = vmatmul.mubr.bf16.gmra.mrb[0].mxu0 %v4542
    %v7280 = vpop.f32.mrb[0].mxu0
    %v7281 = vadd.f32 %v5878, %v7280
    %v7282 = vpop.f32.mrb[0].mxu0
    %v7283 = vadd.f32 %v5880, %v7282
    %v7284 = vpop.f32.mrb[0].mxu0
    %v7285 = vadd.f32 %v5882, %v7284
    %v7286 = vpop.f32.mrb[0].mxu0
    %v7287 = vadd.f32 %v5884, %v7286
    %7288 = vmatprep.mubr.bf16.mxu0 %v4547
    %7289 = vmatmul.mubr.bf16.gmra.mrb[0].mxu0 %v4546
    %v7290 = vpop.f32.mrb[0].mxu0
    %v7291 = vadd.f32 %v5888, %v7290
    %v7292 = vpop.f32.mrb[0].mxu0
    %v7293 = vadd.f32 %v5890, %v7292
    %v7294 = vpop.f32.mrb[0].mxu0
    %v7295 = vadd.f32 %v5892, %v7294
    %v7296 = vpop.f32.mrb[0].mxu0
    %v7297 = vadd.f32 %v5894, %v7296
    %7298 = vmatprep.mubr.bf16.mxu0 %v4551
    %7299 = vmatmul.mubr.bf16.gmra.mrb[0].mxu0 %v4550
    %v7300 = vpop.f32.mrb[0].mxu0
    %v7301 = vadd.f32 %v5898, %v7300
    %v7302 = vpop.f32.mrb[0].mxu0
    %v7303 = vadd.f32 %v5900, %v7302
    %v7304 = vpop.f32.mrb[0].mxu0
    %v7305 = vadd.f32 %v5902, %v7304
    %v7306 = vpop.f32.mrb[0].mxu0
    %v7307 = vadd.f32 %v5904, %v7306
    %7308 = vmatprep.mubr.bf16.mxu0 %v4555
    %7309 = vmatmul.mubr.bf16.gmra.mrb[0].mxu0 %v4554
    %v7310 = vpop.f32.mrb[0].mxu0
    %v7311 = vadd.f32 %v5908, %v7310
    %v7312 = vpop.f32.mrb[0].mxu0
    %v7313 = vadd.f32 %v5910, %v7312
    %v7314 = vpop.f32.mrb[0].mxu0
    %v7315 = vadd.f32 %v5912, %v7314
    %v7316 = vpop.f32.mrb[0].mxu0
    %v7317 = vadd.f32 %v5914, %v7316
    %7318 = vmatprep.mubr.bf16.mxu0 %v4559
    %7319 = vmatmul.mubr.bf16.gmra.mrb[0].mxu0 %v4558
    %v7320 = vpop.f32.mrb[0].mxu0
    %v7321 = vadd.f32 %v5918, %v7320
    %v7322 = vpop.f32.mrb[0].mxu0
    %v7323 = vadd.f32 %v5920, %v7322
    %v7324 = vpop.f32.mrb[0].mxu0
    %v7325 = vadd.f32 %v5922, %v7324
    %v7326 = vpop.f32.mrb[0].mxu0
    %v7327 = vadd.f32 %v5924, %v7326
    %7328 = vmatprep.mubr.bf16.mxu0 %v4563
    %7329 = vmatmul.mubr.bf16.gmra.mrb[0].mxu0 %v4562
    %v7330 = vpop.f32.mrb[0].mxu0
    %v7331 = vadd.f32 %v5928, %v7330
    %v7332 = vpop.f32.mrb[0].mxu0
    %v7333 = vadd.f32 %v5930, %v7332
    %v7334 = vpop.f32.mrb[0].mxu0
    %v7335 = vadd.f32 %v5932, %v7334
    %v7336 = vpop.f32.mrb[0].mxu0
    %v7337 = vadd.f32 %v5934, %v7336
    %7338 = vmatprep.mubr.bf16.mxu0 %v4567
    %7339 = vmatmul.mubr.bf16.gmra.mrb[0].mxu0 %v4566
    %v7340 = vpop.f32.mrb[0].mxu0
    %v7341 = vadd.f32 %v5938, %v7340
    %v7342 = vpop.f32.mrb[0].mxu0
    %v7343 = vadd.f32 %v5940, %v7342
    %v7344 = vpop.f32.mrb[0].mxu0
    %v7345 = vadd.f32 %v5942, %v7344
    %v7346 = vpop.f32.mrb[0].mxu0
    %v7347 = vadd.f32 %v5944, %v7346
    %7348 = vmatprep.mubr.bf16.mxu0 %v4571
    %7349 = vmatmul.mubr.bf16.gmra.mrb[0].mxu0 %v4570
    %v7350 = vpop.f32.mrb[0].mxu0
    %v7351 = vadd.f32 %v5948, %v7350
    %v7352 = vpop.f32.mrb[0].mxu0
    %v7353 = vadd.f32 %v5950, %v7352
    %v7354 = vpop.f32.mrb[0].mxu0
    %v7355 = vadd.f32 %v5952, %v7354
    %v7356 = vpop.f32.mrb[0].mxu0
    %v7357 = vadd.f32 %v5954, %v7356
    %7358 = vmatprep.mubr.bf16.mxu0 %v4575
    %7359 = vmatmul.mubr.bf16.gmra.mrb[0].mxu0 %v4574
    %v7360 = vpop.f32.mrb[0].mxu0
    %v7361 = vadd.f32 %v5958, %v7360
    %v7362 = vpop.f32.mrb[0].mxu0
    %v7363 = vadd.f32 %v5960, %v7362
    %v7364 = vpop.f32.mrb[0].mxu0
    %v7365 = vadd.f32 %v5962, %v7364
    %v7366 = vpop.f32.mrb[0].mxu0
    %v7367 = vadd.f32 %v5964, %v7366
    %7368 = vmatprep.mubr.bf16.mxu0 %v4579
    %7369 = vmatmul.mubr.bf16.gmra.mrb[0].mxu0 %v4578
    %v7370 = vpop.f32.mrb[0].mxu0
    %v7371 = vadd.f32 %v5968, %v7370
    %v7372 = vpop.f32.mrb[0].mxu0
    %v7373 = vadd.f32 %v5970, %v7372
    %v7374 = vpop.f32.mrb[0].mxu0
    %v7375 = vadd.f32 %v5972, %v7374
    %v7376 = vpop.f32.mrb[0].mxu0
    %v7377 = vadd.f32 %v5974, %v7376
    %7378 = vmatprep.mubr.bf16.mxu0 %v4583
    %7379 = vmatmul.mubr.bf16.gmra.mrb[0].mxu0 %v4582
    %v7380 = vpop.f32.mrb[0].mxu0
    %v7381 = vadd.f32 %v5978, %v7380
    %v7382 = vpop.f32.mrb[0].mxu0
    %v7383 = vadd.f32 %v5980, %v7382
    %v7384 = vpop.f32.mrb[0].mxu0
    %v7385 = vadd.f32 %v5982, %v7384
    %v7386 = vpop.f32.mrb[0].mxu0
    %v7387 = vadd.f32 %v5984, %v7386
    %7388 = vmatprep.mubr.bf16.mxu0 %v4587
    %7389 = vmatmul.mubr.bf16.gmra.mrb[0].mxu0 %v4586
    %v7390 = vpop.f32.mrb[0].mxu0
    %v7391 = vadd.f32 %v5988, %v7390
    %v7392 = vpop.f32.mrb[0].mxu0
    %v7393 = vadd.f32 %v5990, %v7392
    %v7394 = vpop.f32.mrb[0].mxu0
    %v7395 = vadd.f32 %v5992, %v7394
    %v7396 = vpop.f32.mrb[0].mxu0
    %v7397 = vadd.f32 %v5994, %v7396
    %7398 = vmatprep.mubr.bf16.mxu0 %v4591
    %7399 = vmatmul.mubr.bf16.gmra.mrb[0].mxu0 %v4590
    %v7400 = vpop.f32.mrb[0].mxu0
    %v7401 = vadd.f32 %v5998, %v7400
    %v7402 = vpop.f32.mrb[0].mxu0
    %v7403 = vadd.f32 %v6000, %v7402
    %v7404 = vpop.f32.mrb[0].mxu0
    %v7405 = vadd.f32 %v6002, %v7404
    %v7406 = vpop.f32.mrb[0].mxu0
    %v7407 = vadd.f32 %v6004, %v7406
    %7408 = vmatprep.mubr.bf16.mxu0 %v4595
    %7409 = vmatmul.mubr.bf16.gmra.mrb[0].mxu0 %v4594
    %v7410 = vpop.f32.mrb[0].mxu0
    %v7411 = vadd.f32 %v6008, %v7410
    %v7412 = vpop.f32.mrb[0].mxu0
    %v7413 = vadd.f32 %v6010, %v7412
    %v7414 = vpop.f32.mrb[0].mxu0
    %v7415 = vadd.f32 %v6012, %v7414
    %v7416 = vpop.f32.mrb[0].mxu0
    %v7417 = vadd.f32 %v6014, %v7416
    %7418 = vmatprep.mubr.bf16.mxu0 %v4599
    %7419 = vmatmul.mubr.bf16.gmra.mrb[0].mxu0 %v4598
    %v7420 = vpop.f32.mrb[0].mxu0
    %v7421 = vadd.f32 %v6018, %v7420
    %v7422 = vpop.f32.mrb[0].mxu0
    %v7423 = vadd.f32 %v6020, %v7422
    %v7424 = vpop.f32.mrb[0].mxu0
    %v7425 = vadd.f32 %v6022, %v7424
    %v7426 = vpop.f32.mrb[0].mxu0
    %v7427 = vadd.f32 %v6024, %v7426
    %7428 = vmatprep.mubr.bf16.mxu0 %v4603
    %7429 = vmatmul.mubr.bf16.gmra.mrb[0].mxu0 %v4602
    %v7430 = vpop.f32.mrb[0].mxu0
    %v7431 = vadd.f32 %v6028, %v7430
    %v7432 = vpop.f32.mrb[0].mxu0
    %v7433 = vadd.f32 %v6030, %v7432
    %v7434 = vpop.f32.mrb[0].mxu0
    %v7435 = vadd.f32 %v6032, %v7434
    %v7436 = vpop.f32.mrb[0].mxu0
    %v7437 = vadd.f32 %v6034, %v7436
    %7438 = vmatprep.mubr.bf16.mxu0 %v4607
    %7439 = vmatmul.mubr.bf16.gmra.mrb[0].mxu0 %v4606
    %v7440 = vpop.f32.mrb[0].mxu0
    %v7441 = vadd.f32 %v6038, %v7440
    %v7442 = vpop.f32.mrb[0].mxu0
    %v7443 = vadd.f32 %v6040, %v7442
    %v7444 = vpop.f32.mrb[0].mxu0
    %v7445 = vadd.f32 %v6042, %v7444
    %v7446 = vpop.f32.mrb[0].mxu0
    %v7447 = vadd.f32 %v6044, %v7446
    %7448 = vmatprep.mubr.bf16.mxu0 %v4611
    %7449 = vmatmul.mubr.bf16.gmra.mrb[0].mxu0 %v4610
    %v7450 = vpop.f32.mrb[0].mxu0
    %v7451 = vadd.f32 %v6048, %v7450
    %v7452 = vpop.f32.mrb[0].mxu0
    %v7453 = vadd.f32 %v6050, %v7452
    %v7454 = vpop.f32.mrb[0].mxu0
    %v7455 = vadd.f32 %v6052, %v7454
    %v7456 = vpop.f32.mrb[0].mxu0
    %v7457 = vadd.f32 %v6054, %v7456
    %7458 = vmatprep.mubr.bf16.mxu0 %v4615
    %7459 = vmatmul.mubr.bf16.gmra.mrb[0].mxu0 %v4614
    %v7460 = vpop.f32.mrb[0].mxu0
    %v7461 = vadd.f32 %v6058, %v7460
    %v7462 = vpop.f32.mrb[0].mxu0
    %v7463 = vadd.f32 %v6060, %v7462
    %v7464 = vpop.f32.mrb[0].mxu0
    %v7465 = vadd.f32 %v6062, %v7464
    %v7466 = vpop.f32.mrb[0].mxu0
    %v7467 = vadd.f32 %v6064, %v7466
    %7468 = vmatprep.mubr.bf16.mxu0 %v4619
    %7469 = vmatmul.mubr.bf16.gmra.mrb[0].mxu0 %v4618
    %v7470 = vpop.f32.mrb[0].mxu0
    %v7471 = vadd.f32 %v6068, %v7470
    %v7472 = vpop.f32.mrb[0].mxu0
    %v7473 = vadd.f32 %v6070, %v7472
    %v7474 = vpop.f32.mrb[0].mxu0
    %v7475 = vadd.f32 %v6072, %v7474
    %v7476 = vpop.f32.mrb[0].mxu0
    %v7477 = vadd.f32 %v6074, %v7476
    %7478 = vmatprep.mubr.bf16.mxu0 %v4623
    %7479 = vmatmul.mubr.bf16.gmra.mrb[0].mxu0 %v4622
    %v7480 = vpop.f32.mrb[0].mxu0
    %v7481 = vadd.f32 %v6078, %v7480
    %v7482 = vpop.f32.mrb[0].mxu0
    %v7483 = vadd.f32 %v6080, %v7482
    %v7484 = vpop.f32.mrb[0].mxu0
    %v7485 = vadd.f32 %v6082, %v7484
    %v7486 = vpop.f32.mrb[0].mxu0
    %v7487 = vadd.f32 %v6084, %v7486
    %7488 = vmatprep.mubr.bf16.mxu0 %v4627
    %7489 = vmatmul.mubr.bf16.gmra.mrb[0].mxu0 %v4626
    %v7490 = vpop.f32.mrb[0].mxu0
    %v7491 = vadd.f32 %v6088, %v7490
    %v7492 = vpop.f32.mrb[0].mxu0
    %v7493 = vadd.f32 %v6090, %v7492
    %v7494 = vpop.f32.mrb[0].mxu0
    %v7495 = vadd.f32 %v6092, %v7494
    %v7496 = vpop.f32.mrb[0].mxu0
    %v7497 = vadd.f32 %v6094, %v7496
    %7498 = vmatprep.mubr.bf16.mxu0 %v4631
    %7499 = vmatmul.mubr.bf16.gmra.mrb[0].mxu0 %v4630
    %v7500 = vpop.f32.mrb[0].mxu0
    %v7501 = vadd.f32 %v6098, %v7500
    %v7502 = vpop.f32.mrb[0].mxu0
    %v7503 = vadd.f32 %v6100, %v7502
    %v7504 = vpop.f32.mrb[0].mxu0
    %v7505 = vadd.f32 %v6102, %v7504
    %v7506 = vpop.f32.mrb[0].mxu0
    %v7507 = vadd.f32 %v6104, %v7506
    %7508 = vmatprep.mubr.bf16.mxu0 %v4635
    %7509 = vmatmul.mubr.bf16.gmra.mrb[0].mxu0 %v4634
    %v7510 = vpop.f32.mrb[0].mxu0
    %v7511 = vadd.f32 %v6108, %v7510
    %v7512 = vpop.f32.mrb[0].mxu0
    %v7513 = vadd.f32 %v6110, %v7512
    %v7514 = vpop.f32.mrb[0].mxu0
    %v7515 = vadd.f32 %v6112, %v7514
    %v7516 = vpop.f32.mrb[0].mxu0
    %v7517 = vadd.f32 %v6114, %v7516
    %7518 = vmatprep.mubr.bf16.mxu0 %v4639
    %7519 = vmatmul.mubr.bf16.gmra.mrb[0].mxu0 %v4638
    %v7520 = vpop.f32.mrb[0].mxu0
    %v7521 = vadd.f32 %v6118, %v7520
    %v7522 = vpop.f32.mrb[0].mxu0
    %v7523 = vadd.f32 %v6120, %v7522
    %v7524 = vpop.f32.mrb[0].mxu0
    %v7525 = vadd.f32 %v6122, %v7524
    %v7526 = vpop.f32.mrb[0].mxu0
    %v7527 = vadd.f32 %v6124, %v7526
    %7528 = vmatprep.mubr.bf16.mxu0 %v4643
    %7529 = vmatmul.mubr.bf16.gmra.mrb[0].mxu0 %v4642
    %v7530 = vpop.f32.mrb[0].mxu0
    %v7531 = vadd.f32 %v6128, %v7530
    %v7532 = vpop.f32.mrb[0].mxu0
    %v7533 = vadd.f32 %v6130, %v7532
    %v7534 = vpop.f32.mrb[0].mxu0
    %v7535 = vadd.f32 %v6132, %v7534
    %v7536 = vpop.f32.mrb[0].mxu0
    %v7537 = vadd.f32 %v6134, %v7536
    %7538 = vmatprep.mubr.bf16.mxu0 %v4647
    %7539 = vmatmul.mubr.bf16.gmra.mrb[0].mxu0 %v4646
    %v7540 = vpop.f32.mrb[0].mxu0
    %v7541 = vadd.f32 %v6138, %v7540
    %v7542 = vpop.f32.mrb[0].mxu0
    %v7543 = vadd.f32 %v6140, %v7542
    %v7544 = vpop.f32.mrb[0].mxu0
    %v7545 = vadd.f32 %v6142, %v7544
    %v7546 = vpop.f32.mrb[0].mxu0
    %v7547 = vadd.f32 %v6144, %v7546
    %7548 = vmatprep.mubr.bf16.mxu0 %v4651
    %7549 = vmatmul.mubr.bf16.gmra.mrb[0].mxu0 %v4650
    %v7550 = vpop.f32.mrb[0].mxu0
    %v7551 = vadd.f32 %v6148, %v7550
    %v7552 = vpop.f32.mrb[0].mxu0
    %v7553 = vadd.f32 %v6150, %v7552
    %v7554 = vpop.f32.mrb[0].mxu0
    %v7555 = vadd.f32 %v6152, %v7554
    %v7556 = vpop.f32.mrb[0].mxu0
    %v7557 = vadd.f32 %v6154, %v7556
    %7558 = vmatprep.mubr.bf16.mxu0 %v4655
    %7559 = vmatmul.mubr.bf16.gmra.mrb[0].mxu0 %v4654
    %v7560 = vpop.f32.mrb[0].mxu0
    %v7561 = vadd.f32 %v6158, %v7560
    %v7562 = vpop.f32.mrb[0].mxu0
    %v7563 = vadd.f32 %v6160, %v7562
    %v7564 = vpop.f32.mrb[0].mxu0
    %v7565 = vadd.f32 %v6162, %v7564
    %v7566 = vpop.f32.mrb[0].mxu0
    %v7567 = vadd.f32 %v6164, %v7566
    %7568 = vdwg.mxu0
    %7569 = vmatprep.subr.bf16.mxu0 %v7073
    %7570 = vmatpush1.bf16.msra.mxu0 %v7072
    %7571 = vmatprep.subr.bf16.mxu0 %v7076
    %7572 = vmatpush1.bf16.msra.mxu0 %v7075
    %7573 = vmatprep.subr.bf16.mxu0 %v7079
    %7574 = vmatpush1.bf16.msra.mxu0 %v7078
    %7575 = vmatprep.subr.bf16.mxu0 %v7082
    %7576 = vmatpush1.bf16.msra.mxu0 %v7081
    %7577 = vmatprep.subr.bf16.mxu0 %v7085
    %7578 = vmatpush1.bf16.msra.mxu0 %v7084
    %7579 = vmatprep.subr.bf16.mxu0 %v7088
    %7580 = vmatpush1.bf16.msra.mxu0 %v7087
    %7581 = vmatprep.subr.bf16.mxu0 %v7091
    %7582 = vmatpush1.bf16.msra.mxu0 %v7090
    %7583 = vmatprep.subr.bf16.mxu0 %v7094
    %7584 = vmatpush1.bf16.msra.mxu0 %v7093
    %7585 = vmatprep.subr.bf16.mxu0 %v7097
    %7586 = vmatpush1.bf16.msra.mxu0 %v7096
    %7587 = vmatprep.subr.bf16.mxu0 %v7100
    %7588 = vmatpush1.bf16.msra.mxu0 %v7099
    %7589 = vmatprep.subr.bf16.mxu0 %v7103
    %7590 = vmatpush1.bf16.msra.mxu0 %v7102
    %7591 = vmatprep.subr.bf16.mxu0 %v7106
    %7592 = vmatpush1.bf16.msra.mxu0 %v7105
    %7593 = vmatprep.subr.bf16.mxu0 0
    %7594 = vmatpush1.bf16.msra.mxu0 0
    %7595 = vmatprep.subr.bf16.mxu0 0
    %7596 = vmatpush1.bf16.msra.mxu0 0
    %7597 = vmatprep.subr.bf16.mxu0 0
    %7598 = vmatpush1.bf16.msra.mxu0 0
    %7599 = vmatprep.subr.bf16.mxu0 0
    %7600 = vmatpush1.bf16.msra.mxu0 0
    %7601 = vmatprep.mubr.bf16.mxu0 %v7193
    %7602 = vmatmul.mubr.bf16.gmra.mrb[0].mxu0 %v4532
    %v7603 = vpop.f32.mrb[0].mxu0
    %v7604 = vadd.f32 %v7251, %v7603
    %v7605 = vpop.f32.mrb[0].mxu0
    %v7606 = vadd.f32 %v7253, %v7605
    %v7607 = vpop.f32.mrb[0].mxu0
    %v7608 = vadd.f32 %v7255, %v7607
    %v7609 = vpop.f32.mrb[0].mxu0
    %v7610 = vadd.f32 %v7257, %v7609
    %7611 = vmatprep.mubr.bf16.mxu0 %v7196
    %7612 = vmatmul.mubr.bf16.gmra.mrb[0].mxu0 %v4536
    %v7613 = vpop.f32.mrb[0].mxu0
    %v7614 = vadd.f32 %v7261, %v7613
    %v7615 = vpop.f32.mrb[0].mxu0
    %v7616 = vadd.f32 %v7263, %v7615
    %v7617 = vpop.f32.mrb[0].mxu0
    %v7618 = vadd.f32 %v7265, %v7617
    %v7619 = vpop.f32.mrb[0].mxu0
    %v7620 = vadd.f32 %v7267, %v7619
    %7621 = vmatprep.mubr.bf16.mxu0 %v7199
    %7622 = vmatmul.mubr.bf16.gmra.mrb[0].mxu0 %v4540
    %v7623 = vpop.f32.mrb[0].mxu0
    %v7624 = vadd.f32 %v7271, %v7623
    %v7625 = vpop.f32.mrb[0].mxu0
    %v7626 = vadd.f32 %v7273, %v7625
    %v7627 = vpop.f32.mrb[0].mxu0
    %v7628 = vadd.f32 %v7275, %v7627
    %v7629 = vpop.f32.mrb[0].mxu0
    %v7630 = vadd.f32 %v7277, %v7629
    %7631 = vmatprep.mubr.bf16.mxu0 %v7202
    %7632 = vmatmul.mubr.bf16.gmra.mrb[0].mxu0 %v4544
    %v7633 = vpop.f32.mrb[0].mxu0
    %v7634 = vadd.f32 %v7281, %v7633
    %v7635 = vpop.f32.mrb[0].mxu0
    %v7636 = vadd.f32 %v7283, %v7635
    %v7637 = vpop.f32.mrb[0].mxu0
    %v7638 = vadd.f32 %v7285, %v7637
    %v7639 = vpop.f32.mrb[0].mxu0
    %v7640 = vadd.f32 %v7287, %v7639
    %7641 = vmatprep.mubr.bf16.mxu0 %v7205
    %7642 = vmatmul.mubr.bf16.gmra.mrb[0].mxu0 %v4548
    %v7643 = vpop.f32.mrb[0].mxu0
    %v7644 = vadd.f32 %v7291, %v7643
    %v7645 = vpop.f32.mrb[0].mxu0
    %v7646 = vadd.f32 %v7293, %v7645
    %v7647 = vpop.f32.mrb[0].mxu0
    %v7648 = vadd.f32 %v7295, %v7647
    %v7649 = vpop.f32.mrb[0].mxu0
    %v7650 = vadd.f32 %v7297, %v7649
    %7651 = vmatprep.mubr.bf16.mxu0 %v7208
    %7652 = vmatmul.mubr.bf16.gmra.mrb[0].mxu0 %v4552
    %v7653 = vpop.f32.mrb[0].mxu0
    %v7654 = vadd.f32 %v7301, %v7653
    %v7655 = vpop.f32.mrb[0].mxu0
    %v7656 = vadd.f32 %v7303, %v7655
    %v7657 = vpop.f32.mrb[0].mxu0
    %v7658 = vadd.f32 %v7305, %v7657
    %v7659 = vpop.f32.mrb[0].mxu0
    %v7660 = vadd.f32 %v7307, %v7659
    %7661 = vmatprep.mubr.bf16.mxu0 %v7211
    %7662 = vmatmul.mubr.bf16.gmra.mrb[0].mxu0 %v4556
    %v7663 = vpop.f32.mrb[0].mxu0
    %v7664 = vadd.f32 %v7311, %v7663
    %v7665 = vpop.f32.mrb[0].mxu0
    %v7666 = vadd.f32 %v7313, %v7665
    %v7667 = vpop.f32.mrb[0].mxu0
    %v7668 = vadd.f32 %v7315, %v7667
    %v7669 = vpop.f32.mrb[0].mxu0
    %v7670 = vadd.f32 %v7317, %v7669
    %7671 = vmatprep.mubr.bf16.mxu0 %v7214
    %7672 = vmatmul.mubr.bf16.gmra.mrb[0].mxu0 %v4560
    %v7673 = vpop.f32.mrb[0].mxu0
    %v7674 = vadd.f32 %v7321, %v7673
    %v7675 = vpop.f32.mrb[0].mxu0
    %v7676 = vadd.f32 %v7323, %v7675
    %v7677 = vpop.f32.mrb[0].mxu0
    %v7678 = vadd.f32 %v7325, %v7677
    %v7679 = vpop.f32.mrb[0].mxu0
    %v7680 = vadd.f32 %v7327, %v7679
    %7681 = vmatprep.mubr.bf16.mxu0 %v5365
    %7682 = vmatmul.mubr.bf16.gmra.mrb[0].mxu0 %v4564
    %v7683 = vpop.f32.mrb[0].mxu0
    %v7684 = vadd.f32 %v7331, %v7683
    %v7685 = vpop.f32.mrb[0].mxu0
    %v7686 = vadd.f32 %v7333, %v7685
    %v7687 = vpop.f32.mrb[0].mxu0
    %v7688 = vadd.f32 %v7335, %v7687
    %v7689 = vpop.f32.mrb[0].mxu0
    %v7690 = vadd.f32 %v7337, %v7689
    %7691 = vmatprep.mubr.bf16.mxu0 %v5368
    %7692 = vmatmul.mubr.bf16.gmra.mrb[0].mxu0 %v4568
    %v7693 = vpop.f32.mrb[0].mxu0
    %v7694 = vadd.f32 %v7341, %v7693
    %v7695 = vpop.f32.mrb[0].mxu0
    %v7696 = vadd.f32 %v7343, %v7695
    %v7697 = vpop.f32.mrb[0].mxu0
    %v7698 = vadd.f32 %v7345, %v7697
    %v7699 = vpop.f32.mrb[0].mxu0
    %v7700 = vadd.f32 %v7347, %v7699
    %7701 = vmatprep.mubr.bf16.mxu0 %v5371
    %7702 = vmatmul.mubr.bf16.gmra.mrb[0].mxu0 %v4572
    %v7703 = vpop.f32.mrb[0].mxu0
    %v7704 = vadd.f32 %v7351, %v7703
    %v7705 = vpop.f32.mrb[0].mxu0
    %v7706 = vadd.f32 %v7353, %v7705
    %v7707 = vpop.f32.mrb[0].mxu0
    %v7708 = vadd.f32 %v7355, %v7707
    %v7709 = vpop.f32.mrb[0].mxu0
    %v7710 = vadd.f32 %v7357, %v7709
    %7711 = vmatprep.mubr.bf16.mxu0 %v5374
    %7712 = vmatmul.mubr.bf16.gmra.mrb[0].mxu0 %v4576
    %v7713 = vpop.f32.mrb[0].mxu0
    %v7714 = vadd.f32 %v7361, %v7713
    %v7715 = vpop.f32.mrb[0].mxu0
    %v7716 = vadd.f32 %v7363, %v7715
    %v7717 = vpop.f32.mrb[0].mxu0
    %v7718 = vadd.f32 %v7365, %v7717
    %v7719 = vpop.f32.mrb[0].mxu0
    %v7720 = vadd.f32 %v7367, %v7719
    %7721 = vmatprep.mubr.bf16.mxu0 %v5377
    %7722 = vmatmul.mubr.bf16.gmra.mrb[0].mxu0 %v4580
    %v7723 = vpop.f32.mrb[0].mxu0
    %v7724 = vadd.f32 %v7371, %v7723
    %v7725 = vpop.f32.mrb[0].mxu0
    %v7726 = vadd.f32 %v7373, %v7725
    %v7727 = vpop.f32.mrb[0].mxu0
    %v7728 = vadd.f32 %v7375, %v7727
    %v7729 = vpop.f32.mrb[0].mxu0
    %v7730 = vadd.f32 %v7377, %v7729
    %7731 = vmatprep.mubr.bf16.mxu0 %v5380
    %7732 = vmatmul.mubr.bf16.gmra.mrb[0].mxu0 %v4584
    %v7733 = vpop.f32.mrb[0].mxu0
    %v7734 = vadd.f32 %v7381, %v7733
    %v7735 = vpop.f32.mrb[0].mxu0
    %v7736 = vadd.f32 %v7383, %v7735
    %v7737 = vpop.f32.mrb[0].mxu0
    %v7738 = vadd.f32 %v7385, %v7737
    %v7739 = vpop.f32.mrb[0].mxu0
    %v7740 = vadd.f32 %v7387, %v7739
    %7741 = vmatprep.mubr.bf16.mxu0 %v5383
    %7742 = vmatmul.mubr.bf16.gmra.mrb[0].mxu0 %v4588
    %v7743 = vpop.f32.mrb[0].mxu0
    %v7744 = vadd.f32 %v7391, %v7743
    %v7745 = vpop.f32.mrb[0].mxu0
    %v7746 = vadd.f32 %v7393, %v7745
    %v7747 = vpop.f32.mrb[0].mxu0
    %v7748 = vadd.f32 %v7395, %v7747
    %v7749 = vpop.f32.mrb[0].mxu0
    %v7750 = vadd.f32 %v7397, %v7749
    %7751 = vmatprep.mubr.bf16.mxu0 %v5386
    %7752 = vmatmul.mubr.bf16.gmra.mrb[0].mxu0 %v4592
    %v7753 = vpop.f32.mrb[0].mxu0
    %v7754 = vadd.f32 %v7401, %v7753
    %v7755 = vpop.f32.mrb[0].mxu0
    %v7756 = vadd.f32 %v7403, %v7755
    %v7757 = vpop.f32.mrb[0].mxu0
    %v7758 = vadd.f32 %v7405, %v7757
    %v7759 = vpop.f32.mrb[0].mxu0
    %v7760 = vadd.f32 %v7407, %v7759
    %7761 = vmatprep.mubr.bf16.mxu0 %v5389
    %7762 = vmatmul.mubr.bf16.gmra.mrb[0].mxu0 %v4596
    %v7763 = vpop.f32.mrb[0].mxu0
    %v7764 = vadd.f32 %v7411, %v7763
    %v7765 = vpop.f32.mrb[0].mxu0
    %v7766 = vadd.f32 %v7413, %v7765
    %v7767 = vpop.f32.mrb[0].mxu0
    %v7768 = vadd.f32 %v7415, %v7767
    %v7769 = vpop.f32.mrb[0].mxu0
    %v7770 = vadd.f32 %v7417, %v7769
    %7771 = vmatprep.mubr.bf16.mxu0 %v5392
    %7772 = vmatmul.mubr.bf16.gmra.mrb[0].mxu0 %v4600
    %v7773 = vpop.f32.mrb[0].mxu0
    %v7774 = vadd.f32 %v7421, %v7773
    %v7775 = vpop.f32.mrb[0].mxu0
    %v7776 = vadd.f32 %v7423, %v7775
    %v7777 = vpop.f32.mrb[0].mxu0
    %v7778 = vadd.f32 %v7425, %v7777
    %v7779 = vpop.f32.mrb[0].mxu0
    %v7780 = vadd.f32 %v7427, %v7779
    %7781 = vmatprep.mubr.bf16.mxu0 %v5395
    %7782 = vmatmul.mubr.bf16.gmra.mrb[0].mxu0 %v4604
    %v7783 = vpop.f32.mrb[0].mxu0
    %v7784 = vadd.f32 %v7431, %v7783
    %v7785 = vpop.f32.mrb[0].mxu0
    %v7786 = vadd.f32 %v7433, %v7785
    %v7787 = vpop.f32.mrb[0].mxu0
    %v7788 = vadd.f32 %v7435, %v7787
    %v7789 = vpop.f32.mrb[0].mxu0
    %v7790 = vadd.f32 %v7437, %v7789
    %7791 = vmatprep.mubr.bf16.mxu0 %v5398
    %7792 = vmatmul.mubr.bf16.gmra.mrb[0].mxu0 %v4608
    %v7793 = vpop.f32.mrb[0].mxu0
    %v7794 = vadd.f32 %v7441, %v7793
    %v7795 = vpop.f32.mrb[0].mxu0
    %v7796 = vadd.f32 %v7443, %v7795
    %v7797 = vpop.f32.mrb[0].mxu0
    %v7798 = vadd.f32 %v7445, %v7797
    %v7799 = vpop.f32.mrb[0].mxu0
    %v7800 = vadd.f32 %v7447, %v7799
    %7801 = vmatprep.mubr.bf16.mxu0 %v5401
    %7802 = vmatmul.mubr.bf16.gmra.mrb[0].mxu0 %v4612
    %v7803 = vpop.f32.mrb[0].mxu0
    %v7804 = vadd.f32 %v7451, %v7803
    %v7805 = vpop.f32.mrb[0].mxu0
    %v7806 = vadd.f32 %v7453, %v7805
    %v7807 = vpop.f32.mrb[0].mxu0
    %v7808 = vadd.f32 %v7455, %v7807
    %v7809 = vpop.f32.mrb[0].mxu0
    %v7810 = vadd.f32 %v7457, %v7809
    %7811 = vmatprep.mubr.bf16.mxu0 %v5404
    %7812 = vmatmul.mubr.bf16.gmra.mrb[0].mxu0 %v4616
    %v7813 = vpop.f32.mrb[0].mxu0
    %v7814 = vadd.f32 %v7461, %v7813
    %v7815 = vpop.f32.mrb[0].mxu0
    %v7816 = vadd.f32 %v7463, %v7815
    %v7817 = vpop.f32.mrb[0].mxu0
    %v7818 = vadd.f32 %v7465, %v7817
    %v7819 = vpop.f32.mrb[0].mxu0
    %v7820 = vadd.f32 %v7467, %v7819
    %7821 = vmatprep.mubr.bf16.mxu0 %v5407
    %7822 = vmatmul.mubr.bf16.gmra.mrb[0].mxu0 %v4620
    %v7823 = vpop.f32.mrb[0].mxu0
    %v7824 = vadd.f32 %v7471, %v7823
    %v7825 = vpop.f32.mrb[0].mxu0
    %v7826 = vadd.f32 %v7473, %v7825
    %v7827 = vpop.f32.mrb[0].mxu0
    %v7828 = vadd.f32 %v7475, %v7827
    %v7829 = vpop.f32.mrb[0].mxu0
    %v7830 = vadd.f32 %v7477, %v7829
    %7831 = vmatprep.mubr.bf16.mxu0 %v5410
    %7832 = vmatmul.mubr.bf16.gmra.mrb[0].mxu0 %v4624
    %v7833 = vpop.f32.mrb[0].mxu0
    %v7834 = vadd.f32 %v7481, %v7833
    %v7835 = vpop.f32.mrb[0].mxu0
    %v7836 = vadd.f32 %v7483, %v7835
    %v7837 = vpop.f32.mrb[0].mxu0
    %v7838 = vadd.f32 %v7485, %v7837
    %v7839 = vpop.f32.mrb[0].mxu0
    %v7840 = vadd.f32 %v7487, %v7839
    %7841 = vmatprep.mubr.bf16.mxu0 %v5413
    %7842 = vmatmul.mubr.bf16.gmra.mrb[0].mxu0 %v4628
    %v7843 = vpop.f32.mrb[0].mxu0
    %v7844 = vadd.f32 %v7491, %v7843
    %v7845 = vpop.f32.mrb[0].mxu0
    %v7846 = vadd.f32 %v7493, %v7845
    %v7847 = vpop.f32.mrb[0].mxu0
    %v7848 = vadd.f32 %v7495, %v7847
    %v7849 = vpop.f32.mrb[0].mxu0
    %v7850 = vadd.f32 %v7497, %v7849
    %7851 = vmatprep.mubr.bf16.mxu0 %v5416
    %7852 = vmatmul.mubr.bf16.gmra.mrb[0].mxu0 %v4632
    %v7853 = vpop.f32.mrb[0].mxu0
    %v7854 = vadd.f32 %v7501, %v7853
    %v7855 = vpop.f32.mrb[0].mxu0
    %v7856 = vadd.f32 %v7503, %v7855
    %v7857 = vpop.f32.mrb[0].mxu0
    %v7858 = vadd.f32 %v7505, %v7857
    %v7859 = vpop.f32.mrb[0].mxu0
    %v7860 = vadd.f32 %v7507, %v7859
    %7861 = vmatprep.mubr.bf16.mxu0 %v5419
    %7862 = vmatmul.mubr.bf16.gmra.mrb[0].mxu0 %v4636
    %v7863 = vpop.f32.mrb[0].mxu0
    %v7864 = vadd.f32 %v7511, %v7863
    %v7865 = vpop.f32.mrb[0].mxu0
    %v7866 = vadd.f32 %v7513, %v7865
    %v7867 = vpop.f32.mrb[0].mxu0
    %v7868 = vadd.f32 %v7515, %v7867
    %v7869 = vpop.f32.mrb[0].mxu0
    %v7870 = vadd.f32 %v7517, %v7869
    %7871 = vmatprep.mubr.bf16.mxu0 %v5422
    %7872 = vmatmul.mubr.bf16.gmra.mrb[0].mxu0 %v4640
    %v7873 = vpop.f32.mrb[0].mxu0
    %v7874 = vadd.f32 %v7521, %v7873
    %v7875 = vpop.f32.mrb[0].mxu0
    %v7876 = vadd.f32 %v7523, %v7875
    %v7877 = vpop.f32.mrb[0].mxu0
    %v7878 = vadd.f32 %v7525, %v7877
    %v7879 = vpop.f32.mrb[0].mxu0
    %v7880 = vadd.f32 %v7527, %v7879
    %7881 = vmatprep.mubr.bf16.mxu0 %v5425
    %7882 = vmatmul.mubr.bf16.gmra.mrb[0].mxu0 %v4644
    %v7883 = vpop.f32.mrb[0].mxu0
    %v7884 = vadd.f32 %v7531, %v7883
    %v7885 = vpop.f32.mrb[0].mxu0
    %v7886 = vadd.f32 %v7533, %v7885
    %v7887 = vpop.f32.mrb[0].mxu0
    %v7888 = vadd.f32 %v7535, %v7887
    %v7889 = vpop.f32.mrb[0].mxu0
    %v7890 = vadd.f32 %v7537, %v7889
    %7891 = vmatprep.mubr.bf16.mxu0 %v5428
    %7892 = vmatmul.mubr.bf16.gmra.mrb[0].mxu0 %v4648
    %v7893 = vpop.f32.mrb[0].mxu0
    %v7894 = vadd.f32 %v7541, %v7893
    %v7895 = vpop.f32.mrb[0].mxu0
    %v7896 = vadd.f32 %v7543, %v7895
    %v7897 = vpop.f32.mrb[0].mxu0
    %v7898 = vadd.f32 %v7545, %v7897
    %v7899 = vpop.f32.mrb[0].mxu0
    %v7900 = vadd.f32 %v7547, %v7899
    %7901 = vmatprep.mubr.bf16.mxu0 %v5431
    %7902 = vmatmul.mubr.bf16.gmra.mrb[0].mxu0 %v4652
    %v7903 = vpop.f32.mrb[0].mxu0
    %v7904 = vadd.f32 %v7551, %v7903
    %v7905 = vpop.f32.mrb[0].mxu0
    %v7906 = vadd.f32 %v7553, %v7905
    %v7907 = vpop.f32.mrb[0].mxu0
    %v7908 = vadd.f32 %v7555, %v7907
    %v7909 = vpop.f32.mrb[0].mxu0
    %v7910 = vadd.f32 %v7557, %v7909
    %7911 = vmatprep.mubr.bf16.mxu0 %v5434
    %7912 = vmatmul.mubr.bf16.gmra.mrb[0].mxu0 %v4656
    %v7913 = vpop.f32.mrb[0].mxu0
    %v7914 = vadd.f32 %v7561, %v7913
    %v7915 = vpop.f32.mrb[0].mxu0
    %v7916 = vadd.f32 %v7563, %v7915
    %v7917 = vpop.f32.mrb[0].mxu0
    %v7918 = vadd.f32 %v7565, %v7917
    %v7919 = vpop.f32.mrb[0].mxu0
    %v7920 = vadd.f32 %v7567, %v7919
    %7921 = vdwg.mxu0
    %7922 = vmatprep.subr.bf16.mxu0 0
    %7923 = vmatpush1.bf16.msra.mxu0 %v7026
    %7924 = vmatprep.subr.bf16.mxu0 0
    %7925 = vmatpush1.bf16.msra.mxu0 %v7029
    %7926 = vmatprep.subr.bf16.mxu0 0
    %7927 = vmatpush1.bf16.msra.mxu0 %v7032
    %7928 = vmatprep.subr.bf16.mxu0 0
    %7929 = vmatpush1.bf16.msra.mxu0 %v7035
    %7930 = vmatprep.subr.bf16.mxu0 0
    %7931 = vmatpush1.bf16.msra.mxu0 %v7038
    %7932 = vmatprep.subr.bf16.mxu0 0
    %7933 = vmatpush1.bf16.msra.mxu0 %v7041
    %7934 = vmatprep.subr.bf16.mxu0 0
    %7935 = vmatpush1.bf16.msra.mxu0 %v7044
    %7936 = vmatprep.subr.bf16.mxu0 0
    %7937 = vmatpush1.bf16.msra.mxu0 %v7047
    %7938 = vmatprep.subr.bf16.mxu0 0
    %7939 = vmatpush1.bf16.msra.mxu0 %v7050
    %7940 = vmatprep.subr.bf16.mxu0 0
    %7941 = vmatpush1.bf16.msra.mxu0 %v7053
    %7942 = vmatprep.subr.bf16.mxu0 0
    %7943 = vmatpush1.bf16.msra.mxu0 %v7056
    %7944 = vmatprep.subr.bf16.mxu0 0
    %7945 = vmatpush1.bf16.msra.mxu0 %v7059
    %7946 = vmatprep.subr.bf16.mxu0 0
    %7947 = vmatpush1.bf16.msra.mxu0 %v7062
    %7948 = vmatprep.subr.bf16.mxu0 0
    %7949 = vmatpush1.bf16.msra.mxu0 %v7065
    %7950 = vmatprep.subr.bf16.mxu0 0
    %7951 = vmatpush1.bf16.msra.mxu0 %v7068
    %7952 = vmatprep.subr.bf16.mxu0 0
    %7953 = vmatpush1.bf16.msra.mxu0 %v7071
    %7954 = vmatprep.mubr.bf16.mxu0 %v4531
    %7955 = vmatmul.mubr.bf16.gmra.mrb[0].mxu0 %v4530
    %v7956 = vpop.f32.mrb[0].mxu0
    %v7957 = vadd.f32 %v6490, %v7956
    %v7958 = vpop.f32.mrb[0].mxu0
    %v7959 = vpop.f32.mrb[0].mxu0
    %v7960 = vadd.f32 %v6493, %v7959
    %v7961 = vpop.f32.mrb[0].mxu0
    %7962 = vmatprep.mubr.bf16.mxu0 %v4535
    %7963 = vmatmul.mubr.bf16.gmra.mrb[0].mxu0 %v4534
    %v7964 = vpop.f32.mrb[0].mxu0
    %v7965 = vadd.f32 %v6498, %v7964
    %v7966 = vpop.f32.mrb[0].mxu0
    %v7967 = vpop.f32.mrb[0].mxu0
    %v7968 = vadd.f32 %v6501, %v7967
    %v7969 = vpop.f32.mrb[0].mxu0
    %7970 = vmatprep.mubr.bf16.mxu0 %v4539
    %7971 = vmatmul.mubr.bf16.gmra.mrb[0].mxu0 %v4538
    %v7972 = vpop.f32.mrb[0].mxu0
    %v7973 = vadd.f32 %v6506, %v7972
    %v7974 = vpop.f32.mrb[0].mxu0
    %v7975 = vpop.f32.mrb[0].mxu0
    %v7976 = vadd.f32 %v6509, %v7975
    %v7977 = vpop.f32.mrb[0].mxu0
    %7978 = vmatprep.mubr.bf16.mxu0 %v4543
    %7979 = vmatmul.mubr.bf16.gmra.mrb[0].mxu0 %v4542
    %v7980 = vpop.f32.mrb[0].mxu0
    %v7981 = vadd.f32 %v6514, %v7980
    %v7982 = vpop.f32.mrb[0].mxu0
    %v7983 = vpop.f32.mrb[0].mxu0
    %v7984 = vadd.f32 %v6517, %v7983
    %v7985 = vpop.f32.mrb[0].mxu0
    %7986 = vmatprep.mubr.bf16.mxu0 %v4547
    %7987 = vmatmul.mubr.bf16.gmra.mrb[0].mxu0 %v4546
    %v7988 = vpop.f32.mrb[0].mxu0
    %v7989 = vadd.f32 %v6522, %v7988
    %v7990 = vpop.f32.mrb[0].mxu0
    %v7991 = vpop.f32.mrb[0].mxu0
    %v7992 = vadd.f32 %v6525, %v7991
    %v7993 = vpop.f32.mrb[0].mxu0
    %7994 = vmatprep.mubr.bf16.mxu0 %v4551
    %7995 = vmatmul.mubr.bf16.gmra.mrb[0].mxu0 %v4550
    %v7996 = vpop.f32.mrb[0].mxu0
    %v7997 = vadd.f32 %v6530, %v7996
    %v7998 = vpop.f32.mrb[0].mxu0
    %v7999 = vpop.f32.mrb[0].mxu0
    %v8000 = vadd.f32 %v6533, %v7999
    %v8001 = vpop.f32.mrb[0].mxu0
    %8002 = vmatprep.mubr.bf16.mxu0 %v4555
    %8003 = vmatmul.mubr.bf16.gmra.mrb[0].mxu0 %v4554
    %v8004 = vpop.f32.mrb[0].mxu0
    %v8005 = vadd.f32 %v6538, %v8004
    %v8006 = vpop.f32.mrb[0].mxu0
    %v8007 = vpop.f32.mrb[0].mxu0
    %v8008 = vadd.f32 %v6541, %v8007
    %v8009 = vpop.f32.mrb[0].mxu0
    %8010 = vmatprep.mubr.bf16.mxu0 %v4559
    %8011 = vmatmul.mubr.bf16.gmra.mrb[0].mxu0 %v4558
    %v8012 = vpop.f32.mrb[0].mxu0
    %v8013 = vadd.f32 %v6546, %v8012
    %v8014 = vpop.f32.mrb[0].mxu0
    %v8015 = vpop.f32.mrb[0].mxu0
    %v8016 = vadd.f32 %v6549, %v8015
    %v8017 = vpop.f32.mrb[0].mxu0
    %8018 = vmatprep.mubr.bf16.mxu0 %v4563
    %8019 = vmatmul.mubr.bf16.gmra.mrb[0].mxu0 %v4562
    %v8020 = vpop.f32.mrb[0].mxu0
    %v8021 = vadd.f32 %v6554, %v8020
    %v8022 = vpop.f32.mrb[0].mxu0
    %v8023 = vpop.f32.mrb[0].mxu0
    %v8024 = vadd.f32 %v6557, %v8023
    %v8025 = vpop.f32.mrb[0].mxu0
    %8026 = vmatprep.mubr.bf16.mxu0 %v4567
    %8027 = vmatmul.mubr.bf16.gmra.mrb[0].mxu0 %v4566
    %v8028 = vpop.f32.mrb[0].mxu0
    %v8029 = vadd.f32 %v6562, %v8028
    %v8030 = vpop.f32.mrb[0].mxu0
    %v8031 = vpop.f32.mrb[0].mxu0
    %v8032 = vadd.f32 %v6565, %v8031
    %v8033 = vpop.f32.mrb[0].mxu0
    %8034 = vmatprep.mubr.bf16.mxu0 %v4571
    %8035 = vmatmul.mubr.bf16.gmra.mrb[0].mxu0 %v4570
    %v8036 = vpop.f32.mrb[0].mxu0
    %v8037 = vadd.f32 %v6570, %v8036
    %v8038 = vpop.f32.mrb[0].mxu0
    %v8039 = vpop.f32.mrb[0].mxu0
    %v8040 = vadd.f32 %v6573, %v8039
    %v8041 = vpop.f32.mrb[0].mxu0
    %8042 = vmatprep.mubr.bf16.mxu0 %v4575
    %8043 = vmatmul.mubr.bf16.gmra.mrb[0].mxu0 %v4574
    %v8044 = vpop.f32.mrb[0].mxu0
    %v8045 = vadd.f32 %v6578, %v8044
    %v8046 = vpop.f32.mrb[0].mxu0
    %v8047 = vpop.f32.mrb[0].mxu0
    %v8048 = vadd.f32 %v6581, %v8047
    %v8049 = vpop.f32.mrb[0].mxu0
    %8050 = vmatprep.mubr.bf16.mxu0 %v4579
    %8051 = vmatmul.mubr.bf16.gmra.mrb[0].mxu0 %v4578
    %v8052 = vpop.f32.mrb[0].mxu0
    %v8053 = vadd.f32 %v6586, %v8052
    %v8054 = vpop.f32.mrb[0].mxu0
    %v8055 = vpop.f32.mrb[0].mxu0
    %v8056 = vadd.f32 %v6589, %v8055
    %v8057 = vpop.f32.mrb[0].mxu0
    %8058 = vmatprep.mubr.bf16.mxu0 %v4583
    %8059 = vmatmul.mubr.bf16.gmra.mrb[0].mxu0 %v4582
    %v8060 = vpop.f32.mrb[0].mxu0
    %v8061 = vadd.f32 %v6594, %v8060
    %v8062 = vpop.f32.mrb[0].mxu0
    %v8063 = vpop.f32.mrb[0].mxu0
    %v8064 = vadd.f32 %v6597, %v8063
    %v8065 = vpop.f32.mrb[0].mxu0
    %8066 = vmatprep.mubr.bf16.mxu0 %v4587
    %8067 = vmatmul.mubr.bf16.gmra.mrb[0].mxu0 %v4586
    %v8068 = vpop.f32.mrb[0].mxu0
    %v8069 = vadd.f32 %v6602, %v8068
    %v8070 = vpop.f32.mrb[0].mxu0
    %v8071 = vpop.f32.mrb[0].mxu0
    %v8072 = vadd.f32 %v6605, %v8071
    %v8073 = vpop.f32.mrb[0].mxu0
    %8074 = vmatprep.mubr.bf16.mxu0 %v4591
    %8075 = vmatmul.mubr.bf16.gmra.mrb[0].mxu0 %v4590
    %v8076 = vpop.f32.mrb[0].mxu0
    %v8077 = vadd.f32 %v6610, %v8076
    %v8078 = vpop.f32.mrb[0].mxu0
    %v8079 = vpop.f32.mrb[0].mxu0
    %v8080 = vadd.f32 %v6613, %v8079
    %v8081 = vpop.f32.mrb[0].mxu0
    %8082 = vmatprep.mubr.bf16.mxu0 %v4595
    %8083 = vmatmul.mubr.bf16.gmra.mrb[0].mxu0 %v4594
    %v8084 = vpop.f32.mrb[0].mxu0
    %v8085 = vadd.f32 %v6618, %v8084
    %v8086 = vpop.f32.mrb[0].mxu0
    %v8087 = vpop.f32.mrb[0].mxu0
    %v8088 = vadd.f32 %v6621, %v8087
    %v8089 = vpop.f32.mrb[0].mxu0
    %8090 = vmatprep.mubr.bf16.mxu0 %v4599
    %8091 = vmatmul.mubr.bf16.gmra.mrb[0].mxu0 %v4598
    %v8092 = vpop.f32.mrb[0].mxu0
    %v8093 = vadd.f32 %v6626, %v8092
    %v8094 = vpop.f32.mrb[0].mxu0
    %v8095 = vpop.f32.mrb[0].mxu0
    %v8096 = vadd.f32 %v6629, %v8095
    %v8097 = vpop.f32.mrb[0].mxu0
    %8098 = vmatprep.mubr.bf16.mxu0 %v4603
    %8099 = vmatmul.mubr.bf16.gmra.mrb[0].mxu0 %v4602
    %v8100 = vpop.f32.mrb[0].mxu0
    %v8101 = vadd.f32 %v6634, %v8100
    %v8102 = vpop.f32.mrb[0].mxu0
    %v8103 = vpop.f32.mrb[0].mxu0
    %v8104 = vadd.f32 %v6637, %v8103
    %v8105 = vpop.f32.mrb[0].mxu0
    %8106 = vmatprep.mubr.bf16.mxu0 %v4607
    %8107 = vmatmul.mubr.bf16.gmra.mrb[0].mxu0 %v4606
    %v8108 = vpop.f32.mrb[0].mxu0
    %v8109 = vadd.f32 %v6642, %v8108
    %v8110 = vpop.f32.mrb[0].mxu0
    %v8111 = vpop.f32.mrb[0].mxu0
    %v8112 = vadd.f32 %v6645, %v8111
    %v8113 = vpop.f32.mrb[0].mxu0
    %8114 = vmatprep.mubr.bf16.mxu0 %v4611
    %8115 = vmatmul.mubr.bf16.gmra.mrb[0].mxu0 %v4610
    %v8116 = vpop.f32.mrb[0].mxu0
    %v8117 = vadd.f32 %v6650, %v8116
    %v8118 = vpop.f32.mrb[0].mxu0
    %v8119 = vpop.f32.mrb[0].mxu0
    %v8120 = vadd.f32 %v6653, %v8119
    %v8121 = vpop.f32.mrb[0].mxu0
    %8122 = vmatprep.mubr.bf16.mxu0 %v4615
    %8123 = vmatmul.mubr.bf16.gmra.mrb[0].mxu0 %v4614
    %v8124 = vpop.f32.mrb[0].mxu0
    %v8125 = vadd.f32 %v6658, %v8124
    %v8126 = vpop.f32.mrb[0].mxu0
    %v8127 = vpop.f32.mrb[0].mxu0
    %v8128 = vadd.f32 %v6661, %v8127
    %v8129 = vpop.f32.mrb[0].mxu0
    %8130 = vmatprep.mubr.bf16.mxu0 %v4619
    %8131 = vmatmul.mubr.bf16.gmra.mrb[0].mxu0 %v4618
    %v8132 = vpop.f32.mrb[0].mxu0
    %v8133 = vadd.f32 %v6666, %v8132
    %v8134 = vpop.f32.mrb[0].mxu0
    %v8135 = vpop.f32.mrb[0].mxu0
    %v8136 = vadd.f32 %v6669, %v8135
    %v8137 = vpop.f32.mrb[0].mxu0
    %8138 = vmatprep.mubr.bf16.mxu0 %v4623
    %8139 = vmatmul.mubr.bf16.gmra.mrb[0].mxu0 %v4622
    %v8140 = vpop.f32.mrb[0].mxu0
    %v8141 = vadd.f32 %v6674, %v8140
    %v8142 = vpop.f32.mrb[0].mxu0
    %v8143 = vpop.f32.mrb[0].mxu0
    %v8144 = vadd.f32 %v6677, %v8143
    %v8145 = vpop.f32.mrb[0].mxu0
    %8146 = vmatprep.mubr.bf16.mxu0 %v4627
    %8147 = vmatmul.mubr.bf16.gmra.mrb[0].mxu0 %v4626
    %v8148 = vpop.f32.mrb[0].mxu0
    %v8149 = vadd.f32 %v6682, %v8148
    %v8150 = vpop.f32.mrb[0].mxu0
    %v8151 = vpop.f32.mrb[0].mxu0
    %v8152 = vadd.f32 %v6685, %v8151
    %v8153 = vpop.f32.mrb[0].mxu0
    %8154 = vmatprep.mubr.bf16.mxu0 %v4631
    %8155 = vmatmul.mubr.bf16.gmra.mrb[0].mxu0 %v4630
    %v8156 = vpop.f32.mrb[0].mxu0
    %v8157 = vadd.f32 %v6690, %v8156
    %v8158 = vpop.f32.mrb[0].mxu0
    %v8159 = vpop.f32.mrb[0].mxu0
    %v8160 = vadd.f32 %v6693, %v8159
    %v8161 = vpop.f32.mrb[0].mxu0
    %8162 = vmatprep.mubr.bf16.mxu0 %v4635
    %8163 = vmatmul.mubr.bf16.gmra.mrb[0].mxu0 %v4634
    %v8164 = vpop.f32.mrb[0].mxu0
    %v8165 = vadd.f32 %v6698, %v8164
    %v8166 = vpop.f32.mrb[0].mxu0
    %v8167 = vpop.f32.mrb[0].mxu0
    %v8168 = vadd.f32 %v6701, %v8167
    %v8169 = vpop.f32.mrb[0].mxu0
    %8170 = vmatprep.mubr.bf16.mxu0 %v4639
    %8171 = vmatmul.mubr.bf16.gmra.mrb[0].mxu0 %v4638
    %v8172 = vpop.f32.mrb[0].mxu0
    %v8173 = vadd.f32 %v6706, %v8172
    %v8174 = vpop.f32.mrb[0].mxu0
    %v8175 = vpop.f32.mrb[0].mxu0
    %v8176 = vadd.f32 %v6709, %v8175
    %v8177 = vpop.f32.mrb[0].mxu0
    %8178 = vmatprep.mubr.bf16.mxu0 %v4643
    %8179 = vmatmul.mubr.bf16.gmra.mrb[0].mxu0 %v4642
    %v8180 = vpop.f32.mrb[0].mxu0
    %v8181 = vadd.f32 %v6714, %v8180
    %v8182 = vpop.f32.mrb[0].mxu0
    %v8183 = vpop.f32.mrb[0].mxu0
    %v8184 = vadd.f32 %v6717, %v8183
    %v8185 = vpop.f32.mrb[0].mxu0
    %8186 = vmatprep.mubr.bf16.mxu0 %v4647
    %8187 = vmatmul.mubr.bf16.gmra.mrb[0].mxu0 %v4646
    %v8188 = vpop.f32.mrb[0].mxu0
    %v8189 = vadd.f32 %v6722, %v8188
    %v8190 = vpop.f32.mrb[0].mxu0
    %v8191 = vpop.f32.mrb[0].mxu0
    %v8192 = vadd.f32 %v6725, %v8191
    %v8193 = vpop.f32.mrb[0].mxu0
    %8194 = vmatprep.mubr.bf16.mxu0 %v4651
    %8195 = vmatmul.mubr.bf16.gmra.mrb[0].mxu0 %v4650
    %v8196 = vpop.f32.mrb[0].mxu0
    %v8197 = vadd.f32 %v6730, %v8196
    %v8198 = vpop.f32.mrb[0].mxu0
    %v8199 = vpop.f32.mrb[0].mxu0
    %v8200 = vadd.f32 %v6733, %v8199
    %v8201 = vpop.f32.mrb[0].mxu0
    %8202 = vmatprep.mubr.bf16.mxu0 %v4655
    %8203 = vmatmul.mubr.bf16.gmra.mrb[0].mxu0 %v4654
    %v8204 = vpop.f32.mrb[0].mxu0
    %v8205 = vadd.f32 %v6738, %v8204
    %v8206 = vpop.f32.mrb[0].mxu0
    %v8207 = vpop.f32.mrb[0].mxu0
    %v8208 = vadd.f32 %v6741, %v8207
    %v8209 = vpop.f32.mrb[0].mxu0
    %8210 = vdwg.mxu0
    %8211 = vmatprep.subr.bf16.mxu0 0
    %8212 = vmatpush1.bf16.msra.mxu0 %v7074
    %8213 = vmatprep.subr.bf16.mxu0 0
    %8214 = vmatpush1.bf16.msra.mxu0 %v7077
    %8215 = vmatprep.subr.bf16.mxu0 0
    %8216 = vmatpush1.bf16.msra.mxu0 %v7080
    %8217 = vmatprep.subr.bf16.mxu0 0
    %8218 = vmatpush1.bf16.msra.mxu0 %v7083
    %8219 = vmatprep.subr.bf16.mxu0 0
    %8220 = vmatpush1.bf16.msra.mxu0 %v7086
    %8221 = vmatprep.subr.bf16.mxu0 0
    %8222 = vmatpush1.bf16.msra.mxu0 %v7089
    %8223 = vmatprep.subr.bf16.mxu0 0
    %8224 = vmatpush1.bf16.msra.mxu0 %v7092
    %8225 = vmatprep.subr.bf16.mxu0 0
    %8226 = vmatpush1.bf16.msra.mxu0 %v7095
    %8227 = vmatprep.subr.bf16.mxu0 0
    %8228 = vmatpush1.bf16.msra.mxu0 %v7098
    %8229 = vmatprep.subr.bf16.mxu0 0
    %8230 = vmatpush1.bf16.msra.mxu0 %v7101
    %8231 = vmatprep.subr.bf16.mxu0 0
    %8232 = vmatpush1.bf16.msra.mxu0 %v7104
    %8233 = vmatprep.subr.bf16.mxu0 0
    %8234 = vmatpush1.bf16.msra.mxu0 %v7107
    %8235 = vmatprep.subr.bf16.mxu0 0
    %8236 = vmatpush1.bf16.msra.mxu0 0
    %8237 = vmatprep.subr.bf16.mxu0 0
    %8238 = vmatpush1.bf16.msra.mxu0 0
    %8239 = vmatprep.subr.bf16.mxu0 0
    %8240 = vmatpush1.bf16.msra.mxu0 0
    %8241 = vmatprep.subr.bf16.mxu0 0
    %8242 = vmatpush1.bf16.msra.mxu0 0
    %8243 = vmatprep.mubr.bf16.mxu0 %v7193
    %8244 = vmatmul.mubr.bf16.gmra.mrb[0].mxu0 %v4532
    %v8245 = vpop.f32.mrb[0].mxu0
    %v8246 = vadd.f32 %v7957, %v8245
    %v8247 = vpop.f32.mrb[0].mxu0
    %v8248 = vpop.f32.mrb[0].mxu0
    %v8249 = vadd.f32 %v7960, %v8248
    %v8250 = vpop.f32.mrb[0].mxu0
    %8251 = vmatprep.mubr.bf16.mxu0 %v7196
    %8252 = vmatmul.mubr.bf16.gmra.mrb[0].mxu0 %v4536
    %v8253 = vpop.f32.mrb[0].mxu0
    %v8254 = vadd.f32 %v7965, %v8253
    %v8255 = vpop.f32.mrb[0].mxu0
    %v8256 = vpop.f32.mrb[0].mxu0
    %v8257 = vadd.f32 %v7968, %v8256
    %v8258 = vpop.f32.mrb[0].mxu0
    %8259 = vmatprep.mubr.bf16.mxu0 %v7199
    %8260 = vmatmul.mubr.bf16.gmra.mrb[0].mxu0 %v4540
    %v8261 = vpop.f32.mrb[0].mxu0
    %v8262 = vadd.f32 %v7973, %v8261
    %v8263 = vpop.f32.mrb[0].mxu0
    %v8264 = vpop.f32.mrb[0].mxu0
    %v8265 = vadd.f32 %v7976, %v8264
    %v8266 = vpop.f32.mrb[0].mxu0
    %8267 = vmatprep.mubr.bf16.mxu0 %v7202
    %8268 = vmatmul.mubr.bf16.gmra.mrb[0].mxu0 %v4544
    %v8269 = vpop.f32.mrb[0].mxu0
    %v8270 = vadd.f32 %v7981, %v8269
    %v8271 = vpop.f32.mrb[0].mxu0
    %v8272 = vpop.f32.mrb[0].mxu0
    %v8273 = vadd.f32 %v7984, %v8272
    %v8274 = vpop.f32.mrb[0].mxu0
    %8275 = vmatprep.mubr.bf16.mxu0 %v7205
    %8276 = vmatmul.mubr.bf16.gmra.mrb[0].mxu0 %v4548
    %v8277 = vpop.f32.mrb[0].mxu0
    %v8278 = vadd.f32 %v7989, %v8277
    %v8279 = vpop.f32.mrb[0].mxu0
    %v8280 = vpop.f32.mrb[0].mxu0
    %v8281 = vadd.f32 %v7992, %v8280
    %v8282 = vpop.f32.mrb[0].mxu0
    %8283 = vmatprep.mubr.bf16.mxu0 %v7208
    %8284 = vmatmul.mubr.bf16.gmra.mrb[0].mxu0 %v4552
    %v8285 = vpop.f32.mrb[0].mxu0
    %v8286 = vadd.f32 %v7997, %v8285
    %v8287 = vpop.f32.mrb[0].mxu0
    %v8288 = vpop.f32.mrb[0].mxu0
    %v8289 = vadd.f32 %v8000, %v8288
    %v8290 = vpop.f32.mrb[0].mxu0
    %8291 = vmatprep.mubr.bf16.mxu0 %v7211
    %8292 = vmatmul.mubr.bf16.gmra.mrb[0].mxu0 %v4556
    %v8293 = vpop.f32.mrb[0].mxu0
    %v8294 = vadd.f32 %v8005, %v8293
    %v8295 = vpop.f32.mrb[0].mxu0
    %v8296 = vpop.f32.mrb[0].mxu0
    %v8297 = vadd.f32 %v8008, %v8296
    %v8298 = vpop.f32.mrb[0].mxu0
    %8299 = vmatprep.mubr.bf16.mxu0 %v7214
    %8300 = vmatmul.mubr.bf16.gmra.mrb[0].mxu0 %v4560
    %v8301 = vpop.f32.mrb[0].mxu0
    %v8302 = vadd.f32 %v8013, %v8301
    %v8303 = vpop.f32.mrb[0].mxu0
    %v8304 = vpop.f32.mrb[0].mxu0
    %v8305 = vadd.f32 %v8016, %v8304
    %v8306 = vpop.f32.mrb[0].mxu0
    %8307 = vmatprep.mubr.bf16.mxu0 %v5365
    %8308 = vmatmul.mubr.bf16.gmra.mrb[0].mxu0 %v4564
    %v8309 = vpop.f32.mrb[0].mxu0
    %v8310 = vadd.f32 %v8021, %v8309
    %v8311 = vpop.f32.mrb[0].mxu0
    %v8312 = vpop.f32.mrb[0].mxu0
    %v8313 = vadd.f32 %v8024, %v8312
    %v8314 = vpop.f32.mrb[0].mxu0
    %8315 = vmatprep.mubr.bf16.mxu0 %v5368
    %8316 = vmatmul.mubr.bf16.gmra.mrb[0].mxu0 %v4568
    %v8317 = vpop.f32.mrb[0].mxu0
    %v8318 = vadd.f32 %v8029, %v8317
    %v8319 = vpop.f32.mrb[0].mxu0
    %v8320 = vpop.f32.mrb[0].mxu0
    %v8321 = vadd.f32 %v8032, %v8320
    %v8322 = vpop.f32.mrb[0].mxu0
    %8323 = vmatprep.mubr.bf16.mxu0 %v5371
    %8324 = vmatmul.mubr.bf16.gmra.mrb[0].mxu0 %v4572
    %v8325 = vpop.f32.mrb[0].mxu0
    %v8326 = vadd.f32 %v8037, %v8325
    %v8327 = vpop.f32.mrb[0].mxu0
    %v8328 = vpop.f32.mrb[0].mxu0
    %v8329 = vadd.f32 %v8040, %v8328
    %v8330 = vpop.f32.mrb[0].mxu0
    %8331 = vmatprep.mubr.bf16.mxu0 %v5374
    %8332 = vmatmul.mubr.bf16.gmra.mrb[0].mxu0 %v4576
    %v8333 = vpop.f32.mrb[0].mxu0
    %v8334 = vadd.f32 %v8045, %v8333
    %v8335 = vpop.f32.mrb[0].mxu0
    %v8336 = vpop.f32.mrb[0].mxu0
    %v8337 = vadd.f32 %v8048, %v8336
    %v8338 = vpop.f32.mrb[0].mxu0
    %8339 = vmatprep.mubr.bf16.mxu0 %v5377
    %8340 = vmatmul.mubr.bf16.gmra.mrb[0].mxu0 %v4580
    %v8341 = vpop.f32.mrb[0].mxu0
    %v8342 = vadd.f32 %v8053, %v8341
    %v8343 = vpop.f32.mrb[0].mxu0
    %v8344 = vpop.f32.mrb[0].mxu0
    %v8345 = vadd.f32 %v8056, %v8344
    %v8346 = vpop.f32.mrb[0].mxu0
    %8347 = vmatprep.mubr.bf16.mxu0 %v5380
    %8348 = vmatmul.mubr.bf16.gmra.mrb[0].mxu0 %v4584
    %v8349 = vpop.f32.mrb[0].mxu0
    %v8350 = vadd.f32 %v8061, %v8349
    %v8351 = vpop.f32.mrb[0].mxu0
    %v8352 = vpop.f32.mrb[0].mxu0
    %v8353 = vadd.f32 %v8064, %v8352
    %v8354 = vpop.f32.mrb[0].mxu0
    %8355 = vmatprep.mubr.bf16.mxu0 %v5383
    %8356 = vmatmul.mubr.bf16.gmra.mrb[0].mxu0 %v4588
    %v8357 = vpop.f32.mrb[0].mxu0
    %v8358 = vadd.f32 %v8069, %v8357
    %v8359 = vpop.f32.mrb[0].mxu0
    %v8360 = vpop.f32.mrb[0].mxu0
    %v8361 = vadd.f32 %v8072, %v8360
    %v8362 = vpop.f32.mrb[0].mxu0
    %8363 = vmatprep.mubr.bf16.mxu0 %v5386
    %8364 = vmatmul.mubr.bf16.gmra.mrb[0].mxu0 %v4592
    %v8365 = vpop.f32.mrb[0].mxu0
    %v8366 = vadd.f32 %v8077, %v8365
    %v8367 = vpop.f32.mrb[0].mxu0
    %v8368 = vpop.f32.mrb[0].mxu0
    %v8369 = vadd.f32 %v8080, %v8368
    %v8370 = vpop.f32.mrb[0].mxu0
    %8371 = vmatprep.mubr.bf16.mxu0 %v5389
    %8372 = vmatmul.mubr.bf16.gmra.mrb[0].mxu0 %v4596
    %v8373 = vpop.f32.mrb[0].mxu0
    %v8374 = vadd.f32 %v8085, %v8373
    %v8375 = vpop.f32.mrb[0].mxu0
    %v8376 = vpop.f32.mrb[0].mxu0
    %v8377 = vadd.f32 %v8088, %v8376
    %v8378 = vpop.f32.mrb[0].mxu0
    %8379 = vmatprep.mubr.bf16.mxu0 %v5392
    %8380 = vmatmul.mubr.bf16.gmra.mrb[0].mxu0 %v4600
    %v8381 = vpop.f32.mrb[0].mxu0
    %v8382 = vadd.f32 %v8093, %v8381
    %v8383 = vpop.f32.mrb[0].mxu0
    %v8384 = vpop.f32.mrb[0].mxu0
    %v8385 = vadd.f32 %v8096, %v8384
    %v8386 = vpop.f32.mrb[0].mxu0
    %8387 = vmatprep.mubr.bf16.mxu0 %v5395
    %8388 = vmatmul.mubr.bf16.gmra.mrb[0].mxu0 %v4604
    %v8389 = vpop.f32.mrb[0].mxu0
    %v8390 = vadd.f32 %v8101, %v8389
    %v8391 = vpop.f32.mrb[0].mxu0
    %v8392 = vpop.f32.mrb[0].mxu0
    %v8393 = vadd.f32 %v8104, %v8392
    %v8394 = vpop.f32.mrb[0].mxu0
    %8395 = vmatprep.mubr.bf16.mxu0 %v5398
    %8396 = vmatmul.mubr.bf16.gmra.mrb[0].mxu0 %v4608
    %v8397 = vpop.f32.mrb[0].mxu0
    %v8398 = vadd.f32 %v8109, %v8397
    %v8399 = vpop.f32.mrb[0].mxu0
    %v8400 = vpop.f32.mrb[0].mxu0
    %v8401 = vadd.f32 %v8112, %v8400
    %v8402 = vpop.f32.mrb[0].mxu0
    %8403 = vmatprep.mubr.bf16.mxu0 %v5401
    %8404 = vmatmul.mubr.bf16.gmra.mrb[0].mxu0 %v4612
    %v8405 = vpop.f32.mrb[0].mxu0
    %v8406 = vadd.f32 %v8117, %v8405
    %v8407 = vpop.f32.mrb[0].mxu0
    %v8408 = vpop.f32.mrb[0].mxu0
    %v8409 = vadd.f32 %v8120, %v8408
    %v8410 = vpop.f32.mrb[0].mxu0
    %8411 = vmatprep.mubr.bf16.mxu0 %v5404
    %8412 = vmatmul.mubr.bf16.gmra.mrb[0].mxu0 %v4616
    %v8413 = vpop.f32.mrb[0].mxu0
    %v8414 = vadd.f32 %v8125, %v8413
    %v8415 = vpop.f32.mrb[0].mxu0
    %v8416 = vpop.f32.mrb[0].mxu0
    %v8417 = vadd.f32 %v8128, %v8416
    %v8418 = vpop.f32.mrb[0].mxu0
    %8419 = vmatprep.mubr.bf16.mxu0 %v5407
    %8420 = vmatmul.mubr.bf16.gmra.mrb[0].mxu0 %v4620
    %v8421 = vpop.f32.mrb[0].mxu0
    %v8422 = vadd.f32 %v8133, %v8421
    %v8423 = vpop.f32.mrb[0].mxu0
    %v8424 = vpop.f32.mrb[0].mxu0
    %v8425 = vadd.f32 %v8136, %v8424
    %v8426 = vpop.f32.mrb[0].mxu0
    %8427 = vmatprep.mubr.bf16.mxu0 %v5410
    %8428 = vmatmul.mubr.bf16.gmra.mrb[0].mxu0 %v4624
    %v8429 = vpop.f32.mrb[0].mxu0
    %v8430 = vadd.f32 %v8141, %v8429
    %v8431 = vpop.f32.mrb[0].mxu0
    %v8432 = vpop.f32.mrb[0].mxu0
    %v8433 = vadd.f32 %v8144, %v8432
    %v8434 = vpop.f32.mrb[0].mxu0
    %8435 = vmatprep.mubr.bf16.mxu0 %v5413
    %8436 = vmatmul.mubr.bf16.gmra.mrb[0].mxu0 %v4628
    %v8437 = vpop.f32.mrb[0].mxu0
    %v8438 = vadd.f32 %v8149, %v8437
    %v8439 = vpop.f32.mrb[0].mxu0
    %v8440 = vpop.f32.mrb[0].mxu0
    %v8441 = vadd.f32 %v8152, %v8440
    %v8442 = vpop.f32.mrb[0].mxu0
    %8443 = vmatprep.mubr.bf16.mxu0 %v5416
    %8444 = vmatmul.mubr.bf16.gmra.mrb[0].mxu0 %v4632
    %v8445 = vpop.f32.mrb[0].mxu0
    %v8446 = vadd.f32 %v8157, %v8445
    %v8447 = vpop.f32.mrb[0].mxu0
    %v8448 = vpop.f32.mrb[0].mxu0
    %v8449 = vadd.f32 %v8160, %v8448
    %v8450 = vpop.f32.mrb[0].mxu0
    %8451 = vmatprep.mubr.bf16.mxu0 %v5419
    %8452 = vmatmul.mubr.bf16.gmra.mrb[0].mxu0 %v4636
    %v8453 = vpop.f32.mrb[0].mxu0
    %v8454 = vadd.f32 %v8165, %v8453
    %v8455 = vpop.f32.mrb[0].mxu0
    %v8456 = vpop.f32.mrb[0].mxu0
    %v8457 = vadd.f32 %v8168, %v8456
    %v8458 = vpop.f32.mrb[0].mxu0
    %8459 = vmatprep.mubr.bf16.mxu0 %v5422
    %8460 = vmatmul.mubr.bf16.gmra.mrb[0].mxu0 %v4640
    %v8461 = vpop.f32.mrb[0].mxu0
    %v8462 = vadd.f32 %v8173, %v8461
    %v8463 = vpop.f32.mrb[0].mxu0
    %v8464 = vpop.f32.mrb[0].mxu0
    %v8465 = vadd.f32 %v8176, %v8464
    %v8466 = vpop.f32.mrb[0].mxu0
    %8467 = vmatprep.mubr.bf16.mxu0 %v5425
    %8468 = vmatmul.mubr.bf16.gmra.mrb[0].mxu0 %v4644
    %v8469 = vpop.f32.mrb[0].mxu0
    %v8470 = vadd.f32 %v8181, %v8469
    %v8471 = vpop.f32.mrb[0].mxu0
    %v8472 = vpop.f32.mrb[0].mxu0
    %v8473 = vadd.f32 %v8184, %v8472
    %v8474 = vpop.f32.mrb[0].mxu0
    %8475 = vmatprep.mubr.bf16.mxu0 %v5428
    %8476 = vmatmul.mubr.bf16.gmra.mrb[0].mxu0 %v4648
    %v8477 = vpop.f32.mrb[0].mxu0
    %v8478 = vadd.f32 %v8189, %v8477
    %v8479 = vpop.f32.mrb[0].mxu0
    %v8480 = vpop.f32.mrb[0].mxu0
    %v8481 = vadd.f32 %v8192, %v8480
    %v8482 = vpop.f32.mrb[0].mxu0
    %8483 = vmatprep.mubr.bf16.mxu0 %v5431
    %8484 = vmatmul.mubr.bf16.gmra.mrb[0].mxu0 %v4652
    %v8485 = vpop.f32.mrb[0].mxu0
    %v8486 = vadd.f32 %v8197, %v8485
    %v8487 = vpop.f32.mrb[0].mxu0
    %v8488 = vpop.f32.mrb[0].mxu0
    %v8489 = vadd.f32 %v8200, %v8488
    %v8490 = vpop.f32.mrb[0].mxu0
    %8491 = vmatprep.mubr.bf16.mxu0 %v5434
    %8492 = vmatmul.mubr.bf16.gmra.mrb[0].mxu0 %v4656
    %v8493 = vpop.f32.mrb[0].mxu0
    %v8494 = vadd.f32 %v8205, %v8493
    %v8495 = vpop.f32.mrb[0].mxu0
    %v8496 = vpop.f32.mrb[0].mxu0
    %v8497 = vadd.f32 %v8208, %v8496
    %v8498 = vpop.f32.mrb[0].mxu0
    %8499 = vdwg.mxu0
    %v8500 = vld [vmem:[%s6] sm:$0x7]
    %v8502 = vlaneseq
    %v8503 = vshrl.u32 %v8502, 7
    %v8504 = vsub.s32 0, %v8503
    %v8505 = vrot.slane %v8500, %v8504
    %v8506 = vlaneseq
    %v8507 = vshrl.u32 %v8506, 7
    %v8508 = vsub.s32 1, %v8507
    %v8509 = vrot.slane %v8500, %v8508
    %v8510 = vlaneseq
    %v8511 = vshrl.u32 %v8510, 7
    %v8512 = vsub.s32 2, %v8511
    %v8513 = vrot.slane %v8500, %v8512
    %v8517 = vadd.f32 %v7604, %v8505
    %v8518 = vadd.f32 %v7606, %v8509
    %v8519 = vadd.f32 %v8246, %v8513
    %v8520 = vadd.f32 %v7608, %v8505
    %v8521 = vadd.f32 %v7610, %v8509
    %v8522 = vadd.f32 %v8249, %v8513
    %v8523 = vadd.f32 %v7614, %v8505
    %v8524 = vadd.f32 %v7616, %v8509
    %v8525 = vadd.f32 %v8254, %v8513
    %v8526 = vadd.f32 %v7618, %v8505
    %v8527 = vadd.f32 %v7620, %v8509
    %v8528 = vadd.f32 %v8257, %v8513
    %v8529 = vadd.f32 %v7624, %v8505
    %v8530 = vadd.f32 %v7626, %v8509
    %v8531 = vadd.f32 %v8262, %v8513
    %v8532 = vadd.f32 %v7628, %v8505
    %v8533 = vadd.f32 %v7630, %v8509
    %v8534 = vadd.f32 %v8265, %v8513
    %v8535 = vadd.f32 %v7634, %v8505
    %v8536 = vadd.f32 %v7636, %v8509
    %v8537 = vadd.f32 %v8270, %v8513
    %v8538 = vadd.f32 %v7638, %v8505
    %v8539 = vadd.f32 %v7640, %v8509
    %v8540 = vadd.f32 %v8273, %v8513
    %v8541 = vadd.f32 %v7644, %v8505
    %v8542 = vadd.f32 %v7646, %v8509
    %v8543 = vadd.f32 %v8278, %v8513
    %v8544 = vadd.f32 %v7648, %v8505
    %v8545 = vadd.f32 %v7650, %v8509
    %v8546 = vadd.f32 %v8281, %v8513
    %v8547 = vadd.f32 %v7654, %v8505
    %v8548 = vadd.f32 %v7656, %v8509
    %v8549 = vadd.f32 %v8286, %v8513
    %v8550 = vadd.f32 %v7658, %v8505
    %v8551 = vadd.f32 %v7660, %v8509
    %v8552 = vadd.f32 %v8289, %v8513
    %v8553 = vadd.f32 %v7664, %v8505
    %v8554 = vadd.f32 %v7666, %v8509
    %v8555 = vadd.f32 %v8294, %v8513
    %v8556 = vadd.f32 %v7668, %v8505
    %v8557 = vadd.f32 %v7670, %v8509
    %v8558 = vadd.f32 %v8297, %v8513
    %v8559 = vadd.f32 %v7674, %v8505
    %v8560 = vadd.f32 %v7676, %v8509
    %v8561 = vadd.f32 %v8302, %v8513
    %v8562 = vadd.f32 %v7678, %v8505
    %v8563 = vadd.f32 %v7680, %v8509
    %v8564 = vadd.f32 %v8305, %v8513
    %v8565 = vadd.f32 %v7684, %v8505
    %v8566 = vadd.f32 %v7686, %v8509
    %v8567 = vadd.f32 %v8310, %v8513
    %v8568 = vadd.f32 %v7688, %v8505
    %v8569 = vadd.f32 %v7690, %v8509
    %v8570 = vadd.f32 %v8313, %v8513
    %v8571 = vadd.f32 %v7694, %v8505
    %v8572 = vadd.f32 %v7696, %v8509
    %v8573 = vadd.f32 %v8318, %v8513
    %v8574 = vadd.f32 %v7698, %v8505
    %v8575 = vadd.f32 %v7700, %v8509
    %v8576 = vadd.f32 %v8321, %v8513
    %v8577 = vadd.f32 %v7704, %v8505
    %v8578 = vadd.f32 %v7706, %v8509
    %v8579 = vadd.f32 %v8326, %v8513
    %v8580 = vadd.f32 %v7708, %v8505
    %v8581 = vadd.f32 %v7710, %v8509
    %v8582 = vadd.f32 %v8329, %v8513
    %v8583 = vadd.f32 %v7714, %v8505
    %v8584 = vadd.f32 %v7716, %v8509
    %v8585 = vadd.f32 %v8334, %v8513
    %v8586 = vadd.f32 %v7718, %v8505
    %v8587 = vadd.f32 %v7720, %v8509
    %v8588 = vadd.f32 %v8337, %v8513
    %v8589 = vadd.f32 %v7724, %v8505
    %v8590 = vadd.f32 %v7726, %v8509
    %v8591 = vadd.f32 %v8342, %v8513
    %v8592 = vadd.f32 %v7728, %v8505
    %v8593 = vadd.f32 %v7730, %v8509
    %v8594 = vadd.f32 %v8345, %v8513
    %v8595 = vadd.f32 %v7734, %v8505
    %v8596 = vadd.f32 %v7736, %v8509
    %v8597 = vadd.f32 %v8350, %v8513
    %v8598 = vadd.f32 %v7738, %v8505
    %v8599 = vadd.f32 %v7740, %v8509
    %v8600 = vadd.f32 %v8353, %v8513
    %v8601 = vadd.f32 %v7744, %v8505
    %v8602 = vadd.f32 %v7746, %v8509
    %v8603 = vadd.f32 %v8358, %v8513
    %v8604 = vadd.f32 %v7748, %v8505
    %v8605 = vadd.f32 %v7750, %v8509
    %v8606 = vadd.f32 %v8361, %v8513
    %v8607 = vadd.f32 %v7754, %v8505
    %v8608 = vadd.f32 %v7756, %v8509
    %v8609 = vadd.f32 %v8366, %v8513
    %v8610 = vadd.f32 %v7758, %v8505
    %v8611 = vadd.f32 %v7760, %v8509
    %v8612 = vadd.f32 %v8369, %v8513
    %v8613 = vadd.f32 %v7764, %v8505
    %v8614 = vadd.f32 %v7766, %v8509
    %v8615 = vadd.f32 %v8374, %v8513
    %v8616 = vadd.f32 %v7768, %v8505
    %v8617 = vadd.f32 %v7770, %v8509
    %v8618 = vadd.f32 %v8377, %v8513
    %v8619 = vadd.f32 %v7774, %v8505
    %v8620 = vadd.f32 %v7776, %v8509
    %v8621 = vadd.f32 %v8382, %v8513
    %v8622 = vadd.f32 %v7778, %v8505
    %v8623 = vadd.f32 %v7780, %v8509
    %v8624 = vadd.f32 %v8385, %v8513
    %v8625 = vadd.f32 %v7784, %v8505
    %v8626 = vadd.f32 %v7786, %v8509
    %v8627 = vadd.f32 %v8390, %v8513
    %v8628 = vadd.f32 %v7788, %v8505
    %v8629 = vadd.f32 %v7790, %v8509
    %v8630 = vadd.f32 %v8393, %v8513
    %v8631 = vadd.f32 %v7794, %v8505
    %v8632 = vadd.f32 %v7796, %v8509
    %v8633 = vadd.f32 %v8398, %v8513
    %v8634 = vadd.f32 %v7798, %v8505
    %v8635 = vadd.f32 %v7800, %v8509
    %v8636 = vadd.f32 %v8401, %v8513
    %v8637 = vadd.f32 %v7804, %v8505
    %v8638 = vadd.f32 %v7806, %v8509
    %v8639 = vadd.f32 %v8406, %v8513
    %v8640 = vadd.f32 %v7808, %v8505
    %v8641 = vadd.f32 %v7810, %v8509
    %v8642 = vadd.f32 %v8409, %v8513
    %v8643 = vadd.f32 %v7814, %v8505
    %v8644 = vadd.f32 %v7816, %v8509
    %v8645 = vadd.f32 %v8414, %v8513
    %v8646 = vadd.f32 %v7818, %v8505
    %v8647 = vadd.f32 %v7820, %v8509
    %v8648 = vadd.f32 %v8417, %v8513
    %v8649 = vadd.f32 %v7824, %v8505
    %v8650 = vadd.f32 %v7826, %v8509
    %v8651 = vadd.f32 %v8422, %v8513
    %v8652 = vadd.f32 %v7828, %v8505
    %v8653 = vadd.f32 %v7830, %v8509
    %v8654 = vadd.f32 %v8425, %v8513
    %v8655 = vadd.f32 %v7834, %v8505
    %v8656 = vadd.f32 %v7836, %v8509
    %v8657 = vadd.f32 %v8430, %v8513
    %v8658 = vadd.f32 %v7838, %v8505
    %v8659 = vadd.f32 %v7840, %v8509
    %v8660 = vadd.f32 %v8433, %v8513
    %v8661 = vadd.f32 %v7844, %v8505
    %v8662 = vadd.f32 %v7846, %v8509
    %v8663 = vadd.f32 %v8438, %v8513
    %v8664 = vadd.f32 %v7848, %v8505
    %v8665 = vadd.f32 %v7850, %v8509
    %v8666 = vadd.f32 %v8441, %v8513
    %v8667 = vadd.f32 %v7854, %v8505
    %v8668 = vadd.f32 %v7856, %v8509
    %v8669 = vadd.f32 %v8446, %v8513
    %v8670 = vadd.f32 %v7858, %v8505
    %v8671 = vadd.f32 %v7860, %v8509
    %v8672 = vadd.f32 %v8449, %v8513
    %v8673 = vadd.f32 %v7864, %v8505
    %v8674 = vadd.f32 %v7866, %v8509
    %v8675 = vadd.f32 %v8454, %v8513
    %v8676 = vadd.f32 %v7868, %v8505
    %v8677 = vadd.f32 %v7870, %v8509
    %v8678 = vadd.f32 %v8457, %v8513
    %v8679 = vadd.f32 %v7874, %v8505
    %v8680 = vadd.f32 %v7876, %v8509
    %v8681 = vadd.f32 %v8462, %v8513
    %v8682 = vadd.f32 %v7878, %v8505
    %v8683 = vadd.f32 %v7880, %v8509
    %v8684 = vadd.f32 %v8465, %v8513
    %v8685 = vadd.f32 %v7884, %v8505
    %v8686 = vadd.f32 %v7886, %v8509
    %v8687 = vadd.f32 %v8470, %v8513
    %v8688 = vadd.f32 %v7888, %v8505
    %v8689 = vadd.f32 %v7890, %v8509
    %v8690 = vadd.f32 %v8473, %v8513
    %v8691 = vadd.f32 %v7894, %v8505
    %v8692 = vadd.f32 %v7896, %v8509
    %v8693 = vadd.f32 %v8478, %v8513
    %v8694 = vadd.f32 %v7898, %v8505
    %v8695 = vadd.f32 %v7900, %v8509
    %v8696 = vadd.f32 %v8481, %v8513
    %v8697 = vadd.f32 %v7904, %v8505
    %v8698 = vadd.f32 %v7906, %v8509
    %v8699 = vadd.f32 %v8486, %v8513
    %v8700 = vadd.f32 %v7908, %v8505
    %v8701 = vadd.f32 %v7910, %v8509
    %v8702 = vadd.f32 %v8489, %v8513
    %v8703 = vadd.f32 %v7914, %v8505
    %v8704 = vadd.f32 %v7916, %v8509
    %v8705 = vadd.f32 %v8494, %v8513
    %v8706 = vadd.f32 %v7918, %v8505
    %v8707 = vadd.f32 %v7920, %v8509
    %v8708 = vadd.f32 %v8497, %v8513
    %v8709 = vmax.f32 %v8517, 0.0
    %v8710 = vmax.f32 %v8518, 0.0
    %v8711 = vmax.f32 %v8519, 0.0
    %v8712 = vmax.f32 %v8520, 0.0
    %v8713 = vmax.f32 %v8521, 0.0
    %v8714 = vmax.f32 %v8522, 0.0
    %v8715 = vmax.f32 %v8523, 0.0
    %v8716 = vmax.f32 %v8524, 0.0
    %v8717 = vmax.f32 %v8525, 0.0
    %v8718 = vmax.f32 %v8526, 0.0
    %v8719 = vmax.f32 %v8527, 0.0
    %v8720 = vmax.f32 %v8528, 0.0
    %v8721 = vmax.f32 %v8529, 0.0
    %v8722 = vmax.f32 %v8530, 0.0
    %v8723 = vmax.f32 %v8531, 0.0
    %v8724 = vmax.f32 %v8532, 0.0
    %v8725 = vmax.f32 %v8533, 0.0
    %v8726 = vmax.f32 %v8534, 0.0
    %v8727 = vmax.f32 %v8535, 0.0
    %v8728 = vmax.f32 %v8536, 0.0
    %v8729 = vmax.f32 %v8537, 0.0
    %v8730 = vmax.f32 %v8538, 0.0
    %v8731 = vmax.f32 %v8539, 0.0
    %v8732 = vmax.f32 %v8540, 0.0
    %v8733 = vmax.f32 %v8541, 0.0
    %v8734 = vmax.f32 %v8542, 0.0
    %v8735 = vmax.f32 %v8543, 0.0
    %v8736 = vmax.f32 %v8544, 0.0
    %v8737 = vmax.f32 %v8545, 0.0
    %v8738 = vmax.f32 %v8546, 0.0
    %v8739 = vmax.f32 %v8547, 0.0
    %v8740 = vmax.f32 %v8548, 0.0
    %v8741 = vmax.f32 %v8549, 0.0
    %v8742 = vmax.f32 %v8550, 0.0
    %v8743 = vmax.f32 %v8551, 0.0
    %v8744 = vmax.f32 %v8552, 0.0
    %v8745 = vmax.f32 %v8553, 0.0
    %v8746 = vmax.f32 %v8554, 0.0
    %v8747 = vmax.f32 %v8555, 0.0
    %v8748 = vmax.f32 %v8556, 0.0
    %v8749 = vmax.f32 %v8557, 0.0
    %v8750 = vmax.f32 %v8558, 0.0
    %v8751 = vmax.f32 %v8559, 0.0
    %v8752 = vmax.f32 %v8560, 0.0
    %v8753 = vmax.f32 %v8561, 0.0
    %v8754 = vmax.f32 %v8562, 0.0
    %v8755 = vmax.f32 %v8563, 0.0
    %v8756 = vmax.f32 %v8564, 0.0
    %v8757 = vmax.f32 %v8565, 0.0
    %v8758 = vmax.f32 %v8566, 0.0
    %v8759 = vmax.f32 %v8567, 0.0
    %v8760 = vmax.f32 %v8568, 0.0
    %v8761 = vmax.f32 %v8569, 0.0
    %v8762 = vmax.f32 %v8570, 0.0
    %v8763 = vmax.f32 %v8571, 0.0
    %v8764 = vmax.f32 %v8572, 0.0
    %v8765 = vmax.f32 %v8573, 0.0
    %v8766 = vmax.f32 %v8574, 0.0
    %v8767 = vmax.f32 %v8575, 0.0
    %v8768 = vmax.f32 %v8576, 0.0
    %v8769 = vmax.f32 %v8577, 0.0
    %v8770 = vmax.f32 %v8578, 0.0
    %v8771 = vmax.f32 %v8579, 0.0
    %v8772 = vmax.f32 %v8580, 0.0
    %v8773 = vmax.f32 %v8581, 0.0
    %v8774 = vmax.f32 %v8582, 0.0
    %v8775 = vmax.f32 %v8583, 0.0
    %v8776 = vmax.f32 %v8584, 0.0
    %v8777 = vmax.f32 %v8585, 0.0
    %v8778 = vmax.f32 %v8586, 0.0
    %v8779 = vmax.f32 %v8587, 0.0
    %v8780 = vmax.f32 %v8588, 0.0
    %v8781 = vmax.f32 %v8589, 0.0
    %v8782 = vmax.f32 %v8590, 0.0
    %v8783 = vmax.f32 %v8591, 0.0
    %v8784 = vmax.f32 %v8592, 0.0
    %v8785 = vmax.f32 %v8593, 0.0
    %v8786 = vmax.f32 %v8594, 0.0
    %v8787 = vmax.f32 %v8595, 0.0
    %v8788 = vmax.f32 %v8596, 0.0
    %v8789 = vmax.f32 %v8597, 0.0
    %v8790 = vmax.f32 %v8598, 0.0
    %v8791 = vmax.f32 %v8599, 0.0
    %v8792 = vmax.f32 %v8600, 0.0
    %v8793 = vmax.f32 %v8601, 0.0
    %v8794 = vmax.f32 %v8602, 0.0
    %v8795 = vmax.f32 %v8603, 0.0
    %v8796 = vmax.f32 %v8604, 0.0
    %v8797 = vmax.f32 %v8605, 0.0
    %v8798 = vmax.f32 %v8606, 0.0
    %v8799 = vmax.f32 %v8607, 0.0
    %v8800 = vmax.f32 %v8608, 0.0
    %v8801 = vmax.f32 %v8609, 0.0
    %v8802 = vmax.f32 %v8610, 0.0
    %v8803 = vmax.f32 %v8611, 0.0
    %v8804 = vmax.f32 %v8612, 0.0
    %v8805 = vmax.f32 %v8613, 0.0
    %v8806 = vmax.f32 %v8614, 0.0
    %v8807 = vmax.f32 %v8615, 0.0
    %v8808 = vmax.f32 %v8616, 0.0
    %v8809 = vmax.f32 %v8617, 0.0
    %v8810 = vmax.f32 %v8618, 0.0
    %v8811 = vmax.f32 %v8619, 0.0
    %v8812 = vmax.f32 %v8620, 0.0
    %v8813 = vmax.f32 %v8621, 0.0
    %v8814 = vmax.f32 %v8622, 0.0
    %v8815 = vmax.f32 %v8623, 0.0
    %v8816 = vmax.f32 %v8624, 0.0
    %v8817 = vmax.f32 %v8625, 0.0
    %v8818 = vmax.f32 %v8626, 0.0
    %v8819 = vmax.f32 %v8627, 0.0
    %v8820 = vmax.f32 %v8628, 0.0
    %v8821 = vmax.f32 %v8629, 0.0
    %v8822 = vmax.f32 %v8630, 0.0
    %v8823 = vmax.f32 %v8631, 0.0
    %v8824 = vmax.f32 %v8632, 0.0
    %v8825 = vmax.f32 %v8633, 0.0
    %v8826 = vmax.f32 %v8634, 0.0
    %v8827 = vmax.f32 %v8635, 0.0
    %v8828 = vmax.f32 %v8636, 0.0
    %v8829 = vmax.f32 %v8637, 0.0
    %v8830 = vmax.f32 %v8638, 0.0
    %v8831 = vmax.f32 %v8639, 0.0
    %v8832 = vmax.f32 %v8640, 0.0
    %v8833 = vmax.f32 %v8641, 0.0
    %v8834 = vmax.f32 %v8642, 0.0
    %v8835 = vmax.f32 %v8643, 0.0
    %v8836 = vmax.f32 %v8644, 0.0
    %v8837 = vmax.f32 %v8645, 0.0
    %v8838 = vmax.f32 %v8646, 0.0
    %v8839 = vmax.f32 %v8647, 0.0
    %v8840 = vmax.f32 %v8648, 0.0
    %v8841 = vmax.f32 %v8649, 0.0
    %v8842 = vmax.f32 %v8650, 0.0
    %v8843 = vmax.f32 %v8651, 0.0
    %v8844 = vmax.f32 %v8652, 0.0
    %v8845 = vmax.f32 %v8653, 0.0
    %v8846 = vmax.f32 %v8654, 0.0
    %v8847 = vmax.f32 %v8655, 0.0
    %v8848 = vmax.f32 %v8656, 0.0
    %v8849 = vmax.f32 %v8657, 0.0
    %v8850 = vmax.f32 %v8658, 0.0
    %v8851 = vmax.f32 %v8659, 0.0
    %v8852 = vmax.f32 %v8660, 0.0
    %v8853 = vmax.f32 %v8661, 0.0
    %v8854 = vmax.f32 %v8662, 0.0
    %v8855 = vmax.f32 %v8663, 0.0
    %v8856 = vmax.f32 %v8664, 0.0
    %v8857 = vmax.f32 %v8665, 0.0
    %v8858 = vmax.f32 %v8666, 0.0
    %v8859 = vmax.f32 %v8667, 0.0
    %v8860 = vmax.f32 %v8668, 0.0
    %v8861 = vmax.f32 %v8669, 0.0
    %v8862 = vmax.f32 %v8670, 0.0
    %v8863 = vmax.f32 %v8671, 0.0
    %v8864 = vmax.f32 %v8672, 0.0
    %v8865 = vmax.f32 %v8673, 0.0
    %v8866 = vmax.f32 %v8674, 0.0
    %v8867 = vmax.f32 %v8675, 0.0
    %v8868 = vmax.f32 %v8676, 0.0
    %v8869 = vmax.f32 %v8677, 0.0
    %v8870 = vmax.f32 %v8678, 0.0
    %v8871 = vmax.f32 %v8679, 0.0
    %v8872 = vmax.f32 %v8680, 0.0
    %v8873 = vmax.f32 %v8681, 0.0
    %v8874 = vmax.f32 %v8682, 0.0
    %v8875 = vmax.f32 %v8683, 0.0
    %v8876 = vmax.f32 %v8684, 0.0
    %v8877 = vmax.f32 %v8685, 0.0
    %v8878 = vmax.f32 %v8686, 0.0
    %v8879 = vmax.f32 %v8687, 0.0
    %v8880 = vmax.f32 %v8688, 0.0
    %v8881 = vmax.f32 %v8689, 0.0
    %v8882 = vmax.f32 %v8690, 0.0
    %v8883 = vmax.f32 %v8691, 0.0
    %v8884 = vmax.f32 %v8692, 0.0
    %v8885 = vmax.f32 %v8693, 0.0
    %v8886 = vmax.f32 %v8694, 0.0
    %v8887 = vmax.f32 %v8695, 0.0
    %v8888 = vmax.f32 %v8696, 0.0
    %v8889 = vmax.f32 %v8697, 0.0
    %v8890 = vmax.f32 %v8698, 0.0
    %v8891 = vmax.f32 %v8699, 0.0
    %v8892 = vmax.f32 %v8700, 0.0
    %v8893 = vmax.f32 %v8701, 0.0
    %v8894 = vmax.f32 %v8702, 0.0
    %v8895 = vmax.f32 %v8703, 0.0
    %v8896 = vmax.f32 %v8704, 0.0
    %v8897 = vmax.f32 %v8705, 0.0
    %v8898 = vmax.f32 %v8706, 0.0
    %v8899 = vmax.f32 %v8707, 0.0
    %v8900 = vmax.f32 %v8708, 0.0
    %v8901 = vmul.f32 %v8709, %v8709
    %v8902 = vmul.f32 %v8710, %v8710
    %v8903 = vmul.f32 %v8711, %v8711
    %v8904 = vmul.f32 %v8757, %v8757
    %v8905 = vmul.f32 %v8758, %v8758
    %v8906 = vmul.f32 %v8759, %v8759
    %v8907 = vmul.f32 %v8805, %v8805
    %v8908 = vmul.f32 %v8806, %v8806
    %v8909 = vmul.f32 %v8807, %v8807
    %v8910 = vmul.f32 %v8853, %v8853
    %v8911 = vmul.f32 %v8854, %v8854
    %v8912 = vmul.f32 %v8855, %v8855
    %v8913 = vmul.f32 %v8712, %v8712
    %v8914 = vmul.f32 %v8713, %v8713
    %v8915 = vmul.f32 %v8714, %v8714
    %v8916 = vmul.f32 %v8760, %v8760
    %v8917 = vmul.f32 %v8761, %v8761
    %v8918 = vmul.f32 %v8762, %v8762
    %v8919 = vmul.f32 %v8808, %v8808
    %v8920 = vmul.f32 %v8809, %v8809
    %v8921 = vmul.f32 %v8810, %v8810
    %v8922 = vmul.f32 %v8856, %v8856
    %v8923 = vmul.f32 %v8857, %v8857
    %v8924 = vmul.f32 %v8858, %v8858
    %v8925 = vmul.f32 %v8715, %v8715
    %v8926 = vmul.f32 %v8716, %v8716
    %v8927 = vmul.f32 %v8717, %v8717
    %v8928 = vmul.f32 %v8763, %v8763
    %v8929 = vmul.f32 %v8764, %v8764
    %v8930 = vmul.f32 %v8765, %v8765
    %v8931 = vmul.f32 %v8811, %v8811
    %v8932 = vmul.f32 %v8812, %v8812
    %v8933 = vmul.f32 %v8813, %v8813
    %v8934 = vmul.f32 %v8859, %v8859
    %v8935 = vmul.f32 %v8860, %v8860
    %v8936 = vmul.f32 %v8861, %v8861
    %v8937 = vmul.f32 %v8718, %v8718
    %v8938 = vmul.f32 %v8719, %v8719
    %v8939 = vmul.f32 %v8720, %v8720
    %v8940 = vmul.f32 %v8766, %v8766
    %v8941 = vmul.f32 %v8767, %v8767
    %v8942 = vmul.f32 %v8768, %v8768
    %v8943 = vmul.f32 %v8814, %v8814
    %v8944 = vmul.f32 %v8815, %v8815
    %v8945 = vmul.f32 %v8816, %v8816
    %v8946 = vmul.f32 %v8862, %v8862
    %v8947 = vmul.f32 %v8863, %v8863
    %v8948 = vmul.f32 %v8864, %v8864
    %v8949 = vmul.f32 %v8721, %v8721
    %v8950 = vmul.f32 %v8722, %v8722
    %v8951 = vmul.f32 %v8723, %v8723
    %v8952 = vmul.f32 %v8769, %v8769
    %v8953 = vmul.f32 %v8770, %v8770
    %v8954 = vmul.f32 %v8771, %v8771
    %v8955 = vmul.f32 %v8817, %v8817
    %v8956 = vmul.f32 %v8818, %v8818
    %v8957 = vmul.f32 %v8819, %v8819
    %v8958 = vmul.f32 %v8865, %v8865
    %v8959 = vmul.f32 %v8866, %v8866
    %v8960 = vmul.f32 %v8867, %v8867
    %v8961 = vmul.f32 %v8724, %v8724
    %v8962 = vmul.f32 %v8725, %v8725
    %v8963 = vmul.f32 %v8726, %v8726
    %v8964 = vmul.f32 %v8772, %v8772
    %v8965 = vmul.f32 %v8773, %v8773
    %v8966 = vmul.f32 %v8774, %v8774
    %v8967 = vmul.f32 %v8820, %v8820
    %v8968 = vmul.f32 %v8821, %v8821
    %v8969 = vmul.f32 %v8822, %v8822
    %v8970 = vmul.f32 %v8868, %v8868
    %v8971 = vmul.f32 %v8869, %v8869
    %v8972 = vmul.f32 %v8870, %v8870
    %v8973 = vmul.f32 %v8727, %v8727
    %v8974 = vmul.f32 %v8728, %v8728
    %v8975 = vmul.f32 %v8729, %v8729
    %v8976 = vmul.f32 %v8775, %v8775
    %v8977 = vmul.f32 %v8776, %v8776
    %v8978 = vmul.f32 %v8777, %v8777
    %v8979 = vmul.f32 %v8823, %v8823
    %v8980 = vmul.f32 %v8824, %v8824
    %v8981 = vmul.f32 %v8825, %v8825
    %v8982 = vmul.f32 %v8871, %v8871
    %v8983 = vmul.f32 %v8872, %v8872
    %v8984 = vmul.f32 %v8873, %v8873
    %v8985 = vmul.f32 %v8730, %v8730
    %v8986 = vmul.f32 %v8731, %v8731
    %v8987 = vmul.f32 %v8732, %v8732
    %v8988 = vmul.f32 %v8778, %v8778
    %v8989 = vmul.f32 %v8779, %v8779
    %v8990 = vmul.f32 %v8780, %v8780
    %v8991 = vmul.f32 %v8826, %v8826
    %v8992 = vmul.f32 %v8827, %v8827
    %v8993 = vmul.f32 %v8828, %v8828
    %v8994 = vmul.f32 %v8874, %v8874
    %v8995 = vmul.f32 %v8875, %v8875
    %v8996 = vmul.f32 %v8876, %v8876
    %v8997 = vmul.f32 %v8733, %v8733
    %v8998 = vmul.f32 %v8734, %v8734
    %v8999 = vmul.f32 %v8735, %v8735
    %v9000 = vmul.f32 %v8781, %v8781
    %v9001 = vmul.f32 %v8782, %v8782
    %v9002 = vmul.f32 %v8783, %v8783
    %v9003 = vmul.f32 %v8829, %v8829
    %v9004 = vmul.f32 %v8830, %v8830
    %v9005 = vmul.f32 %v8831, %v8831
    %v9006 = vmul.f32 %v8877, %v8877
    %v9007 = vmul.f32 %v8878, %v8878
    %v9008 = vmul.f32 %v8879, %v8879
    %v9009 = vmul.f32 %v8736, %v8736
    %v9010 = vmul.f32 %v8737, %v8737
    %v9011 = vmul.f32 %v8738, %v8738
    %v9012 = vmul.f32 %v8784, %v8784
    %v9013 = vmul.f32 %v8785, %v8785
    %v9014 = vmul.f32 %v8786, %v8786
    %v9015 = vmul.f32 %v8832, %v8832
    %v9016 = vmul.f32 %v8833, %v8833
    %v9017 = vmul.f32 %v8834, %v8834
    %v9018 = vmul.f32 %v8880, %v8880
    %v9019 = vmul.f32 %v8881, %v8881
    %v9020 = vmul.f32 %v8882, %v8882
    %v9021 = vmul.f32 %v8739, %v8739
    %v9022 = vmul.f32 %v8740, %v8740
    %v9023 = vmul.f32 %v8741, %v8741
    %v9024 = vmul.f32 %v8787, %v8787
    %v9025 = vmul.f32 %v8788, %v8788
    %v9026 = vmul.f32 %v8789, %v8789
    %v9027 = vmul.f32 %v8835, %v8835
    %v9028 = vmul.f32 %v8836, %v8836
    %v9029 = vmul.f32 %v8837, %v8837
    %v9030 = vmul.f32 %v8883, %v8883
    %v9031 = vmul.f32 %v8884, %v8884
    %v9032 = vmul.f32 %v8885, %v8885
    %v9033 = vmul.f32 %v8742, %v8742
    %v9034 = vmul.f32 %v8743, %v8743
    %v9035 = vmul.f32 %v8744, %v8744
    %v9036 = vmul.f32 %v8790, %v8790
    %v9037 = vmul.f32 %v8791, %v8791
    %v9038 = vmul.f32 %v8792, %v8792
    %v9039 = vmul.f32 %v8838, %v8838
    %v9040 = vmul.f32 %v8839, %v8839
    %v9041 = vmul.f32 %v8840, %v8840
    %v9042 = vmul.f32 %v8886, %v8886
    %v9043 = vmul.f32 %v8887, %v8887
    %v9044 = vmul.f32 %v8888, %v8888
    %v9045 = vmul.f32 %v8745, %v8745
    %v9046 = vmul.f32 %v8746, %v8746
    %v9047 = vmul.f32 %v8747, %v8747
    %v9048 = vmul.f32 %v8793, %v8793
    %v9049 = vmul.f32 %v8794, %v8794
    %v9050 = vmul.f32 %v8795, %v8795
    %v9051 = vmul.f32 %v8841, %v8841
    %v9052 = vmul.f32 %v8842, %v8842
    %v9053 = vmul.f32 %v8843, %v8843
    %v9054 = vmul.f32 %v8889, %v8889
    %v9055 = vmul.f32 %v8890, %v8890
    %v9056 = vmul.f32 %v8891, %v8891
    %v9057 = vmul.f32 %v8748, %v8748
    %v9058 = vmul.f32 %v8749, %v8749
    %v9059 = vmul.f32 %v8750, %v8750
    %v9060 = vmul.f32 %v8796, %v8796
    %v9061 = vmul.f32 %v8797, %v8797
    %v9062 = vmul.f32 %v8798, %v8798
    %v9063 = vmul.f32 %v8844, %v8844
    %v9064 = vmul.f32 %v8845, %v8845
    %v9065 = vmul.f32 %v8846, %v8846
    %v9066 = vmul.f32 %v8892, %v8892
    %v9067 = vmul.f32 %v8893, %v8893
    %v9068 = vmul.f32 %v8894, %v8894
    %v9069 = vmul.f32 %v8751, %v8751
    %v9070 = vmul.f32 %v8752, %v8752
    %v9071 = vmul.f32 %v8753, %v8753
    %v9072 = vmul.f32 %v8799, %v8799
    %v9073 = vmul.f32 %v8800, %v8800
    %v9074 = vmul.f32 %v8801, %v8801
    %v9075 = vmul.f32 %v8847, %v8847
    %v9076 = vmul.f32 %v8848, %v8848
    %v9077 = vmul.f32 %v8849, %v8849
    %v9078 = vmul.f32 %v8895, %v8895
    %v9079 = vmul.f32 %v8896, %v8896
    %v9080 = vmul.f32 %v8897, %v8897
    %v9081 = vmul.f32 %v8754, %v8754
    %v9082 = vmul.f32 %v8755, %v8755
    %v9083 = vmul.f32 %v8756, %v8756
    %v9084 = vmul.f32 %v8802, %v8802
    %v9085 = vmul.f32 %v8803, %v8803
    %v9086 = vmul.f32 %v8804, %v8804
    %v9087 = vmul.f32 %v8850, %v8850
    %v9088 = vmul.f32 %v8851, %v8851
    %v9089 = vmul.f32 %v8852, %v8852
    %v9090 = vmul.f32 %v8898, %v8898
    %v9091 = vmul.f32 %v8899, %v8899
    %v9092 = vmul.f32 %v8900, %v8900
    %v9093 = vadd.f32 %v8901, %v8902
    %v9094 = vadd.f32 %v9093, %v8903
    %v9095 = vadd.f32 %v9094, %v8904
    %v9096 = vadd.f32 %v9095, %v8905
    %v9097 = vadd.f32 %v9096, %v8906
    %v9098 = vadd.f32 %v9097, %v8907
    %v9099 = vadd.f32 %v9098, %v8908
    %v9100 = vadd.f32 %v9099, %v8909
    %v9101 = vadd.f32 %v9100, %v8910
    %v9102 = vadd.f32 %v9101, %v8911
    %v9103 = vadd.f32 %v9102, %v8912
    %9104 = vadd.xlane.f32.xlu0 %v9103
    %v9105 = vpop.xlane.xlu0 %9104
    %v9106 = vadd.f32 %v8913, %v8914
    %v9107 = vadd.f32 %v9106, %v8915
    %v9108 = vadd.f32 %v9107, %v8916
    %v9109 = vadd.f32 %v9108, %v8917
    %v9110 = vadd.f32 %v9109, %v8918
    %v9111 = vadd.f32 %v9110, %v8919
    %v9112 = vadd.f32 %v9111, %v8920
    %v9113 = vadd.f32 %v9112, %v8921
    %v9114 = vadd.f32 %v9113, %v8922
    %v9115 = vadd.f32 %v9114, %v8923
    %v9116 = vadd.f32 %v9115, %v8924
    %9117 = vadd.xlane.f32.xlu0 %v9116
    %v9118 = vpop.xlane.xlu0 %9117
    %v9119 = vadd.f32 %v8925, %v8926
    %v9120 = vadd.f32 %v9119, %v8927
    %v9121 = vadd.f32 %v9120, %v8928
    %v9122 = vadd.f32 %v9121, %v8929
    %v9123 = vadd.f32 %v9122, %v8930
    %v9124 = vadd.f32 %v9123, %v8931
    %v9125 = vadd.f32 %v9124, %v8932
    %v9126 = vadd.f32 %v9125, %v8933
    %v9127 = vadd.f32 %v9126, %v8934
    %v9128 = vadd.f32 %v9127, %v8935
    %v9129 = vadd.f32 %v9128, %v8936
    %9130 = vadd.xlane.f32.xlu0 %v9129
    %v9131 = vpop.xlane.xlu0 %9130
    %v9132 = vadd.f32 %v8937, %v8938
    %v9133 = vadd.f32 %v9132, %v8939
    %v9134 = vadd.f32 %v9133, %v8940
    %v9135 = vadd.f32 %v9134, %v8941
    %v9136 = vadd.f32 %v9135, %v8942
    %v9137 = vadd.f32 %v9136, %v8943
    %v9138 = vadd.f32 %v9137, %v8944
    %v9139 = vadd.f32 %v9138, %v8945
    %v9140 = vadd.f32 %v9139, %v8946
    %v9141 = vadd.f32 %v9140, %v8947
    %v9142 = vadd.f32 %v9141, %v8948
    %9143 = vadd.xlane.f32.xlu0 %v9142
    %v9144 = vpop.xlane.xlu0 %9143
    %v9145 = vadd.f32 %v8949, %v8950
    %v9146 = vadd.f32 %v9145, %v8951
    %v9147 = vadd.f32 %v9146, %v8952
    %v9148 = vadd.f32 %v9147, %v8953
    %v9149 = vadd.f32 %v9148, %v8954
    %v9150 = vadd.f32 %v9149, %v8955
    %v9151 = vadd.f32 %v9150, %v8956
    %v9152 = vadd.f32 %v9151, %v8957
    %v9153 = vadd.f32 %v9152, %v8958
    %v9154 = vadd.f32 %v9153, %v8959
    %v9155 = vadd.f32 %v9154, %v8960
    %9156 = vadd.xlane.f32.xlu0 %v9155
    %v9157 = vpop.xlane.xlu0 %9156
    %v9158 = vadd.f32 %v8961, %v8962
    %v9159 = vadd.f32 %v9158, %v8963
    %v9160 = vadd.f32 %v9159, %v8964
    %v9161 = vadd.f32 %v9160, %v8965
    %v9162 = vadd.f32 %v9161, %v8966
    %v9163 = vadd.f32 %v9162, %v8967
    %v9164 = vadd.f32 %v9163, %v8968
    %v9165 = vadd.f32 %v9164, %v8969
    %v9166 = vadd.f32 %v9165, %v8970
    %v9167 = vadd.f32 %v9166, %v8971
    %v9168 = vadd.f32 %v9167, %v8972
    %9169 = vadd.xlane.f32.xlu0 %v9168
    %v9170 = vpop.xlane.xlu0 %9169
    %v9171 = vadd.f32 %v8973, %v8974
    %v9172 = vadd.f32 %v9171, %v8975
    %v9173 = vadd.f32 %v9172, %v8976
    %v9174 = vadd.f32 %v9173, %v8977
    %v9175 = vadd.f32 %v9174, %v8978
    %v9176 = vadd.f32 %v9175, %v8979
    %v9177 = vadd.f32 %v9176, %v8980
    %v9178 = vadd.f32 %v9177, %v8981
    %v9179 = vadd.f32 %v9178, %v8982
    %v9180 = vadd.f32 %v9179, %v8983
    %v9181 = vadd.f32 %v9180, %v8984
    %9182 = vadd.xlane.f32.xlu0 %v9181
    %v9183 = vpop.xlane.xlu0 %9182
    %v9184 = vadd.f32 %v8985, %v8986
    %v9185 = vadd.f32 %v9184, %v8987
    %v9186 = vadd.f32 %v9185, %v8988
    %v9187 = vadd.f32 %v9186, %v8989
    %v9188 = vadd.f32 %v9187, %v8990
    %v9189 = vadd.f32 %v9188, %v8991
    %v9190 = vadd.f32 %v9189, %v8992
    %v9191 = vadd.f32 %v9190, %v8993
    %v9192 = vadd.f32 %v9191, %v8994
    %v9193 = vadd.f32 %v9192, %v8995
    %v9194 = vadd.f32 %v9193, %v8996
    %9195 = vadd.xlane.f32.xlu0 %v9194
    %v9196 = vpop.xlane.xlu0 %9195
    %v9197 = vadd.f32 %v8997, %v8998
    %v9198 = vadd.f32 %v9197, %v8999
    %v9199 = vadd.f32 %v9198, %v9000
    %v9200 = vadd.f32 %v9199, %v9001
    %v9201 = vadd.f32 %v9200, %v9002
    %v9202 = vadd.f32 %v9201, %v9003
    %v9203 = vadd.f32 %v9202, %v9004
    %v9204 = vadd.f32 %v9203, %v9005
    %v9205 = vadd.f32 %v9204, %v9006
    %v9206 = vadd.f32 %v9205, %v9007
    %v9207 = vadd.f32 %v9206, %v9008
    %9208 = vadd.xlane.f32.xlu0 %v9207
    %v9209 = vpop.xlane.xlu0 %9208
    %v9210 = vadd.f32 %v9009, %v9010
    %v9211 = vadd.f32 %v9210, %v9011
    %v9212 = vadd.f32 %v9211, %v9012
    %v9213 = vadd.f32 %v9212, %v9013
    %v9214 = vadd.f32 %v9213, %v9014
    %v9215 = vadd.f32 %v9214, %v9015
    %v9216 = vadd.f32 %v9215, %v9016
    %v9217 = vadd.f32 %v9216, %v9017
    %v9218 = vadd.f32 %v9217, %v9018
    %v9219 = vadd.f32 %v9218, %v9019
    %v9220 = vadd.f32 %v9219, %v9020
    %9221 = vadd.xlane.f32.xlu0 %v9220
    %v9222 = vpop.xlane.xlu0 %9221
    %v9223 = vadd.f32 %v9021, %v9022
    %v9224 = vadd.f32 %v9223, %v9023
    %v9225 = vadd.f32 %v9224, %v9024
    %v9226 = vadd.f32 %v9225, %v9025
    %v9227 = vadd.f32 %v9226, %v9026
    %v9228 = vadd.f32 %v9227, %v9027
    %v9229 = vadd.f32 %v9228, %v9028
    %v9230 = vadd.f32 %v9229, %v9029
    %v9231 = vadd.f32 %v9230, %v9030
    %v9232 = vadd.f32 %v9231, %v9031
    %v9233 = vadd.f32 %v9232, %v9032
    %9234 = vadd.xlane.f32.xlu0 %v9233
    %v9235 = vpop.xlane.xlu0 %9234
    %v9236 = vadd.f32 %v9033, %v9034
    %v9237 = vadd.f32 %v9236, %v9035
    %v9238 = vadd.f32 %v9237, %v9036
    %v9239 = vadd.f32 %v9238, %v9037
    %v9240 = vadd.f32 %v9239, %v9038
    %v9241 = vadd.f32 %v9240, %v9039
    %v9242 = vadd.f32 %v9241, %v9040
    %v9243 = vadd.f32 %v9242, %v9041
    %v9244 = vadd.f32 %v9243, %v9042
    %v9245 = vadd.f32 %v9244, %v9043
    %v9246 = vadd.f32 %v9245, %v9044
    %9247 = vadd.xlane.f32.xlu0 %v9246
    %v9248 = vpop.xlane.xlu0 %9247
    %v9249 = vadd.f32 %v9045, %v9046
    %v9250 = vadd.f32 %v9249, %v9047
    %v9251 = vadd.f32 %v9250, %v9048
    %v9252 = vadd.f32 %v9251, %v9049
    %v9253 = vadd.f32 %v9252, %v9050
    %v9254 = vadd.f32 %v9253, %v9051
    %v9255 = vadd.f32 %v9254, %v9052
    %v9256 = vadd.f32 %v9255, %v9053
    %v9257 = vadd.f32 %v9256, %v9054
    %v9258 = vadd.f32 %v9257, %v9055
    %v9259 = vadd.f32 %v9258, %v9056
    %9260 = vadd.xlane.f32.xlu0 %v9259
    %v9261 = vpop.xlane.xlu0 %9260
    %v9262 = vadd.f32 %v9057, %v9058
    %v9263 = vadd.f32 %v9262, %v9059
    %v9264 = vadd.f32 %v9263, %v9060
    %v9265 = vadd.f32 %v9264, %v9061
    %v9266 = vadd.f32 %v9265, %v9062
    %v9267 = vadd.f32 %v9266, %v9063
    %v9268 = vadd.f32 %v9267, %v9064
    %v9269 = vadd.f32 %v9268, %v9065
    %v9270 = vadd.f32 %v9269, %v9066
    %v9271 = vadd.f32 %v9270, %v9067
    %v9272 = vadd.f32 %v9271, %v9068
    %9273 = vadd.xlane.f32.xlu0 %v9272
    %v9274 = vpop.xlane.xlu0 %9273
    %v9275 = vadd.f32 %v9069, %v9070
    %v9276 = vadd.f32 %v9275, %v9071
    %v9277 = vadd.f32 %v9276, %v9072
    %v9278 = vadd.f32 %v9277, %v9073
    %v9279 = vadd.f32 %v9278, %v9074
    %v9280 = vadd.f32 %v9279, %v9075
    %v9281 = vadd.f32 %v9280, %v9076
    %v9282 = vadd.f32 %v9281, %v9077
    %v9283 = vadd.f32 %v9282, %v9078
    %v9284 = vadd.f32 %v9283, %v9079
    %v9285 = vadd.f32 %v9284, %v9080
    %9286 = vadd.xlane.f32.xlu0 %v9285
    %v9287 = vpop.xlane.xlu0 %9286
    %v9288 = vadd.f32 %v9081, %v9082
    %v9289 = vadd.f32 %v9288, %v9083
    %v9290 = vadd.f32 %v9289, %v9084
    %v9291 = vadd.f32 %v9290, %v9085
    %v9292 = vadd.f32 %v9291, %v9086
    %v9293 = vadd.f32 %v9292, %v9087
    %v9294 = vadd.f32 %v9293, %v9088
    %v9295 = vadd.f32 %v9294, %v9089
    %v9296 = vadd.f32 %v9295, %v9090
    %v9297 = vadd.f32 %v9296, %v9091
    %v9298 = vadd.f32 %v9297, %v9092
    %9299 = vadd.xlane.f32.xlu0 %v9298
    %v9300 = vpop.xlane.xlu0 %9299
    %v9301 = vmax.f32 %v9105, 1e-24
    %v9302 = vmax.f32 %v9118, 1e-24
    %v9303 = vmax.f32 %v9131, 1e-24
    %v9304 = vmax.f32 %v9144, 1e-24
    %v9305 = vmax.f32 %v9157, 1e-24
    %v9306 = vmax.f32 %v9170, 1e-24
    %v9307 = vmax.f32 %v9183, 1e-24
    %v9308 = vmax.f32 %v9196, 1e-24
    %v9309 = vmax.f32 %v9209, 1e-24
    %v9310 = vmax.f32 %v9222, 1e-24
    %v9311 = vmax.f32 %v9235, 1e-24
    %v9312 = vmax.f32 %v9248, 1e-24
    %v9313 = vmax.f32 %v9261, 1e-24
    %v9314 = vmax.f32 %v9274, 1e-24
    %v9315 = vmax.f32 %v9287, 1e-24
    %v9316 = vmax.f32 %v9300, 1e-24
    %v9317 = vrsqrt.pop %v9301
    %v9318 = vrsqrt.pop %v9302
    %v9319 = vrsqrt.pop %v9303
    %v9320 = vrsqrt.pop %v9304
    %v9321 = vrsqrt.pop %v9305
    %v9322 = vrsqrt.pop %v9306
    %v9323 = vrsqrt.pop %v9307
    %v9324 = vrsqrt.pop %v9308
    %v9325 = vrsqrt.pop %v9309
    %v9326 = vrsqrt.pop %v9310
    %v9327 = vrsqrt.pop %v9311
    %v9328 = vrsqrt.pop %v9312
    %v9329 = vrsqrt.pop %v9313
    %v9330 = vrsqrt.pop %v9314
    %v9331 = vrsqrt.pop %v9315
    %v9332 = vrsqrt.pop %v9316
    %v9333 = vpack.c.bf16 %v8712, %v8709
    %v9334 = vpack.c.bf16 %v8713, %v8710
    %v9335 = vpack.c.bf16 %v8714, %v8711
    %v9336 = vpack.c.bf16 %v8760, %v8757
    %v9337 = vpack.c.bf16 %v8761, %v8758
    %v9338 = vpack.c.bf16 %v8762, %v8759
    %v9339 = vpack.c.bf16 %v8808, %v8805
    %v9340 = vpack.c.bf16 %v8809, %v8806
    %v9341 = vpack.c.bf16 %v8810, %v8807
    %v9342 = vpack.c.bf16 %v8856, %v8853
    %v9343 = vpack.c.bf16 %v8857, %v8854
    %v9344 = vpack.c.bf16 %v8858, %v8855
    %v9345 = vpack.c.bf16 %v8718, %v8715
    %v9346 = vpack.c.bf16 %v8719, %v8716
    %v9347 = vpack.c.bf16 %v8720, %v8717
    %v9348 = vpack.c.bf16 %v8766, %v8763
    %v9349 = vpack.c.bf16 %v8767, %v8764
    %v9350 = vpack.c.bf16 %v8768, %v8765
    %v9351 = vpack.c.bf16 %v8814, %v8811
    %v9352 = vpack.c.bf16 %v8815, %v8812
    %v9353 = vpack.c.bf16 %v8816, %v8813
    %v9354 = vpack.c.bf16 %v8862, %v8859
    %v9355 = vpack.c.bf16 %v8863, %v8860
    %v9356 = vpack.c.bf16 %v8864, %v8861
    %v9357 = vpack.c.bf16 %v8724, %v8721
    %v9358 = vpack.c.bf16 %v8725, %v8722
    %v9359 = vpack.c.bf16 %v8726, %v8723
    %v9360 = vpack.c.bf16 %v8772, %v8769
    %v9361 = vpack.c.bf16 %v8773, %v8770
    %v9362 = vpack.c.bf16 %v8774, %v8771
    %v9363 = vpack.c.bf16 %v8820, %v8817
    %v9364 = vpack.c.bf16 %v8821, %v8818
    %v9365 = vpack.c.bf16 %v8822, %v8819
    %v9366 = vpack.c.bf16 %v8868, %v8865
    %v9367 = vpack.c.bf16 %v8869, %v8866
    %v9368 = vpack.c.bf16 %v8870, %v8867
    %v9369 = vpack.c.bf16 %v8730, %v8727
    %v9370 = vpack.c.bf16 %v8731, %v8728
    %v9371 = vpack.c.bf16 %v8732, %v8729
    %v9372 = vpack.c.bf16 %v8778, %v8775
    %v9373 = vpack.c.bf16 %v8779, %v8776
    %v9374 = vpack.c.bf16 %v8780, %v8777
    %v9375 = vpack.c.bf16 %v8826, %v8823
    %v9376 = vpack.c.bf16 %v8827, %v8824
    %v9377 = vpack.c.bf16 %v8828, %v8825
    %v9378 = vpack.c.bf16 %v8874, %v8871
    %v9379 = vpack.c.bf16 %v8875, %v8872
    %v9380 = vpack.c.bf16 %v8876, %v8873
    %v9381 = vpack.c.bf16 %v8736, %v8733
    %v9382 = vpack.c.bf16 %v8737, %v8734
    %v9383 = vpack.c.bf16 %v8738, %v8735
    %v9384 = vpack.c.bf16 %v8784, %v8781
    %v9385 = vpack.c.bf16 %v8785, %v8782
    %v9386 = vpack.c.bf16 %v8786, %v8783
    %v9387 = vpack.c.bf16 %v8832, %v8829
    %v9388 = vpack.c.bf16 %v8833, %v8830
    %v9389 = vpack.c.bf16 %v8834, %v8831
    %v9390 = vpack.c.bf16 %v8880, %v8877
    %v9391 = vpack.c.bf16 %v8881, %v8878
    %v9392 = vpack.c.bf16 %v8882, %v8879
    %v9393 = vpack.c.bf16 %v8742, %v8739
    %v9394 = vpack.c.bf16 %v8743, %v8740
    %v9395 = vpack.c.bf16 %v8744, %v8741
    %v9396 = vpack.c.bf16 %v8790, %v8787
    %v9397 = vpack.c.bf16 %v8791, %v8788
    %v9398 = vpack.c.bf16 %v8792, %v8789
    %v9399 = vpack.c.bf16 %v8838, %v8835
    %v9400 = vpack.c.bf16 %v8839, %v8836
    %v9401 = vpack.c.bf16 %v8840, %v8837
    %v9402 = vpack.c.bf16 %v8886, %v8883
    %v9403 = vpack.c.bf16 %v8887, %v8884
    %v9404 = vpack.c.bf16 %v8888, %v8885
    %v9405 = vpack.c.bf16 %v8748, %v8745
    %v9406 = vpack.c.bf16 %v8749, %v8746
    %v9407 = vpack.c.bf16 %v8750, %v8747
    %v9408 = vpack.c.bf16 %v8796, %v8793
    %v9409 = vpack.c.bf16 %v8797, %v8794
    %v9410 = vpack.c.bf16 %v8798, %v8795
    %v9411 = vpack.c.bf16 %v8844, %v8841
    %v9412 = vpack.c.bf16 %v8845, %v8842
    %v9413 = vpack.c.bf16 %v8846, %v8843
    %v9414 = vpack.c.bf16 %v8892, %v8889
    %v9415 = vpack.c.bf16 %v8893, %v8890
    %v9416 = vpack.c.bf16 %v8894, %v8891
    %v9417 = vpack.c.bf16 %v8754, %v8751
    %v9418 = vpack.c.bf16 %v8755, %v8752
    %v9419 = vpack.c.bf16 %v8756, %v8753
    %v9420 = vpack.c.bf16 %v8802, %v8799
    %v9421 = vpack.c.bf16 %v8803, %v8800
    %v9422 = vpack.c.bf16 %v8804, %v8801
    %v9423 = vpack.c.bf16 %v8850, %v8847
    %v9424 = vpack.c.bf16 %v8851, %v8848
    %v9425 = vpack.c.bf16 %v8852, %v8849
    %v9426 = vpack.c.bf16 %v8898, %v8895
    %v9427 = vpack.c.bf16 %v8899, %v8896
    %v9428 = vpack.c.bf16 %v8900, %v8897
    %v9429 = vld [vmem:[%s7] sm:$0xf]
    %v9430 = vld [vmem:[%s7 + $0x4] sm:$0xf]
    %v9431 = vld [vmem:[%s7 + $0x8] sm:$0xf]
    %v9432 = vld [vmem:[%s7 + $0xc] sm:$0xf]
    %v9433 = vld [vmem:[%s7 + $0x10] sm:$0xf]
    %v9434 = vld [vmem:[%s7 + $0x14] sm:$0xf]
    %v9435 = vld [vmem:[%s7 + $0x18] sm:$0xf]
    %v9436 = vld [vmem:[%s7 + $0x1c] sm:$0xf]
    %v9437 = vld [vmem:[%s7 + $0x20] sm:$0xf]
    %v9438 = vld [vmem:[%s7 + $0x24] sm:$0xf]
    %v9439 = vld [vmem:[%s7 + $0x28] sm:$0xf]
    %v9440 = vld [vmem:[%s7 + $0x2c] sm:$0xf]
    %v9441 = vld [vmem:[%s7 + $0x30] sm:$0xf]
    %v9442 = vld [vmem:[%s7 + $0x34] sm:$0xf]
    %v9443 = vld [vmem:[%s7 + $0x38] sm:$0xf]
    %v9444 = vld [vmem:[%s7 + $0x3c] sm:$0xf]
    %v9445 = vld [vmem:[%s7 + $0x40] sm:$0xf]
    %v9446 = vld [vmem:[%s7 + $0x44] sm:$0xf]
    %v9447 = vld [vmem:[%s7 + $0x48] sm:$0xf]
    %v9448 = vld [vmem:[%s7 + $0x4c] sm:$0xf]
    %v9449 = vld [vmem:[%s7 + $0x50] sm:$0xf]
    %v9450 = vld [vmem:[%s7 + $0x54] sm:$0xf]
    %v9451 = vld [vmem:[%s7 + $0x58] sm:$0xf]
    %v9452 = vld [vmem:[%s7 + $0x5c] sm:$0xf]
    %v9453 = vld [vmem:[%s7 + $0x60] sm:$0xf]
    %v9454 = vld [vmem:[%s7 + $0x64] sm:$0xf]
    %v9455 = vld [vmem:[%s7 + $0x68] sm:$0xf]
    %v9456 = vld [vmem:[%s7 + $0x6c] sm:$0xf]
    %v9457 = vld [vmem:[%s7 + $0x70] sm:$0xf]
    %v9458 = vld [vmem:[%s7 + $0x74] sm:$0xf]
    %v9459 = vld [vmem:[%s7 + $0x78] sm:$0xf]
    %v9460 = vld [vmem:[%s7 + $0x7c] sm:$0xf]
    %v9461 = vld [vmem:[%s7 + $0x80] sm:$0xf]
    %v9462 = vld [vmem:[%s7 + $0x84] sm:$0xf]
    %v9463 = vld [vmem:[%s7 + $0x88] sm:$0xf]
    %v9464 = vld [vmem:[%s7 + $0x8c] sm:$0xf]
    %v9465 = vld [vmem:[%s7 + $0x90] sm:$0xf]
    %v9466 = vld [vmem:[%s7 + $0x94] sm:$0xf]
    %v9467 = vld [vmem:[%s7 + $0x98] sm:$0xf]
    %v9468 = vld [vmem:[%s7 + $0x9c] sm:$0xf]
    %v9469 = vld [vmem:[%s7 + $0xa0] sm:$0xf]
    %v9470 = vld [vmem:[%s7 + $0xa4] sm:$0xf]
    %v9471 = vld [vmem:[%s7 + $0xa8] sm:$0xf]
    %v9472 = vld [vmem:[%s7 + $0xac] sm:$0xf]
    %v9473 = vld [vmem:[%s7 + $0xb0] sm:$0xf]
    %v9474 = vld [vmem:[%s7 + $0xb4] sm:$0xf]
    %v9475 = vld [vmem:[%s7 + $0xb8] sm:$0xf]
    %v9476 = vld [vmem:[%s7 + $0xbc] sm:$0xf]
    %v9477 = vld [vmem:[%s7 + $0xc0] sm:$0xf]
    %v9478 = vld [vmem:[%s7 + $0xc4] sm:$0xf]
    %v9479 = vld [vmem:[%s7 + $0xc8] sm:$0xf]
    %v9480 = vld [vmem:[%s7 + $0xcc] sm:$0xf]
    %v9481 = vld [vmem:[%s7 + $0xd0] sm:$0xf]
    %v9482 = vld [vmem:[%s7 + $0xd4] sm:$0xf]
    %v9483 = vld [vmem:[%s7 + $0xd8] sm:$0xf]
    %v9484 = vld [vmem:[%s7 + $0xdc] sm:$0xf]
    %v9485 = vld [vmem:[%s7 + $0xe0] sm:$0xf]
    %v9486 = vld [vmem:[%s7 + $0xe4] sm:$0xf]
    %v9487 = vld [vmem:[%s7 + $0xe8] sm:$0xf]
    %v9488 = vld [vmem:[%s7 + $0xec] sm:$0xf]
    %v9489 = vld [vmem:[%s7 + $0xf0] sm:$0xf]
    %v9490 = vld [vmem:[%s7 + $0xf4] sm:$0xf]
    %v9491 = vld [vmem:[%s7 + $0xf8] sm:$0xf]
    %v9492 = vld [vmem:[%s7 + $0xfc] sm:$0xf]
    %v9493 = vld [vmem:[%s7 + $0x100] sm:$0xf]
    %v9494 = vld [vmem:[%s7 + $0x104] sm:$0xf]
    %v9495 = vld [vmem:[%s7 + $0x108] sm:$0xf]
    %v9496 = vld [vmem:[%s7 + $0x10c] sm:$0xf]
    %v9497 = vld [vmem:[%s7 + $0x110] sm:$0xf]
    %v9498 = vld [vmem:[%s7 + $0x114] sm:$0xf]
    %v9499 = vld [vmem:[%s7 + $0x118] sm:$0xf]
    %v9500 = vld [vmem:[%s7 + $0x11c] sm:$0xf]
    %v9501 = vld [vmem:[%s7 + $0x120] sm:$0xf]
    %v9502 = vld [vmem:[%s7 + $0x124] sm:$0xf]
    %v9503 = vld [vmem:[%s7 + $0x128] sm:$0xf]
    %v9504 = vld [vmem:[%s7 + $0x12c] sm:$0xf]
    %v9505 = vld [vmem:[%s7 + $0x130] sm:$0xf]
    %v9506 = vld [vmem:[%s7 + $0x134] sm:$0xf]
    %v9507 = vld [vmem:[%s7 + $0x138] sm:$0xf]
    %v9508 = vld [vmem:[%s7 + $0x13c] sm:$0xf]
    %v9509 = vld [vmem:[%s7 + $0x140] sm:$0xf]
    %v9510 = vld [vmem:[%s7 + $0x144] sm:$0xf]
    %v9511 = vld [vmem:[%s7 + $0x148] sm:$0xf]
    %v9512 = vld [vmem:[%s7 + $0x14c] sm:$0xf]
    %v9513 = vld [vmem:[%s7 + $0x150] sm:$0xf]
    %v9514 = vld [vmem:[%s7 + $0x154] sm:$0xf]
    %v9515 = vld [vmem:[%s7 + $0x158] sm:$0xf]
    %v9516 = vld [vmem:[%s7 + $0x15c] sm:$0xf]
    %v9517 = vld [vmem:[%s7 + $0x160] sm:$0xf]
    %v9518 = vld [vmem:[%s7 + $0x164] sm:$0xf]
    %v9519 = vld [vmem:[%s7 + $0x168] sm:$0xf]
    %v9520 = vld [vmem:[%s7 + $0x16c] sm:$0xf]
    %v9521 = vld [vmem:[%s7 + $0x170] sm:$0xf]
    %v9522 = vld [vmem:[%s7 + $0x174] sm:$0xf]
    %v9523 = vld [vmem:[%s7 + $0x178] sm:$0xf]
    %v9524 = vld [vmem:[%s7 + $0x17c] sm:$0xf]
    %v9525 = vld [vmem:[%s7 + $0x180] sm:$0xf]
    %v9526 = vld [vmem:[%s7 + $0x184] sm:$0xf]
    %v9527 = vld [vmem:[%s7 + $0x188] sm:$0xf]
    %v9528 = vld [vmem:[%s7 + $0x18c] sm:$0xf]
    %v9529 = vld [vmem:[%s7 + $0x190] sm:$0xf]
    %v9530 = vld [vmem:[%s7 + $0x194] sm:$0xf]
    %v9531 = vld [vmem:[%s7 + $0x198] sm:$0xf]
    %v9532 = vld [vmem:[%s7 + $0x19c] sm:$0xf]
    %v9533 = vld [vmem:[%s7 + $0x1a0] sm:$0xf]
    %v9534 = vld [vmem:[%s7 + $0x1a4] sm:$0xf]
    %v9535 = vld [vmem:[%s7 + $0x1a8] sm:$0xf]
    %v9536 = vld [vmem:[%s7 + $0x1ac] sm:$0xf]
    %v9537 = vld [vmem:[%s7 + $0x1b0] sm:$0xf]
    %v9538 = vld [vmem:[%s7 + $0x1b4] sm:$0xf]
    %v9539 = vld [vmem:[%s7 + $0x1b8] sm:$0xf]
    %v9540 = vld [vmem:[%s7 + $0x1bc] sm:$0xf]
    %v9541 = vld [vmem:[%s7 + $0x1c0] sm:$0xf]
    %v9542 = vld [vmem:[%s7 + $0x1c4] sm:$0xf]
    %v9543 = vld [vmem:[%s7 + $0x1c8] sm:$0xf]
    %v9544 = vld [vmem:[%s7 + $0x1cc] sm:$0xf]
    %v9545 = vld [vmem:[%s7 + $0x1d0] sm:$0xf]
    %v9546 = vld [vmem:[%s7 + $0x1d4] sm:$0xf]
    %v9547 = vld [vmem:[%s7 + $0x1d8] sm:$0xf]
    %v9548 = vld [vmem:[%s7 + $0x1dc] sm:$0xf]
    %v9549 = vld [vmem:[%s7 + $0x1e0] sm:$0xf]
    %v9550 = vld [vmem:[%s7 + $0x1e4] sm:$0xf]
    %v9551 = vld [vmem:[%s7 + $0x1e8] sm:$0xf]
    %v9552 = vld [vmem:[%s7 + $0x1ec] sm:$0xf]
    %v9553 = vld [vmem:[%s7 + $0x1f0] sm:$0xf]
    %v9554 = vld [vmem:[%s7 + $0x1f4] sm:$0xf]
    %v9555 = vld [vmem:[%s7 + $0x1f8] sm:$0xf]
    %v9556 = vld [vmem:[%s7 + $0x1fc] sm:$0xf]
    %v9557 = vld [vmem:[%s7 + $0x200] sm:$0xf]
    %v9558 = vld [vmem:[%s7 + $0x204] sm:$0xf]
    %v9559 = vld [vmem:[%s7 + $0x208] sm:$0xf]
    %v9560 = vld [vmem:[%s7 + $0x20c] sm:$0xf]
    %v9561 = vld [vmem:[%s7 + $0x210] sm:$0xf]
    %v9562 = vld [vmem:[%s7 + $0x214] sm:$0xf]
    %v9563 = vld [vmem:[%s7 + $0x218] sm:$0xf]
    %v9564 = vld [vmem:[%s7 + $0x21c] sm:$0xf]
    %v9565 = vld [vmem:[%s7 + $0x220] sm:$0xf]
    %v9566 = vld [vmem:[%s7 + $0x224] sm:$0xf]
    %v9567 = vld [vmem:[%s7 + $0x228] sm:$0xf]
    %v9568 = vld [vmem:[%s7 + $0x22c] sm:$0xf]
    %v9569 = vld [vmem:[%s7 + $0x230] sm:$0xf]
    %v9570 = vld [vmem:[%s7 + $0x234] sm:$0xf]
    %v9571 = vld [vmem:[%s7 + $0x238] sm:$0xf]
    %v9572 = vld [vmem:[%s7 + $0x23c] sm:$0xf]
    %v9573 = vld [vmem:[%s7 + $0x240] sm:$0xf]
    %v9574 = vld [vmem:[%s7 + $0x244] sm:$0xf]
    %v9575 = vld [vmem:[%s7 + $0x248] sm:$0xf]
    %v9576 = vld [vmem:[%s7 + $0x24c] sm:$0xf]
    %v9577 = vld [vmem:[%s7 + $0x250] sm:$0xf]
    %v9578 = vld [vmem:[%s7 + $0x254] sm:$0xf]
    %v9579 = vld [vmem:[%s7 + $0x258] sm:$0xf]
    %v9580 = vld [vmem:[%s7 + $0x25c] sm:$0xf]
    %v9581 = vld [vmem:[%s7 + $0x260] sm:$0xf]
    %v9582 = vld [vmem:[%s7 + $0x264] sm:$0xf]
    %v9583 = vld [vmem:[%s7 + $0x268] sm:$0xf]
    %v9584 = vld [vmem:[%s7 + $0x26c] sm:$0xf]
    %v9585 = vld [vmem:[%s7 + $0x270] sm:$0xf]
    %v9586 = vld [vmem:[%s7 + $0x274] sm:$0xf]
    %v9587 = vld [vmem:[%s7 + $0x278] sm:$0xf]
    %v9588 = vld [vmem:[%s7 + $0x27c] sm:$0xf]
    %v9589 = vld [vmem:[%s7 + $0x280] sm:$0xf]
    %v9590 = vld [vmem:[%s7 + $0x284] sm:$0xf]
    %v9591 = vld [vmem:[%s7 + $0x288] sm:$0xf]
    %v9592 = vld [vmem:[%s7 + $0x28c] sm:$0xf]
    %v9593 = vld [vmem:[%s7 + $0x290] sm:$0xf]
    %v9594 = vld [vmem:[%s7 + $0x294] sm:$0xf]
    %v9595 = vld [vmem:[%s7 + $0x298] sm:$0xf]
    %v9596 = vld [vmem:[%s7 + $0x29c] sm:$0xf]
    %v9597 = vld [vmem:[%s7 + $0x2a0] sm:$0xf]
    %v9598 = vld [vmem:[%s7 + $0x2a4] sm:$0xf]
    %v9599 = vld [vmem:[%s7 + $0x2a8] sm:$0xf]
    %v9600 = vld [vmem:[%s7 + $0x2ac] sm:$0xf]
    %v9601 = vld [vmem:[%s7 + $0x2b0] sm:$0xf]
    %v9602 = vld [vmem:[%s7 + $0x2b4] sm:$0xf]
    %v9603 = vld [vmem:[%s7 + $0x2b8] sm:$0xf]
    %v9604 = vld [vmem:[%s7 + $0x2bc] sm:$0xf]
    %v9605 = vld [vmem:[%s7 + $0x2c0] sm:$0xf]
    %v9606 = vld [vmem:[%s7 + $0x2c4] sm:$0xf]
    %v9607 = vld [vmem:[%s7 + $0x2c8] sm:$0xf]
    %v9608 = vld [vmem:[%s7 + $0x2cc] sm:$0xf]
    %v9609 = vld [vmem:[%s7 + $0x2d0] sm:$0xf]
    %v9610 = vld [vmem:[%s7 + $0x2d4] sm:$0xf]
    %v9611 = vld [vmem:[%s7 + $0x2d8] sm:$0xf]
    %v9612 = vld [vmem:[%s7 + $0x2dc] sm:$0xf]
    %v9613 = vld [vmem:[%s7 + $0x2e0] sm:$0xf]
    %v9614 = vld [vmem:[%s7 + $0x2e4] sm:$0xf]
    %v9615 = vld [vmem:[%s7 + $0x2e8] sm:$0xf]
    %v9616 = vld [vmem:[%s7 + $0x2ec] sm:$0xf]
    %v9617 = vld [vmem:[%s7 + $0x2f0] sm:$0xf]
    %v9618 = vld [vmem:[%s7 + $0x2f4] sm:$0xf]
    %v9619 = vld [vmem:[%s7 + $0x2f8] sm:$0xf]
    %v9620 = vld [vmem:[%s7 + $0x2fc] sm:$0xf]
    %v9813 = vunpack.c.l.b16 %v9429
    %v9814 = vunpack.c.l.b16 %v9430
    %v9815 = vunpack.c.l.b16 %v9431
    %v9816 = vunpack.c.l.b16 %v9432
    %v9817 = vunpack.c.l.b16 %v9433
    %v9818 = vunpack.c.l.b16 %v9434
    %v9819 = vunpack.c.l.b16 %v9435
    %v9820 = vunpack.c.l.b16 %v9436
    %v9821 = vunpack.c.l.b16 %v9437
    %v9822 = vunpack.c.l.b16 %v9438
    %v9823 = vunpack.c.l.b16 %v9439
    %v9824 = vunpack.c.l.b16 %v9440
    %v9825 = vunpack.c.l.b16 %v9441
    %v9826 = vunpack.c.l.b16 %v9442
    %v9827 = vunpack.c.l.b16 %v9443
    %v9828 = vunpack.c.l.b16 %v9444
    %v9829 = vunpack.c.l.b16 %v9445
    %v9830 = vunpack.c.l.b16 %v9446
    %v9831 = vunpack.c.l.b16 %v9447
    %v9832 = vunpack.c.l.b16 %v9448
    %v9833 = vunpack.c.l.b16 %v9449
    %v9834 = vunpack.c.l.b16 %v9450
    %v9835 = vunpack.c.l.b16 %v9451
    %v9836 = vunpack.c.l.b16 %v9452
    %v9837 = vunpack.c.l.b16 %v9453
    %v9838 = vunpack.c.l.b16 %v9454
    %v9839 = vunpack.c.l.b16 %v9455
    %v9840 = vunpack.c.l.b16 %v9456
    %v9841 = vunpack.c.l.b16 %v9457
    %v9842 = vunpack.c.l.b16 %v9458
    %v9843 = vunpack.c.l.b16 %v9459
    %v9844 = vunpack.c.l.b16 %v9460
    %v9845 = vunpack.c.l.b16 %v9461
    %v9846 = vunpack.c.l.b16 %v9462
    %v9847 = vunpack.c.l.b16 %v9463
    %v9848 = vunpack.c.l.b16 %v9464
    %v9849 = vunpack.c.l.b16 %v9465
    %v9850 = vunpack.c.l.b16 %v9466
    %v9851 = vunpack.c.l.b16 %v9467
    %v9852 = vunpack.c.l.b16 %v9468
    %v9853 = vunpack.c.l.b16 %v9469
    %v9854 = vunpack.c.l.b16 %v9470
    %v9855 = vunpack.c.l.b16 %v9471
    %v9856 = vunpack.c.l.b16 %v9472
    %v9857 = vunpack.c.l.b16 %v9473
    %v9858 = vunpack.c.l.b16 %v9474
    %v9859 = vunpack.c.l.b16 %v9475
    %v9860 = vunpack.c.l.b16 %v9476
    %v9861 = vunpack.c.l.b16 %v9477
    %v9862 = vunpack.c.l.b16 %v9478
    %v9863 = vunpack.c.l.b16 %v9479
    %v9864 = vunpack.c.l.b16 %v9480
    %v9865 = vunpack.c.l.b16 %v9481
    %v9866 = vunpack.c.l.b16 %v9482
    %v9867 = vunpack.c.l.b16 %v9483
    %v9868 = vunpack.c.l.b16 %v9484
    %v9869 = vunpack.c.l.b16 %v9485
    %v9870 = vunpack.c.l.b16 %v9486
    %v9871 = vunpack.c.l.b16 %v9487
    %v9872 = vunpack.c.l.b16 %v9488
    %v9873 = vunpack.c.l.b16 %v9489
    %v9874 = vunpack.c.l.b16 %v9490
    %v9875 = vunpack.c.l.b16 %v9491
    %v9876 = vunpack.c.l.b16 %v9492
    %v9877 = vunpack.c.l.b16 %v9493
    %v9878 = vunpack.c.l.b16 %v9494
    %v9879 = vunpack.c.l.b16 %v9495
    %v9880 = vunpack.c.l.b16 %v9496
    %v9881 = vunpack.c.l.b16 %v9497
    %v9882 = vunpack.c.l.b16 %v9498
    %v9883 = vunpack.c.l.b16 %v9499
    %v9884 = vunpack.c.l.b16 %v9500
    %v9885 = vunpack.c.l.b16 %v9501
    %v9886 = vunpack.c.l.b16 %v9502
    %v9887 = vunpack.c.l.b16 %v9503
    %v9888 = vunpack.c.l.b16 %v9504
    %v9889 = vunpack.c.l.b16 %v9505
    %v9890 = vunpack.c.l.b16 %v9506
    %v9891 = vunpack.c.l.b16 %v9507
    %v9892 = vunpack.c.l.b16 %v9508
    %v9893 = vunpack.c.l.b16 %v9509
    %v9894 = vunpack.c.l.b16 %v9510
    %v9895 = vunpack.c.l.b16 %v9511
    %v9896 = vunpack.c.l.b16 %v9512
    %v9897 = vunpack.c.l.b16 %v9513
    %v9898 = vunpack.c.l.b16 %v9514
    %v9899 = vunpack.c.l.b16 %v9515
    %v9900 = vunpack.c.l.b16 %v9516
    %v9901 = vunpack.c.l.b16 %v9517
    %v9902 = vunpack.c.l.b16 %v9518
    %v9903 = vunpack.c.l.b16 %v9519
    %v9904 = vunpack.c.l.b16 %v9520
    %v9905 = vunpack.c.l.b16 %v9521
    %v9906 = vunpack.c.l.b16 %v9522
    %v9907 = vunpack.c.l.b16 %v9523
    %v9908 = vunpack.c.l.b16 %v9524
    %v9909 = vunpack.c.l.b16 %v9525
    %v9910 = vunpack.c.l.b16 %v9526
    %v9911 = vunpack.c.l.b16 %v9527
    %v9912 = vunpack.c.l.b16 %v9528
    %v9913 = vunpack.c.l.b16 %v9529
    %v9914 = vunpack.c.l.b16 %v9530
    %v9915 = vunpack.c.l.b16 %v9531
    %v9916 = vunpack.c.l.b16 %v9532
    %v9917 = vunpack.c.l.b16 %v9533
    %v9918 = vunpack.c.l.b16 %v9534
    %v9919 = vunpack.c.l.b16 %v9535
    %v9920 = vunpack.c.l.b16 %v9536
    %v9921 = vunpack.c.l.b16 %v9537
    %v9922 = vunpack.c.l.b16 %v9538
    %v9923 = vunpack.c.l.b16 %v9539
    %v9924 = vunpack.c.l.b16 %v9540
    %v9925 = vunpack.c.l.b16 %v9541
    %v9926 = vunpack.c.l.b16 %v9542
    %v9927 = vunpack.c.l.b16 %v9543
    %v9928 = vunpack.c.l.b16 %v9544
    %v9929 = vunpack.c.l.b16 %v9545
    %v9930 = vunpack.c.l.b16 %v9546
    %v9931 = vunpack.c.l.b16 %v9547
    %v9932 = vunpack.c.l.b16 %v9548
    %v9933 = vunpack.c.l.b16 %v9549
    %v9934 = vunpack.c.l.b16 %v9550
    %v9935 = vunpack.c.l.b16 %v9551
    %v9936 = vunpack.c.l.b16 %v9552
    %v9937 = vunpack.c.l.b16 %v9553
    %v9938 = vunpack.c.l.b16 %v9554
    %v9939 = vunpack.c.l.b16 %v9555
    %v9940 = vunpack.c.l.b16 %v9556
    %v9941 = vunpack.c.l.b16 %v9557
    %v9942 = vunpack.c.l.b16 %v9558
    %v9943 = vunpack.c.l.b16 %v9559
    %v9944 = vunpack.c.l.b16 %v9560
    %v9945 = vunpack.c.l.b16 %v9561
    %v9946 = vunpack.c.l.b16 %v9562
    %v9947 = vunpack.c.l.b16 %v9563
    %v9948 = vunpack.c.l.b16 %v9564
    %v9949 = vunpack.c.l.b16 %v9565
    %v9950 = vunpack.c.l.b16 %v9566
    %v9951 = vunpack.c.l.b16 %v9567
    %v9952 = vunpack.c.l.b16 %v9568
    %v9953 = vunpack.c.l.b16 %v9569
    %v9954 = vunpack.c.l.b16 %v9570
    %v9955 = vunpack.c.l.b16 %v9571
    %v9956 = vunpack.c.l.b16 %v9572
    %v9957 = vunpack.c.l.b16 %v9573
    %v9958 = vunpack.c.l.b16 %v9574
    %v9959 = vunpack.c.l.b16 %v9575
    %v9960 = vunpack.c.l.b16 %v9576
    %v9961 = vunpack.c.l.b16 %v9577
    %v9962 = vunpack.c.l.b16 %v9578
    %v9963 = vunpack.c.l.b16 %v9579
    %v9964 = vunpack.c.l.b16 %v9580
    %v9965 = vunpack.c.l.b16 %v9581
    %v9966 = vunpack.c.l.b16 %v9582
    %v9967 = vunpack.c.l.b16 %v9583
    %v9968 = vunpack.c.l.b16 %v9584
    %v9969 = vunpack.c.l.b16 %v9585
    %v9970 = vunpack.c.l.b16 %v9586
    %v9971 = vunpack.c.l.b16 %v9587
    %v9972 = vunpack.c.l.b16 %v9588
    %v9973 = vunpack.c.l.b16 %v9589
    %v9974 = vunpack.c.l.b16 %v9590
    %v9975 = vunpack.c.l.b16 %v9591
    %v9976 = vunpack.c.l.b16 %v9592
    %v9977 = vunpack.c.l.b16 %v9593
    %v9978 = vunpack.c.l.b16 %v9594
    %v9979 = vunpack.c.l.b16 %v9595
    %v9980 = vunpack.c.l.b16 %v9596
    %v9981 = vunpack.c.l.b16 %v9597
    %v9982 = vunpack.c.l.b16 %v9598
    %v9983 = vunpack.c.l.b16 %v9599
    %v9984 = vunpack.c.l.b16 %v9600
    %v9985 = vunpack.c.l.b16 %v9601
    %v9986 = vunpack.c.l.b16 %v9602
    %v9987 = vunpack.c.l.b16 %v9603
    %v9988 = vunpack.c.l.b16 %v9604
    %v9989 = vunpack.c.l.b16 %v9605
    %v9990 = vunpack.c.l.b16 %v9606
    %v9991 = vunpack.c.l.b16 %v9607
    %v9992 = vunpack.c.l.b16 %v9608
    %v9993 = vunpack.c.l.b16 %v9609
    %v9994 = vunpack.c.l.b16 %v9610
    %v9995 = vunpack.c.l.b16 %v9611
    %v9996 = vunpack.c.l.b16 %v9612
    %v9997 = vunpack.c.l.b16 %v9613
    %v9998 = vunpack.c.l.b16 %v9614
    %v9999 = vunpack.c.l.b16 %v9615
    %v10000 = vunpack.c.l.b16 %v9616
    %v10001 = vunpack.c.l.b16 %v9617
    %v10002 = vunpack.c.l.b16 %v9618
    %v10003 = vunpack.c.l.b16 %v9619
    %v10004 = vunpack.c.l.b16 %v9620
    %v10005 = vpack.c.b16 %v9814, %v9813
    %v10006 = vpack.c.b16 %v9816, %v9815
    %v10007 = vpack.c.b16 %v9818, %v9817
    %v10008 = vpack.c.b16 %v9820, %v9819
    %v10009 = vpack.c.b16 %v9822, %v9821
    %v10010 = vpack.c.b16 %v9824, %v9823
    %v10011 = vpack.c.b16 %v9826, %v9825
    %v10012 = vpack.c.b16 %v9828, %v9827
    %v10013 = vpack.c.b16 %v9830, %v9829
    %v10014 = vpack.c.b16 %v9832, %v9831
    %v10015 = vpack.c.b16 %v9834, %v9833
    %v10016 = vpack.c.b16 %v9836, %v9835
    %v10017 = vpack.c.b16 %v9838, %v9837
    %v10018 = vpack.c.b16 %v9840, %v9839
    %v10019 = vpack.c.b16 %v9842, %v9841
    %v10020 = vpack.c.b16 %v9844, %v9843
    %v10021 = vpack.c.b16 %v9846, %v9845
    %v10022 = vpack.c.b16 %v9848, %v9847
    %v10023 = vpack.c.b16 %v9850, %v9849
    %v10024 = vpack.c.b16 %v9852, %v9851
    %v10025 = vpack.c.b16 %v9854, %v9853
    %v10026 = vpack.c.b16 %v9856, %v9855
    %v10027 = vpack.c.b16 %v9858, %v9857
    %v10028 = vpack.c.b16 %v9860, %v9859
    %v10029 = vpack.c.b16 %v9862, %v9861
    %v10030 = vpack.c.b16 %v9864, %v9863
    %v10031 = vpack.c.b16 %v9866, %v9865
    %v10032 = vpack.c.b16 %v9868, %v9867
    %v10033 = vpack.c.b16 %v9870, %v9869
    %v10034 = vpack.c.b16 %v9872, %v9871
    %v10035 = vpack.c.b16 %v9874, %v9873
    %v10036 = vpack.c.b16 %v9876, %v9875
    %v10037 = vpack.c.b16 %v9878, %v9877
    %v10038 = vpack.c.b16 %v9880, %v9879
    %v10039 = vpack.c.b16 %v9882, %v9881
    %v10040 = vpack.c.b16 %v9884, %v9883
    %v10041 = vpack.c.b16 %v9886, %v9885
    %v10042 = vpack.c.b16 %v9888, %v9887
    %v10043 = vpack.c.b16 %v9890, %v9889
    %v10044 = vpack.c.b16 %v9892, %v9891
    %v10045 = vpack.c.b16 %v9894, %v9893
    %v10046 = vpack.c.b16 %v9896, %v9895
    %v10047 = vpack.c.b16 %v9898, %v9897
    %v10048 = vpack.c.b16 %v9900, %v9899
    %v10049 = vpack.c.b16 %v9902, %v9901
    %v10050 = vpack.c.b16 %v9904, %v9903
    %v10051 = vpack.c.b16 %v9906, %v9905
    %v10052 = vpack.c.b16 %v9908, %v9907
    %v10053 = vpack.c.b16 %v9910, %v9909
    %v10054 = vpack.c.b16 %v9912, %v9911
    %v10055 = vpack.c.b16 %v9914, %v9913
    %v10056 = vpack.c.b16 %v9916, %v9915
    %v10057 = vpack.c.b16 %v9918, %v9917
    %v10058 = vpack.c.b16 %v9920, %v9919
    %v10059 = vpack.c.b16 %v9922, %v9921
    %v10060 = vpack.c.b16 %v9924, %v9923
    %v10061 = vpack.c.b16 %v9926, %v9925
    %v10062 = vpack.c.b16 %v9928, %v9927
    %v10063 = vpack.c.b16 %v9930, %v9929
    %v10064 = vpack.c.b16 %v9932, %v9931
    %v10065 = vpack.c.b16 %v9934, %v9933
    %v10066 = vpack.c.b16 %v9936, %v9935
    %v10067 = vpack.c.b16 %v9938, %v9937
    %v10068 = vpack.c.b16 %v9940, %v9939
    %v10069 = vpack.c.b16 %v9942, %v9941
    %v10070 = vpack.c.b16 %v9944, %v9943
    %v10071 = vpack.c.b16 %v9946, %v9945
    %v10072 = vpack.c.b16 %v9948, %v9947
    %v10073 = vpack.c.b16 %v9950, %v9949
    %v10074 = vpack.c.b16 %v9952, %v9951
    %v10075 = vpack.c.b16 %v9954, %v9953
    %v10076 = vpack.c.b16 %v9956, %v9955
    %v10077 = vpack.c.b16 %v9958, %v9957
    %v10078 = vpack.c.b16 %v9960, %v9959
    %v10079 = vpack.c.b16 %v9962, %v9961
    %v10080 = vpack.c.b16 %v9964, %v9963
    %v10081 = vpack.c.b16 %v9966, %v9965
    %v10082 = vpack.c.b16 %v9968, %v9967
    %v10083 = vpack.c.b16 %v9970, %v9969
    %v10084 = vpack.c.b16 %v9972, %v9971
    %v10085 = vpack.c.b16 %v9974, %v9973
    %v10086 = vpack.c.b16 %v9976, %v9975
    %v10087 = vpack.c.b16 %v9978, %v9977
    %v10088 = vpack.c.b16 %v9980, %v9979
    %v10089 = vpack.c.b16 %v9982, %v9981
    %v10090 = vpack.c.b16 %v9984, %v9983
    %v10091 = vpack.c.b16 %v9986, %v9985
    %v10092 = vpack.c.b16 %v9988, %v9987
    %v10093 = vpack.c.b16 %v9990, %v9989
    %v10094 = vpack.c.b16 %v9992, %v9991
    %v10095 = vpack.c.b16 %v9994, %v9993
    %v10096 = vpack.c.b16 %v9996, %v9995
    %v10097 = vpack.c.b16 %v9998, %v9997
    %v10098 = vpack.c.b16 %v10000, %v9999
    %v10099 = vpack.c.b16 %v10002, %v10001
    %v10100 = vpack.c.b16 %v10004, %v10003
    %10197 = vmatprep.subr.bf16.mxu0 0
    %10198 = vmatpush1.bf16.msra.mxu0 %v10005
    %10199 = vmatprep.subr.bf16.mxu0 0
    %10200 = vmatpush1.bf16.msra.mxu0 %v10006
    %10201 = vmatprep.subr.bf16.mxu0 0
    %10202 = vmatpush1.bf16.msra.mxu0 %v10007
    %10203 = vmatprep.subr.bf16.mxu0 0
    %10204 = vmatpush1.bf16.msra.mxu0 %v10008
    %10205 = vmatprep.subr.bf16.mxu0 0
    %10206 = vmatpush1.bf16.msra.mxu0 %v10009
    %10207 = vmatprep.subr.bf16.mxu0 0
    %10208 = vmatpush1.bf16.msra.mxu0 %v10010
    %10209 = vmatprep.subr.bf16.mxu0 0
    %10210 = vmatpush1.bf16.msra.mxu0 %v10011
    %10211 = vmatprep.subr.bf16.mxu0 0
    %10212 = vmatpush1.bf16.msra.mxu0 %v10012
    %10213 = vmatprep.subr.bf16.mxu0 0
    %10214 = vmatpush1.bf16.msra.mxu0 %v10013
    %10215 = vmatprep.subr.bf16.mxu0 0
    %10216 = vmatpush1.bf16.msra.mxu0 %v10014
    %10217 = vmatprep.subr.bf16.mxu0 0
    %10218 = vmatpush1.bf16.msra.mxu0 %v10015
    %10219 = vmatprep.subr.bf16.mxu0 0
    %10220 = vmatpush1.bf16.msra.mxu0 %v10016
    %10221 = vmatprep.subr.bf16.mxu0 0
    %10222 = vmatpush1.bf16.msra.mxu0 %v10017
    %10223 = vmatprep.subr.bf16.mxu0 0
    %10224 = vmatpush1.bf16.msra.mxu0 %v10018
    %10225 = vmatprep.subr.bf16.mxu0 0
    %10226 = vmatpush1.bf16.msra.mxu0 %v10019
    %10227 = vmatprep.subr.bf16.mxu0 0
    %10228 = vmatpush1.bf16.msra.mxu0 %v10020
    %10229 = vmatprep.mubr.bf16.mxu0 %v9334
    %10230 = vmatmul.mubr.bf16.gmra.mrb[0].mxu0 %v9333
    %v10231 = vpop.f32.mrb[0].mxu0
    %v10232 = vadd.f32 0.0, %v10231
    %v10233 = vpop.f32.mrb[0].mxu0
    %v10234 = vpop.f32.mrb[0].mxu0
    %v10235 = vadd.f32 0.0, %v10234
    %v10236 = vpop.f32.mrb[0].mxu0
    %10237 = vmatprep.mubr.bf16.mxu0 %v9346
    %10238 = vmatmul.mubr.bf16.gmra.mrb[0].mxu0 %v9345
    %v10239 = vpop.f32.mrb[0].mxu0
    %v10240 = vadd.f32 0.0, %v10239
    %v10241 = vpop.f32.mrb[0].mxu0
    %v10242 = vpop.f32.mrb[0].mxu0
    %v10243 = vadd.f32 0.0, %v10242
    %v10244 = vpop.f32.mrb[0].mxu0
    %10245 = vmatprep.mubr.bf16.mxu0 %v9358
    %10246 = vmatmul.mubr.bf16.gmra.mrb[0].mxu0 %v9357
    %v10247 = vpop.f32.mrb[0].mxu0
    %v10248 = vadd.f32 0.0, %v10247
    %v10249 = vpop.f32.mrb[0].mxu0
    %v10250 = vpop.f32.mrb[0].mxu0
    %v10251 = vadd.f32 0.0, %v10250
    %v10252 = vpop.f32.mrb[0].mxu0
    %10253 = vmatprep.mubr.bf16.mxu0 %v9370
    %10254 = vmatmul.mubr.bf16.gmra.mrb[0].mxu0 %v9369
    %v10255 = vpop.f32.mrb[0].mxu0
    %v10256 = vadd.f32 0.0, %v10255
    %v10257 = vpop.f32.mrb[0].mxu0
    %v10258 = vpop.f32.mrb[0].mxu0
    %v10259 = vadd.f32 0.0, %v10258
    %v10260 = vpop.f32.mrb[0].mxu0
    %10261 = vmatprep.mubr.bf16.mxu0 %v9382
    %10262 = vmatmul.mubr.bf16.gmra.mrb[0].mxu0 %v9381
    %v10263 = vpop.f32.mrb[0].mxu0
    %v10264 = vadd.f32 0.0, %v10263
    %v10265 = vpop.f32.mrb[0].mxu0
    %v10266 = vpop.f32.mrb[0].mxu0
    %v10267 = vadd.f32 0.0, %v10266
    %v10268 = vpop.f32.mrb[0].mxu0
    %10269 = vmatprep.mubr.bf16.mxu0 %v9394
    %10270 = vmatmul.mubr.bf16.gmra.mrb[0].mxu0 %v9393
    %v10271 = vpop.f32.mrb[0].mxu0
    %v10272 = vadd.f32 0.0, %v10271
    %v10273 = vpop.f32.mrb[0].mxu0
    %v10274 = vpop.f32.mrb[0].mxu0
    %v10275 = vadd.f32 0.0, %v10274
    %v10276 = vpop.f32.mrb[0].mxu0
    %10277 = vmatprep.mubr.bf16.mxu0 %v9406
    %10278 = vmatmul.mubr.bf16.gmra.mrb[0].mxu0 %v9405
    %v10279 = vpop.f32.mrb[0].mxu0
    %v10280 = vadd.f32 0.0, %v10279
    %v10281 = vpop.f32.mrb[0].mxu0
    %v10282 = vpop.f32.mrb[0].mxu0
    %v10283 = vadd.f32 0.0, %v10282
    %v10284 = vpop.f32.mrb[0].mxu0
    %10285 = vmatprep.mubr.bf16.mxu0 %v9418
    %10286 = vmatmul.mubr.bf16.gmra.mrb[0].mxu0 %v9417
    %v10287 = vpop.f32.mrb[0].mxu0
    %v10288 = vadd.f32 0.0, %v10287
    %v10289 = vpop.f32.mrb[0].mxu0
    %v10290 = vpop.f32.mrb[0].mxu0
    %v10291 = vadd.f32 0.0, %v10290
    %v10292 = vpop.f32.mrb[0].mxu0
    %10293 = vdwg.mxu0
    %10294 = vmatprep.subr.bf16.mxu0 0
    %10295 = vmatpush1.bf16.msra.mxu0 %v10021
    %10296 = vmatprep.subr.bf16.mxu0 0
    %10297 = vmatpush1.bf16.msra.mxu0 %v10022
    %10298 = vmatprep.subr.bf16.mxu0 0
    %10299 = vmatpush1.bf16.msra.mxu0 %v10023
    %10300 = vmatprep.subr.bf16.mxu0 0
    %10301 = vmatpush1.bf16.msra.mxu0 %v10024
    %10302 = vmatprep.subr.bf16.mxu0 0
    %10303 = vmatpush1.bf16.msra.mxu0 %v10025
    %10304 = vmatprep.subr.bf16.mxu0 0
    %10305 = vmatpush1.bf16.msra.mxu0 %v10026
    %10306 = vmatprep.subr.bf16.mxu0 0
    %10307 = vmatpush1.bf16.msra.mxu0 %v10027
    %10308 = vmatprep.subr.bf16.mxu0 0
    %10309 = vmatpush1.bf16.msra.mxu0 %v10028
    %10310 = vmatprep.subr.bf16.mxu0 0
    %10311 = vmatpush1.bf16.msra.mxu0 %v10029
    %10312 = vmatprep.subr.bf16.mxu0 0
    %10313 = vmatpush1.bf16.msra.mxu0 %v10030
    %10314 = vmatprep.subr.bf16.mxu0 0
    %10315 = vmatpush1.bf16.msra.mxu0 %v10031
    %10316 = vmatprep.subr.bf16.mxu0 0
    %10317 = vmatpush1.bf16.msra.mxu0 %v10032
    %10318 = vmatprep.subr.bf16.mxu0 0
    %10319 = vmatpush1.bf16.msra.mxu0 %v10033
    %10320 = vmatprep.subr.bf16.mxu0 0
    %10321 = vmatpush1.bf16.msra.mxu0 %v10034
    %10322 = vmatprep.subr.bf16.mxu0 0
    %10323 = vmatpush1.bf16.msra.mxu0 %v10035
    %10324 = vmatprep.subr.bf16.mxu0 0
    %10325 = vmatpush1.bf16.msra.mxu0 %v10036
    %10326 = vmatprep.mubr.bf16.mxu0 %v9336
    %10327 = vmatmul.mubr.bf16.gmra.mrb[0].mxu0 %v9335
    %v10328 = vpop.f32.mrb[0].mxu0
    %v10329 = vadd.f32 %v10232, %v10328
    %v10330 = vpop.f32.mrb[0].mxu0
    %v10331 = vpop.f32.mrb[0].mxu0
    %v10332 = vadd.f32 %v10235, %v10331
    %v10333 = vpop.f32.mrb[0].mxu0
    %10334 = vmatprep.mubr.bf16.mxu0 %v9348
    %10335 = vmatmul.mubr.bf16.gmra.mrb[0].mxu0 %v9347
    %v10336 = vpop.f32.mrb[0].mxu0
    %v10337 = vadd.f32 %v10240, %v10336
    %v10338 = vpop.f32.mrb[0].mxu0
    %v10339 = vpop.f32.mrb[0].mxu0
    %v10340 = vadd.f32 %v10243, %v10339
    %v10341 = vpop.f32.mrb[0].mxu0
    %10342 = vmatprep.mubr.bf16.mxu0 %v9360
    %10343 = vmatmul.mubr.bf16.gmra.mrb[0].mxu0 %v9359
    %v10344 = vpop.f32.mrb[0].mxu0
    %v10345 = vadd.f32 %v10248, %v10344
    %v10346 = vpop.f32.mrb[0].mxu0
    %v10347 = vpop.f32.mrb[0].mxu0
    %v10348 = vadd.f32 %v10251, %v10347
    %v10349 = vpop.f32.mrb[0].mxu0
    %10350 = vmatprep.mubr.bf16.mxu0 %v9372
    %10351 = vmatmul.mubr.bf16.gmra.mrb[0].mxu0 %v9371
    %v10352 = vpop.f32.mrb[0].mxu0
    %v10353 = vadd.f32 %v10256, %v10352
    %v10354 = vpop.f32.mrb[0].mxu0
    %v10355 = vpop.f32.mrb[0].mxu0
    %v10356 = vadd.f32 %v10259, %v10355
    %v10357 = vpop.f32.mrb[0].mxu0
    %10358 = vmatprep.mubr.bf16.mxu0 %v9384
    %10359 = vmatmul.mubr.bf16.gmra.mrb[0].mxu0 %v9383
    %v10360 = vpop.f32.mrb[0].mxu0
    %v10361 = vadd.f32 %v10264, %v10360
    %v10362 = vpop.f32.mrb[0].mxu0
    %v10363 = vpop.f32.mrb[0].mxu0
    %v10364 = vadd.f32 %v10267, %v10363
    %v10365 = vpop.f32.mrb[0].mxu0
    %10366 = vmatprep.mubr.bf16.mxu0 %v9396
    %10367 = vmatmul.mubr.bf16.gmra.mrb[0].mxu0 %v9395
    %v10368 = vpop.f32.mrb[0].mxu0
    %v10369 = vadd.f32 %v10272, %v10368
    %v10370 = vpop.f32.mrb[0].mxu0
    %v10371 = vpop.f32.mrb[0].mxu0
    %v10372 = vadd.f32 %v10275, %v10371
    %v10373 = vpop.f32.mrb[0].mxu0
    %10374 = vmatprep.mubr.bf16.mxu0 %v9408
    %10375 = vmatmul.mubr.bf16.gmra.mrb[0].mxu0 %v9407
    %v10376 = vpop.f32.mrb[0].mxu0
    %v10377 = vadd.f32 %v10280, %v10376
    %v10378 = vpop.f32.mrb[0].mxu0
    %v10379 = vpop.f32.mrb[0].mxu0
    %v10380 = vadd.f32 %v10283, %v10379
    %v10381 = vpop.f32.mrb[0].mxu0
    %10382 = vmatprep.mubr.bf16.mxu0 %v9420
    %10383 = vmatmul.mubr.bf16.gmra.mrb[0].mxu0 %v9419
    %v10384 = vpop.f32.mrb[0].mxu0
    %v10385 = vadd.f32 %v10288, %v10384
    %v10386 = vpop.f32.mrb[0].mxu0
    %v10387 = vpop.f32.mrb[0].mxu0
    %v10388 = vadd.f32 %v10291, %v10387
    %v10389 = vpop.f32.mrb[0].mxu0
    %10390 = vdwg.mxu0
    %10391 = vmatprep.subr.bf16.mxu0 0
    %10392 = vmatpush1.bf16.msra.mxu0 %v10037
    %10393 = vmatprep.subr.bf16.mxu0 0
    %10394 = vmatpush1.bf16.msra.mxu0 %v10038
    %10395 = vmatprep.subr.bf16.mxu0 0
    %10396 = vmatpush1.bf16.msra.mxu0 %v10039
    %10397 = vmatprep.subr.bf16.mxu0 0
    %10398 = vmatpush1.bf16.msra.mxu0 %v10040
    %10399 = vmatprep.subr.bf16.mxu0 0
    %10400 = vmatpush1.bf16.msra.mxu0 %v10041
    %10401 = vmatprep.subr.bf16.mxu0 0
    %10402 = vmatpush1.bf16.msra.mxu0 %v10042
    %10403 = vmatprep.subr.bf16.mxu0 0
    %10404 = vmatpush1.bf16.msra.mxu0 %v10043
    %10405 = vmatprep.subr.bf16.mxu0 0
    %10406 = vmatpush1.bf16.msra.mxu0 %v10044
    %10407 = vmatprep.subr.bf16.mxu0 0
    %10408 = vmatpush1.bf16.msra.mxu0 %v10045
    %10409 = vmatprep.subr.bf16.mxu0 0
    %10410 = vmatpush1.bf16.msra.mxu0 %v10046
    %10411 = vmatprep.subr.bf16.mxu0 0
    %10412 = vmatpush1.bf16.msra.mxu0 %v10047
    %10413 = vmatprep.subr.bf16.mxu0 0
    %10414 = vmatpush1.bf16.msra.mxu0 %v10048
    %10415 = vmatprep.subr.bf16.mxu0 0
    %10416 = vmatpush1.bf16.msra.mxu0 %v10049
    %10417 = vmatprep.subr.bf16.mxu0 0
    %10418 = vmatpush1.bf16.msra.mxu0 %v10050
    %10419 = vmatprep.subr.bf16.mxu0 0
    %10420 = vmatpush1.bf16.msra.mxu0 %v10051
    %10421 = vmatprep.subr.bf16.mxu0 0
    %10422 = vmatpush1.bf16.msra.mxu0 %v10052
    %10423 = vmatprep.mubr.bf16.mxu0 %v9338
    %10424 = vmatmul.mubr.bf16.gmra.mrb[0].mxu0 %v9337
    %v10425 = vpop.f32.mrb[0].mxu0
    %v10426 = vadd.f32 %v10329, %v10425
    %v10427 = vpop.f32.mrb[0].mxu0
    %v10428 = vpop.f32.mrb[0].mxu0
    %v10429 = vadd.f32 %v10332, %v10428
    %v10430 = vpop.f32.mrb[0].mxu0
    %10431 = vmatprep.mubr.bf16.mxu0 %v9350
    %10432 = vmatmul.mubr.bf16.gmra.mrb[0].mxu0 %v9349
    %v10433 = vpop.f32.mrb[0].mxu0
    %v10434 = vadd.f32 %v10337, %v10433
    %v10435 = vpop.f32.mrb[0].mxu0
    %v10436 = vpop.f32.mrb[0].mxu0
    %v10437 = vadd.f32 %v10340, %v10436
    %v10438 = vpop.f32.mrb[0].mxu0
    %10439 = vmatprep.mubr.bf16.mxu0 %v9362
    %10440 = vmatmul.mubr.bf16.gmra.mrb[0].mxu0 %v9361
    %v10441 = vpop.f32.mrb[0].mxu0
    %v10442 = vadd.f32 %v10345, %v10441
    %v10443 = vpop.f32.mrb[0].mxu0
    %v10444 = vpop.f32.mrb[0].mxu0
    %v10445 = vadd.f32 %v10348, %v10444
    %v10446 = vpop.f32.mrb[0].mxu0
    %10447 = vmatprep.mubr.bf16.mxu0 %v9374
    %10448 = vmatmul.mubr.bf16.gmra.mrb[0].mxu0 %v9373
    %v10449 = vpop.f32.mrb[0].mxu0
    %v10450 = vadd.f32 %v10353, %v10449
    %v10451 = vpop.f32.mrb[0].mxu0
    %v10452 = vpop.f32.mrb[0].mxu0
    %v10453 = vadd.f32 %v10356, %v10452
    %v10454 = vpop.f32.mrb[0].mxu0
    %10455 = vmatprep.mubr.bf16.mxu0 %v9386
    %10456 = vmatmul.mubr.bf16.gmra.mrb[0].mxu0 %v9385
    %v10457 = vpop.f32.mrb[0].mxu0
    %v10458 = vadd.f32 %v10361, %v10457
    %v10459 = vpop.f32.mrb[0].mxu0
    %v10460 = vpop.f32.mrb[0].mxu0
    %v10461 = vadd.f32 %v10364, %v10460
    %v10462 = vpop.f32.mrb[0].mxu0
    %10463 = vmatprep.mubr.bf16.mxu0 %v9398
    %10464 = vmatmul.mubr.bf16.gmra.mrb[0].mxu0 %v9397
    %v10465 = vpop.f32.mrb[0].mxu0
    %v10466 = vadd.f32 %v10369, %v10465
    %v10467 = vpop.f32.mrb[0].mxu0
    %v10468 = vpop.f32.mrb[0].mxu0
    %v10469 = vadd.f32 %v10372, %v10468
    %v10470 = vpop.f32.mrb[0].mxu0
    %10471 = vmatprep.mubr.bf16.mxu0 %v9410
    %10472 = vmatmul.mubr.bf16.gmra.mrb[0].mxu0 %v9409
    %v10473 = vpop.f32.mrb[0].mxu0
    %v10474 = vadd.f32 %v10377, %v10473
    %v10475 = vpop.f32.mrb[0].mxu0
    %v10476 = vpop.f32.mrb[0].mxu0
    %v10477 = vadd.f32 %v10380, %v10476
    %v10478 = vpop.f32.mrb[0].mxu0
    %10479 = vmatprep.mubr.bf16.mxu0 %v9422
    %10480 = vmatmul.mubr.bf16.gmra.mrb[0].mxu0 %v9421
    %v10481 = vpop.f32.mrb[0].mxu0
    %v10482 = vadd.f32 %v10385, %v10481
    %v10483 = vpop.f32.mrb[0].mxu0
    %v10484 = vpop.f32.mrb[0].mxu0
    %v10485 = vadd.f32 %v10388, %v10484
    %v10486 = vpop.f32.mrb[0].mxu0
    %10487 = vdwg.mxu0
    %10488 = vmatprep.subr.bf16.mxu0 0
    %10489 = vmatpush1.bf16.msra.mxu0 %v10053
    %10490 = vmatprep.subr.bf16.mxu0 0
    %10491 = vmatpush1.bf16.msra.mxu0 %v10054
    %10492 = vmatprep.subr.bf16.mxu0 0
    %10493 = vmatpush1.bf16.msra.mxu0 %v10055
    %10494 = vmatprep.subr.bf16.mxu0 0
    %10495 = vmatpush1.bf16.msra.mxu0 %v10056
    %10496 = vmatprep.subr.bf16.mxu0 0
    %10497 = vmatpush1.bf16.msra.mxu0 %v10057
    %10498 = vmatprep.subr.bf16.mxu0 0
    %10499 = vmatpush1.bf16.msra.mxu0 %v10058
    %10500 = vmatprep.subr.bf16.mxu0 0
    %10501 = vmatpush1.bf16.msra.mxu0 %v10059
    %10502 = vmatprep.subr.bf16.mxu0 0
    %10503 = vmatpush1.bf16.msra.mxu0 %v10060
    %10504 = vmatprep.subr.bf16.mxu0 0
    %10505 = vmatpush1.bf16.msra.mxu0 %v10061
    %10506 = vmatprep.subr.bf16.mxu0 0
    %10507 = vmatpush1.bf16.msra.mxu0 %v10062
    %10508 = vmatprep.subr.bf16.mxu0 0
    %10509 = vmatpush1.bf16.msra.mxu0 %v10063
    %10510 = vmatprep.subr.bf16.mxu0 0
    %10511 = vmatpush1.bf16.msra.mxu0 %v10064
    %10512 = vmatprep.subr.bf16.mxu0 0
    %10513 = vmatpush1.bf16.msra.mxu0 %v10065
    %10514 = vmatprep.subr.bf16.mxu0 0
    %10515 = vmatpush1.bf16.msra.mxu0 %v10066
    %10516 = vmatprep.subr.bf16.mxu0 0
    %10517 = vmatpush1.bf16.msra.mxu0 %v10067
    %10518 = vmatprep.subr.bf16.mxu0 0
    %10519 = vmatpush1.bf16.msra.mxu0 %v10068
    %10520 = vmatprep.mubr.bf16.mxu0 %v9340
    %10521 = vmatmul.mubr.bf16.gmra.mrb[0].mxu0 %v9339
    %v10522 = vpop.f32.mrb[0].mxu0
    %v10523 = vadd.f32 %v10426, %v10522
    %v10524 = vpop.f32.mrb[0].mxu0
    %v10525 = vpop.f32.mrb[0].mxu0
    %v10526 = vadd.f32 %v10429, %v10525
    %v10527 = vpop.f32.mrb[0].mxu0
    %10528 = vmatprep.mubr.bf16.mxu0 %v9352
    %10529 = vmatmul.mubr.bf16.gmra.mrb[0].mxu0 %v9351
    %v10530 = vpop.f32.mrb[0].mxu0
    %v10531 = vadd.f32 %v10434, %v10530
    %v10532 = vpop.f32.mrb[0].mxu0
    %v10533 = vpop.f32.mrb[0].mxu0
    %v10534 = vadd.f32 %v10437, %v10533
    %v10535 = vpop.f32.mrb[0].mxu0
    %10536 = vmatprep.mubr.bf16.mxu0 %v9364
    %10537 = vmatmul.mubr.bf16.gmra.mrb[0].mxu0 %v9363
    %v10538 = vpop.f32.mrb[0].mxu0
    %v10539 = vadd.f32 %v10442, %v10538
    %v10540 = vpop.f32.mrb[0].mxu0
    %v10541 = vpop.f32.mrb[0].mxu0
    %v10542 = vadd.f32 %v10445, %v10541
    %v10543 = vpop.f32.mrb[0].mxu0
    %10544 = vmatprep.mubr.bf16.mxu0 %v9376
    %10545 = vmatmul.mubr.bf16.gmra.mrb[0].mxu0 %v9375
    %v10546 = vpop.f32.mrb[0].mxu0
    %v10547 = vadd.f32 %v10450, %v10546
    %v10548 = vpop.f32.mrb[0].mxu0
    %v10549 = vpop.f32.mrb[0].mxu0
    %v10550 = vadd.f32 %v10453, %v10549
    %v10551 = vpop.f32.mrb[0].mxu0
    %10552 = vmatprep.mubr.bf16.mxu0 %v9388
    %10553 = vmatmul.mubr.bf16.gmra.mrb[0].mxu0 %v9387
    %v10554 = vpop.f32.mrb[0].mxu0
    %v10555 = vadd.f32 %v10458, %v10554
    %v10556 = vpop.f32.mrb[0].mxu0
    %v10557 = vpop.f32.mrb[0].mxu0
    %v10558 = vadd.f32 %v10461, %v10557
    %v10559 = vpop.f32.mrb[0].mxu0
    %10560 = vmatprep.mubr.bf16.mxu0 %v9400
    %10561 = vmatmul.mubr.bf16.gmra.mrb[0].mxu0 %v9399
    %v10562 = vpop.f32.mrb[0].mxu0
    %v10563 = vadd.f32 %v10466, %v10562
    %v10564 = vpop.f32.mrb[0].mxu0
    %v10565 = vpop.f32.mrb[0].mxu0
    %v10566 = vadd.f32 %v10469, %v10565
    %v10567 = vpop.f32.mrb[0].mxu0
    %10568 = vmatprep.mubr.bf16.mxu0 %v9412
    %10569 = vmatmul.mubr.bf16.gmra.mrb[0].mxu0 %v9411
    %v10570 = vpop.f32.mrb[0].mxu0
    %v10571 = vadd.f32 %v10474, %v10570
    %v10572 = vpop.f32.mrb[0].mxu0
    %v10573 = vpop.f32.mrb[0].mxu0
    %v10574 = vadd.f32 %v10477, %v10573
    %v10575 = vpop.f32.mrb[0].mxu0
    %10576 = vmatprep.mubr.bf16.mxu0 %v9424
    %10577 = vmatmul.mubr.bf16.gmra.mrb[0].mxu0 %v9423
    %v10578 = vpop.f32.mrb[0].mxu0
    %v10579 = vadd.f32 %v10482, %v10578
    %v10580 = vpop.f32.mrb[0].mxu0
    %v10581 = vpop.f32.mrb[0].mxu0
    %v10582 = vadd.f32 %v10485, %v10581
    %v10583 = vpop.f32.mrb[0].mxu0
    %10584 = vdwg.mxu0
    %10585 = vmatprep.subr.bf16.mxu0 0
    %10586 = vmatpush1.bf16.msra.mxu0 %v10069
    %10587 = vmatprep.subr.bf16.mxu0 0
    %10588 = vmatpush1.bf16.msra.mxu0 %v10070
    %10589 = vmatprep.subr.bf16.mxu0 0
    %10590 = vmatpush1.bf16.msra.mxu0 %v10071
    %10591 = vmatprep.subr.bf16.mxu0 0
    %10592 = vmatpush1.bf16.msra.mxu0 %v10072
    %10593 = vmatprep.subr.bf16.mxu0 0
    %10594 = vmatpush1.bf16.msra.mxu0 %v10073
    %10595 = vmatprep.subr.bf16.mxu0 0
    %10596 = vmatpush1.bf16.msra.mxu0 %v10074
    %10597 = vmatprep.subr.bf16.mxu0 0
    %10598 = vmatpush1.bf16.msra.mxu0 %v10075
    %10599 = vmatprep.subr.bf16.mxu0 0
    %10600 = vmatpush1.bf16.msra.mxu0 %v10076
    %10601 = vmatprep.subr.bf16.mxu0 0
    %10602 = vmatpush1.bf16.msra.mxu0 %v10077
    %10603 = vmatprep.subr.bf16.mxu0 0
    %10604 = vmatpush1.bf16.msra.mxu0 %v10078
    %10605 = vmatprep.subr.bf16.mxu0 0
    %10606 = vmatpush1.bf16.msra.mxu0 %v10079
    %10607 = vmatprep.subr.bf16.mxu0 0
    %10608 = vmatpush1.bf16.msra.mxu0 %v10080
    %10609 = vmatprep.subr.bf16.mxu0 0
    %10610 = vmatpush1.bf16.msra.mxu0 %v10081
    %10611 = vmatprep.subr.bf16.mxu0 0
    %10612 = vmatpush1.bf16.msra.mxu0 %v10082
    %10613 = vmatprep.subr.bf16.mxu0 0
    %10614 = vmatpush1.bf16.msra.mxu0 %v10083
    %10615 = vmatprep.subr.bf16.mxu0 0
    %10616 = vmatpush1.bf16.msra.mxu0 %v10084
    %10617 = vmatprep.mubr.bf16.mxu0 %v9342
    %10618 = vmatmul.mubr.bf16.gmra.mrb[0].mxu0 %v9341
    %v10619 = vpop.f32.mrb[0].mxu0
    %v10620 = vadd.f32 %v10523, %v10619
    %v10621 = vpop.f32.mrb[0].mxu0
    %v10622 = vpop.f32.mrb[0].mxu0
    %v10623 = vadd.f32 %v10526, %v10622
    %v10624 = vpop.f32.mrb[0].mxu0
    %10625 = vmatprep.mubr.bf16.mxu0 %v9354
    %10626 = vmatmul.mubr.bf16.gmra.mrb[0].mxu0 %v9353
    %v10627 = vpop.f32.mrb[0].mxu0
    %v10628 = vadd.f32 %v10531, %v10627
    %v10629 = vpop.f32.mrb[0].mxu0
    %v10630 = vpop.f32.mrb[0].mxu0
    %v10631 = vadd.f32 %v10534, %v10630
    %v10632 = vpop.f32.mrb[0].mxu0
    %10633 = vmatprep.mubr.bf16.mxu0 %v9366
    %10634 = vmatmul.mubr.bf16.gmra.mrb[0].mxu0 %v9365
    %v10635 = vpop.f32.mrb[0].mxu0
    %v10636 = vadd.f32 %v10539, %v10635
    %v10637 = vpop.f32.mrb[0].mxu0
    %v10638 = vpop.f32.mrb[0].mxu0
    %v10639 = vadd.f32 %v10542, %v10638
    %v10640 = vpop.f32.mrb[0].mxu0
    %10641 = vmatprep.mubr.bf16.mxu0 %v9378
    %10642 = vmatmul.mubr.bf16.gmra.mrb[0].mxu0 %v9377
    %v10643 = vpop.f32.mrb[0].mxu0
    %v10644 = vadd.f32 %v10547, %v10643
    %v10645 = vpop.f32.mrb[0].mxu0
    %v10646 = vpop.f32.mrb[0].mxu0
    %v10647 = vadd.f32 %v10550, %v10646
    %v10648 = vpop.f32.mrb[0].mxu0
    %10649 = vmatprep.mubr.bf16.mxu0 %v9390
    %10650 = vmatmul.mubr.bf16.gmra.mrb[0].mxu0 %v9389
    %v10651 = vpop.f32.mrb[0].mxu0
    %v10652 = vadd.f32 %v10555, %v10651
    %v10653 = vpop.f32.mrb[0].mxu0
    %v10654 = vpop.f32.mrb[0].mxu0
    %v10655 = vadd.f32 %v10558, %v10654
    %v10656 = vpop.f32.mrb[0].mxu0
    %10657 = vmatprep.mubr.bf16.mxu0 %v9402
    %10658 = vmatmul.mubr.bf16.gmra.mrb[0].mxu0 %v9401
    %v10659 = vpop.f32.mrb[0].mxu0
    %v10660 = vadd.f32 %v10563, %v10659
    %v10661 = vpop.f32.mrb[0].mxu0
    %v10662 = vpop.f32.mrb[0].mxu0
    %v10663 = vadd.f32 %v10566, %v10662
    %v10664 = vpop.f32.mrb[0].mxu0
    %10665 = vmatprep.mubr.bf16.mxu0 %v9414
    %10666 = vmatmul.mubr.bf16.gmra.mrb[0].mxu0 %v9413
    %v10667 = vpop.f32.mrb[0].mxu0
    %v10668 = vadd.f32 %v10571, %v10667
    %v10669 = vpop.f32.mrb[0].mxu0
    %v10670 = vpop.f32.mrb[0].mxu0
    %v10671 = vadd.f32 %v10574, %v10670
    %v10672 = vpop.f32.mrb[0].mxu0
    %10673 = vmatprep.mubr.bf16.mxu0 %v9426
    %10674 = vmatmul.mubr.bf16.gmra.mrb[0].mxu0 %v9425
    %v10675 = vpop.f32.mrb[0].mxu0
    %v10676 = vadd.f32 %v10579, %v10675
    %v10677 = vpop.f32.mrb[0].mxu0
    %v10678 = vpop.f32.mrb[0].mxu0
    %v10679 = vadd.f32 %v10582, %v10678
    %v10680 = vpop.f32.mrb[0].mxu0
    %10681 = vdwg.mxu0
    %10682 = vmatprep.subr.bf16.mxu0 0
    %10683 = vmatpush1.bf16.msra.mxu0 %v10085
    %10684 = vmatprep.subr.bf16.mxu0 0
    %10685 = vmatpush1.bf16.msra.mxu0 %v10086
    %10686 = vmatprep.subr.bf16.mxu0 0
    %10687 = vmatpush1.bf16.msra.mxu0 %v10087
    %10688 = vmatprep.subr.bf16.mxu0 0
    %10689 = vmatpush1.bf16.msra.mxu0 %v10088
    %10690 = vmatprep.subr.bf16.mxu0 0
    %10691 = vmatpush1.bf16.msra.mxu0 %v10089
    %10692 = vmatprep.subr.bf16.mxu0 0
    %10693 = vmatpush1.bf16.msra.mxu0 %v10090
    %10694 = vmatprep.subr.bf16.mxu0 0
    %10695 = vmatpush1.bf16.msra.mxu0 %v10091
    %10696 = vmatprep.subr.bf16.mxu0 0
    %10697 = vmatpush1.bf16.msra.mxu0 %v10092
    %10698 = vmatprep.subr.bf16.mxu0 0
    %10699 = vmatpush1.bf16.msra.mxu0 %v10093
    %10700 = vmatprep.subr.bf16.mxu0 0
    %10701 = vmatpush1.bf16.msra.mxu0 %v10094
    %10702 = vmatprep.subr.bf16.mxu0 0
    %10703 = vmatpush1.bf16.msra.mxu0 %v10095
    %10704 = vmatprep.subr.bf16.mxu0 0
    %10705 = vmatpush1.bf16.msra.mxu0 %v10096
    %10706 = vmatprep.subr.bf16.mxu0 0
    %10707 = vmatpush1.bf16.msra.mxu0 %v10097
    %10708 = vmatprep.subr.bf16.mxu0 0
    %10709 = vmatpush1.bf16.msra.mxu0 %v10098
    %10710 = vmatprep.subr.bf16.mxu0 0
    %10711 = vmatpush1.bf16.msra.mxu0 %v10099
    %10712 = vmatprep.subr.bf16.mxu0 0
    %10713 = vmatpush1.bf16.msra.mxu0 %v10100
    %10714 = vmatprep.mubr.bf16.mxu0 %v9344
    %10715 = vmatmul.mubr.bf16.gmra.mrb[0].mxu0 %v9343
    %v10716 = vpop.f32.mrb[0].mxu0
    %v10717 = vadd.f32 %v10620, %v10716
    %v10718 = vpop.f32.mrb[0].mxu0
    %v10719 = vpop.f32.mrb[0].mxu0
    %v10720 = vadd.f32 %v10623, %v10719
    %v10721 = vpop.f32.mrb[0].mxu0
    %10722 = vmatprep.mubr.bf16.mxu0 %v9356
    %10723 = vmatmul.mubr.bf16.gmra.mrb[0].mxu0 %v9355
    %v10724 = vpop.f32.mrb[0].mxu0
    %v10725 = vadd.f32 %v10628, %v10724
    %v10726 = vpop.f32.mrb[0].mxu0
    %v10727 = vpop.f32.mrb[0].mxu0
    %v10728 = vadd.f32 %v10631, %v10727
    %v10729 = vpop.f32.mrb[0].mxu0
    %10730 = vmatprep.mubr.bf16.mxu0 %v9368
    %10731 = vmatmul.mubr.bf16.gmra.mrb[0].mxu0 %v9367
    %v10732 = vpop.f32.mrb[0].mxu0
    %v10733 = vadd.f32 %v10636, %v10732
    %v10734 = vpop.f32.mrb[0].mxu0
    %v10735 = vpop.f32.mrb[0].mxu0
    %v10736 = vadd.f32 %v10639, %v10735
    %v10737 = vpop.f32.mrb[0].mxu0
    %10738 = vmatprep.mubr.bf16.mxu0 %v9380
    %10739 = vmatmul.mubr.bf16.gmra.mrb[0].mxu0 %v9379
    %v10740 = vpop.f32.mrb[0].mxu0
    %v10741 = vadd.f32 %v10644, %v10740
    %v10742 = vpop.f32.mrb[0].mxu0
    %v10743 = vpop.f32.mrb[0].mxu0
    %v10744 = vadd.f32 %v10647, %v10743
    %v10745 = vpop.f32.mrb[0].mxu0
    %10746 = vmatprep.mubr.bf16.mxu0 %v9392
    %10747 = vmatmul.mubr.bf16.gmra.mrb[0].mxu0 %v9391
    %v10748 = vpop.f32.mrb[0].mxu0
    %v10749 = vadd.f32 %v10652, %v10748
    %v10750 = vpop.f32.mrb[0].mxu0
    %v10751 = vpop.f32.mrb[0].mxu0
    %v10752 = vadd.f32 %v10655, %v10751
    %v10753 = vpop.f32.mrb[0].mxu0
    %10754 = vmatprep.mubr.bf16.mxu0 %v9404
    %10755 = vmatmul.mubr.bf16.gmra.mrb[0].mxu0 %v9403
    %v10756 = vpop.f32.mrb[0].mxu0
    %v10757 = vadd.f32 %v10660, %v10756
    %v10758 = vpop.f32.mrb[0].mxu0
    %v10759 = vpop.f32.mrb[0].mxu0
    %v10760 = vadd.f32 %v10663, %v10759
    %v10761 = vpop.f32.mrb[0].mxu0
    %10762 = vmatprep.mubr.bf16.mxu0 %v9416
    %10763 = vmatmul.mubr.bf16.gmra.mrb[0].mxu0 %v9415
    %v10764 = vpop.f32.mrb[0].mxu0
    %v10765 = vadd.f32 %v10668, %v10764
    %v10766 = vpop.f32.mrb[0].mxu0
    %v10767 = vpop.f32.mrb[0].mxu0
    %v10768 = vadd.f32 %v10671, %v10767
    %v10769 = vpop.f32.mrb[0].mxu0
    %10770 = vmatprep.mubr.bf16.mxu0 %v9428
    %10771 = vmatmul.mubr.bf16.gmra.mrb[0].mxu0 %v9427
    %v10772 = vpop.f32.mrb[0].mxu0
    %v10773 = vadd.f32 %v10676, %v10772
    %v10774 = vpop.f32.mrb[0].mxu0
    %v10775 = vpop.f32.mrb[0].mxu0
    %v10776 = vadd.f32 %v10679, %v10775
    %v10777 = vpop.f32.mrb[0].mxu0
    %10778 = vdwg.mxu0
    %v10779 = vmul.f32 %v10717, %v9317
    %v10780 = vmul.f32 %v10720, %v9318
    %v10781 = vmul.f32 %v10725, %v9319
    %v10782 = vmul.f32 %v10728, %v9320
    %v10783 = vmul.f32 %v10733, %v9321
    %v10784 = vmul.f32 %v10736, %v9322
    %v10785 = vmul.f32 %v10741, %v9323
    %v10786 = vmul.f32 %v10744, %v9324
    %v10787 = vmul.f32 %v10749, %v9325
    %v10788 = vmul.f32 %v10752, %v9326
    %v10789 = vmul.f32 %v10757, %v9327
    %v10790 = vmul.f32 %v10760, %v9328
    %v10791 = vmul.f32 %v10765, %v9329
    %v10792 = vmul.f32 %v10768, %v9330
    %v10793 = vmul.f32 %v10773, %v9331
    %v10794 = vmul.f32 %v10776, %v9332
    %v10795 = vld [vmem:[%s8] sm:$0x1]
    %v10797 = vlaneseq
    %v10798 = vshrl.u32 %v10797, 7
    %v10799 = vsub.s32 0, %v10798
    %v10800 = vrot.slane %v10795, %v10799
    %v10802 = vadd.f32 %v10779, %v10800
    %v10803 = vadd.f32 %v10780, %v10800
    %v10804 = vadd.f32 %v10781, %v10800
    %v10805 = vadd.f32 %v10782, %v10800
    %v10806 = vadd.f32 %v10783, %v10800
    %v10807 = vadd.f32 %v10784, %v10800
    %v10808 = vadd.f32 %v10785, %v10800
    %v10809 = vadd.f32 %v10786, %v10800
    %v10810 = vadd.f32 %v10787, %v10800
    %v10811 = vadd.f32 %v10788, %v10800
    %v10812 = vadd.f32 %v10789, %v10800
    %v10813 = vadd.f32 %v10790, %v10800
    %v10814 = vadd.f32 %v10791, %v10800
    %v10815 = vadd.f32 %v10792, %v10800
    %v10816 = vadd.f32 %v10793, %v10800
    %v10817 = vadd.f32 %v10794, %v10800
    %10818 = vst [vmem:[#allocation5] sm:$0xff] %v10802
    %10819 = vst [vmem:[#allocation5 + $0x8] sm:$0xff] %v10803
    %10820 = vst [vmem:[#allocation5 + $0x10] sm:$0xff] %v10804
    %10821 = vst [vmem:[#allocation5 + $0x18] sm:$0xff] %v10805
    %10822 = vst [vmem:[#allocation5 + $0x20] sm:$0xff] %v10806
    %10823 = vst [vmem:[#allocation5 + $0x28] sm:$0xff] %v10807
    %10824 = vst [vmem:[#allocation5 + $0x30] sm:$0xff] %v10808
    %10825 = vst [vmem:[#allocation5 + $0x38] sm:$0xff] %v10809
    %10826 = vst [vmem:[#allocation5 + $0x40] sm:$0xff] %v10810
    %10827 = vst [vmem:[#allocation5 + $0x48] sm:$0xff] %v10811
    %10828 = vst [vmem:[#allocation5 + $0x50] sm:$0xff] %v10812
    %10829 = vst [vmem:[#allocation5 + $0x58] sm:$0xff] %v10813
    %10830 = vst [vmem:[#allocation5 + $0x60] sm:$0xff] %v10814
    %10831 = vst [vmem:[#allocation5 + $0x68] sm:$0xff] %v10815
    %10832 = vst [vmem:[#allocation5 + $0x70] sm:$0xff] %v10816
    %10833 = vst [vmem:[#allocation5 + $0x78] sm:$0xff] %v10817
    // Predicated region
    $region42: #{tpu_custom_call.1} parent=1 // pred_check
      _
    $region43: #{tpu_custom_call.1} parent=1 // pred_check_branch
      %10835 = sbr.rel (0) target = $region45
    $region44: #{tpu_custom_call.1} parent=1 // pred_region
      %s10837 = ssub.s32 2048, 2048
      %10838 = vsyncadd [#allocation4], %s10837
      %s10839 = sshll.u32 [#allocation5], 4
      %s10840 = int_to_ptr.vmem [resolvable:$true] %s10839
      %10845 = dma.vmem_to_hbm [thread:$0]  %s10840, 2048, %s9, [#allocation4], 128, 128, 8
    $region45: #{tpu_custom_call.1} parent=1 // pred_fallthru
      _
    // Predicated region
    $region46: #{tpu_custom_call.1} parent=1 // pred_check
      _
    $region47: #{tpu_custom_call.1} parent=1 // pred_check_branch
      %10847 = sbr.rel (0) target = $region49
    $region48: #{tpu_custom_call.1} parent=1 // pred_region
      %10848 = dma.done [#allocation4], 2048
    $region49: #{tpu_custom_call.1} parent=1 // pred_fallthru
      _
    %10849 = vsyncpa [#allocation3], 1
    %10850 = vsyncpa [#allocation4], 1

</llo_original>
